<compile_context>
chip_gen: v6e
topology: v6e:2x2x1
jax: 0.10.0
libtpu: 0.0.40
codegen_flags: <defaults>
</compile_context>

<pallas_src>
import functools

import jax
import jax.numpy as jnp
from jax.experimental import pallas as pl
from jax.experimental.pallas import tpu as pltpu


def _make_encoder_kernel(T, B, E, H):
    """Fused 2-layer bidirectional GRU over the full (T, B) batch."""
    H2 = 2 * H
    H3 = 3 * H

    def kernel(lens_ref, x_ref,
               wih0f, whh0f, bih0f, bhh0f,
               wih0b, whh0b, bih0b, bhh0b,
               wih1f, whh1f, bih1f, bhh1f,
               wih1b, whh1b, bih1b, bhh1b,
               out_ref, hid_ref,
               gi_f, gi_b, y01, out_b):
        f32 = jnp.float32
        bf16 = jnp.bfloat16

        # ---- hoisted, loop-invariant work --------------------------------
        lens = lens_ref[...]                              # (B, 1) int32, loaded ONCE
        # Hoisted lane broadcast of the validity masks (no per-step re-broadcast).
        masks = [jnp.broadcast_to(lens > t, (B, H)) for t in range(T)]

        def gru_step(h, whh_ref, bhh, gi_ref, t):
            # One GRU cell step.  Single fused (B,H)@(H,3H) MXU push; gate
            # slices land on 128-lane boundaries (whole vregs for H=128).
            gh = jnp.dot(h.astype(bf16), whh_ref[...],
                         preferred_element_type=f32) + bhh          # (B, 3H)
            gi = gi_ref[t * B:(t + 1) * B, :]                        # (B, 3H) vld
            r = jax.nn.sigmoid(gi[:, 0:H] + gh[:, 0:H])
            z = jax.nn.sigmoid(gi[:, H:H2] + gh[:, H:H2])
            n = jnp.tanh(gi[:, H2:H3] + r * gh[:, H2:H3])
            h_new = (1.0 - z) * n + z * h
            m = masks[t]
            h = jnp.where(m, h_new, h)                # freeze past length
            return h, jnp.where(m, h, 0.0)            # padded steps emit 0

        def birecur(whh_f, whh_b, bhh_f_ref, bhh_b_ref, emit_f, emit_b):
            # Both directions of one layer, explicitly interleaved in one
            # fully-unrolled time loop (T static) so the two independent
            # dependency chains overlap.  h lives in vregs.
            bh_f = bhh_f_ref[...]                     # (1, 3H) f32
            bh_b = bhh_b_ref[...]
            h_f = jnp.zeros((B, H), f32)
            h_b = jnp.zeros((B, H), f32)
            for s in range(T):
                tf = s
                tb = T - 1 - s
                h_f, y_f = gru_step(h_f, whh_f, bh_f, gi_f, tf)
                h_b, y_b = gru_step(h_b, whh_b, bh_b, gi_b, tb)
                emit_f(tf * B, y_f)
                emit_b(tb * B, y_b)
            return h_f, h_b

        x = x_ref[...]                                # (T*B, E) bf16

        # ---- layer 0: fused input matmuls, results spilled to VMEM scratch
        gi_f[...] = jnp.dot(x, wih0f[...], preferred_element_type=f32) + bih0f[...]
        gi_b[...] = jnp.dot(x, wih0b[...], preferred_element_type=f32) + bih0b[...]

        def emit0_f(row, v):
            y01[row:row + B, 0:H] = v.astype(bf16)

        def emit0_b(row, v):
            y01[row:row + B, H:H2] = v.astype(bf16)

        h0f, h0b = birecur(whh0f, whh0b, bhh0f, bhh0b, emit0_f, emit0_b)

        # ---- layer 1: single K=2H contraction over the [fwd ; bwd] scratch
        y = y01[...]                                  # (T*B, 2H) bf16
        gi_f[...] = jnp.dot(y, wih1f[...], preferred_element_type=f32) + bih1f[...]
        gi_b[...] = jnp.dot(y, wih1b[...], preferred_element_type=f32) + bih1b[...]

        def emit1_f(row, v):
            out_ref[row:row + B, :] = v               # fwd -> output directly

        def emit1_b(row, v):
            out_b[row:row + B, :] = v                 # bwd -> own scratch

        h1f, h1b = birecur(whh1f, whh1b, bhh1f, bhh1b, emit1_f, emit1_b)

        # Single vectorized fwd+bwd sum (no per-step out_ref RMW).
        out_ref[...] = out_ref[...] + out_b[...]

        # ---- final hiddens: [l0_fwd, l0_bwd, l1_fwd, l1_bwd] -------------
        hid_ref[0] = h0f
        hid_ref[1] = h0b
        hid_ref[2] = h1f
        hid_ref[3] = h1b

    return kernel


def _prep_dir(w_ih, w_hh, b_ih, b_hh):
    """PyTorch-layout GRU weights -> gate-fused, matmul-ready tensors."""
    wih = w_ih.T.astype(jnp.bfloat16)                  # (Din, 3H), cols [r|z|n]
    whh = w_hh.T.astype(jnp.bfloat16)                  # (H,  3H)
    bih = b_ih.reshape(1, -1).astype(jnp.float32)      # (1, 3H)
    bhh = b_hh.reshape(1, -1).astype(jnp.float32)      # (1, 3H)
    return wih, whh, bih, bhh


def encoder_rnn_forward(params, input_seqs, input_lengths, hidden_size, n_layers=2):
    """input_seqs: (T, B) int32 (seq-major); input_lengths: (B,) int32."""
    assert n_layers == 2, "kernel is specialized for the module default n_layers=2"
    T, B = input_seqs.shape
    H = hidden_size
    E = params["embedding"].shape[1]

    # Embedding gather (padding_idx=0 row is zero) + eval-mode dropout = id.
    embedded = jnp.take(params["embedding"], input_seqs, axis=0)   # (T, B, E)
    x2d = embedded.reshape(T * B, E).astype(jnp.bfloat16)          # lane/sublane-dense
    lens2 = jnp.asarray(input_lengths, jnp.int32)[:, None]         # (B, 1)

    flat = []
    for layer in range(2):
        for d in range(2):                                         # 0=fwd, 1=bwd
            flat += list(_prep_dir(*params["layers"][layer][d]))

    # Advisory cost estimate (matmul flops + gate transcendentals + IO bytes).
    flops = 0
    for layer in range(2):
        din = E if layer == 0 else 2 * H
        flops += 2 * 2 * (T * B) * din * (3 * H)     # hoisted input matmuls, 2 dirs
        flops += 2 * 2 * (T * B) * H * (3 * H)       # recurrent matmuls, 2 dirs
    transcendentals = 2 * 2 * (T * B) * (3 * H)      # sigmoid x2 + tanh per step/dir/layer
    bytes_accessed = (x2d.size * 2 + lens2.size * 4
                      + sum(int(a.size) * a.dtype.itemsize for a in flat)
                      + T * B * H * 4 + 2 * n_layers * B * H * 4)

    vmem = pl.BlockSpec(memory_space=pltpu.MemorySpace.VMEM)
    out2d, hidden = pl.pallas_call(
        _make_encoder_kernel(T, B, E, H),
        out_shape=(jax.ShapeDtypeStruct((T * B, H), jnp.float32),   # lane-dense output
                   jax.ShapeDtypeStruct((2 * n_layers, B, H), jnp.float32)),
        in_specs=[vmem] * (2 + len(flat)),
        out_specs=(vmem, vmem),
        scratch_shapes=[pltpu.VMEM((T * B, 3 * H), jnp.float32),    # gi (fwd dir)
                        pltpu.VMEM((T * B, 3 * H), jnp.float32),    # gi (bwd dir)
                        pltpu.VMEM((T * B, 2 * H), jnp.bfloat16),   # layer-0 [fwd|bwd]
                        pltpu.VMEM((T * B, H), jnp.float32)],       # layer-1 bwd outputs
        cost_estimate=pl.CostEstimate(flops=flops,
                                      transcendentals=transcendentals,
                                      bytes_accessed=bytes_accessed),
    )(lens2, x2d, *flat)

    outputs = out2d.reshape(T, B, H)     # free wrapper-side reshape
    return outputs, hidden


def init_encoder_params(key, input_size, embedding_size, hidden_size, n_layers=2):
    params = {}
    key, k_emb = jax.random.split(key)
    emb = 0.1 * jax.random.normal(k_emb, (input_size, embedding_size), jnp.float32)
    emb = emb.at[0].set(0.0)  # padding_idx=0
    params["embedding"] = emb

    bound = float(hidden_size) ** -0.5
    layers = []
    for layer in range(n_layers):
        d_in = embedding_size if layer == 0 else 2 * hidden_size
        dirs = []
        for _ in range(2):  # fwd, bwd
            key, k1, k2, k3, k4 = jax.random.split(key, 5)
            w_ih = jax.random.uniform(k1, (3 * hidden_size, d_in),
                                      jnp.float32, -bound, bound)
            w_hh = jax.random.uniform(k2, (3 * hidden_size, hidden_size),
                                      jnp.float32, -bound, bound)
            b_ih = jax.random.uniform(k3, (3 * hidden_size,),
                                      jnp.float32, -bound, bound)
            b_hh = jax.random.uniform(k4, (3 * hidden_size,),
                                      jnp.float32, -bound, bound)
            dirs.append((w_ih, w_hh, b_ih, b_hh))
        layers.append(dirs)
    params["layers"] = layers
    return params


if __name__ == "__main__":
    input_size = 50        # vocab
    embedding_size = 32
    hidden_size = 128      # multiple of 128 -> fully lane-dense tiles/stores
    n_layers = 2
    T, B = 8, 8            # T*B = 64 rows, sublane-aligned row blocks

    key = jax.random.PRNGKey(0)
    key, k_tok = jax.random.split(key)
    params = init_encoder_params(key, input_size, embedding_size,
                                 hidden_size, n_layers)

    # Sorted-decreasing lengths, matching pack_padded_sequence's requirement.
    input_lengths = jnp.array([8, 8, 7, 6, 5, 4, 3, 2], jnp.int32)
    tokens = jax.random.randint(k_tok, (T, B), 1, input_size, jnp.int32)
    t_idx = jnp.arange(T, dtype=jnp.int32)[:, None]
    input_seqs = jnp.where(t_idx < input_lengths[None, :], tokens, 0)  # pad=0

    fwd = jax.jit(functools.partial(encoder_rnn_forward,
                                    hidden_size=hidden_size,
                                    n_layers=n_layers))
    outputs, hidden = fwd(params, input_seqs, input_lengths)
    jax.block_until_ready((outputs, hidden))

    assert outputs.shape == (T, B, hidden_size)
    assert hidden.shape == (2 * n_layers, B, hidden_size)
    assert bool(jnp.all(jnp.isfinite(outputs))) and bool(jnp.all(jnp.isfinite(hidden)))
    # Padded positions must be exactly zero (pad_packed_sequence semantics):
    # batch element B-1 has length 2, so timestep T-1 is padding.
    assert float(jnp.max(jnp.abs(outputs[T - 1, B - 1]))) == 0.0
    print("KERNEL_OK")
</pallas_src>

<mosaic_0001>
module attributes {stable_mosaic.version = 11 : i64} {
  func.func @kernel(%arg0: memref<8x1xi32, #tpu.memory_space<vmem>>, %arg1: memref<64x32xbf16, #tpu.memory_space<vmem>>, %arg2: memref<32x384xbf16, #tpu.memory_space<vmem>>, %arg3: memref<128x384xbf16, #tpu.memory_space<vmem>>, %arg4: memref<1x384xf32, #tpu.memory_space<vmem>>, %arg5: memref<1x384xf32, #tpu.memory_space<vmem>>, %arg6: memref<32x384xbf16, #tpu.memory_space<vmem>>, %arg7: memref<128x384xbf16, #tpu.memory_space<vmem>>, %arg8: memref<1x384xf32, #tpu.memory_space<vmem>>, %arg9: memref<1x384xf32, #tpu.memory_space<vmem>>, %arg10: memref<256x384xbf16, #tpu.memory_space<vmem>>, %arg11: memref<128x384xbf16, #tpu.memory_space<vmem>>, %arg12: memref<1x384xf32, #tpu.memory_space<vmem>>, %arg13: memref<1x384xf32, #tpu.memory_space<vmem>>, %arg14: memref<256x384xbf16, #tpu.memory_space<vmem>>, %arg15: memref<128x384xbf16, #tpu.memory_space<vmem>>, %arg16: memref<1x384xf32, #tpu.memory_space<vmem>>, %arg17: memref<1x384xf32, #tpu.memory_space<vmem>>, %arg18: memref<64x128xf32, #tpu.memory_space<vmem>>, %arg19: memref<4x8x128xf32, #tpu.memory_space<vmem>>, %arg20: memref<64x384xf32, #tpu.memory_space<vmem>>, %arg21: memref<64x384xf32, #tpu.memory_space<vmem>>, %arg22: memref<64x256xbf16, #tpu.memory_space<vmem>>, %arg23: memref<64x128xf32, #tpu.memory_space<vmem>>) attributes {dimension_semantics = [], scalar_prefetch = 0 : i64, scratch_operands = 4 : i64, tpu.core_type = #tpu.core_type<tc>} {
    %c0 = arith.constant 0 : index
    %c0_0 = arith.constant 0 : index
    %0 = vector.load %arg0[%c0, %c0_0] : memref<8x1xi32, #tpu.memory_space<vmem>>, vector<8x1xi32>
    %c0_i32 = arith.constant 0 : i32
    %1 = vector.broadcast %c0_i32 : i32 to vector<8x1xi32>
    %2 = arith.cmpi sgt, %0, %1 : vector<8x1xi32>
    %3 = vector.shape_cast %2 : vector<8x1xi1> to vector<8x1xi1>
    %4 = vector.broadcast %3 : vector<8x1xi1> to vector<8x128xi1>
    %c1_i32 = arith.constant 1 : i32
    %5 = vector.broadcast %c1_i32 : i32 to vector<8x1xi32>
    %6 = arith.cmpi sgt, %0, %5 : vector<8x1xi32>
    %7 = vector.shape_cast %6 : vector<8x1xi1> to vector<8x1xi1>
    %8 = vector.broadcast %7 : vector<8x1xi1> to vector<8x128xi1>
    %c2_i32 = arith.constant 2 : i32
    %9 = vector.broadcast %c2_i32 : i32 to vector<8x1xi32>
    %10 = arith.cmpi sgt, %0, %9 : vector<8x1xi32>
    %11 = vector.shape_cast %10 : vector<8x1xi1> to vector<8x1xi1>
    %12 = vector.broadcast %11 : vector<8x1xi1> to vector<8x128xi1>
    %c3_i32 = arith.constant 3 : i32
    %13 = vector.broadcast %c3_i32 : i32 to vector<8x1xi32>
    %14 = arith.cmpi sgt, %0, %13 : vector<8x1xi32>
    %15 = vector.shape_cast %14 : vector<8x1xi1> to vector<8x1xi1>
    %16 = vector.broadcast %15 : vector<8x1xi1> to vector<8x128xi1>
    %c4_i32 = arith.constant 4 : i32
    %17 = vector.broadcast %c4_i32 : i32 to vector<8x1xi32>
    %18 = arith.cmpi sgt, %0, %17 : vector<8x1xi32>
    %19 = vector.shape_cast %18 : vector<8x1xi1> to vector<8x1xi1>
    %20 = vector.broadcast %19 : vector<8x1xi1> to vector<8x128xi1>
    %c5_i32 = arith.constant 5 : i32
    %21 = vector.broadcast %c5_i32 : i32 to vector<8x1xi32>
    %22 = arith.cmpi sgt, %0, %21 : vector<8x1xi32>
    %23 = vector.shape_cast %22 : vector<8x1xi1> to vector<8x1xi1>
    %24 = vector.broadcast %23 : vector<8x1xi1> to vector<8x128xi1>
    %c6_i32 = arith.constant 6 : i32
    %25 = vector.broadcast %c6_i32 : i32 to vector<8x1xi32>
    %26 = arith.cmpi sgt, %0, %25 : vector<8x1xi32>
    %27 = vector.shape_cast %26 : vector<8x1xi1> to vector<8x1xi1>
    %28 = vector.broadcast %27 : vector<8x1xi1> to vector<8x128xi1>
    %c7_i32 = arith.constant 7 : i32
    %29 = vector.broadcast %c7_i32 : i32 to vector<8x1xi32>
    %30 = arith.cmpi sgt, %0, %29 : vector<8x1xi32>
    %31 = vector.shape_cast %30 : vector<8x1xi1> to vector<8x1xi1>
    %32 = vector.broadcast %31 : vector<8x1xi1> to vector<8x128xi1>
    %c0_1 = arith.constant 0 : index
    %c0_2 = arith.constant 0 : index
    %33 = vector.load %arg1[%c0_1, %c0_2] : memref<64x32xbf16, #tpu.memory_space<vmem>>, vector<64x32xbf16>
    %c0_3 = arith.constant 0 : index
    %c0_4 = arith.constant 0 : index
    %34 = vector.load %arg2[%c0_3, %c0_4] : memref<32x384xbf16, #tpu.memory_space<vmem>>, vector<32x384xbf16>
    %cst = arith.constant dense<0.000000e+00> : vector<64x384xf32>
    %35 = tpu.matmul %33, %34, %cst {dimension_numbers = #tpu.dot_dimension_numbers<[1], [0], [0], [1], [0, 0, 1, 1], [], []>} : vector<64x32xbf16>, vector<32x384xbf16>, vector<64x384xf32> -> vector<64x384xf32>
    %c0_5 = arith.constant 0 : index
    %c0_6 = arith.constant 0 : index
    %36 = vector.load %arg4[%c0_5, %c0_6] : memref<1x384xf32, #tpu.memory_space<vmem>>, vector<1x384xf32>
    %37 = vector.broadcast %36 : vector<1x384xf32> to vector<64x384xf32>
    %38 = arith.addf %35, %37 : vector<64x384xf32>
    %c0_7 = arith.constant 0 : index
    %c0_8 = arith.constant 0 : index
    %39 = vector.load %arg20[%c0_7, %c0_8] : memref<64x384xf32, #tpu.memory_space<vmem>>, vector<64x384xf32>
    tpu.vector_store %arg20[%c0_7, %c0_8], %38 {strides = array<i32>} : memref<64x384xf32, #tpu.memory_space<vmem>>, vector<64x384xf32>,
    %c0_9 = arith.constant 0 : index
    %c0_10 = arith.constant 0 : index
    %40 = vector.load %arg6[%c0_9, %c0_10] : memref<32x384xbf16, #tpu.memory_space<vmem>>, vector<32x384xbf16>
    %cst_11 = arith.constant dense<0.000000e+00> : vector<64x384xf32>
    %41 = tpu.matmul %33, %40, %cst_11 {dimension_numbers = #tpu.dot_dimension_numbers<[1], [0], [0], [1], [0, 0, 1, 1], [], []>} : vector<64x32xbf16>, vector<32x384xbf16>, vector<64x384xf32> -> vector<64x384xf32>
    %c0_12 = arith.constant 0 : index
    %c0_13 = arith.constant 0 : index
    %42 = vector.load %arg8[%c0_12, %c0_13] : memref<1x384xf32, #tpu.memory_space<vmem>>, vector<1x384xf32>
    %43 = vector.broadcast %42 : vector<1x384xf32> to vector<64x384xf32>
    %44 = arith.addf %41, %43 : vector<64x384xf32>
    %c0_14 = arith.constant 0 : index
    %c0_15 = arith.constant 0 : index
    %45 = vector.load %arg21[%c0_14, %c0_15] : memref<64x384xf32, #tpu.memory_space<vmem>>, vector<64x384xf32>
    tpu.vector_store %arg21[%c0_14, %c0_15], %44 {strides = array<i32>} : memref<64x384xf32, #tpu.memory_space<vmem>>, vector<64x384xf32>,
    %c0_16 = arith.constant 0 : index
    %c0_17 = arith.constant 0 : index
    %46 = vector.load %arg5[%c0_16, %c0_17] : memref<1x384xf32, #tpu.memory_space<vmem>>, vector<1x384xf32>
    %c0_18 = arith.constant 0 : index
    %c0_19 = arith.constant 0 : index
    %47 = vector.load %arg9[%c0_18, %c0_19] : memref<1x384xf32, #tpu.memory_space<vmem>>, vector<1x384xf32>
    %cst_20 = arith.constant 0.000000e+00 : f32
    %48 = vector.broadcast %cst_20 : f32 to vector<8x128xf32>
    %cst_21 = arith.constant 0.000000e+00 : f32
    %49 = vector.broadcast %cst_21 : f32 to vector<8x128xf32>
    %50 = arith.truncf %48 : vector<8x128xf32> to vector<8x128xbf16>
    %c0_22 = arith.constant 0 : index
    %c0_23 = arith.constant 0 : index
    %51 = vector.load %arg3[%c0_22, %c0_23] : memref<128x384xbf16, #tpu.memory_space<vmem>>, vector<128x384xbf16>
    %cst_24 = arith.constant dense<0.000000e+00> : vector<8x384xf32>
    %52 = tpu.matmul %50, %51, %cst_24 {dimension_numbers = #tpu.dot_dimension_numbers<[1], [0], [0], [1], [0, 0, 1, 1], [], []>} : vector<8x128xbf16>, vector<128x384xbf16>, vector<8x384xf32> -> vector<8x384xf32>
    %53 = vector.broadcast %46 : vector<1x384xf32> to vector<8x384xf32>
    %54 = arith.addf %52, %53 : vector<8x384xf32>
    %c0_25 = arith.constant 0 : index
    %c0_26 = arith.constant 0 : index
    %55 = vector.load %arg20[%c0_25, %c0_26] : memref<64x384xf32, #tpu.memory_space<vmem>>, vector<8x384xf32>
    %56 = vector.extract_strided_slice %55 {offsets = [0, 0], sizes = [8, 128], strides = [1, 1]} : vector<8x384xf32> to vector<8x128xf32>
    %57 = vector.extract_strided_slice %54 {offsets = [0, 0], sizes = [8, 128], strides = [1, 1]} : vector<8x384xf32> to vector<8x128xf32>
    %58 = arith.addf %56, %57 : vector<8x128xf32>
    %59 = arith.negf %58 : vector<8x128xf32>
    %60 = math.exp %59 : vector<8x128xf32>
    %cst_27 = arith.constant 1.000000e+00 : f32
    %61 = vector.broadcast %cst_27 : f32 to vector<8x128xf32>
    %62 = arith.addf %61, %60 : vector<8x128xf32>
    %63 = arith.divf %61, %62 : vector<8x128xf32>
    %64 = vector.extract_strided_slice %55 {offsets = [0, 128], sizes = [8, 128], strides = [1, 1]} : vector<8x384xf32> to vector<8x128xf32>
    %65 = vector.extract_strided_slice %54 {offsets = [0, 128], sizes = [8, 128], strides = [1, 1]} : vector<8x384xf32> to vector<8x128xf32>
    %66 = arith.addf %64, %65 : vector<8x128xf32>
    %67 = arith.negf %66 : vector<8x128xf32>
    %68 = math.exp %67 : vector<8x128xf32>
    %cst_28 = arith.constant 1.000000e+00 : f32
    %69 = vector.broadcast %cst_28 : f32 to vector<8x128xf32>
    %70 = arith.addf %69, %68 : vector<8x128xf32>
    %71 = arith.divf %69, %70 : vector<8x128xf32>
    %72 = vector.extract_strided_slice %55 {offsets = [0, 256], sizes = [8, 128], strides = [1, 1]} : vector<8x384xf32> to vector<8x128xf32>
    %73 = vector.extract_strided_slice %54 {offsets = [0, 256], sizes = [8, 128], strides = [1, 1]} : vector<8x384xf32> to vector<8x128xf32>
    %74 = arith.mulf %63, %73 : vector<8x128xf32>
    %75 = arith.addf %72, %74 : vector<8x128xf32>
    %76 = math.tanh %75 : vector<8x128xf32>
    %cst_29 = arith.constant 1.000000e+00 : f32
    %77 = vector.broadcast %cst_29 : f32 to vector<8x128xf32>
    %78 = arith.subf %77, %71 : vector<8x128xf32>
    %79 = arith.mulf %78, %76 : vector<8x128xf32>
    %80 = arith.mulf %71, %48 : vector<8x128xf32>
    %81 = arith.addf %79, %80 : vector<8x128xf32>
    %82 = arith.select %4, %81, %48 : vector<8x128xi1>, vector<8x128xf32>
    %cst_30 = arith.constant 0.000000e+00 : f32
    %83 = vector.broadcast %cst_30 : f32 to vector<8x128xf32>
    %84 = arith.select %4, %82, %83 : vector<8x128xi1>, vector<8x128xf32>
    %85 = arith.truncf %49 : vector<8x128xf32> to vector<8x128xbf16>
    %c0_31 = arith.constant 0 : index
    %c0_32 = arith.constant 0 : index
    %86 = vector.load %arg7[%c0_31, %c0_32] : memref<128x384xbf16, #tpu.memory_space<vmem>>, vector<128x384xbf16>
    %cst_33 = arith.constant dense<0.000000e+00> : vector<8x384xf32>
    %87 = tpu.matmul %85, %86, %cst_33 {dimension_numbers = #tpu.dot_dimension_numbers<[1], [0], [0], [1], [0, 0, 1, 1], [], []>} : vector<8x128xbf16>, vector<128x384xbf16>, vector<8x384xf32> -> vector<8x384xf32>
    %88 = vector.broadcast %47 : vector<1x384xf32> to vector<8x384xf32>
    %89 = arith.addf %87, %88 : vector<8x384xf32>
    %c56 = arith.constant 56 : index
    %c0_34 = arith.constant 0 : index
    %90 = vector.load %arg21[%c56, %c0_34] : memref<64x384xf32, #tpu.memory_space<vmem>>, vector<8x384xf32>
    %91 = vector.extract_strided_slice %90 {offsets = [0, 0], sizes = [8, 128], strides = [1, 1]} : vector<8x384xf32> to vector<8x128xf32>
    %92 = vector.extract_strided_slice %89 {offsets = [0, 0], sizes = [8, 128], strides = [1, 1]} : vector<8x384xf32> to vector<8x128xf32>
    %93 = arith.addf %91, %92 : vector<8x128xf32>
    %94 = arith.negf %93 : vector<8x128xf32>
    %95 = math.exp %94 : vector<8x128xf32>
    %cst_35 = arith.constant 1.000000e+00 : f32
    %96 = vector.broadcast %cst_35 : f32 to vector<8x128xf32>
    %97 = arith.addf %96, %95 : vector<8x128xf32>
    %98 = arith.divf %96, %97 : vector<8x128xf32>
    %99 = vector.extract_strided_slice %90 {offsets = [0, 128], sizes = [8, 128], strides = [1, 1]} : vector<8x384xf32> to vector<8x128xf32>
    %100 = vector.extract_strided_slice %89 {offsets = [0, 128], sizes = [8, 128], strides = [1, 1]} : vector<8x384xf32> to vector<8x128xf32>
    %101 = arith.addf %99, %100 : vector<8x128xf32>
    %102 = arith.negf %101 : vector<8x128xf32>
    %103 = math.exp %102 : vector<8x128xf32>
    %cst_36 = arith.constant 1.000000e+00 : f32
    %104 = vector.broadcast %cst_36 : f32 to vector<8x128xf32>
    %105 = arith.addf %104, %103 : vector<8x128xf32>
    %106 = arith.divf %104, %105 : vector<8x128xf32>
    %107 = vector.extract_strided_slice %90 {offsets = [0, 256], sizes = [8, 128], strides = [1, 1]} : vector<8x384xf32> to vector<8x128xf32>
    %108 = vector.extract_strided_slice %89 {offsets = [0, 256], sizes = [8, 128], strides = [1, 1]} : vector<8x384xf32> to vector<8x128xf32>
    %109 = arith.mulf %98, %108 : vector<8x128xf32>
    %110 = arith.addf %107, %109 : vector<8x128xf32>
    %111 = math.tanh %110 : vector<8x128xf32>
    %cst_37 = arith.constant 1.000000e+00 : f32
    %112 = vector.broadcast %cst_37 : f32 to vector<8x128xf32>
    %113 = arith.subf %112, %106 : vector<8x128xf32>
    %114 = arith.mulf %113, %111 : vector<8x128xf32>
    %115 = arith.mulf %106, %49 : vector<8x128xf32>
    %116 = arith.addf %114, %115 : vector<8x128xf32>
    %117 = arith.select %32, %116, %49 : vector<8x128xi1>, vector<8x128xf32>
    %cst_38 = arith.constant 0.000000e+00 : f32
    %118 = vector.broadcast %cst_38 : f32 to vector<8x128xf32>
    %119 = arith.select %32, %117, %118 : vector<8x128xi1>, vector<8x128xf32>
    %120 = arith.truncf %84 : vector<8x128xf32> to vector<8x128xbf16>
    %c0_39 = arith.constant 0 : index
    %c0_40 = arith.constant 0 : index
    %121 = vector.load %arg22[%c0_39, %c0_40] : memref<64x256xbf16, #tpu.memory_space<vmem>>, vector<8x128xbf16>
    tpu.vector_store %arg22[%c0_39, %c0_40], %120 {strides = array<i32>} : memref<64x256xbf16, #tpu.memory_space<vmem>>, vector<8x128xbf16>,
    %122 = arith.truncf %119 : vector<8x128xf32> to vector<8x128xbf16>
    %c56_41 = arith.constant 56 : index
    %c128 = arith.constant 128 : index
    %123 = vector.load %arg22[%c56_41, %c128] : memref<64x256xbf16, #tpu.memory_space<vmem>>, vector<8x128xbf16>
    tpu.vector_store %arg22[%c56_41, %c128], %122 {strides = array<i32>} : memref<64x256xbf16, #tpu.memory_space<vmem>>, vector<8x128xbf16>,
    %124 = arith.truncf %82 : vector<8x128xf32> to vector<8x128xbf16>
    %c0_42 = arith.constant 0 : index
    %c0_43 = arith.constant 0 : index
    %125 = vector.load %arg3[%c0_42, %c0_43] : memref<128x384xbf16, #tpu.memory_space<vmem>>, vector<128x384xbf16>
    %cst_44 = arith.constant dense<0.000000e+00> : vector<8x384xf32>
    %126 = tpu.matmul %124, %125, %cst_44 {dimension_numbers = #tpu.dot_dimension_numbers<[1], [0], [0], [1], [0, 0, 1, 1], [], []>} : vector<8x128xbf16>, vector<128x384xbf16>, vector<8x384xf32> -> vector<8x384xf32>
    %127 = vector.broadcast %46 : vector<1x384xf32> to vector<8x384xf32>
    %128 = arith.addf %126, %127 : vector<8x384xf32>
    %c8 = arith.constant 8 : index
    %c0_45 = arith.constant 0 : index
    %129 = vector.load %arg20[%c8, %c0_45] : memref<64x384xf32, #tpu.memory_space<vmem>>, vector<8x384xf32>
    %130 = vector.extract_strided_slice %129 {offsets = [0, 0], sizes = [8, 128], strides = [1, 1]} : vector<8x384xf32> to vector<8x128xf32>
    %131 = vector.extract_strided_slice %128 {offsets = [0, 0], sizes = [8, 128], strides = [1, 1]} : vector<8x384xf32> to vector<8x128xf32>
    %132 = arith.addf %130, %131 : vector<8x128xf32>
    %133 = arith.negf %132 : vector<8x128xf32>
    %134 = math.exp %133 : vector<8x128xf32>
    %cst_46 = arith.constant 1.000000e+00 : f32
    %135 = vector.broadcast %cst_46 : f32 to vector<8x128xf32>
    %136 = arith.addf %135, %134 : vector<8x128xf32>
    %137 = arith.divf %135, %136 : vector<8x128xf32>
    %138 = vector.extract_strided_slice %129 {offsets = [0, 128], sizes = [8, 128], strides = [1, 1]} : vector<8x384xf32> to vector<8x128xf32>
    %139 = vector.extract_strided_slice %128 {offsets = [0, 128], sizes = [8, 128], strides = [1, 1]} : vector<8x384xf32> to vector<8x128xf32>
    %140 = arith.addf %138, %139 : vector<8x128xf32>
    %141 = arith.negf %140 : vector<8x128xf32>
    %142 = math.exp %141 : vector<8x128xf32>
    %cst_47 = arith.constant 1.000000e+00 : f32
    %143 = vector.broadcast %cst_47 : f32 to vector<8x128xf32>
    %144 = arith.addf %143, %142 : vector<8x128xf32>
    %145 = arith.divf %143, %144 : vector<8x128xf32>
    %146 = vector.extract_strided_slice %129 {offsets = [0, 256], sizes = [8, 128], strides = [1, 1]} : vector<8x384xf32> to vector<8x128xf32>
    %147 = vector.extract_strided_slice %128 {offsets = [0, 256], sizes = [8, 128], strides = [1, 1]} : vector<8x384xf32> to vector<8x128xf32>
    %148 = arith.mulf %137, %147 : vector<8x128xf32>
    %149 = arith.addf %146, %148 : vector<8x128xf32>
    %150 = math.tanh %149 : vector<8x128xf32>
    %cst_48 = arith.constant 1.000000e+00 : f32
    %151 = vector.broadcast %cst_48 : f32 to vector<8x128xf32>
    %152 = arith.subf %151, %145 : vector<8x128xf32>
    %153 = arith.mulf %152, %150 : vector<8x128xf32>
    %154 = arith.mulf %145, %82 : vector<8x128xf32>
    %155 = arith.addf %153, %154 : vector<8x128xf32>
    %156 = arith.select %8, %155, %82 : vector<8x128xi1>, vector<8x128xf32>
    %cst_49 = arith.constant 0.000000e+00 : f32
    %157 = vector.broadcast %cst_49 : f32 to vector<8x128xf32>
    %158 = arith.select %8, %156, %157 : vector<8x128xi1>, vector<8x128xf32>
    %159 = arith.truncf %117 : vector<8x128xf32> to vector<8x128xbf16>
    %c0_50 = arith.constant 0 : index
    %c0_51 = arith.constant 0 : index
    %160 = vector.load %arg7[%c0_50, %c0_51] : memref<128x384xbf16, #tpu.memory_space<vmem>>, vector<128x384xbf16>
    %cst_52 = arith.constant dense<0.000000e+00> : vector<8x384xf32>
    %161 = tpu.matmul %159, %160, %cst_52 {dimension_numbers = #tpu.dot_dimension_numbers<[1], [0], [0], [1], [0, 0, 1, 1], [], []>} : vector<8x128xbf16>, vector<128x384xbf16>, vector<8x384xf32> -> vector<8x384xf32>
    %162 = vector.broadcast %47 : vector<1x384xf32> to vector<8x384xf32>
    %163 = arith.addf %161, %162 : vector<8x384xf32>
    %c48 = arith.constant 48 : index
    %c0_53 = arith.constant 0 : index
    %164 = vector.load %arg21[%c48, %c0_53] : memref<64x384xf32, #tpu.memory_space<vmem>>, vector<8x384xf32>
    %165 = vector.extract_strided_slice %164 {offsets = [0, 0], sizes = [8, 128], strides = [1, 1]} : vector<8x384xf32> to vector<8x128xf32>
    %166 = vector.extract_strided_slice %163 {offsets = [0, 0], sizes = [8, 128], strides = [1, 1]} : vector<8x384xf32> to vector<8x128xf32>
    %167 = arith.addf %165, %166 : vector<8x128xf32>
    %168 = arith.negf %167 : vector<8x128xf32>
    %169 = math.exp %168 : vector<8x128xf32>
    %cst_54 = arith.constant 1.000000e+00 : f32
    %170 = vector.broadcast %cst_54 : f32 to vector<8x128xf32>
    %171 = arith.addf %170, %169 : vector<8x128xf32>
    %172 = arith.divf %170, %171 : vector<8x128xf32>
    %173 = vector.extract_strided_slice %164 {offsets = [0, 128], sizes = [8, 128], strides = [1, 1]} : vector<8x384xf32> to vector<8x128xf32>
    %174 = vector.extract_strided_slice %163 {offsets = [0, 128], sizes = [8, 128], strides = [1, 1]} : vector<8x384xf32> to vector<8x128xf32>
    %175 = arith.addf %173, %174 : vector<8x128xf32>
    %176 = arith.negf %175 : vector<8x128xf32>
    %177 = math.exp %176 : vector<8x128xf32>
    %cst_55 = arith.constant 1.000000e+00 : f32
    %178 = vector.broadcast %cst_55 : f32 to vector<8x128xf32>
    %179 = arith.addf %178, %177 : vector<8x128xf32>
    %180 = arith.divf %178, %179 : vector<8x128xf32>
    %181 = vector.extract_strided_slice %164 {offsets = [0, 256], sizes = [8, 128], strides = [1, 1]} : vector<8x384xf32> to vector<8x128xf32>
    %182 = vector.extract_strided_slice %163 {offsets = [0, 256], sizes = [8, 128], strides = [1, 1]} : vector<8x384xf32> to vector<8x128xf32>
    %183 = arith.mulf %172, %182 : vector<8x128xf32>
    %184 = arith.addf %181, %183 : vector<8x128xf32>
    %185 = math.tanh %184 : vector<8x128xf32>
    %cst_56 = arith.constant 1.000000e+00 : f32
    %186 = vector.broadcast %cst_56 : f32 to vector<8x128xf32>
    %187 = arith.subf %186, %180 : vector<8x128xf32>
    %188 = arith.mulf %187, %185 : vector<8x128xf32>
    %189 = arith.mulf %180, %117 : vector<8x128xf32>
    %190 = arith.addf %188, %189 : vector<8x128xf32>
    %191 = arith.select %28, %190, %117 : vector<8x128xi1>, vector<8x128xf32>
    %cst_57 = arith.constant 0.000000e+00 : f32
    %192 = vector.broadcast %cst_57 : f32 to vector<8x128xf32>
    %193 = arith.select %28, %191, %192 : vector<8x128xi1>, vector<8x128xf32>
    %194 = arith.truncf %158 : vector<8x128xf32> to vector<8x128xbf16>
    %c8_58 = arith.constant 8 : index
    %c0_59 = arith.constant 0 : index
    %195 = vector.load %arg22[%c8_58, %c0_59] : memref<64x256xbf16, #tpu.memory_space<vmem>>, vector<8x128xbf16>
    tpu.vector_store %arg22[%c8_58, %c0_59], %194 {strides = array<i32>} : memref<64x256xbf16, #tpu.memory_space<vmem>>, vector<8x128xbf16>,
    %196 = arith.truncf %193 : vector<8x128xf32> to vector<8x128xbf16>
    %c48_60 = arith.constant 48 : index
    %c128_61 = arith.constant 128 : index
    %197 = vector.load %arg22[%c48_60, %c128_61] : memref<64x256xbf16, #tpu.memory_space<vmem>>, vector<8x128xbf16>
    tpu.vector_store %arg22[%c48_60, %c128_61], %196 {strides = array<i32>} : memref<64x256xbf16, #tpu.memory_space<vmem>>, vector<8x128xbf16>,
    %198 = arith.truncf %156 : vector<8x128xf32> to vector<8x128xbf16>
    %c0_62 = arith.constant 0 : index
    %c0_63 = arith.constant 0 : index
    %199 = vector.load %arg3[%c0_62, %c0_63] : memref<128x384xbf16, #tpu.memory_space<vmem>>, vector<128x384xbf16>
    %cst_64 = arith.constant dense<0.000000e+00> : vector<8x384xf32>
    %200 = tpu.matmul %198, %199, %cst_64 {dimension_numbers = #tpu.dot_dimension_numbers<[1], [0], [0], [1], [0, 0, 1, 1], [], []>} : vector<8x128xbf16>, vector<128x384xbf16>, vector<8x384xf32> -> vector<8x384xf32>
    %201 = vector.broadcast %46 : vector<1x384xf32> to vector<8x384xf32>
    %202 = arith.addf %200, %201 : vector<8x384xf32>
    %c16 = arith.constant 16 : index
    %c0_65 = arith.constant 0 : index
    %203 = vector.load %arg20[%c16, %c0_65] : memref<64x384xf32, #tpu.memory_space<vmem>>, vector<8x384xf32>
    %204 = vector.extract_strided_slice %203 {offsets = [0, 0], sizes = [8, 128], strides = [1, 1]} : vector<8x384xf32> to vector<8x128xf32>
    %205 = vector.extract_strided_slice %202 {offsets = [0, 0], sizes = [8, 128], strides = [1, 1]} : vector<8x384xf32> to vector<8x128xf32>
    %206 = arith.addf %204, %205 : vector<8x128xf32>
    %207 = arith.negf %206 : vector<8x128xf32>
    %208 = math.exp %207 : vector<8x128xf32>
    %cst_66 = arith.constant 1.000000e+00 : f32
    %209 = vector.broadcast %cst_66 : f32 to vector<8x128xf32>
    %210 = arith.addf %209, %208 : vector<8x128xf32>
    %211 = arith.divf %209, %210 : vector<8x128xf32>
    %212 = vector.extract_strided_slice %203 {offsets = [0, 128], sizes = [8, 128], strides = [1, 1]} : vector<8x384xf32> to vector<8x128xf32>
    %213 = vector.extract_strided_slice %202 {offsets = [0, 128], sizes = [8, 128], strides = [1, 1]} : vector<8x384xf32> to vector<8x128xf32>
    %214 = arith.addf %212, %213 : vector<8x128xf32>
    %215 = arith.negf %214 : vector<8x128xf32>
    %216 = math.exp %215 : vector<8x128xf32>
    %cst_67 = arith.constant 1.000000e+00 : f32
    %217 = vector.broadcast %cst_67 : f32 to vector<8x128xf32>
    %218 = arith.addf %217, %216 : vector<8x128xf32>
    %219 = arith.divf %217, %218 : vector<8x128xf32>
    %220 = vector.extract_strided_slice %203 {offsets = [0, 256], sizes = [8, 128], strides = [1, 1]} : vector<8x384xf32> to vector<8x128xf32>
    %221 = vector.extract_strided_slice %202 {offsets = [0, 256], sizes = [8, 128], strides = [1, 1]} : vector<8x384xf32> to vector<8x128xf32>
    %222 = arith.mulf %211, %221 : vector<8x128xf32>
    %223 = arith.addf %220, %222 : vector<8x128xf32>
    %224 = math.tanh %223 : vector<8x128xf32>
    %cst_68 = arith.constant 1.000000e+00 : f32
    %225 = vector.broadcast %cst_68 : f32 to vector<8x128xf32>
    %226 = arith.subf %225, %219 : vector<8x128xf32>
    %227 = arith.mulf %226, %224 : vector<8x128xf32>
    %228 = arith.mulf %219, %156 : vector<8x128xf32>
    %229 = arith.addf %227, %228 : vector<8x128xf32>
    %230 = arith.select %12, %229, %156 : vector<8x128xi1>, vector<8x128xf32>
    %cst_69 = arith.constant 0.000000e+00 : f32
    %231 = vector.broadcast %cst_69 : f32 to vector<8x128xf32>
    %232 = arith.select %12, %230, %231 : vector<8x128xi1>, vector<8x128xf32>
    %233 = arith.truncf %191 : vector<8x128xf32> to vector<8x128xbf16>
    %c0_70 = arith.constant 0 : index
    %c0_71 = arith.constant 0 : index
    %234 = vector.load %arg7[%c0_70, %c0_71] : memref<128x384xbf16, #tpu.memory_space<vmem>>, vector<128x384xbf16>
    %cst_72 = arith.constant dense<0.000000e+00> : vector<8x384xf32>
    %235 = tpu.matmul %233, %234, %cst_72 {dimension_numbers = #tpu.dot_dimension_numbers<[1], [0], [0], [1], [0, 0, 1, 1], [], []>} : vector<8x128xbf16>, vector<128x384xbf16>, vector<8x384xf32> -> vector<8x384xf32>
    %236 = vector.broadcast %47 : vector<1x384xf32> to vector<8x384xf32>
    %237 = arith.addf %235, %236 : vector<8x384xf32>
    %c40 = arith.constant 40 : index
    %c0_73 = arith.constant 0 : index
    %238 = vector.load %arg21[%c40, %c0_73] : memref<64x384xf32, #tpu.memory_space<vmem>>, vector<8x384xf32>
    %239 = vector.extract_strided_slice %238 {offsets = [0, 0], sizes = [8, 128], strides = [1, 1]} : vector<8x384xf32> to vector<8x128xf32>
    %240 = vector.extract_strided_slice %237 {offsets = [0, 0], sizes = [8, 128], strides = [1, 1]} : vector<8x384xf32> to vector<8x128xf32>
    %241 = arith.addf %239, %240 : vector<8x128xf32>
    %242 = arith.negf %241 : vector<8x128xf32>
    %243 = math.exp %242 : vector<8x128xf32>
    %cst_74 = arith.constant 1.000000e+00 : f32
    %244 = vector.broadcast %cst_74 : f32 to vector<8x128xf32>
    %245 = arith.addf %244, %243 : vector<8x128xf32>
    %246 = arith.divf %244, %245 : vector<8x128xf32>
    %247 = vector.extract_strided_slice %238 {offsets = [0, 128], sizes = [8, 128], strides = [1, 1]} : vector<8x384xf32> to vector<8x128xf32>
    %248 = vector.extract_strided_slice %237 {offsets = [0, 128], sizes = [8, 128], strides = [1, 1]} : vector<8x384xf32> to vector<8x128xf32>
    %249 = arith.addf %247, %248 : vector<8x128xf32>
    %250 = arith.negf %249 : vector<8x128xf32>
    %251 = math.exp %250 : vector<8x128xf32>
    %cst_75 = arith.constant 1.000000e+00 : f32
    %252 = vector.broadcast %cst_75 : f32 to vector<8x128xf32>
    %253 = arith.addf %252, %251 : vector<8x128xf32>
    %254 = arith.divf %252, %253 : vector<8x128xf32>
    %255 = vector.extract_strided_slice %238 {offsets = [0, 256], sizes = [8, 128], strides = [1, 1]} : vector<8x384xf32> to vector<8x128xf32>
    %256 = vector.extract_strided_slice %237 {offsets = [0, 256], sizes = [8, 128], strides = [1, 1]} : vector<8x384xf32> to vector<8x128xf32>
    %257 = arith.mulf %246, %256 : vector<8x128xf32>
    %258 = arith.addf %255, %257 : vector<8x128xf32>
    %259 = math.tanh %258 : vector<8x128xf32>
    %cst_76 = arith.constant 1.000000e+00 : f32
    %260 = vector.broadcast %cst_76 : f32 to vector<8x128xf32>
    %261 = arith.subf %260, %254 : vector<8x128xf32>
    %262 = arith.mulf %261, %259 : vector<8x128xf32>
    %263 = arith.mulf %254, %191 : vector<8x128xf32>
    %264 = arith.addf %262, %263 : vector<8x128xf32>
    %265 = arith.select %24, %264, %191 : vector<8x128xi1>, vector<8x128xf32>
    %cst_77 = arith.constant 0.000000e+00 : f32
    %266 = vector.broadcast %cst_77 : f32 to vector<8x128xf32>
    %267 = arith.select %24, %265, %266 : vector<8x128xi1>, vector<8x128xf32>
    %268 = arith.truncf %232 : vector<8x128xf32> to vector<8x128xbf16>
    %c16_78 = arith.constant 16 : index
    %c0_79 = arith.constant 0 : index
    %269 = vector.load %arg22[%c16_78, %c0_79] : memref<64x256xbf16, #tpu.memory_space<vmem>>, vector<8x128xbf16>
    tpu.vector_store %arg22[%c16_78, %c0_79], %268 {strides = array<i32>} : memref<64x256xbf16, #tpu.memory_space<vmem>>, vector<8x128xbf16>,
    %270 = arith.truncf %267 : vector<8x128xf32> to vector<8x128xbf16>
    %c40_80 = arith.constant 40 : index
    %c128_81 = arith.constant 128 : index
    %271 = vector.load %arg22[%c40_80, %c128_81] : memref<64x256xbf16, #tpu.memory_space<vmem>>, vector<8x128xbf16>
    tpu.vector_store %arg22[%c40_80, %c128_81], %270 {strides = array<i32>} : memref<64x256xbf16, #tpu.memory_space<vmem>>, vector<8x128xbf16>,
    %272 = arith.truncf %230 : vector<8x128xf32> to vector<8x128xbf16>
    %c0_82 = arith.constant 0 : index
    %c0_83 = arith.constant 0 : index
    %273 = vector.load %arg3[%c0_82, %c0_83] : memref<128x384xbf16, #tpu.memory_space<vmem>>, vector<128x384xbf16>
    %cst_84 = arith.constant dense<0.000000e+00> : vector<8x384xf32>
    %274 = tpu.matmul %272, %273, %cst_84 {dimension_numbers = #tpu.dot_dimension_numbers<[1], [0], [0], [1], [0, 0, 1, 1], [], []>} : vector<8x128xbf16>, vector<128x384xbf16>, vector<8x384xf32> -> vector<8x384xf32>
    %275 = vector.broadcast %46 : vector<1x384xf32> to vector<8x384xf32>
    %276 = arith.addf %274, %275 : vector<8x384xf32>
    %c24 = arith.constant 24 : index
    %c0_85 = arith.constant 0 : index
    %277 = vector.load %arg20[%c24, %c0_85] : memref<64x384xf32, #tpu.memory_space<vmem>>, vector<8x384xf32>
    %278 = vector.extract_strided_slice %277 {offsets = [0, 0], sizes = [8, 128], strides = [1, 1]} : vector<8x384xf32> to vector<8x128xf32>
    %279 = vector.extract_strided_slice %276 {offsets = [0, 0], sizes = [8, 128], strides = [1, 1]} : vector<8x384xf32> to vector<8x128xf32>
    %280 = arith.addf %278, %279 : vector<8x128xf32>
    %281 = arith.negf %280 : vector<8x128xf32>
    %282 = math.exp %281 : vector<8x128xf32>
    %cst_86 = arith.constant 1.000000e+00 : f32
    %283 = vector.broadcast %cst_86 : f32 to vector<8x128xf32>
    %284 = arith.addf %283, %282 : vector<8x128xf32>
    %285 = arith.divf %283, %284 : vector<8x128xf32>
    %286 = vector.extract_strided_slice %277 {offsets = [0, 128], sizes = [8, 128], strides = [1, 1]} : vector<8x384xf32> to vector<8x128xf32>
    %287 = vector.extract_strided_slice %276 {offsets = [0, 128], sizes = [8, 128], strides = [1, 1]} : vector<8x384xf32> to vector<8x128xf32>
    %288 = arith.addf %286, %287 : vector<8x128xf32>
    %289 = arith.negf %288 : vector<8x128xf32>
    %290 = math.exp %289 : vector<8x128xf32>
    %cst_87 = arith.constant 1.000000e+00 : f32
    %291 = vector.broadcast %cst_87 : f32 to vector<8x128xf32>
    %292 = arith.addf %291, %290 : vector<8x128xf32>
    %293 = arith.divf %291, %292 : vector<8x128xf32>
    %294 = vector.extract_strided_slice %277 {offsets = [0, 256], sizes = [8, 128], strides = [1, 1]} : vector<8x384xf32> to vector<8x128xf32>
    %295 = vector.extract_strided_slice %276 {offsets = [0, 256], sizes = [8, 128], strides = [1, 1]} : vector<8x384xf32> to vector<8x128xf32>
    %296 = arith.mulf %285, %295 : vector<8x128xf32>
    %297 = arith.addf %294, %296 : vector<8x128xf32>
    %298 = math.tanh %297 : vector<8x128xf32>
    %cst_88 = arith.constant 1.000000e+00 : f32
    %299 = vector.broadcast %cst_88 : f32 to vector<8x128xf32>
    %300 = arith.subf %299, %293 : vector<8x128xf32>
    %301 = arith.mulf %300, %298 : vector<8x128xf32>
    %302 = arith.mulf %293, %230 : vector<8x128xf32>
    %303 = arith.addf %301, %302 : vector<8x128xf32>
    %304 = arith.select %16, %303, %230 : vector<8x128xi1>, vector<8x128xf32>
    %cst_89 = arith.constant 0.000000e+00 : f32
    %305 = vector.broadcast %cst_89 : f32 to vector<8x128xf32>
    %306 = arith.select %16, %304, %305 : vector<8x128xi1>, vector<8x128xf32>
    %307 = arith.truncf %265 : vector<8x128xf32> to vector<8x128xbf16>
    %c0_90 = arith.constant 0 : index
    %c0_91 = arith.constant 0 : index
    %308 = vector.load %arg7[%c0_90, %c0_91] : memref<128x384xbf16, #tpu.memory_space<vmem>>, vector<128x384xbf16>
    %cst_92 = arith.constant dense<0.000000e+00> : vector<8x384xf32>
    %309 = tpu.matmul %307, %308, %cst_92 {dimension_numbers = #tpu.dot_dimension_numbers<[1], [0], [0], [1], [0, 0, 1, 1], [], []>} : vector<8x128xbf16>, vector<128x384xbf16>, vector<8x384xf32> -> vector<8x384xf32>
    %310 = vector.broadcast %47 : vector<1x384xf32> to vector<8x384xf32>
    %311 = arith.addf %309, %310 : vector<8x384xf32>
    %c32 = arith.constant 32 : index
    %c0_93 = arith.constant 0 : index
    %312 = vector.load %arg21[%c32, %c0_93] : memref<64x384xf32, #tpu.memory_space<vmem>>, vector<8x384xf32>
    %313 = vector.extract_strided_slice %312 {offsets = [0, 0], sizes = [8, 128], strides = [1, 1]} : vector<8x384xf32> to vector<8x128xf32>
    %314 = vector.extract_strided_slice %311 {offsets = [0, 0], sizes = [8, 128], strides = [1, 1]} : vector<8x384xf32> to vector<8x128xf32>
    %315 = arith.addf %313, %314 : vector<8x128xf32>
    %316 = arith.negf %315 : vector<8x128xf32>
    %317 = math.exp %316 : vector<8x128xf32>
    %cst_94 = arith.constant 1.000000e+00 : f32
    %318 = vector.broadcast %cst_94 : f32 to vector<8x128xf32>
    %319 = arith.addf %318, %317 : vector<8x128xf32>
    %320 = arith.divf %318, %319 : vector<8x128xf32>
    %321 = vector.extract_strided_slice %312 {offsets = [0, 128], sizes = [8, 128], strides = [1, 1]} : vector<8x384xf32> to vector<8x128xf32>
    %322 = vector.extract_strided_slice %311 {offsets = [0, 128], sizes = [8, 128], strides = [1, 1]} : vector<8x384xf32> to vector<8x128xf32>
    %323 = arith.addf %321, %322 : vector<8x128xf32>
    %324 = arith.negf %323 : vector<8x128xf32>
    %325 = math.exp %324 : vector<8x128xf32>
    %cst_95 = arith.constant 1.000000e+00 : f32
    %326 = vector.broadcast %cst_95 : f32 to vector<8x128xf32>
    %327 = arith.addf %326, %325 : vector<8x128xf32>
    %328 = arith.divf %326, %327 : vector<8x128xf32>
    %329 = vector.extract_strided_slice %312 {offsets = [0, 256], sizes = [8, 128], strides = [1, 1]} : vector<8x384xf32> to vector<8x128xf32>
    %330 = vector.extract_strided_slice %311 {offsets = [0, 256], sizes = [8, 128], strides = [1, 1]} : vector<8x384xf32> to vector<8x128xf32>
    %331 = arith.mulf %320, %330 : vector<8x128xf32>
    %332 = arith.addf %329, %331 : vector<8x128xf32>
    %333 = math.tanh %332 : vector<8x128xf32>
    %cst_96 = arith.constant 1.000000e+00 : f32
    %334 = vector.broadcast %cst_96 : f32 to vector<8x128xf32>
    %335 = arith.subf %334, %328 : vector<8x128xf32>
    %336 = arith.mulf %335, %333 : vector<8x128xf32>
    %337 = arith.mulf %328, %265 : vector<8x128xf32>
    %338 = arith.addf %336, %337 : vector<8x128xf32>
    %339 = arith.select %20, %338, %265 : vector<8x128xi1>, vector<8x128xf32>
    %cst_97 = arith.constant 0.000000e+00 : f32
    %340 = vector.broadcast %cst_97 : f32 to vector<8x128xf32>
    %341 = arith.select %20, %339, %340 : vector<8x128xi1>, vector<8x128xf32>
    %342 = arith.truncf %306 : vector<8x128xf32> to vector<8x128xbf16>
    %c24_98 = arith.constant 24 : index
    %c0_99 = arith.constant 0 : index
    %343 = vector.load %arg22[%c24_98, %c0_99] : memref<64x256xbf16, #tpu.memory_space<vmem>>, vector<8x128xbf16>
    tpu.vector_store %arg22[%c24_98, %c0_99], %342 {strides = array<i32>} : memref<64x256xbf16, #tpu.memory_space<vmem>>, vector<8x128xbf16>,
    %344 = arith.truncf %341 : vector<8x128xf32> to vector<8x128xbf16>
    %c32_100 = arith.constant 32 : index
    %c128_101 = arith.constant 128 : index
    %345 = vector.load %arg22[%c32_100, %c128_101] : memref<64x256xbf16, #tpu.memory_space<vmem>>, vector<8x128xbf16>
    tpu.vector_store %arg22[%c32_100, %c128_101], %344 {strides = array<i32>} : memref<64x256xbf16, #tpu.memory_space<vmem>>, vector<8x128xbf16>,
    %346 = arith.truncf %304 : vector<8x128xf32> to vector<8x128xbf16>
    %c0_102 = arith.constant 0 : index
    %c0_103 = arith.constant 0 : index
    %347 = vector.load %arg3[%c0_102, %c0_103] : memref<128x384xbf16, #tpu.memory_space<vmem>>, vector<128x384xbf16>
    %cst_104 = arith.constant dense<0.000000e+00> : vector<8x384xf32>
    %348 = tpu.matmul %346, %347, %cst_104 {dimension_numbers = #tpu.dot_dimension_numbers<[1], [0], [0], [1], [0, 0, 1, 1], [], []>} : vector<8x128xbf16>, vector<128x384xbf16>, vector<8x384xf32> -> vector<8x384xf32>
    %349 = vector.broadcast %46 : vector<1x384xf32> to vector<8x384xf32>
    %350 = arith.addf %348, %349 : vector<8x384xf32>
    %c32_105 = arith.constant 32 : index
    %c0_106 = arith.constant 0 : index
    %351 = vector.load %arg20[%c32_105, %c0_106] : memref<64x384xf32, #tpu.memory_space<vmem>>, vector<8x384xf32>
    %352 = vector.extract_strided_slice %351 {offsets = [0, 0], sizes = [8, 128], strides = [1, 1]} : vector<8x384xf32> to vector<8x128xf32>
    %353 = vector.extract_strided_slice %350 {offsets = [0, 0], sizes = [8, 128], strides = [1, 1]} : vector<8x384xf32> to vector<8x128xf32>
    %354 = arith.addf %352, %353 : vector<8x128xf32>
    %355 = arith.negf %354 : vector<8x128xf32>
    %356 = math.exp %355 : vector<8x128xf32>
    %cst_107 = arith.constant 1.000000e+00 : f32
    %357 = vector.broadcast %cst_107 : f32 to vector<8x128xf32>
    %358 = arith.addf %357, %356 : vector<8x128xf32>
    %359 = arith.divf %357, %358 : vector<8x128xf32>
    %360 = vector.extract_strided_slice %351 {offsets = [0, 128], sizes = [8, 128], strides = [1, 1]} : vector<8x384xf32> to vector<8x128xf32>
    %361 = vector.extract_strided_slice %350 {offsets = [0, 128], sizes = [8, 128], strides = [1, 1]} : vector<8x384xf32> to vector<8x128xf32>
    %362 = arith.addf %360, %361 : vector<8x128xf32>
    %363 = arith.negf %362 : vector<8x128xf32>
    %364 = math.exp %363 : vector<8x128xf32>
    %cst_108 = arith.constant 1.000000e+00 : f32
    %365 = vector.broadcast %cst_108 : f32 to vector<8x128xf32>
    %366 = arith.addf %365, %364 : vector<8x128xf32>
    %367 = arith.divf %365, %366 : vector<8x128xf32>
    %368 = vector.extract_strided_slice %351 {offsets = [0, 256], sizes = [8, 128], strides = [1, 1]} : vector<8x384xf32> to vector<8x128xf32>
    %369 = vector.extract_strided_slice %350 {offsets = [0, 256], sizes = [8, 128], strides = [1, 1]} : vector<8x384xf32> to vector<8x128xf32>
    %370 = arith.mulf %359, %369 : vector<8x128xf32>
    %371 = arith.addf %368, %370 : vector<8x128xf32>
    %372 = math.tanh %371 : vector<8x128xf32>
    %cst_109 = arith.constant 1.000000e+00 : f32
    %373 = vector.broadcast %cst_109 : f32 to vector<8x128xf32>
    %374 = arith.subf %373, %367 : vector<8x128xf32>
    %375 = arith.mulf %374, %372 : vector<8x128xf32>
    %376 = arith.mulf %367, %304 : vector<8x128xf32>
    %377 = arith.addf %375, %376 : vector<8x128xf32>
    %378 = arith.select %20, %377, %304 : vector<8x128xi1>, vector<8x128xf32>
    %cst_110 = arith.constant 0.000000e+00 : f32
    %379 = vector.broadcast %cst_110 : f32 to vector<8x128xf32>
    %380 = arith.select %20, %378, %379 : vector<8x128xi1>, vector<8x128xf32>
    %381 = arith.truncf %339 : vector<8x128xf32> to vector<8x128xbf16>
    %c0_111 = arith.constant 0 : index
    %c0_112 = arith.constant 0 : index
    %382 = vector.load %arg7[%c0_111, %c0_112] : memref<128x384xbf16, #tpu.memory_space<vmem>>, vector<128x384xbf16>
    %cst_113 = arith.constant dense<0.000000e+00> : vector<8x384xf32>
    %383 = tpu.matmul %381, %382, %cst_113 {dimension_numbers = #tpu.dot_dimension_numbers<[1], [0], [0], [1], [0, 0, 1, 1], [], []>} : vector<8x128xbf16>, vector<128x384xbf16>, vector<8x384xf32> -> vector<8x384xf32>
    %384 = vector.broadcast %47 : vector<1x384xf32> to vector<8x384xf32>
    %385 = arith.addf %383, %384 : vector<8x384xf32>
    %c24_114 = arith.constant 24 : index
    %c0_115 = arith.constant 0 : index
    %386 = vector.load %arg21[%c24_114, %c0_115] : memref<64x384xf32, #tpu.memory_space<vmem>>, vector<8x384xf32>
    %387 = vector.extract_strided_slice %386 {offsets = [0, 0], sizes = [8, 128], strides = [1, 1]} : vector<8x384xf32> to vector<8x128xf32>
    %388 = vector.extract_strided_slice %385 {offsets = [0, 0], sizes = [8, 128], strides = [1, 1]} : vector<8x384xf32> to vector<8x128xf32>
    %389 = arith.addf %387, %388 : vector<8x128xf32>
    %390 = arith.negf %389 : vector<8x128xf32>
    %391 = math.exp %390 : vector<8x128xf32>
    %cst_116 = arith.constant 1.000000e+00 : f32
    %392 = vector.broadcast %cst_116 : f32 to vector<8x128xf32>
    %393 = arith.addf %392, %391 : vector<8x128xf32>
    %394 = arith.divf %392, %393 : vector<8x128xf32>
    %395 = vector.extract_strided_slice %386 {offsets = [0, 128], sizes = [8, 128], strides = [1, 1]} : vector<8x384xf32> to vector<8x128xf32>
    %396 = vector.extract_strided_slice %385 {offsets = [0, 128], sizes = [8, 128], strides = [1, 1]} : vector<8x384xf32> to vector<8x128xf32>
    %397 = arith.addf %395, %396 : vector<8x128xf32>
    %398 = arith.negf %397 : vector<8x128xf32>
    %399 = math.exp %398 : vector<8x128xf32>
    %cst_117 = arith.constant 1.000000e+00 : f32
    %400 = vector.broadcast %cst_117 : f32 to vector<8x128xf32>
    %401 = arith.addf %400, %399 : vector<8x128xf32>
    %402 = arith.divf %400, %401 : vector<8x128xf32>
    %403 = vector.extract_strided_slice %386 {offsets = [0, 256], sizes = [8, 128], strides = [1, 1]} : vector<8x384xf32> to vector<8x128xf32>
    %404 = vector.extract_strided_slice %385 {offsets = [0, 256], sizes = [8, 128], strides = [1, 1]} : vector<8x384xf32> to vector<8x128xf32>
    %405 = arith.mulf %394, %404 : vector<8x128xf32>
    %406 = arith.addf %403, %405 : vector<8x128xf32>
    %407 = math.tanh %406 : vector<8x128xf32>
    %cst_118 = arith.constant 1.000000e+00 : f32
    %408 = vector.broadcast %cst_118 : f32 to vector<8x128xf32>
    %409 = arith.subf %408, %402 : vector<8x128xf32>
    %410 = arith.mulf %409, %407 : vector<8x128xf32>
    %411 = arith.mulf %402, %339 : vector<8x128xf32>
    %412 = arith.addf %410, %411 : vector<8x128xf32>
    %413 = arith.select %16, %412, %339 : vector<8x128xi1>, vector<8x128xf32>
    %cst_119 = arith.constant 0.000000e+00 : f32
    %414 = vector.broadcast %cst_119 : f32 to vector<8x128xf32>
    %415 = arith.select %16, %413, %414 : vector<8x128xi1>, vector<8x128xf32>
    %416 = arith.truncf %380 : vector<8x128xf32> to vector<8x128xbf16>
    %c32_120 = arith.constant 32 : index
    %c0_121 = arith.constant 0 : index
    %417 = vector.load %arg22[%c32_120, %c0_121] : memref<64x256xbf16, #tpu.memory_space<vmem>>, vector<8x128xbf16>
    tpu.vector_store %arg22[%c32_120, %c0_121], %416 {strides = array<i32>} : memref<64x256xbf16, #tpu.memory_space<vmem>>, vector<8x128xbf16>,
    %418 = arith.truncf %415 : vector<8x128xf32> to vector<8x128xbf16>
    %c24_122 = arith.constant 24 : index
    %c128_123 = arith.constant 128 : index
    %419 = vector.load %arg22[%c24_122, %c128_123] : memref<64x256xbf16, #tpu.memory_space<vmem>>, vector<8x128xbf16>
    tpu.vector_store %arg22[%c24_122, %c128_123], %418 {strides = array<i32>} : memref<64x256xbf16, #tpu.memory_space<vmem>>, vector<8x128xbf16>,
    %420 = arith.truncf %378 : vector<8x128xf32> to vector<8x128xbf16>
    %c0_124 = arith.constant 0 : index
    %c0_125 = arith.constant 0 : index
    %421 = vector.load %arg3[%c0_124, %c0_125] : memref<128x384xbf16, #tpu.memory_space<vmem>>, vector<128x384xbf16>
    %cst_126 = arith.constant dense<0.000000e+00> : vector<8x384xf32>
    %422 = tpu.matmul %420, %421, %cst_126 {dimension_numbers = #tpu.dot_dimension_numbers<[1], [0], [0], [1], [0, 0, 1, 1], [], []>} : vector<8x128xbf16>, vector<128x384xbf16>, vector<8x384xf32> -> vector<8x384xf32>
    %423 = vector.broadcast %46 : vector<1x384xf32> to vector<8x384xf32>
    %424 = arith.addf %422, %423 : vector<8x384xf32>
    %c40_127 = arith.constant 40 : index
    %c0_128 = arith.constant 0 : index
    %425 = vector.load %arg20[%c40_127, %c0_128] : memref<64x384xf32, #tpu.memory_space<vmem>>, vector<8x384xf32>
    %426 = vector.extract_strided_slice %425 {offsets = [0, 0], sizes = [8, 128], strides = [1, 1]} : vector<8x384xf32> to vector<8x128xf32>
    %427 = vector.extract_strided_slice %424 {offsets = [0, 0], sizes = [8, 128], strides = [1, 1]} : vector<8x384xf32> to vector<8x128xf32>
    %428 = arith.addf %426, %427 : vector<8x128xf32>
    %429 = arith.negf %428 : vector<8x128xf32>
    %430 = math.exp %429 : vector<8x128xf32>
    %cst_129 = arith.constant 1.000000e+00 : f32
    %431 = vector.broadcast %cst_129 : f32 to vector<8x128xf32>
    %432 = arith.addf %431, %430 : vector<8x128xf32>
    %433 = arith.divf %431, %432 : vector<8x128xf32>
    %434 = vector.extract_strided_slice %425 {offsets = [0, 128], sizes = [8, 128], strides = [1, 1]} : vector<8x384xf32> to vector<8x128xf32>
    %435 = vector.extract_strided_slice %424 {offsets = [0, 128], sizes = [8, 128], strides = [1, 1]} : vector<8x384xf32> to vector<8x128xf32>
    %436 = arith.addf %434, %435 : vector<8x128xf32>
    %437 = arith.negf %436 : vector<8x128xf32>
    %438 = math.exp %437 : vector<8x128xf32>
    %cst_130 = arith.constant 1.000000e+00 : f32
    %439 = vector.broadcast %cst_130 : f32 to vector<8x128xf32>
    %440 = arith.addf %439, %438 : vector<8x128xf32>
    %441 = arith.divf %439, %440 : vector<8x128xf32>
    %442 = vector.extract_strided_slice %425 {offsets = [0, 256], sizes = [8, 128], strides = [1, 1]} : vector<8x384xf32> to vector<8x128xf32>
    %443 = vector.extract_strided_slice %424 {offsets = [0, 256], sizes = [8, 128], strides = [1, 1]} : vector<8x384xf32> to vector<8x128xf32>
    %444 = arith.mulf %433, %443 : vector<8x128xf32>
    %445 = arith.addf %442, %444 : vector<8x128xf32>
    %446 = math.tanh %445 : vector<8x128xf32>
    %cst_131 = arith.constant 1.000000e+00 : f32
    %447 = vector.broadcast %cst_131 : f32 to vector<8x128xf32>
    %448 = arith.subf %447, %441 : vector<8x128xf32>
    %449 = arith.mulf %448, %446 : vector<8x128xf32>
    %450 = arith.mulf %441, %378 : vector<8x128xf32>
    %451 = arith.addf %449, %450 : vector<8x128xf32>
    %452 = arith.select %24, %451, %378 : vector<8x128xi1>, vector<8x128xf32>
    %cst_132 = arith.constant 0.000000e+00 : f32
    %453 = vector.broadcast %cst_132 : f32 to vector<8x128xf32>
    %454 = arith.select %24, %452, %453 : vector<8x128xi1>, vector<8x128xf32>
    %455 = arith.truncf %413 : vector<8x128xf32> to vector<8x128xbf16>
    %c0_133 = arith.constant 0 : index
    %c0_134 = arith.constant 0 : index
    %456 = vector.load %arg7[%c0_133, %c0_134] : memref<128x384xbf16, #tpu.memory_space<vmem>>, vector<128x384xbf16>
    %cst_135 = arith.constant dense<0.000000e+00> : vector<8x384xf32>
    %457 = tpu.matmul %455, %456, %cst_135 {dimension_numbers = #tpu.dot_dimension_numbers<[1], [0], [0], [1], [0, 0, 1, 1], [], []>} : vector<8x128xbf16>, vector<128x384xbf16>, vector<8x384xf32> -> vector<8x384xf32>
    %458 = vector.broadcast %47 : vector<1x384xf32> to vector<8x384xf32>
    %459 = arith.addf %457, %458 : vector<8x384xf32>
    %c16_136 = arith.constant 16 : index
    %c0_137 = arith.constant 0 : index
    %460 = vector.load %arg21[%c16_136, %c0_137] : memref<64x384xf32, #tpu.memory_space<vmem>>, vector<8x384xf32>
    %461 = vector.extract_strided_slice %460 {offsets = [0, 0], sizes = [8, 128], strides = [1, 1]} : vector<8x384xf32> to vector<8x128xf32>
    %462 = vector.extract_strided_slice %459 {offsets = [0, 0], sizes = [8, 128], strides = [1, 1]} : vector<8x384xf32> to vector<8x128xf32>
    %463 = arith.addf %461, %462 : vector<8x128xf32>
    %464 = arith.negf %463 : vector<8x128xf32>
    %465 = math.exp %464 : vector<8x128xf32>
    %cst_138 = arith.constant 1.000000e+00 : f32
    %466 = vector.broadcast %cst_138 : f32 to vector<8x128xf32>
    %467 = arith.addf %466, %465 : vector<8x128xf32>
    %468 = arith.divf %466, %467 : vector<8x128xf32>
    %469 = vector.extract_strided_slice %460 {offsets = [0, 128], sizes = [8, 128], strides = [1, 1]} : vector<8x384xf32> to vector<8x128xf32>
    %470 = vector.extract_strided_slice %459 {offsets = [0, 128], sizes = [8, 128], strides = [1, 1]} : vector<8x384xf32> to vector<8x128xf32>
    %471 = arith.addf %469, %470 : vector<8x128xf32>
    %472 = arith.negf %471 : vector<8x128xf32>
    %473 = math.exp %472 : vector<8x128xf32>
    %cst_139 = arith.constant 1.000000e+00 : f32
    %474 = vector.broadcast %cst_139 : f32 to vector<8x128xf32>
    %475 = arith.addf %474, %473 : vector<8x128xf32>
    %476 = arith.divf %474, %475 : vector<8x128xf32>
    %477 = vector.extract_strided_slice %460 {offsets = [0, 256], sizes = [8, 128], strides = [1, 1]} : vector<8x384xf32> to vector<8x128xf32>
    %478 = vector.extract_strided_slice %459 {offsets = [0, 256], sizes = [8, 128], strides = [1, 1]} : vector<8x384xf32> to vector<8x128xf32>
    %479 = arith.mulf %468, %478 : vector<8x128xf32>
    %480 = arith.addf %477, %479 : vector<8x128xf32>
    %481 = math.tanh %480 : vector<8x128xf32>
    %cst_140 = arith.constant 1.000000e+00 : f32
    %482 = vector.broadcast %cst_140 : f32 to vector<8x128xf32>
    %483 = arith.subf %482, %476 : vector<8x128xf32>
    %484 = arith.mulf %483, %481 : vector<8x128xf32>
    %485 = arith.mulf %476, %413 : vector<8x128xf32>
    %486 = arith.addf %484, %485 : vector<8x128xf32>
    %487 = arith.select %12, %486, %413 : vector<8x128xi1>, vector<8x128xf32>
    %cst_141 = arith.constant 0.000000e+00 : f32
    %488 = vector.broadcast %cst_141 : f32 to vector<8x128xf32>
    %489 = arith.select %12, %487, %488 : vector<8x128xi1>, vector<8x128xf32>
    %490 = arith.truncf %454 : vector<8x128xf32> to vector<8x128xbf16>
    %c40_142 = arith.constant 40 : index
    %c0_143 = arith.constant 0 : index
    %491 = vector.load %arg22[%c40_142, %c0_143] : memref<64x256xbf16, #tpu.memory_space<vmem>>, vector<8x128xbf16>
    tpu.vector_store %arg22[%c40_142, %c0_143], %490 {strides = array<i32>} : memref<64x256xbf16, #tpu.memory_space<vmem>>, vector<8x128xbf16>,
    %492 = arith.truncf %489 : vector<8x128xf32> to vector<8x128xbf16>
    %c16_144 = arith.constant 16 : index
    %c128_145 = arith.constant 128 : index
    %493 = vector.load %arg22[%c16_144, %c128_145] : memref<64x256xbf16, #tpu.memory_space<vmem>>, vector<8x128xbf16>
    tpu.vector_store %arg22[%c16_144, %c128_145], %492 {strides = array<i32>} : memref<64x256xbf16, #tpu.memory_space<vmem>>, vector<8x128xbf16>,
    %494 = arith.truncf %452 : vector<8x128xf32> to vector<8x128xbf16>
    %c0_146 = arith.constant 0 : index
    %c0_147 = arith.constant 0 : index
    %495 = vector.load %arg3[%c0_146, %c0_147] : memref<128x384xbf16, #tpu.memory_space<vmem>>, vector<128x384xbf16>
    %cst_148 = arith.constant dense<0.000000e+00> : vector<8x384xf32>
    %496 = tpu.matmul %494, %495, %cst_148 {dimension_numbers = #tpu.dot_dimension_numbers<[1], [0], [0], [1], [0, 0, 1, 1], [], []>} : vector<8x128xbf16>, vector<128x384xbf16>, vector<8x384xf32> -> vector<8x384xf32>
    %497 = vector.broadcast %46 : vector<1x384xf32> to vector<8x384xf32>
    %498 = arith.addf %496, %497 : vector<8x384xf32>
    %c48_149 = arith.constant 48 : index
    %c0_150 = arith.constant 0 : index
    %499 = vector.load %arg20[%c48_149, %c0_150] : memref<64x384xf32, #tpu.memory_space<vmem>>, vector<8x384xf32>
    %500 = vector.extract_strided_slice %499 {offsets = [0, 0], sizes = [8, 128], strides = [1, 1]} : vector<8x384xf32> to vector<8x128xf32>
    %501 = vector.extract_strided_slice %498 {offsets = [0, 0], sizes = [8, 128], strides = [1, 1]} : vector<8x384xf32> to vector<8x128xf32>
    %502 = arith.addf %500, %501 : vector<8x128xf32>
    %503 = arith.negf %502 : vector<8x128xf32>
    %504 = math.exp %503 : vector<8x128xf32>
    %cst_151 = arith.constant 1.000000e+00 : f32
    %505 = vector.broadcast %cst_151 : f32 to vector<8x128xf32>
    %506 = arith.addf %505, %504 : vector<8x128xf32>
    %507 = arith.divf %505, %506 : vector<8x128xf32>
    %508 = vector.extract_strided_slice %499 {offsets = [0, 128], sizes = [8, 128], strides = [1, 1]} : vector<8x384xf32> to vector<8x128xf32>
    %509 = vector.extract_strided_slice %498 {offsets = [0, 128], sizes = [8, 128], strides = [1, 1]} : vector<8x384xf32> to vector<8x128xf32>
    %510 = arith.addf %508, %509 : vector<8x128xf32>
    %511 = arith.negf %510 : vector<8x128xf32>
    %512 = math.exp %511 : vector<8x128xf32>
    %cst_152 = arith.constant 1.000000e+00 : f32
    %513 = vector.broadcast %cst_152 : f32 to vector<8x128xf32>
    %514 = arith.addf %513, %512 : vector<8x128xf32>
    %515 = arith.divf %513, %514 : vector<8x128xf32>
    %516 = vector.extract_strided_slice %499 {offsets = [0, 256], sizes = [8, 128], strides = [1, 1]} : vector<8x384xf32> to vector<8x128xf32>
    %517 = vector.extract_strided_slice %498 {offsets = [0, 256], sizes = [8, 128], strides = [1, 1]} : vector<8x384xf32> to vector<8x128xf32>
    %518 = arith.mulf %507, %517 : vector<8x128xf32>
    %519 = arith.addf %516, %518 : vector<8x128xf32>
    %520 = math.tanh %519 : vector<8x128xf32>
    %cst_153 = arith.constant 1.000000e+00 : f32
    %521 = vector.broadcast %cst_153 : f32 to vector<8x128xf32>
    %522 = arith.subf %521, %515 : vector<8x128xf32>
    %523 = arith.mulf %522, %520 : vector<8x128xf32>
    %524 = arith.mulf %515, %452 : vector<8x128xf32>
    %525 = arith.addf %523, %524 : vector<8x128xf32>
    %526 = arith.select %28, %525, %452 : vector<8x128xi1>, vector<8x128xf32>
    %cst_154 = arith.constant 0.000000e+00 : f32
    %527 = vector.broadcast %cst_154 : f32 to vector<8x128xf32>
    %528 = arith.select %28, %526, %527 : vector<8x128xi1>, vector<8x128xf32>
    %529 = arith.truncf %487 : vector<8x128xf32> to vector<8x128xbf16>
    %c0_155 = arith.constant 0 : index
    %c0_156 = arith.constant 0 : index
    %530 = vector.load %arg7[%c0_155, %c0_156] : memref<128x384xbf16, #tpu.memory_space<vmem>>, vector<128x384xbf16>
    %cst_157 = arith.constant dense<0.000000e+00> : vector<8x384xf32>
    %531 = tpu.matmul %529, %530, %cst_157 {dimension_numbers = #tpu.dot_dimension_numbers<[1], [0], [0], [1], [0, 0, 1, 1], [], []>} : vector<8x128xbf16>, vector<128x384xbf16>, vector<8x384xf32> -> vector<8x384xf32>
    %532 = vector.broadcast %47 : vector<1x384xf32> to vector<8x384xf32>
    %533 = arith.addf %531, %532 : vector<8x384xf32>
    %c8_158 = arith.constant 8 : index
    %c0_159 = arith.constant 0 : index
    %534 = vector.load %arg21[%c8_158, %c0_159] : memref<64x384xf32, #tpu.memory_space<vmem>>, vector<8x384xf32>
    %535 = vector.extract_strided_slice %534 {offsets = [0, 0], sizes = [8, 128], strides = [1, 1]} : vector<8x384xf32> to vector<8x128xf32>
    %536 = vector.extract_strided_slice %533 {offsets = [0, 0], sizes = [8, 128], strides = [1, 1]} : vector<8x384xf32> to vector<8x128xf32>
    %537 = arith.addf %535, %536 : vector<8x128xf32>
    %538 = arith.negf %537 : vector<8x128xf32>
    %539 = math.exp %538 : vector<8x128xf32>
    %cst_160 = arith.constant 1.000000e+00 : f32
    %540 = vector.broadcast %cst_160 : f32 to vector<8x128xf32>
    %541 = arith.addf %540, %539 : vector<8x128xf32>
    %542 = arith.divf %540, %541 : vector<8x128xf32>
    %543 = vector.extract_strided_slice %534 {offsets = [0, 128], sizes = [8, 128], strides = [1, 1]} : vector<8x384xf32> to vector<8x128xf32>
    %544 = vector.extract_strided_slice %533 {offsets = [0, 128], sizes = [8, 128], strides = [1, 1]} : vector<8x384xf32> to vector<8x128xf32>
    %545 = arith.addf %543, %544 : vector<8x128xf32>
    %546 = arith.negf %545 : vector<8x128xf32>
    %547 = math.exp %546 : vector<8x128xf32>
    %cst_161 = arith.constant 1.000000e+00 : f32
    %548 = vector.broadcast %cst_161 : f32 to vector<8x128xf32>
    %549 = arith.addf %548, %547 : vector<8x128xf32>
    %550 = arith.divf %548, %549 : vector<8x128xf32>
    %551 = vector.extract_strided_slice %534 {offsets = [0, 256], sizes = [8, 128], strides = [1, 1]} : vector<8x384xf32> to vector<8x128xf32>
    %552 = vector.extract_strided_slice %533 {offsets = [0, 256], sizes = [8, 128], strides = [1, 1]} : vector<8x384xf32> to vector<8x128xf32>
    %553 = arith.mulf %542, %552 : vector<8x128xf32>
    %554 = arith.addf %551, %553 : vector<8x128xf32>
    %555 = math.tanh %554 : vector<8x128xf32>
    %cst_162 = arith.constant 1.000000e+00 : f32
    %556 = vector.broadcast %cst_162 : f32 to vector<8x128xf32>
    %557 = arith.subf %556, %550 : vector<8x128xf32>
    %558 = arith.mulf %557, %555 : vector<8x128xf32>
    %559 = arith.mulf %550, %487 : vector<8x128xf32>
    %560 = arith.addf %558, %559 : vector<8x128xf32>
    %561 = arith.select %8, %560, %487 : vector<8x128xi1>, vector<8x128xf32>
    %cst_163 = arith.constant 0.000000e+00 : f32
    %562 = vector.broadcast %cst_163 : f32 to vector<8x128xf32>
    %563 = arith.select %8, %561, %562 : vector<8x128xi1>, vector<8x128xf32>
    %564 = arith.truncf %528 : vector<8x128xf32> to vector<8x128xbf16>
    %c48_164 = arith.constant 48 : index
    %c0_165 = arith.constant 0 : index
    %565 = vector.load %arg22[%c48_164, %c0_165] : memref<64x256xbf16, #tpu.memory_space<vmem>>, vector<8x128xbf16>
    tpu.vector_store %arg22[%c48_164, %c0_165], %564 {strides = array<i32>} : memref<64x256xbf16, #tpu.memory_space<vmem>>, vector<8x128xbf16>,
    %566 = arith.truncf %563 : vector<8x128xf32> to vector<8x128xbf16>
    %c8_166 = arith.constant 8 : index
    %c128_167 = arith.constant 128 : index
    %567 = vector.load %arg22[%c8_166, %c128_167] : memref<64x256xbf16, #tpu.memory_space<vmem>>, vector<8x128xbf16>
    tpu.vector_store %arg22[%c8_166, %c128_167], %566 {strides = array<i32>} : memref<64x256xbf16, #tpu.memory_space<vmem>>, vector<8x128xbf16>,
    %568 = arith.truncf %526 : vector<8x128xf32> to vector<8x128xbf16>
    %c0_168 = arith.constant 0 : index
    %c0_169 = arith.constant 0 : index
    %569 = vector.load %arg3[%c0_168, %c0_169] : memref<128x384xbf16, #tpu.memory_space<vmem>>, vector<128x384xbf16>
    %cst_170 = arith.constant dense<0.000000e+00> : vector<8x384xf32>
    %570 = tpu.matmul %568, %569, %cst_170 {dimension_numbers = #tpu.dot_dimension_numbers<[1], [0], [0], [1], [0, 0, 1, 1], [], []>} : vector<8x128xbf16>, vector<128x384xbf16>, vector<8x384xf32> -> vector<8x384xf32>
    %571 = vector.broadcast %46 : vector<1x384xf32> to vector<8x384xf32>
    %572 = arith.addf %570, %571 : vector<8x384xf32>
    %c56_171 = arith.constant 56 : index
    %c0_172 = arith.constant 0 : index
    %573 = vector.load %arg20[%c56_171, %c0_172] : memref<64x384xf32, #tpu.memory_space<vmem>>, vector<8x384xf32>
    %574 = vector.extract_strided_slice %573 {offsets = [0, 0], sizes = [8, 128], strides = [1, 1]} : vector<8x384xf32> to vector<8x128xf32>
    %575 = vector.extract_strided_slice %572 {offsets = [0, 0], sizes = [8, 128], strides = [1, 1]} : vector<8x384xf32> to vector<8x128xf32>
    %576 = arith.addf %574, %575 : vector<8x128xf32>
    %577 = arith.negf %576 : vector<8x128xf32>
    %578 = math.exp %577 : vector<8x128xf32>
    %cst_173 = arith.constant 1.000000e+00 : f32
    %579 = vector.broadcast %cst_173 : f32 to vector<8x128xf32>
    %580 = arith.addf %579, %578 : vector<8x128xf32>
    %581 = arith.divf %579, %580 : vector<8x128xf32>
    %582 = vector.extract_strided_slice %573 {offsets = [0, 128], sizes = [8, 128], strides = [1, 1]} : vector<8x384xf32> to vector<8x128xf32>
    %583 = vector.extract_strided_slice %572 {offsets = [0, 128], sizes = [8, 128], strides = [1, 1]} : vector<8x384xf32> to vector<8x128xf32>
    %584 = arith.addf %582, %583 : vector<8x128xf32>
    %585 = arith.negf %584 : vector<8x128xf32>
    %586 = math.exp %585 : vector<8x128xf32>
    %cst_174 = arith.constant 1.000000e+00 : f32
    %587 = vector.broadcast %cst_174 : f32 to vector<8x128xf32>
    %588 = arith.addf %587, %586 : vector<8x128xf32>
    %589 = arith.divf %587, %588 : vector<8x128xf32>
    %590 = vector.extract_strided_slice %573 {offsets = [0, 256], sizes = [8, 128], strides = [1, 1]} : vector<8x384xf32> to vector<8x128xf32>
    %591 = vector.extract_strided_slice %572 {offsets = [0, 256], sizes = [8, 128], strides = [1, 1]} : vector<8x384xf32> to vector<8x128xf32>
    %592 = arith.mulf %581, %591 : vector<8x128xf32>
    %593 = arith.addf %590, %592 : vector<8x128xf32>
    %594 = math.tanh %593 : vector<8x128xf32>
    %cst_175 = arith.constant 1.000000e+00 : f32
    %595 = vector.broadcast %cst_175 : f32 to vector<8x128xf32>
    %596 = arith.subf %595, %589 : vector<8x128xf32>
    %597 = arith.mulf %596, %594 : vector<8x128xf32>
    %598 = arith.mulf %589, %526 : vector<8x128xf32>
    %599 = arith.addf %597, %598 : vector<8x128xf32>
    %600 = arith.select %32, %599, %526 : vector<8x128xi1>, vector<8x128xf32>
    %cst_176 = arith.constant 0.000000e+00 : f32
    %601 = vector.broadcast %cst_176 : f32 to vector<8x128xf32>
    %602 = arith.select %32, %600, %601 : vector<8x128xi1>, vector<8x128xf32>
    %603 = arith.truncf %561 : vector<8x128xf32> to vector<8x128xbf16>
    %c0_177 = arith.constant 0 : index
    %c0_178 = arith.constant 0 : index
    %604 = vector.load %arg7[%c0_177, %c0_178] : memref<128x384xbf16, #tpu.memory_space<vmem>>, vector<128x384xbf16>
    %cst_179 = arith.constant dense<0.000000e+00> : vector<8x384xf32>
    %605 = tpu.matmul %603, %604, %cst_179 {dimension_numbers = #tpu.dot_dimension_numbers<[1], [0], [0], [1], [0, 0, 1, 1], [], []>} : vector<8x128xbf16>, vector<128x384xbf16>, vector<8x384xf32> -> vector<8x384xf32>
    %606 = vector.broadcast %47 : vector<1x384xf32> to vector<8x384xf32>
    %607 = arith.addf %605, %606 : vector<8x384xf32>
    %c0_180 = arith.constant 0 : index
    %c0_181 = arith.constant 0 : index
    %608 = vector.load %arg21[%c0_180, %c0_181] : memref<64x384xf32, #tpu.memory_space<vmem>>, vector<8x384xf32>
    %609 = vector.extract_strided_slice %608 {offsets = [0, 0], sizes = [8, 128], strides = [1, 1]} : vector<8x384xf32> to vector<8x128xf32>
    %610 = vector.extract_strided_slice %607 {offsets = [0, 0], sizes = [8, 128], strides = [1, 1]} : vector<8x384xf32> to vector<8x128xf32>
    %611 = arith.addf %609, %610 : vector<8x128xf32>
    %612 = arith.negf %611 : vector<8x128xf32>
    %613 = math.exp %612 : vector<8x128xf32>
    %cst_182 = arith.constant 1.000000e+00 : f32
    %614 = vector.broadcast %cst_182 : f32 to vector<8x128xf32>
    %615 = arith.addf %614, %613 : vector<8x128xf32>
    %616 = arith.divf %614, %615 : vector<8x128xf32>
    %617 = vector.extract_strided_slice %608 {offsets = [0, 128], sizes = [8, 128], strides = [1, 1]} : vector<8x384xf32> to vector<8x128xf32>
    %618 = vector.extract_strided_slice %607 {offsets = [0, 128], sizes = [8, 128], strides = [1, 1]} : vector<8x384xf32> to vector<8x128xf32>
    %619 = arith.addf %617, %618 : vector<8x128xf32>
    %620 = arith.negf %619 : vector<8x128xf32>
    %621 = math.exp %620 : vector<8x128xf32>
    %cst_183 = arith.constant 1.000000e+00 : f32
    %622 = vector.broadcast %cst_183 : f32 to vector<8x128xf32>
    %623 = arith.addf %622, %621 : vector<8x128xf32>
    %624 = arith.divf %622, %623 : vector<8x128xf32>
    %625 = vector.extract_strided_slice %608 {offsets = [0, 256], sizes = [8, 128], strides = [1, 1]} : vector<8x384xf32> to vector<8x128xf32>
    %626 = vector.extract_strided_slice %607 {offsets = [0, 256], sizes = [8, 128], strides = [1, 1]} : vector<8x384xf32> to vector<8x128xf32>
    %627 = arith.mulf %616, %626 : vector<8x128xf32>
    %628 = arith.addf %625, %627 : vector<8x128xf32>
    %629 = math.tanh %628 : vector<8x128xf32>
    %cst_184 = arith.constant 1.000000e+00 : f32
    %630 = vector.broadcast %cst_184 : f32 to vector<8x128xf32>
    %631 = arith.subf %630, %624 : vector<8x128xf32>
    %632 = arith.mulf %631, %629 : vector<8x128xf32>
    %633 = arith.mulf %624, %561 : vector<8x128xf32>
    %634 = arith.addf %632, %633 : vector<8x128xf32>
    %635 = arith.select %4, %634, %561 : vector<8x128xi1>, vector<8x128xf32>
    %cst_185 = arith.constant 0.000000e+00 : f32
    %636 = vector.broadcast %cst_185 : f32 to vector<8x128xf32>
    %637 = arith.select %4, %635, %636 : vector<8x128xi1>, vector<8x128xf32>
    %638 = arith.truncf %602 : vector<8x128xf32> to vector<8x128xbf16>
    %c56_186 = arith.constant 56 : index
    %c0_187 = arith.constant 0 : index
    %639 = vector.load %arg22[%c56_186, %c0_187] : memref<64x256xbf16, #tpu.memory_space<vmem>>, vector<8x128xbf16>
    tpu.vector_store %arg22[%c56_186, %c0_187], %638 {strides = array<i32>} : memref<64x256xbf16, #tpu.memory_space<vmem>>, vector<8x128xbf16>,
    %640 = arith.truncf %637 : vector<8x128xf32> to vector<8x128xbf16>
    %c0_188 = arith.constant 0 : index
    %c128_189 = arith.constant 128 : index
    %641 = vector.load %arg22[%c0_188, %c128_189] : memref<64x256xbf16, #tpu.memory_space<vmem>>, vector<8x128xbf16>
    tpu.vector_store %arg22[%c0_188, %c128_189], %640 {strides = array<i32>} : memref<64x256xbf16, #tpu.memory_space<vmem>>, vector<8x128xbf16>,
    %c0_190 = arith.constant 0 : index
    %c0_191 = arith.constant 0 : index
    %642 = vector.load %arg22[%c0_190, %c0_191] : memref<64x256xbf16, #tpu.memory_space<vmem>>, vector<64x256xbf16>
    %c0_192 = arith.constant 0 : index
    %c0_193 = arith.constant 0 : index
    %643 = vector.load %arg10[%c0_192, %c0_193] : memref<256x384xbf16, #tpu.memory_space<vmem>>, vector<256x384xbf16>
    %cst_194 = arith.constant dense<0.000000e+00> : vector<64x384xf32>
    %644 = tpu.matmul %642, %643, %cst_194 {dimension_numbers = #tpu.dot_dimension_numbers<[1], [0], [0], [1], [0, 0, 1, 1], [], []>} : vector<64x256xbf16>, vector<256x384xbf16>, vector<64x384xf32> -> vector<64x384xf32>
    %c0_195 = arith.constant 0 : index
    %c0_196 = arith.constant 0 : index
    %645 = vector.load %arg12[%c0_195, %c0_196] : memref<1x384xf32, #tpu.memory_space<vmem>>, vector<1x384xf32>
    %646 = vector.broadcast %645 : vector<1x384xf32> to vector<64x384xf32>
    %647 = arith.addf %644, %646 : vector<64x384xf32>
    %c0_197 = arith.constant 0 : index
    %c0_198 = arith.constant 0 : index
    %648 = vector.load %arg20[%c0_197, %c0_198] : memref<64x384xf32, #tpu.memory_space<vmem>>, vector<64x384xf32>
    tpu.vector_store %arg20[%c0_197, %c0_198], %647 {strides = array<i32>} : memref<64x384xf32, #tpu.memory_space<vmem>>, vector<64x384xf32>,
    %c0_199 = arith.constant 0 : index
    %c0_200 = arith.constant 0 : index
    %649 = vector.load %arg14[%c0_199, %c0_200] : memref<256x384xbf16, #tpu.memory_space<vmem>>, vector<256x384xbf16>
    %cst_201 = arith.constant dense<0.000000e+00> : vector<64x384xf32>
    %650 = tpu.matmul %642, %649, %cst_201 {dimension_numbers = #tpu.dot_dimension_numbers<[1], [0], [0], [1], [0, 0, 1, 1], [], []>} : vector<64x256xbf16>, vector<256x384xbf16>, vector<64x384xf32> -> vector<64x384xf32>
    %c0_202 = arith.constant 0 : index
    %c0_203 = arith.constant 0 : index
    %651 = vector.load %arg16[%c0_202, %c0_203] : memref<1x384xf32, #tpu.memory_space<vmem>>, vector<1x384xf32>
    %652 = vector.broadcast %651 : vector<1x384xf32> to vector<64x384xf32>
    %653 = arith.addf %650, %652 : vector<64x384xf32>
    %c0_204 = arith.constant 0 : index
    %c0_205 = arith.constant 0 : index
    %654 = vector.load %arg21[%c0_204, %c0_205] : memref<64x384xf32, #tpu.memory_space<vmem>>, vector<64x384xf32>
    tpu.vector_store %arg21[%c0_204, %c0_205], %653 {strides = array<i32>} : memref<64x384xf32, #tpu.memory_space<vmem>>, vector<64x384xf32>,
    %c0_206 = arith.constant 0 : index
    %c0_207 = arith.constant 0 : index
    %655 = vector.load %arg13[%c0_206, %c0_207] : memref<1x384xf32, #tpu.memory_space<vmem>>, vector<1x384xf32>
    %c0_208 = arith.constant 0 : index
    %c0_209 = arith.constant 0 : index
    %656 = vector.load %arg17[%c0_208, %c0_209] : memref<1x384xf32, #tpu.memory_space<vmem>>, vector<1x384xf32>
    %cst_210 = arith.constant 0.000000e+00 : f32
    %657 = vector.broadcast %cst_210 : f32 to vector<8x128xf32>
    %cst_211 = arith.constant 0.000000e+00 : f32
    %658 = vector.broadcast %cst_211 : f32 to vector<8x128xf32>
    %659 = arith.truncf %657 : vector<8x128xf32> to vector<8x128xbf16>
    %c0_212 = arith.constant 0 : index
    %c0_213 = arith.constant 0 : index
    %660 = vector.load %arg11[%c0_212, %c0_213] : memref<128x384xbf16, #tpu.memory_space<vmem>>, vector<128x384xbf16>
    %cst_214 = arith.constant dense<0.000000e+00> : vector<8x384xf32>
    %661 = tpu.matmul %659, %660, %cst_214 {dimension_numbers = #tpu.dot_dimension_numbers<[1], [0], [0], [1], [0, 0, 1, 1], [], []>} : vector<8x128xbf16>, vector<128x384xbf16>, vector<8x384xf32> -> vector<8x384xf32>
    %662 = vector.broadcast %655 : vector<1x384xf32> to vector<8x384xf32>
    %663 = arith.addf %661, %662 : vector<8x384xf32>
    %c0_215 = arith.constant 0 : index
    %c0_216 = arith.constant 0 : index
    %664 = vector.load %arg20[%c0_215, %c0_216] : memref<64x384xf32, #tpu.memory_space<vmem>>, vector<8x384xf32>
    %665 = vector.extract_strided_slice %664 {offsets = [0, 0], sizes = [8, 128], strides = [1, 1]} : vector<8x384xf32> to vector<8x128xf32>
    %666 = vector.extract_strided_slice %663 {offsets = [0, 0], sizes = [8, 128], strides = [1, 1]} : vector<8x384xf32> to vector<8x128xf32>
    %667 = arith.addf %665, %666 : vector<8x128xf32>
    %668 = arith.negf %667 : vector<8x128xf32>
    %669 = math.exp %668 : vector<8x128xf32>
    %cst_217 = arith.constant 1.000000e+00 : f32
    %670 = vector.broadcast %cst_217 : f32 to vector<8x128xf32>
    %671 = arith.addf %670, %669 : vector<8x128xf32>
    %672 = arith.divf %670, %671 : vector<8x128xf32>
    %673 = vector.extract_strided_slice %664 {offsets = [0, 128], sizes = [8, 128], strides = [1, 1]} : vector<8x384xf32> to vector<8x128xf32>
    %674 = vector.extract_strided_slice %663 {offsets = [0, 128], sizes = [8, 128], strides = [1, 1]} : vector<8x384xf32> to vector<8x128xf32>
    %675 = arith.addf %673, %674 : vector<8x128xf32>
    %676 = arith.negf %675 : vector<8x128xf32>
    %677 = math.exp %676 : vector<8x128xf32>
    %cst_218 = arith.constant 1.000000e+00 : f32
    %678 = vector.broadcast %cst_218 : f32 to vector<8x128xf32>
    %679 = arith.addf %678, %677 : vector<8x128xf32>
    %680 = arith.divf %678, %679 : vector<8x128xf32>
    %681 = vector.extract_strided_slice %664 {offsets = [0, 256], sizes = [8, 128], strides = [1, 1]} : vector<8x384xf32> to vector<8x128xf32>
    %682 = vector.extract_strided_slice %663 {offsets = [0, 256], sizes = [8, 128], strides = [1, 1]} : vector<8x384xf32> to vector<8x128xf32>
    %683 = arith.mulf %672, %682 : vector<8x128xf32>
    %684 = arith.addf %681, %683 : vector<8x128xf32>
    %685 = math.tanh %684 : vector<8x128xf32>
    %cst_219 = arith.constant 1.000000e+00 : f32
    %686 = vector.broadcast %cst_219 : f32 to vector<8x128xf32>
    %687 = arith.subf %686, %680 : vector<8x128xf32>
    %688 = arith.mulf %687, %685 : vector<8x128xf32>
    %689 = arith.mulf %680, %657 : vector<8x128xf32>
    %690 = arith.addf %688, %689 : vector<8x128xf32>
    %691 = arith.select %4, %690, %657 : vector<8x128xi1>, vector<8x128xf32>
    %cst_220 = arith.constant 0.000000e+00 : f32
    %692 = vector.broadcast %cst_220 : f32 to vector<8x128xf32>
    %693 = arith.select %4, %691, %692 : vector<8x128xi1>, vector<8x128xf32>
    %694 = arith.truncf %658 : vector<8x128xf32> to vector<8x128xbf16>
    %c0_221 = arith.constant 0 : index
    %c0_222 = arith.constant 0 : index
    %695 = vector.load %arg15[%c0_221, %c0_222] : memref<128x384xbf16, #tpu.memory_space<vmem>>, vector<128x384xbf16>
    %cst_223 = arith.constant dense<0.000000e+00> : vector<8x384xf32>
    %696 = tpu.matmul %694, %695, %cst_223 {dimension_numbers = #tpu.dot_dimension_numbers<[1], [0], [0], [1], [0, 0, 1, 1], [], []>} : vector<8x128xbf16>, vector<128x384xbf16>, vector<8x384xf32> -> vector<8x384xf32>
    %697 = vector.broadcast %656 : vector<1x384xf32> to vector<8x384xf32>
    %698 = arith.addf %696, %697 : vector<8x384xf32>
    %c56_224 = arith.constant 56 : index
    %c0_225 = arith.constant 0 : index
    %699 = vector.load %arg21[%c56_224, %c0_225] : memref<64x384xf32, #tpu.memory_space<vmem>>, vector<8x384xf32>
    %700 = vector.extract_strided_slice %699 {offsets = [0, 0], sizes = [8, 128], strides = [1, 1]} : vector<8x384xf32> to vector<8x128xf32>
    %701 = vector.extract_strided_slice %698 {offsets = [0, 0], sizes = [8, 128], strides = [1, 1]} : vector<8x384xf32> to vector<8x128xf32>
    %702 = arith.addf %700, %701 : vector<8x128xf32>
    %703 = arith.negf %702 : vector<8x128xf32>
    %704 = math.exp %703 : vector<8x128xf32>
    %cst_226 = arith.constant 1.000000e+00 : f32
    %705 = vector.broadcast %cst_226 : f32 to vector<8x128xf32>
    %706 = arith.addf %705, %704 : vector<8x128xf32>
    %707 = arith.divf %705, %706 : vector<8x128xf32>
    %708 = vector.extract_strided_slice %699 {offsets = [0, 128], sizes = [8, 128], strides = [1, 1]} : vector<8x384xf32> to vector<8x128xf32>
    %709 = vector.extract_strided_slice %698 {offsets = [0, 128], sizes = [8, 128], strides = [1, 1]} : vector<8x384xf32> to vector<8x128xf32>
    %710 = arith.addf %708, %709 : vector<8x128xf32>
    %711 = arith.negf %710 : vector<8x128xf32>
    %712 = math.exp %711 : vector<8x128xf32>
    %cst_227 = arith.constant 1.000000e+00 : f32
    %713 = vector.broadcast %cst_227 : f32 to vector<8x128xf32>
    %714 = arith.addf %713, %712 : vector<8x128xf32>
    %715 = arith.divf %713, %714 : vector<8x128xf32>
    %716 = vector.extract_strided_slice %699 {offsets = [0, 256], sizes = [8, 128], strides = [1, 1]} : vector<8x384xf32> to vector<8x128xf32>
    %717 = vector.extract_strided_slice %698 {offsets = [0, 256], sizes = [8, 128], strides = [1, 1]} : vector<8x384xf32> to vector<8x128xf32>
    %718 = arith.mulf %707, %717 : vector<8x128xf32>
    %719 = arith.addf %716, %718 : vector<8x128xf32>
    %720 = math.tanh %719 : vector<8x128xf32>
    %cst_228 = arith.constant 1.000000e+00 : f32
    %721 = vector.broadcast %cst_228 : f32 to vector<8x128xf32>
    %722 = arith.subf %721, %715 : vector<8x128xf32>
    %723 = arith.mulf %722, %720 : vector<8x128xf32>
    %724 = arith.mulf %715, %658 : vector<8x128xf32>
    %725 = arith.addf %723, %724 : vector<8x128xf32>
    %726 = arith.select %32, %725, %658 : vector<8x128xi1>, vector<8x128xf32>
    %cst_229 = arith.constant 0.000000e+00 : f32
    %727 = vector.broadcast %cst_229 : f32 to vector<8x128xf32>
    %728 = arith.select %32, %726, %727 : vector<8x128xi1>, vector<8x128xf32>
    %c0_230 = arith.constant 0 : index
    %c0_231 = arith.constant 0 : index
    %729 = vector.load %arg18[%c0_230, %c0_231] : memref<64x128xf32, #tpu.memory_space<vmem>>, vector<8x128xf32>
    tpu.vector_store %arg18[%c0_230, %c0_231], %693 {strides = array<i32>} : memref<64x128xf32, #tpu.memory_space<vmem>>, vector<8x128xf32>,
    %c56_232 = arith.constant 56 : index
    %c0_233 = arith.constant 0 : index
    %730 = vector.load %arg23[%c56_232, %c0_233] : memref<64x128xf32, #tpu.memory_space<vmem>>, vector<8x128xf32>
    tpu.vector_store %arg23[%c56_232, %c0_233], %728 {strides = array<i32>} : memref<64x128xf32, #tpu.memory_space<vmem>>, vector<8x128xf32>,
    %731 = arith.truncf %691 : vector<8x128xf32> to vector<8x128xbf16>
    %c0_234 = arith.constant 0 : index
    %c0_235 = arith.constant 0 : index
    %732 = vector.load %arg11[%c0_234, %c0_235] : memref<128x384xbf16, #tpu.memory_space<vmem>>, vector<128x384xbf16>
    %cst_236 = arith.constant dense<0.000000e+00> : vector<8x384xf32>
    %733 = tpu.matmul %731, %732, %cst_236 {dimension_numbers = #tpu.dot_dimension_numbers<[1], [0], [0], [1], [0, 0, 1, 1], [], []>} : vector<8x128xbf16>, vector<128x384xbf16>, vector<8x384xf32> -> vector<8x384xf32>
    %734 = vector.broadcast %655 : vector<1x384xf32> to vector<8x384xf32>
    %735 = arith.addf %733, %734 : vector<8x384xf32>
    %c8_237 = arith.constant 8 : index
    %c0_238 = arith.constant 0 : index
    %736 = vector.load %arg20[%c8_237, %c0_238] : memref<64x384xf32, #tpu.memory_space<vmem>>, vector<8x384xf32>
    %737 = vector.extract_strided_slice %736 {offsets = [0, 0], sizes = [8, 128], strides = [1, 1]} : vector<8x384xf32> to vector<8x128xf32>
    %738 = vector.extract_strided_slice %735 {offsets = [0, 0], sizes = [8, 128], strides = [1, 1]} : vector<8x384xf32> to vector<8x128xf32>
    %739 = arith.addf %737, %738 : vector<8x128xf32>
    %740 = arith.negf %739 : vector<8x128xf32>
    %741 = math.exp %740 : vector<8x128xf32>
    %cst_239 = arith.constant 1.000000e+00 : f32
    %742 = vector.broadcast %cst_239 : f32 to vector<8x128xf32>
    %743 = arith.addf %742, %741 : vector<8x128xf32>
    %744 = arith.divf %742, %743 : vector<8x128xf32>
    %745 = vector.extract_strided_slice %736 {offsets = [0, 128], sizes = [8, 128], strides = [1, 1]} : vector<8x384xf32> to vector<8x128xf32>
    %746 = vector.extract_strided_slice %735 {offsets = [0, 128], sizes = [8, 128], strides = [1, 1]} : vector<8x384xf32> to vector<8x128xf32>
    %747 = arith.addf %745, %746 : vector<8x128xf32>
    %748 = arith.negf %747 : vector<8x128xf32>
    %749 = math.exp %748 : vector<8x128xf32>
    %cst_240 = arith.constant 1.000000e+00 : f32
    %750 = vector.broadcast %cst_240 : f32 to vector<8x128xf32>
    %751 = arith.addf %750, %749 : vector<8x128xf32>
    %752 = arith.divf %750, %751 : vector<8x128xf32>
    %753 = vector.extract_strided_slice %736 {offsets = [0, 256], sizes = [8, 128], strides = [1, 1]} : vector<8x384xf32> to vector<8x128xf32>
    %754 = vector.extract_strided_slice %735 {offsets = [0, 256], sizes = [8, 128], strides = [1, 1]} : vector<8x384xf32> to vector<8x128xf32>
    %755 = arith.mulf %744, %754 : vector<8x128xf32>
    %756 = arith.addf %753, %755 : vector<8x128xf32>
    %757 = math.tanh %756 : vector<8x128xf32>
    %cst_241 = arith.constant 1.000000e+00 : f32
    %758 = vector.broadcast %cst_241 : f32 to vector<8x128xf32>
    %759 = arith.subf %758, %752 : vector<8x128xf32>
    %760 = arith.mulf %759, %757 : vector<8x128xf32>
    %761 = arith.mulf %752, %691 : vector<8x128xf32>
    %762 = arith.addf %760, %761 : vector<8x128xf32>
    %763 = arith.select %8, %762, %691 : vector<8x128xi1>, vector<8x128xf32>
    %cst_242 = arith.constant 0.000000e+00 : f32
    %764 = vector.broadcast %cst_242 : f32 to vector<8x128xf32>
    %765 = arith.select %8, %763, %764 : vector<8x128xi1>, vector<8x128xf32>
    %766 = arith.truncf %726 : vector<8x128xf32> to vector<8x128xbf16>
    %c0_243 = arith.constant 0 : index
    %c0_244 = arith.constant 0 : index
    %767 = vector.load %arg15[%c0_243, %c0_244] : memref<128x384xbf16, #tpu.memory_space<vmem>>, vector<128x384xbf16>
    %cst_245 = arith.constant dense<0.000000e+00> : vector<8x384xf32>
    %768 = tpu.matmul %766, %767, %cst_245 {dimension_numbers = #tpu.dot_dimension_numbers<[1], [0], [0], [1], [0, 0, 1, 1], [], []>} : vector<8x128xbf16>, vector<128x384xbf16>, vector<8x384xf32> -> vector<8x384xf32>
    %769 = vector.broadcast %656 : vector<1x384xf32> to vector<8x384xf32>
    %770 = arith.addf %768, %769 : vector<8x384xf32>
    %c48_246 = arith.constant 48 : index
    %c0_247 = arith.constant 0 : index
    %771 = vector.load %arg21[%c48_246, %c0_247] : memref<64x384xf32, #tpu.memory_space<vmem>>, vector<8x384xf32>
    %772 = vector.extract_strided_slice %771 {offsets = [0, 0], sizes = [8, 128], strides = [1, 1]} : vector<8x384xf32> to vector<8x128xf32>
    %773 = vector.extract_strided_slice %770 {offsets = [0, 0], sizes = [8, 128], strides = [1, 1]} : vector<8x384xf32> to vector<8x128xf32>
    %774 = arith.addf %772, %773 : vector<8x128xf32>
    %775 = arith.negf %774 : vector<8x128xf32>
    %776 = math.exp %775 : vector<8x128xf32>
    %cst_248 = arith.constant 1.000000e+00 : f32
    %777 = vector.broadcast %cst_248 : f32 to vector<8x128xf32>
    %778 = arith.addf %777, %776 : vector<8x128xf32>
    %779 = arith.divf %777, %778 : vector<8x128xf32>
    %780 = vector.extract_strided_slice %771 {offsets = [0, 128], sizes = [8, 128], strides = [1, 1]} : vector<8x384xf32> to vector<8x128xf32>
    %781 = vector.extract_strided_slice %770 {offsets = [0, 128], sizes = [8, 128], strides = [1, 1]} : vector<8x384xf32> to vector<8x128xf32>
    %782 = arith.addf %780, %781 : vector<8x128xf32>
    %783 = arith.negf %782 : vector<8x128xf32>
    %784 = math.exp %783 : vector<8x128xf32>
    %cst_249 = arith.constant 1.000000e+00 : f32
    %785 = vector.broadcast %cst_249 : f32 to vector<8x128xf32>
    %786 = arith.addf %785, %784 : vector<8x128xf32>
    %787 = arith.divf %785, %786 : vector<8x128xf32>
    %788 = vector.extract_strided_slice %771 {offsets = [0, 256], sizes = [8, 128], strides = [1, 1]} : vector<8x384xf32> to vector<8x128xf32>
    %789 = vector.extract_strided_slice %770 {offsets = [0, 256], sizes = [8, 128], strides = [1, 1]} : vector<8x384xf32> to vector<8x128xf32>
    %790 = arith.mulf %779, %789 : vector<8x128xf32>
    %791 = arith.addf %788, %790 : vector<8x128xf32>
    %792 = math.tanh %791 : vector<8x128xf32>
    %cst_250 = arith.constant 1.000000e+00 : f32
    %793 = vector.broadcast %cst_250 : f32 to vector<8x128xf32>
    %794 = arith.subf %793, %787 : vector<8x128xf32>
    %795 = arith.mulf %794, %792 : vector<8x128xf32>
    %796 = arith.mulf %787, %726 : vector<8x128xf32>
    %797 = arith.addf %795, %796 : vector<8x128xf32>
    %798 = arith.select %28, %797, %726 : vector<8x128xi1>, vector<8x128xf32>
    %cst_251 = arith.constant 0.000000e+00 : f32
    %799 = vector.broadcast %cst_251 : f32 to vector<8x128xf32>
    %800 = arith.select %28, %798, %799 : vector<8x128xi1>, vector<8x128xf32>
    %c8_252 = arith.constant 8 : index
    %c0_253 = arith.constant 0 : index
    %801 = vector.load %arg18[%c8_252, %c0_253] : memref<64x128xf32, #tpu.memory_space<vmem>>, vector<8x128xf32>
    tpu.vector_store %arg18[%c8_252, %c0_253], %765 {strides = array<i32>} : memref<64x128xf32, #tpu.memory_space<vmem>>, vector<8x128xf32>,
    %c48_254 = arith.constant 48 : index
    %c0_255 = arith.constant 0 : index
    %802 = vector.load %arg23[%c48_254, %c0_255] : memref<64x128xf32, #tpu.memory_space<vmem>>, vector<8x128xf32>
    tpu.vector_store %arg23[%c48_254, %c0_255], %800 {strides = array<i32>} : memref<64x128xf32, #tpu.memory_space<vmem>>, vector<8x128xf32>,
    %803 = arith.truncf %763 : vector<8x128xf32> to vector<8x128xbf16>
    %c0_256 = arith.constant 0 : index
    %c0_257 = arith.constant 0 : index
    %804 = vector.load %arg11[%c0_256, %c0_257] : memref<128x384xbf16, #tpu.memory_space<vmem>>, vector<128x384xbf16>
    %cst_258 = arith.constant dense<0.000000e+00> : vector<8x384xf32>
    %805 = tpu.matmul %803, %804, %cst_258 {dimension_numbers = #tpu.dot_dimension_numbers<[1], [0], [0], [1], [0, 0, 1, 1], [], []>} : vector<8x128xbf16>, vector<128x384xbf16>, vector<8x384xf32> -> vector<8x384xf32>
    %806 = vector.broadcast %655 : vector<1x384xf32> to vector<8x384xf32>
    %807 = arith.addf %805, %806 : vector<8x384xf32>
    %c16_259 = arith.constant 16 : index
    %c0_260 = arith.constant 0 : index
    %808 = vector.load %arg20[%c16_259, %c0_260] : memref<64x384xf32, #tpu.memory_space<vmem>>, vector<8x384xf32>
    %809 = vector.extract_strided_slice %808 {offsets = [0, 0], sizes = [8, 128], strides = [1, 1]} : vector<8x384xf32> to vector<8x128xf32>
    %810 = vector.extract_strided_slice %807 {offsets = [0, 0], sizes = [8, 128], strides = [1, 1]} : vector<8x384xf32> to vector<8x128xf32>
    %811 = arith.addf %809, %810 : vector<8x128xf32>
    %812 = arith.negf %811 : vector<8x128xf32>
    %813 = math.exp %812 : vector<8x128xf32>
    %cst_261 = arith.constant 1.000000e+00 : f32
    %814 = vector.broadcast %cst_261 : f32 to vector<8x128xf32>
    %815 = arith.addf %814, %813 : vector<8x128xf32>
    %816 = arith.divf %814, %815 : vector<8x128xf32>
    %817 = vector.extract_strided_slice %808 {offsets = [0, 128], sizes = [8, 128], strides = [1, 1]} : vector<8x384xf32> to vector<8x128xf32>
    %818 = vector.extract_strided_slice %807 {offsets = [0, 128], sizes = [8, 128], strides = [1, 1]} : vector<8x384xf32> to vector<8x128xf32>
    %819 = arith.addf %817, %818 : vector<8x128xf32>
    %820 = arith.negf %819 : vector<8x128xf32>
    %821 = math.exp %820 : vector<8x128xf32>
    %cst_262 = arith.constant 1.000000e+00 : f32
    %822 = vector.broadcast %cst_262 : f32 to vector<8x128xf32>
    %823 = arith.addf %822, %821 : vector<8x128xf32>
    %824 = arith.divf %822, %823 : vector<8x128xf32>
    %825 = vector.extract_strided_slice %808 {offsets = [0, 256], sizes = [8, 128], strides = [1, 1]} : vector<8x384xf32> to vector<8x128xf32>
    %826 = vector.extract_strided_slice %807 {offsets = [0, 256], sizes = [8, 128], strides = [1, 1]} : vector<8x384xf32> to vector<8x128xf32>
    %827 = arith.mulf %816, %826 : vector<8x128xf32>
    %828 = arith.addf %825, %827 : vector<8x128xf32>
    %829 = math.tanh %828 : vector<8x128xf32>
    %cst_263 = arith.constant 1.000000e+00 : f32
    %830 = vector.broadcast %cst_263 : f32 to vector<8x128xf32>
    %831 = arith.subf %830, %824 : vector<8x128xf32>
    %832 = arith.mulf %831, %829 : vector<8x128xf32>
    %833 = arith.mulf %824, %763 : vector<8x128xf32>
    %834 = arith.addf %832, %833 : vector<8x128xf32>
    %835 = arith.select %12, %834, %763 : vector<8x128xi1>, vector<8x128xf32>
    %cst_264 = arith.constant 0.000000e+00 : f32
    %836 = vector.broadcast %cst_264 : f32 to vector<8x128xf32>
    %837 = arith.select %12, %835, %836 : vector<8x128xi1>, vector<8x128xf32>
    %838 = arith.truncf %798 : vector<8x128xf32> to vector<8x128xbf16>
    %c0_265 = arith.constant 0 : index
    %c0_266 = arith.constant 0 : index
    %839 = vector.load %arg15[%c0_265, %c0_266] : memref<128x384xbf16, #tpu.memory_space<vmem>>, vector<128x384xbf16>
    %cst_267 = arith.constant dense<0.000000e+00> : vector<8x384xf32>
    %840 = tpu.matmul %838, %839, %cst_267 {dimension_numbers = #tpu.dot_dimension_numbers<[1], [0], [0], [1], [0, 0, 1, 1], [], []>} : vector<8x128xbf16>, vector<128x384xbf16>, vector<8x384xf32> -> vector<8x384xf32>
    %841 = vector.broadcast %656 : vector<1x384xf32> to vector<8x384xf32>
    %842 = arith.addf %840, %841 : vector<8x384xf32>
    %c40_268 = arith.constant 40 : index
    %c0_269 = arith.constant 0 : index
    %843 = vector.load %arg21[%c40_268, %c0_269] : memref<64x384xf32, #tpu.memory_space<vmem>>, vector<8x384xf32>
    %844 = vector.extract_strided_slice %843 {offsets = [0, 0], sizes = [8, 128], strides = [1, 1]} : vector<8x384xf32> to vector<8x128xf32>
    %845 = vector.extract_strided_slice %842 {offsets = [0, 0], sizes = [8, 128], strides = [1, 1]} : vector<8x384xf32> to vector<8x128xf32>
    %846 = arith.addf %844, %845 : vector<8x128xf32>
    %847 = arith.negf %846 : vector<8x128xf32>
    %848 = math.exp %847 : vector<8x128xf32>
    %cst_270 = arith.constant 1.000000e+00 : f32
    %849 = vector.broadcast %cst_270 : f32 to vector<8x128xf32>
    %850 = arith.addf %849, %848 : vector<8x128xf32>
    %851 = arith.divf %849, %850 : vector<8x128xf32>
    %852 = vector.extract_strided_slice %843 {offsets = [0, 128], sizes = [8, 128], strides = [1, 1]} : vector<8x384xf32> to vector<8x128xf32>
    %853 = vector.extract_strided_slice %842 {offsets = [0, 128], sizes = [8, 128], strides = [1, 1]} : vector<8x384xf32> to vector<8x128xf32>
    %854 = arith.addf %852, %853 : vector<8x128xf32>
    %855 = arith.negf %854 : vector<8x128xf32>
    %856 = math.exp %855 : vector<8x128xf32>
    %cst_271 = arith.constant 1.000000e+00 : f32
    %857 = vector.broadcast %cst_271 : f32 to vector<8x128xf32>
    %858 = arith.addf %857, %856 : vector<8x128xf32>
    %859 = arith.divf %857, %858 : vector<8x128xf32>
    %860 = vector.extract_strided_slice %843 {offsets = [0, 256], sizes = [8, 128], strides = [1, 1]} : vector<8x384xf32> to vector<8x128xf32>
    %861 = vector.extract_strided_slice %842 {offsets = [0, 256], sizes = [8, 128], strides = [1, 1]} : vector<8x384xf32> to vector<8x128xf32>
    %862 = arith.mulf %851, %861 : vector<8x128xf32>
    %863 = arith.addf %860, %862 : vector<8x128xf32>
    %864 = math.tanh %863 : vector<8x128xf32>
    %cst_272 = arith.constant 1.000000e+00 : f32
    %865 = vector.broadcast %cst_272 : f32 to vector<8x128xf32>
    %866 = arith.subf %865, %859 : vector<8x128xf32>
    %867 = arith.mulf %866, %864 : vector<8x128xf32>
    %868 = arith.mulf %859, %798 : vector<8x128xf32>
    %869 = arith.addf %867, %868 : vector<8x128xf32>
    %870 = arith.select %24, %869, %798 : vector<8x128xi1>, vector<8x128xf32>
    %cst_273 = arith.constant 0.000000e+00 : f32
    %871 = vector.broadcast %cst_273 : f32 to vector<8x128xf32>
    %872 = arith.select %24, %870, %871 : vector<8x128xi1>, vector<8x128xf32>
    %c16_274 = arith.constant 16 : index
    %c0_275 = arith.constant 0 : index
    %873 = vector.load %arg18[%c16_274, %c0_275] : memref<64x128xf32, #tpu.memory_space<vmem>>, vector<8x128xf32>
    tpu.vector_store %arg18[%c16_274, %c0_275], %837 {strides = array<i32>} : memref<64x128xf32, #tpu.memory_space<vmem>>, vector<8x128xf32>,
    %c40_276 = arith.constant 40 : index
    %c0_277 = arith.constant 0 : index
    %874 = vector.load %arg23[%c40_276, %c0_277] : memref<64x128xf32, #tpu.memory_space<vmem>>, vector<8x128xf32>
    tpu.vector_store %arg23[%c40_276, %c0_277], %872 {strides = array<i32>} : memref<64x128xf32, #tpu.memory_space<vmem>>, vector<8x128xf32>,
    %875 = arith.truncf %835 : vector<8x128xf32> to vector<8x128xbf16>
    %c0_278 = arith.constant 0 : index
    %c0_279 = arith.constant 0 : index
    %876 = vector.load %arg11[%c0_278, %c0_279] : memref<128x384xbf16, #tpu.memory_space<vmem>>, vector<128x384xbf16>
    %cst_280 = arith.constant dense<0.000000e+00> : vector<8x384xf32>
    %877 = tpu.matmul %875, %876, %cst_280 {dimension_numbers = #tpu.dot_dimension_numbers<[1], [0], [0], [1], [0, 0, 1, 1], [], []>} : vector<8x128xbf16>, vector<128x384xbf16>, vector<8x384xf32> -> vector<8x384xf32>
    %878 = vector.broadcast %655 : vector<1x384xf32> to vector<8x384xf32>
    %879 = arith.addf %877, %878 : vector<8x384xf32>
    %c24_281 = arith.constant 24 : index
    %c0_282 = arith.constant 0 : index
    %880 = vector.load %arg20[%c24_281, %c0_282] : memref<64x384xf32, #tpu.memory_space<vmem>>, vector<8x384xf32>
    %881 = vector.extract_strided_slice %880 {offsets = [0, 0], sizes = [8, 128], strides = [1, 1]} : vector<8x384xf32> to vector<8x128xf32>
    %882 = vector.extract_strided_slice %879 {offsets = [0, 0], sizes = [8, 128], strides = [1, 1]} : vector<8x384xf32> to vector<8x128xf32>
    %883 = arith.addf %881, %882 : vector<8x128xf32>
    %884 = arith.negf %883 : vector<8x128xf32>
    %885 = math.exp %884 : vector<8x128xf32>
    %cst_283 = arith.constant 1.000000e+00 : f32
    %886 = vector.broadcast %cst_283 : f32 to vector<8x128xf32>
    %887 = arith.addf %886, %885 : vector<8x128xf32>
    %888 = arith.divf %886, %887 : vector<8x128xf32>
    %889 = vector.extract_strided_slice %880 {offsets = [0, 128], sizes = [8, 128], strides = [1, 1]} : vector<8x384xf32> to vector<8x128xf32>
    %890 = vector.extract_strided_slice %879 {offsets = [0, 128], sizes = [8, 128], strides = [1, 1]} : vector<8x384xf32> to vector<8x128xf32>
    %891 = arith.addf %889, %890 : vector<8x128xf32>
    %892 = arith.negf %891 : vector<8x128xf32>
    %893 = math.exp %892 : vector<8x128xf32>
    %cst_284 = arith.constant 1.000000e+00 : f32
    %894 = vector.broadcast %cst_284 : f32 to vector<8x128xf32>
    %895 = arith.addf %894, %893 : vector<8x128xf32>
    %896 = arith.divf %894, %895 : vector<8x128xf32>
    %897 = vector.extract_strided_slice %880 {offsets = [0, 256], sizes = [8, 128], strides = [1, 1]} : vector<8x384xf32> to vector<8x128xf32>
    %898 = vector.extract_strided_slice %879 {offsets = [0, 256], sizes = [8, 128], strides = [1, 1]} : vector<8x384xf32> to vector<8x128xf32>
    %899 = arith.mulf %888, %898 : vector<8x128xf32>
    %900 = arith.addf %897, %899 : vector<8x128xf32>
    %901 = math.tanh %900 : vector<8x128xf32>
    %cst_285 = arith.constant 1.000000e+00 : f32
    %902 = vector.broadcast %cst_285 : f32 to vector<8x128xf32>
    %903 = arith.subf %902, %896 : vector<8x128xf32>
    %904 = arith.mulf %903, %901 : vector<8x128xf32>
    %905 = arith.mulf %896, %835 : vector<8x128xf32>
    %906 = arith.addf %904, %905 : vector<8x128xf32>
    %907 = arith.select %16, %906, %835 : vector<8x128xi1>, vector<8x128xf32>
    %cst_286 = arith.constant 0.000000e+00 : f32
    %908 = vector.broadcast %cst_286 : f32 to vector<8x128xf32>
    %909 = arith.select %16, %907, %908 : vector<8x128xi1>, vector<8x128xf32>
    %910 = arith.truncf %870 : vector<8x128xf32> to vector<8x128xbf16>
    %c0_287 = arith.constant 0 : index
    %c0_288 = arith.constant 0 : index
    %911 = vector.load %arg15[%c0_287, %c0_288] : memref<128x384xbf16, #tpu.memory_space<vmem>>, vector<128x384xbf16>
    %cst_289 = arith.constant dense<0.000000e+00> : vector<8x384xf32>
    %912 = tpu.matmul %910, %911, %cst_289 {dimension_numbers = #tpu.dot_dimension_numbers<[1], [0], [0], [1], [0, 0, 1, 1], [], []>} : vector<8x128xbf16>, vector<128x384xbf16>, vector<8x384xf32> -> vector<8x384xf32>
    %913 = vector.broadcast %656 : vector<1x384xf32> to vector<8x384xf32>
    %914 = arith.addf %912, %913 : vector<8x384xf32>
    %c32_290 = arith.constant 32 : index
    %c0_291 = arith.constant 0 : index
    %915 = vector.load %arg21[%c32_290, %c0_291] : memref<64x384xf32, #tpu.memory_space<vmem>>, vector<8x384xf32>
    %916 = vector.extract_strided_slice %915 {offsets = [0, 0], sizes = [8, 128], strides = [1, 1]} : vector<8x384xf32> to vector<8x128xf32>
    %917 = vector.extract_strided_slice %914 {offsets = [0, 0], sizes = [8, 128], strides = [1, 1]} : vector<8x384xf32> to vector<8x128xf32>
    %918 = arith.addf %916, %917 : vector<8x128xf32>
    %919 = arith.negf %918 : vector<8x128xf32>
    %920 = math.exp %919 : vector<8x128xf32>
    %cst_292 = arith.constant 1.000000e+00 : f32
    %921 = vector.broadcast %cst_292 : f32 to vector<8x128xf32>
    %922 = arith.addf %921, %920 : vector<8x128xf32>
    %923 = arith.divf %921, %922 : vector<8x128xf32>
    %924 = vector.extract_strided_slice %915 {offsets = [0, 128], sizes = [8, 128], strides = [1, 1]} : vector<8x384xf32> to vector<8x128xf32>
    %925 = vector.extract_strided_slice %914 {offsets = [0, 128], sizes = [8, 128], strides = [1, 1]} : vector<8x384xf32> to vector<8x128xf32>
    %926 = arith.addf %924, %925 : vector<8x128xf32>
    %927 = arith.negf %926 : vector<8x128xf32>
    %928 = math.exp %927 : vector<8x128xf32>
    %cst_293 = arith.constant 1.000000e+00 : f32
    %929 = vector.broadcast %cst_293 : f32 to vector<8x128xf32>
    %930 = arith.addf %929, %928 : vector<8x128xf32>
    %931 = arith.divf %929, %930 : vector<8x128xf32>
    %932 = vector.extract_strided_slice %915 {offsets = [0, 256], sizes = [8, 128], strides = [1, 1]} : vector<8x384xf32> to vector<8x128xf32>
    %933 = vector.extract_strided_slice %914 {offsets = [0, 256], sizes = [8, 128], strides = [1, 1]} : vector<8x384xf32> to vector<8x128xf32>
    %934 = arith.mulf %923, %933 : vector<8x128xf32>
    %935 = arith.addf %932, %934 : vector<8x128xf32>
    %936 = math.tanh %935 : vector<8x128xf32>
    %cst_294 = arith.constant 1.000000e+00 : f32
    %937 = vector.broadcast %cst_294 : f32 to vector<8x128xf32>
    %938 = arith.subf %937, %931 : vector<8x128xf32>
    %939 = arith.mulf %938, %936 : vector<8x128xf32>
    %940 = arith.mulf %931, %870 : vector<8x128xf32>
    %941 = arith.addf %939, %940 : vector<8x128xf32>
    %942 = arith.select %20, %941, %870 : vector<8x128xi1>, vector<8x128xf32>
    %cst_295 = arith.constant 0.000000e+00 : f32
    %943 = vector.broadcast %cst_295 : f32 to vector<8x128xf32>
    %944 = arith.select %20, %942, %943 : vector<8x128xi1>, vector<8x128xf32>
    %c24_296 = arith.constant 24 : index
    %c0_297 = arith.constant 0 : index
    %945 = vector.load %arg18[%c24_296, %c0_297] : memref<64x128xf32, #tpu.memory_space<vmem>>, vector<8x128xf32>
    tpu.vector_store %arg18[%c24_296, %c0_297], %909 {strides = array<i32>} : memref<64x128xf32, #tpu.memory_space<vmem>>, vector<8x128xf32>,
    %c32_298 = arith.constant 32 : index
    %c0_299 = arith.constant 0 : index
    %946 = vector.load %arg23[%c32_298, %c0_299] : memref<64x128xf32, #tpu.memory_space<vmem>>, vector<8x128xf32>
    tpu.vector_store %arg23[%c32_298, %c0_299], %944 {strides = array<i32>} : memref<64x128xf32, #tpu.memory_space<vmem>>, vector<8x128xf32>,
    %947 = arith.truncf %907 : vector<8x128xf32> to vector<8x128xbf16>
    %c0_300 = arith.constant 0 : index
    %c0_301 = arith.constant 0 : index
    %948 = vector.load %arg11[%c0_300, %c0_301] : memref<128x384xbf16, #tpu.memory_space<vmem>>, vector<128x384xbf16>
    %cst_302 = arith.constant dense<0.000000e+00> : vector<8x384xf32>
    %949 = tpu.matmul %947, %948, %cst_302 {dimension_numbers = #tpu.dot_dimension_numbers<[1], [0], [0], [1], [0, 0, 1, 1], [], []>} : vector<8x128xbf16>, vector<128x384xbf16>, vector<8x384xf32> -> vector<8x384xf32>
    %950 = vector.broadcast %655 : vector<1x384xf32> to vector<8x384xf32>
    %951 = arith.addf %949, %950 : vector<8x384xf32>
    %c32_303 = arith.constant 32 : index
    %c0_304 = arith.constant 0 : index
    %952 = vector.load %arg20[%c32_303, %c0_304] : memref<64x384xf32, #tpu.memory_space<vmem>>, vector<8x384xf32>
    %953 = vector.extract_strided_slice %952 {offsets = [0, 0], sizes = [8, 128], strides = [1, 1]} : vector<8x384xf32> to vector<8x128xf32>
    %954 = vector.extract_strided_slice %951 {offsets = [0, 0], sizes = [8, 128], strides = [1, 1]} : vector<8x384xf32> to vector<8x128xf32>
    %955 = arith.addf %953, %954 : vector<8x128xf32>
    %956 = arith.negf %955 : vector<8x128xf32>
    %957 = math.exp %956 : vector<8x128xf32>
    %cst_305 = arith.constant 1.000000e+00 : f32
    %958 = vector.broadcast %cst_305 : f32 to vector<8x128xf32>
    %959 = arith.addf %958, %957 : vector<8x128xf32>
    %960 = arith.divf %958, %959 : vector<8x128xf32>
    %961 = vector.extract_strided_slice %952 {offsets = [0, 128], sizes = [8, 128], strides = [1, 1]} : vector<8x384xf32> to vector<8x128xf32>
    %962 = vector.extract_strided_slice %951 {offsets = [0, 128], sizes = [8, 128], strides = [1, 1]} : vector<8x384xf32> to vector<8x128xf32>
    %963 = arith.addf %961, %962 : vector<8x128xf32>
    %964 = arith.negf %963 : vector<8x128xf32>
    %965 = math.exp %964 : vector<8x128xf32>
    %cst_306 = arith.constant 1.000000e+00 : f32
    %966 = vector.broadcast %cst_306 : f32 to vector<8x128xf32>
    %967 = arith.addf %966, %965 : vector<8x128xf32>
    %968 = arith.divf %966, %967 : vector<8x128xf32>
    %969 = vector.extract_strided_slice %952 {offsets = [0, 256], sizes = [8, 128], strides = [1, 1]} : vector<8x384xf32> to vector<8x128xf32>
    %970 = vector.extract_strided_slice %951 {offsets = [0, 256], sizes = [8, 128], strides = [1, 1]} : vector<8x384xf32> to vector<8x128xf32>
    %971 = arith.mulf %960, %970 : vector<8x128xf32>
    %972 = arith.addf %969, %971 : vector<8x128xf32>
    %973 = math.tanh %972 : vector<8x128xf32>
    %cst_307 = arith.constant 1.000000e+00 : f32
    %974 = vector.broadcast %cst_307 : f32 to vector<8x128xf32>
    %975 = arith.subf %974, %968 : vector<8x128xf32>
    %976 = arith.mulf %975, %973 : vector<8x128xf32>
    %977 = arith.mulf %968, %907 : vector<8x128xf32>
    %978 = arith.addf %976, %977 : vector<8x128xf32>
    %979 = arith.select %20, %978, %907 : vector<8x128xi1>, vector<8x128xf32>
    %cst_308 = arith.constant 0.000000e+00 : f32
    %980 = vector.broadcast %cst_308 : f32 to vector<8x128xf32>
    %981 = arith.select %20, %979, %980 : vector<8x128xi1>, vector<8x128xf32>
    %982 = arith.truncf %942 : vector<8x128xf32> to vector<8x128xbf16>
    %c0_309 = arith.constant 0 : index
    %c0_310 = arith.constant 0 : index
    %983 = vector.load %arg15[%c0_309, %c0_310] : memref<128x384xbf16, #tpu.memory_space<vmem>>, vector<128x384xbf16>
    %cst_311 = arith.constant dense<0.000000e+00> : vector<8x384xf32>
    %984 = tpu.matmul %982, %983, %cst_311 {dimension_numbers = #tpu.dot_dimension_numbers<[1], [0], [0], [1], [0, 0, 1, 1], [], []>} : vector<8x128xbf16>, vector<128x384xbf16>, vector<8x384xf32> -> vector<8x384xf32>
    %985 = vector.broadcast %656 : vector<1x384xf32> to vector<8x384xf32>
    %986 = arith.addf %984, %985 : vector<8x384xf32>
    %c24_312 = arith.constant 24 : index
    %c0_313 = arith.constant 0 : index
    %987 = vector.load %arg21[%c24_312, %c0_313] : memref<64x384xf32, #tpu.memory_space<vmem>>, vector<8x384xf32>
    %988 = vector.extract_strided_slice %987 {offsets = [0, 0], sizes = [8, 128], strides = [1, 1]} : vector<8x384xf32> to vector<8x128xf32>
    %989 = vector.extract_strided_slice %986 {offsets = [0, 0], sizes = [8, 128], strides = [1, 1]} : vector<8x384xf32> to vector<8x128xf32>
    %990 = arith.addf %988, %989 : vector<8x128xf32>
    %991 = arith.negf %990 : vector<8x128xf32>
    %992 = math.exp %991 : vector<8x128xf32>
    %cst_314 = arith.constant 1.000000e+00 : f32
    %993 = vector.broadcast %cst_314 : f32 to vector<8x128xf32>
    %994 = arith.addf %993, %992 : vector<8x128xf32>
    %995 = arith.divf %993, %994 : vector<8x128xf32>
    %996 = vector.extract_strided_slice %987 {offsets = [0, 128], sizes = [8, 128], strides = [1, 1]} : vector<8x384xf32> to vector<8x128xf32>
    %997 = vector.extract_strided_slice %986 {offsets = [0, 128], sizes = [8, 128], strides = [1, 1]} : vector<8x384xf32> to vector<8x128xf32>
    %998 = arith.addf %996, %997 : vector<8x128xf32>
    %999 = arith.negf %998 : vector<8x128xf32>
    %1000 = math.exp %999 : vector<8x128xf32>
    %cst_315 = arith.constant 1.000000e+00 : f32
    %1001 = vector.broadcast %cst_315 : f32 to vector<8x128xf32>
    %1002 = arith.addf %1001, %1000 : vector<8x128xf32>
    %1003 = arith.divf %1001, %1002 : vector<8x128xf32>
    %1004 = vector.extract_strided_slice %987 {offsets = [0, 256], sizes = [8, 128], strides = [1, 1]} : vector<8x384xf32> to vector<8x128xf32>
    %1005 = vector.extract_strided_slice %986 {offsets = [0, 256], sizes = [8, 128], strides = [1, 1]} : vector<8x384xf32> to vector<8x128xf32>
    %1006 = arith.mulf %995, %1005 : vector<8x128xf32>
    %1007 = arith.addf %1004, %1006 : vector<8x128xf32>
    %1008 = math.tanh %1007 : vector<8x128xf32>
    %cst_316 = arith.constant 1.000000e+00 : f32
    %1009 = vector.broadcast %cst_316 : f32 to vector<8x128xf32>
    %1010 = arith.subf %1009, %1003 : vector<8x128xf32>
    %1011 = arith.mulf %1010, %1008 : vector<8x128xf32>
    %1012 = arith.mulf %1003, %942 : vector<8x128xf32>
    %1013 = arith.addf %1011, %1012 : vector<8x128xf32>
    %1014 = arith.select %16, %1013, %942 : vector<8x128xi1>, vector<8x128xf32>
    %cst_317 = arith.constant 0.000000e+00 : f32
    %1015 = vector.broadcast %cst_317 : f32 to vector<8x128xf32>
    %1016 = arith.select %16, %1014, %1015 : vector<8x128xi1>, vector<8x128xf32>
    %c32_318 = arith.constant 32 : index
    %c0_319 = arith.constant 0 : index
    %1017 = vector.load %arg18[%c32_318, %c0_319] : memref<64x128xf32, #tpu.memory_space<vmem>>, vector<8x128xf32>
    tpu.vector_store %arg18[%c32_318, %c0_319], %981 {strides = array<i32>} : memref<64x128xf32, #tpu.memory_space<vmem>>, vector<8x128xf32>,
    %c24_320 = arith.constant 24 : index
    %c0_321 = arith.constant 0 : index
    %1018 = vector.load %arg23[%c24_320, %c0_321] : memref<64x128xf32, #tpu.memory_space<vmem>>, vector<8x128xf32>
    tpu.vector_store %arg23[%c24_320, %c0_321], %1016 {strides = array<i32>} : memref<64x128xf32, #tpu.memory_space<vmem>>, vector<8x128xf32>,
    %1019 = arith.truncf %979 : vector<8x128xf32> to vector<8x128xbf16>
    %c0_322 = arith.constant 0 : index
    %c0_323 = arith.constant 0 : index
    %1020 = vector.load %arg11[%c0_322, %c0_323] : memref<128x384xbf16, #tpu.memory_space<vmem>>, vector<128x384xbf16>
    %cst_324 = arith.constant dense<0.000000e+00> : vector<8x384xf32>
    %1021 = tpu.matmul %1019, %1020, %cst_324 {dimension_numbers = #tpu.dot_dimension_numbers<[1], [0], [0], [1], [0, 0, 1, 1], [], []>} : vector<8x128xbf16>, vector<128x384xbf16>, vector<8x384xf32> -> vector<8x384xf32>
    %1022 = vector.broadcast %655 : vector<1x384xf32> to vector<8x384xf32>
    %1023 = arith.addf %1021, %1022 : vector<8x384xf32>
    %c40_325 = arith.constant 40 : index
    %c0_326 = arith.constant 0 : index
    %1024 = vector.load %arg20[%c40_325, %c0_326] : memref<64x384xf32, #tpu.memory_space<vmem>>, vector<8x384xf32>
    %1025 = vector.extract_strided_slice %1024 {offsets = [0, 0], sizes = [8, 128], strides = [1, 1]} : vector<8x384xf32> to vector<8x128xf32>
    %1026 = vector.extract_strided_slice %1023 {offsets = [0, 0], sizes = [8, 128], strides = [1, 1]} : vector<8x384xf32> to vector<8x128xf32>
    %1027 = arith.addf %1025, %1026 : vector<8x128xf32>
    %1028 = arith.negf %1027 : vector<8x128xf32>
    %1029 = math.exp %1028 : vector<8x128xf32>
    %cst_327 = arith.constant 1.000000e+00 : f32
    %1030 = vector.broadcast %cst_327 : f32 to vector<8x128xf32>
    %1031 = arith.addf %1030, %1029 : vector<8x128xf32>
    %1032 = arith.divf %1030, %1031 : vector<8x128xf32>
    %1033 = vector.extract_strided_slice %1024 {offsets = [0, 128], sizes = [8, 128], strides = [1, 1]} : vector<8x384xf32> to vector<8x128xf32>
    %1034 = vector.extract_strided_slice %1023 {offsets = [0, 128], sizes = [8, 128], strides = [1, 1]} : vector<8x384xf32> to vector<8x128xf32>
    %1035 = arith.addf %1033, %1034 : vector<8x128xf32>
    %1036 = arith.negf %1035 : vector<8x128xf32>
    %1037 = math.exp %1036 : vector<8x128xf32>
    %cst_328 = arith.constant 1.000000e+00 : f32
    %1038 = vector.broadcast %cst_328 : f32 to vector<8x128xf32>
    %1039 = arith.addf %1038, %1037 : vector<8x128xf32>
    %1040 = arith.divf %1038, %1039 : vector<8x128xf32>
    %1041 = vector.extract_strided_slice %1024 {offsets = [0, 256], sizes = [8, 128], strides = [1, 1]} : vector<8x384xf32> to vector<8x128xf32>
    %1042 = vector.extract_strided_slice %1023 {offsets = [0, 256], sizes = [8, 128], strides = [1, 1]} : vector<8x384xf32> to vector<8x128xf32>
    %1043 = arith.mulf %1032, %1042 : vector<8x128xf32>
    %1044 = arith.addf %1041, %1043 : vector<8x128xf32>
    %1045 = math.tanh %1044 : vector<8x128xf32>
    %cst_329 = arith.constant 1.000000e+00 : f32
    %1046 = vector.broadcast %cst_329 : f32 to vector<8x128xf32>
    %1047 = arith.subf %1046, %1040 : vector<8x128xf32>
    %1048 = arith.mulf %1047, %1045 : vector<8x128xf32>
    %1049 = arith.mulf %1040, %979 : vector<8x128xf32>
    %1050 = arith.addf %1048, %1049 : vector<8x128xf32>
    %1051 = arith.select %24, %1050, %979 : vector<8x128xi1>, vector<8x128xf32>
    %cst_330 = arith.constant 0.000000e+00 : f32
    %1052 = vector.broadcast %cst_330 : f32 to vector<8x128xf32>
    %1053 = arith.select %24, %1051, %1052 : vector<8x128xi1>, vector<8x128xf32>
    %1054 = arith.truncf %1014 : vector<8x128xf32> to vector<8x128xbf16>
    %c0_331 = arith.constant 0 : index
    %c0_332 = arith.constant 0 : index
    %1055 = vector.load %arg15[%c0_331, %c0_332] : memref<128x384xbf16, #tpu.memory_space<vmem>>, vector<128x384xbf16>
    %cst_333 = arith.constant dense<0.000000e+00> : vector<8x384xf32>
    %1056 = tpu.matmul %1054, %1055, %cst_333 {dimension_numbers = #tpu.dot_dimension_numbers<[1], [0], [0], [1], [0, 0, 1, 1], [], []>} : vector<8x128xbf16>, vector<128x384xbf16>, vector<8x384xf32> -> vector<8x384xf32>
    %1057 = vector.broadcast %656 : vector<1x384xf32> to vector<8x384xf32>
    %1058 = arith.addf %1056, %1057 : vector<8x384xf32>
    %c16_334 = arith.constant 16 : index
    %c0_335 = arith.constant 0 : index
    %1059 = vector.load %arg21[%c16_334, %c0_335] : memref<64x384xf32, #tpu.memory_space<vmem>>, vector<8x384xf32>
    %1060 = vector.extract_strided_slice %1059 {offsets = [0, 0], sizes = [8, 128], strides = [1, 1]} : vector<8x384xf32> to vector<8x128xf32>
    %1061 = vector.extract_strided_slice %1058 {offsets = [0, 0], sizes = [8, 128], strides = [1, 1]} : vector<8x384xf32> to vector<8x128xf32>
    %1062 = arith.addf %1060, %1061 : vector<8x128xf32>
    %1063 = arith.negf %1062 : vector<8x128xf32>
    %1064 = math.exp %1063 : vector<8x128xf32>
    %cst_336 = arith.constant 1.000000e+00 : f32
    %1065 = vector.broadcast %cst_336 : f32 to vector<8x128xf32>
    %1066 = arith.addf %1065, %1064 : vector<8x128xf32>
    %1067 = arith.divf %1065, %1066 : vector<8x128xf32>
    %1068 = vector.extract_strided_slice %1059 {offsets = [0, 128], sizes = [8, 128], strides = [1, 1]} : vector<8x384xf32> to vector<8x128xf32>
    %1069 = vector.extract_strided_slice %1058 {offsets = [0, 128], sizes = [8, 128], strides = [1, 1]} : vector<8x384xf32> to vector<8x128xf32>
    %1070 = arith.addf %1068, %1069 : vector<8x128xf32>
    %1071 = arith.negf %1070 : vector<8x128xf32>
    %1072 = math.exp %1071 : vector<8x128xf32>
    %cst_337 = arith.constant 1.000000e+00 : f32
    %1073 = vector.broadcast %cst_337 : f32 to vector<8x128xf32>
    %1074 = arith.addf %1073, %1072 : vector<8x128xf32>
    %1075 = arith.divf %1073, %1074 : vector<8x128xf32>
    %1076 = vector.extract_strided_slice %1059 {offsets = [0, 256], sizes = [8, 128], strides = [1, 1]} : vector<8x384xf32> to vector<8x128xf32>
    %1077 = vector.extract_strided_slice %1058 {offsets = [0, 256], sizes = [8, 128], strides = [1, 1]} : vector<8x384xf32> to vector<8x128xf32>
    %1078 = arith.mulf %1067, %1077 : vector<8x128xf32>
    %1079 = arith.addf %1076, %1078 : vector<8x128xf32>
    %1080 = math.tanh %1079 : vector<8x128xf32>
    %cst_338 = arith.constant 1.000000e+00 : f32
    %1081 = vector.broadcast %cst_338 : f32 to vector<8x128xf32>
    %1082 = arith.subf %1081, %1075 : vector<8x128xf32>
    %1083 = arith.mulf %1082, %1080 : vector<8x128xf32>
    %1084 = arith.mulf %1075, %1014 : vector<8x128xf32>
    %1085 = arith.addf %1083, %1084 : vector<8x128xf32>
    %1086 = arith.select %12, %1085, %1014 : vector<8x128xi1>, vector<8x128xf32>
    %cst_339 = arith.constant 0.000000e+00 : f32
    %1087 = vector.broadcast %cst_339 : f32 to vector<8x128xf32>
    %1088 = arith.select %12, %1086, %1087 : vector<8x128xi1>, vector<8x128xf32>
    %c40_340 = arith.constant 40 : index
    %c0_341 = arith.constant 0 : index
    %1089 = vector.load %arg18[%c40_340, %c0_341] : memref<64x128xf32, #tpu.memory_space<vmem>>, vector<8x128xf32>
    tpu.vector_store %arg18[%c40_340, %c0_341], %1053 {strides = array<i32>} : memref<64x128xf32, #tpu.memory_space<vmem>>, vector<8x128xf32>,
    %c16_342 = arith.constant 16 : index
    %c0_343 = arith.constant 0 : index
    %1090 = vector.load %arg23[%c16_342, %c0_343] : memref<64x128xf32, #tpu.memory_space<vmem>>, vector<8x128xf32>
    tpu.vector_store %arg23[%c16_342, %c0_343], %1088 {strides = array<i32>} : memref<64x128xf32, #tpu.memory_space<vmem>>, vector<8x128xf32>,
    %1091 = arith.truncf %1051 : vector<8x128xf32> to vector<8x128xbf16>
    %c0_344 = arith.constant 0 : index
    %c0_345 = arith.constant 0 : index
    %1092 = vector.load %arg11[%c0_344, %c0_345] : memref<128x384xbf16, #tpu.memory_space<vmem>>, vector<128x384xbf16>
    %cst_346 = arith.constant dense<0.000000e+00> : vector<8x384xf32>
    %1093 = tpu.matmul %1091, %1092, %cst_346 {dimension_numbers = #tpu.dot_dimension_numbers<[1], [0], [0], [1], [0, 0, 1, 1], [], []>} : vector<8x128xbf16>, vector<128x384xbf16>, vector<8x384xf32> -> vector<8x384xf32>
    %1094 = vector.broadcast %655 : vector<1x384xf32> to vector<8x384xf32>
    %1095 = arith.addf %1093, %1094 : vector<8x384xf32>
    %c48_347 = arith.constant 48 : index
    %c0_348 = arith.constant 0 : index
    %1096 = vector.load %arg20[%c48_347, %c0_348] : memref<64x384xf32, #tpu.memory_space<vmem>>, vector<8x384xf32>
    %1097 = vector.extract_strided_slice %1096 {offsets = [0, 0], sizes = [8, 128], strides = [1, 1]} : vector<8x384xf32> to vector<8x128xf32>
    %1098 = vector.extract_strided_slice %1095 {offsets = [0, 0], sizes = [8, 128], strides = [1, 1]} : vector<8x384xf32> to vector<8x128xf32>
    %1099 = arith.addf %1097, %1098 : vector<8x128xf32>
    %1100 = arith.negf %1099 : vector<8x128xf32>
    %1101 = math.exp %1100 : vector<8x128xf32>
    %cst_349 = arith.constant 1.000000e+00 : f32
    %1102 = vector.broadcast %cst_349 : f32 to vector<8x128xf32>
    %1103 = arith.addf %1102, %1101 : vector<8x128xf32>
    %1104 = arith.divf %1102, %1103 : vector<8x128xf32>
    %1105 = vector.extract_strided_slice %1096 {offsets = [0, 128], sizes = [8, 128], strides = [1, 1]} : vector<8x384xf32> to vector<8x128xf32>
    %1106 = vector.extract_strided_slice %1095 {offsets = [0, 128], sizes = [8, 128], strides = [1, 1]} : vector<8x384xf32> to vector<8x128xf32>
    %1107 = arith.addf %1105, %1106 : vector<8x128xf32>
    %1108 = arith.negf %1107 : vector<8x128xf32>
    %1109 = math.exp %1108 : vector<8x128xf32>
    %cst_350 = arith.constant 1.000000e+00 : f32
    %1110 = vector.broadcast %cst_350 : f32 to vector<8x128xf32>
    %1111 = arith.addf %1110, %1109 : vector<8x128xf32>
    %1112 = arith.divf %1110, %1111 : vector<8x128xf32>
    %1113 = vector.extract_strided_slice %1096 {offsets = [0, 256], sizes = [8, 128], strides = [1, 1]} : vector<8x384xf32> to vector<8x128xf32>
    %1114 = vector.extract_strided_slice %1095 {offsets = [0, 256], sizes = [8, 128], strides = [1, 1]} : vector<8x384xf32> to vector<8x128xf32>
    %1115 = arith.mulf %1104, %1114 : vector<8x128xf32>
    %1116 = arith.addf %1113, %1115 : vector<8x128xf32>
    %1117 = math.tanh %1116 : vector<8x128xf32>
    %cst_351 = arith.constant 1.000000e+00 : f32
    %1118 = vector.broadcast %cst_351 : f32 to vector<8x128xf32>
    %1119 = arith.subf %1118, %1112 : vector<8x128xf32>
    %1120 = arith.mulf %1119, %1117 : vector<8x128xf32>
    %1121 = arith.mulf %1112, %1051 : vector<8x128xf32>
    %1122 = arith.addf %1120, %1121 : vector<8x128xf32>
    %1123 = arith.select %28, %1122, %1051 : vector<8x128xi1>, vector<8x128xf32>
    %cst_352 = arith.constant 0.000000e+00 : f32
    %1124 = vector.broadcast %cst_352 : f32 to vector<8x128xf32>
    %1125 = arith.select %28, %1123, %1124 : vector<8x128xi1>, vector<8x128xf32>
    %1126 = arith.truncf %1086 : vector<8x128xf32> to vector<8x128xbf16>
    %c0_353 = arith.constant 0 : index
    %c0_354 = arith.constant 0 : index
    %1127 = vector.load %arg15[%c0_353, %c0_354] : memref<128x384xbf16, #tpu.memory_space<vmem>>, vector<128x384xbf16>
    %cst_355 = arith.constant dense<0.000000e+00> : vector<8x384xf32>
    %1128 = tpu.matmul %1126, %1127, %cst_355 {dimension_numbers = #tpu.dot_dimension_numbers<[1], [0], [0], [1], [0, 0, 1, 1], [], []>} : vector<8x128xbf16>, vector<128x384xbf16>, vector<8x384xf32> -> vector<8x384xf32>
    %1129 = vector.broadcast %656 : vector<1x384xf32> to vector<8x384xf32>
    %1130 = arith.addf %1128, %1129 : vector<8x384xf32>
    %c8_356 = arith.constant 8 : index
    %c0_357 = arith.constant 0 : index
    %1131 = vector.load %arg21[%c8_356, %c0_357] : memref<64x384xf32, #tpu.memory_space<vmem>>, vector<8x384xf32>
    %1132 = vector.extract_strided_slice %1131 {offsets = [0, 0], sizes = [8, 128], strides = [1, 1]} : vector<8x384xf32> to vector<8x128xf32>
    %1133 = vector.extract_strided_slice %1130 {offsets = [0, 0], sizes = [8, 128], strides = [1, 1]} : vector<8x384xf32> to vector<8x128xf32>
    %1134 = arith.addf %1132, %1133 : vector<8x128xf32>
    %1135 = arith.negf %1134 : vector<8x128xf32>
    %1136 = math.exp %1135 : vector<8x128xf32>
    %cst_358 = arith.constant 1.000000e+00 : f32
    %1137 = vector.broadcast %cst_358 : f32 to vector<8x128xf32>
    %1138 = arith.addf %1137, %1136 : vector<8x128xf32>
    %1139 = arith.divf %1137, %1138 : vector<8x128xf32>
    %1140 = vector.extract_strided_slice %1131 {offsets = [0, 128], sizes = [8, 128], strides = [1, 1]} : vector<8x384xf32> to vector<8x128xf32>
    %1141 = vector.extract_strided_slice %1130 {offsets = [0, 128], sizes = [8, 128], strides = [1, 1]} : vector<8x384xf32> to vector<8x128xf32>
    %1142 = arith.addf %1140, %1141 : vector<8x128xf32>
    %1143 = arith.negf %1142 : vector<8x128xf32>
    %1144 = math.exp %1143 : vector<8x128xf32>
    %cst_359 = arith.constant 1.000000e+00 : f32
    %1145 = vector.broadcast %cst_359 : f32 to vector<8x128xf32>
    %1146 = arith.addf %1145, %1144 : vector<8x128xf32>
    %1147 = arith.divf %1145, %1146 : vector<8x128xf32>
    %1148 = vector.extract_strided_slice %1131 {offsets = [0, 256], sizes = [8, 128], strides = [1, 1]} : vector<8x384xf32> to vector<8x128xf32>
    %1149 = vector.extract_strided_slice %1130 {offsets = [0, 256], sizes = [8, 128], strides = [1, 1]} : vector<8x384xf32> to vector<8x128xf32>
    %1150 = arith.mulf %1139, %1149 : vector<8x128xf32>
    %1151 = arith.addf %1148, %1150 : vector<8x128xf32>
    %1152 = math.tanh %1151 : vector<8x128xf32>
    %cst_360 = arith.constant 1.000000e+00 : f32
    %1153 = vector.broadcast %cst_360 : f32 to vector<8x128xf32>
    %1154 = arith.subf %1153, %1147 : vector<8x128xf32>
    %1155 = arith.mulf %1154, %1152 : vector<8x128xf32>
    %1156 = arith.mulf %1147, %1086 : vector<8x128xf32>
    %1157 = arith.addf %1155, %1156 : vector<8x128xf32>
    %1158 = arith.select %8, %1157, %1086 : vector<8x128xi1>, vector<8x128xf32>
    %cst_361 = arith.constant 0.000000e+00 : f32
    %1159 = vector.broadcast %cst_361 : f32 to vector<8x128xf32>
    %1160 = arith.select %8, %1158, %1159 : vector<8x128xi1>, vector<8x128xf32>
    %c48_362 = arith.constant 48 : index
    %c0_363 = arith.constant 0 : index
    %1161 = vector.load %arg18[%c48_362, %c0_363] : memref<64x128xf32, #tpu.memory_space<vmem>>, vector<8x128xf32>
    tpu.vector_store %arg18[%c48_362, %c0_363], %1125 {strides = array<i32>} : memref<64x128xf32, #tpu.memory_space<vmem>>, vector<8x128xf32>,
    %c8_364 = arith.constant 8 : index
    %c0_365 = arith.constant 0 : index
    %1162 = vector.load %arg23[%c8_364, %c0_365] : memref<64x128xf32, #tpu.memory_space<vmem>>, vector<8x128xf32>
    tpu.vector_store %arg23[%c8_364, %c0_365], %1160 {strides = array<i32>} : memref<64x128xf32, #tpu.memory_space<vmem>>, vector<8x128xf32>,
    %1163 = arith.truncf %1123 : vector<8x128xf32> to vector<8x128xbf16>
    %c0_366 = arith.constant 0 : index
    %c0_367 = arith.constant 0 : index
    %1164 = vector.load %arg11[%c0_366, %c0_367] : memref<128x384xbf16, #tpu.memory_space<vmem>>, vector<128x384xbf16>
    %cst_368 = arith.constant dense<0.000000e+00> : vector<8x384xf32>
    %1165 = tpu.matmul %1163, %1164, %cst_368 {dimension_numbers = #tpu.dot_dimension_numbers<[1], [0], [0], [1], [0, 0, 1, 1], [], []>} : vector<8x128xbf16>, vector<128x384xbf16>, vector<8x384xf32> -> vector<8x384xf32>
    %1166 = vector.broadcast %655 : vector<1x384xf32> to vector<8x384xf32>
    %1167 = arith.addf %1165, %1166 : vector<8x384xf32>
    %c56_369 = arith.constant 56 : index
    %c0_370 = arith.constant 0 : index
    %1168 = vector.load %arg20[%c56_369, %c0_370] : memref<64x384xf32, #tpu.memory_space<vmem>>, vector<8x384xf32>
    %1169 = vector.extract_strided_slice %1168 {offsets = [0, 0], sizes = [8, 128], strides = [1, 1]} : vector<8x384xf32> to vector<8x128xf32>
    %1170 = vector.extract_strided_slice %1167 {offsets = [0, 0], sizes = [8, 128], strides = [1, 1]} : vector<8x384xf32> to vector<8x128xf32>
    %1171 = arith.addf %1169, %1170 : vector<8x128xf32>
    %1172 = arith.negf %1171 : vector<8x128xf32>
    %1173 = math.exp %1172 : vector<8x128xf32>
    %cst_371 = arith.constant 1.000000e+00 : f32
    %1174 = vector.broadcast %cst_371 : f32 to vector<8x128xf32>
    %1175 = arith.addf %1174, %1173 : vector<8x128xf32>
    %1176 = arith.divf %1174, %1175 : vector<8x128xf32>
    %1177 = vector.extract_strided_slice %1168 {offsets = [0, 128], sizes = [8, 128], strides = [1, 1]} : vector<8x384xf32> to vector<8x128xf32>
    %1178 = vector.extract_strided_slice %1167 {offsets = [0, 128], sizes = [8, 128], strides = [1, 1]} : vector<8x384xf32> to vector<8x128xf32>
    %1179 = arith.addf %1177, %1178 : vector<8x128xf32>
    %1180 = arith.negf %1179 : vector<8x128xf32>
    %1181 = math.exp %1180 : vector<8x128xf32>
    %cst_372 = arith.constant 1.000000e+00 : f32
    %1182 = vector.broadcast %cst_372 : f32 to vector<8x128xf32>
    %1183 = arith.addf %1182, %1181 : vector<8x128xf32>
    %1184 = arith.divf %1182, %1183 : vector<8x128xf32>
    %1185 = vector.extract_strided_slice %1168 {offsets = [0, 256], sizes = [8, 128], strides = [1, 1]} : vector<8x384xf32> to vector<8x128xf32>
    %1186 = vector.extract_strided_slice %1167 {offsets = [0, 256], sizes = [8, 128], strides = [1, 1]} : vector<8x384xf32> to vector<8x128xf32>
    %1187 = arith.mulf %1176, %1186 : vector<8x128xf32>
    %1188 = arith.addf %1185, %1187 : vector<8x128xf32>
    %1189 = math.tanh %1188 : vector<8x128xf32>
    %cst_373 = arith.constant 1.000000e+00 : f32
    %1190 = vector.broadcast %cst_373 : f32 to vector<8x128xf32>
    %1191 = arith.subf %1190, %1184 : vector<8x128xf32>
    %1192 = arith.mulf %1191, %1189 : vector<8x128xf32>
    %1193 = arith.mulf %1184, %1123 : vector<8x128xf32>
    %1194 = arith.addf %1192, %1193 : vector<8x128xf32>
    %1195 = arith.select %32, %1194, %1123 : vector<8x128xi1>, vector<8x128xf32>
    %cst_374 = arith.constant 0.000000e+00 : f32
    %1196 = vector.broadcast %cst_374 : f32 to vector<8x128xf32>
    %1197 = arith.select %32, %1195, %1196 : vector<8x128xi1>, vector<8x128xf32>
    %1198 = arith.truncf %1158 : vector<8x128xf32> to vector<8x128xbf16>
    %c0_375 = arith.constant 0 : index
    %c0_376 = arith.constant 0 : index
    %1199 = vector.load %arg15[%c0_375, %c0_376] : memref<128x384xbf16, #tpu.memory_space<vmem>>, vector<128x384xbf16>
    %cst_377 = arith.constant dense<0.000000e+00> : vector<8x384xf32>
    %1200 = tpu.matmul %1198, %1199, %cst_377 {dimension_numbers = #tpu.dot_dimension_numbers<[1], [0], [0], [1], [0, 0, 1, 1], [], []>} : vector<8x128xbf16>, vector<128x384xbf16>, vector<8x384xf32> -> vector<8x384xf32>
    %1201 = vector.broadcast %656 : vector<1x384xf32> to vector<8x384xf32>
    %1202 = arith.addf %1200, %1201 : vector<8x384xf32>
    %c0_378 = arith.constant 0 : index
    %c0_379 = arith.constant 0 : index
    %1203 = vector.load %arg21[%c0_378, %c0_379] : memref<64x384xf32, #tpu.memory_space<vmem>>, vector<8x384xf32>
    %1204 = vector.extract_strided_slice %1203 {offsets = [0, 0], sizes = [8, 128], strides = [1, 1]} : vector<8x384xf32> to vector<8x128xf32>
    %1205 = vector.extract_strided_slice %1202 {offsets = [0, 0], sizes = [8, 128], strides = [1, 1]} : vector<8x384xf32> to vector<8x128xf32>
    %1206 = arith.addf %1204, %1205 : vector<8x128xf32>
    %1207 = arith.negf %1206 : vector<8x128xf32>
    %1208 = math.exp %1207 : vector<8x128xf32>
    %cst_380 = arith.constant 1.000000e+00 : f32
    %1209 = vector.broadcast %cst_380 : f32 to vector<8x128xf32>
    %1210 = arith.addf %1209, %1208 : vector<8x128xf32>
    %1211 = arith.divf %1209, %1210 : vector<8x128xf32>
    %1212 = vector.extract_strided_slice %1203 {offsets = [0, 128], sizes = [8, 128], strides = [1, 1]} : vector<8x384xf32> to vector<8x128xf32>
    %1213 = vector.extract_strided_slice %1202 {offsets = [0, 128], sizes = [8, 128], strides = [1, 1]} : vector<8x384xf32> to vector<8x128xf32>
    %1214 = arith.addf %1212, %1213 : vector<8x128xf32>
    %1215 = arith.negf %1214 : vector<8x128xf32>
    %1216 = math.exp %1215 : vector<8x128xf32>
    %cst_381 = arith.constant 1.000000e+00 : f32
    %1217 = vector.broadcast %cst_381 : f32 to vector<8x128xf32>
    %1218 = arith.addf %1217, %1216 : vector<8x128xf32>
    %1219 = arith.divf %1217, %1218 : vector<8x128xf32>
    %1220 = vector.extract_strided_slice %1203 {offsets = [0, 256], sizes = [8, 128], strides = [1, 1]} : vector<8x384xf32> to vector<8x128xf32>
    %1221 = vector.extract_strided_slice %1202 {offsets = [0, 256], sizes = [8, 128], strides = [1, 1]} : vector<8x384xf32> to vector<8x128xf32>
    %1222 = arith.mulf %1211, %1221 : vector<8x128xf32>
    %1223 = arith.addf %1220, %1222 : vector<8x128xf32>
    %1224 = math.tanh %1223 : vector<8x128xf32>
    %cst_382 = arith.constant 1.000000e+00 : f32
    %1225 = vector.broadcast %cst_382 : f32 to vector<8x128xf32>
    %1226 = arith.subf %1225, %1219 : vector<8x128xf32>
    %1227 = arith.mulf %1226, %1224 : vector<8x128xf32>
    %1228 = arith.mulf %1219, %1158 : vector<8x128xf32>
    %1229 = arith.addf %1227, %1228 : vector<8x128xf32>
    %1230 = arith.select %4, %1229, %1158 : vector<8x128xi1>, vector<8x128xf32>
    %cst_383 = arith.constant 0.000000e+00 : f32
    %1231 = vector.broadcast %cst_383 : f32 to vector<8x128xf32>
    %1232 = arith.select %4, %1230, %1231 : vector<8x128xi1>, vector<8x128xf32>
    %c56_384 = arith.constant 56 : index
    %c0_385 = arith.constant 0 : index
    %1233 = vector.load %arg18[%c56_384, %c0_385] : memref<64x128xf32, #tpu.memory_space<vmem>>, vector<8x128xf32>
    tpu.vector_store %arg18[%c56_384, %c0_385], %1197 {strides = array<i32>} : memref<64x128xf32, #tpu.memory_space<vmem>>, vector<8x128xf32>,
    %c0_386 = arith.constant 0 : index
    %c0_387 = arith.constant 0 : index
    %1234 = vector.load %arg23[%c0_386, %c0_387] : memref<64x128xf32, #tpu.memory_space<vmem>>, vector<8x128xf32>
    tpu.vector_store %arg23[%c0_386, %c0_387], %1232 {strides = array<i32>} : memref<64x128xf32, #tpu.memory_space<vmem>>, vector<8x128xf32>,
    %c0_388 = arith.constant 0 : index
    %c0_389 = arith.constant 0 : index
    %1235 = vector.load %arg18[%c0_388, %c0_389] : memref<64x128xf32, #tpu.memory_space<vmem>>, vector<64x128xf32>
    %c0_390 = arith.constant 0 : index
    %c0_391 = arith.constant 0 : index
    %1236 = vector.load %arg23[%c0_390, %c0_391] : memref<64x128xf32, #tpu.memory_space<vmem>>, vector<64x128xf32>
    %1237 = arith.addf %1235, %1236 : vector<64x128xf32>
    %c0_392 = arith.constant 0 : index
    %c0_393 = arith.constant 0 : index
    %1238 = vector.load %arg18[%c0_392, %c0_393] : memref<64x128xf32, #tpu.memory_space<vmem>>, vector<64x128xf32>
    tpu.vector_store %arg18[%c0_392, %c0_393], %1237 {strides = array<i32>} : memref<64x128xf32, #tpu.memory_space<vmem>>, vector<64x128xf32>,
    %c0_394 = arith.constant 0 : index
    %c0_395 = arith.constant 0 : index
    %c0_396 = arith.constant 0 : index
    %1239 = vector.load %arg19[%c0_394, %c0_395, %c0_396] : memref<4x8x128xf32, #tpu.memory_space<vmem>>, vector<1x8x128xf32>
    %1240 = vector.shape_cast %1239 : vector<1x8x128xf32> to vector<8x128xf32>
    %1241 = vector.shape_cast %600 : vector<8x128xf32> to vector<1x8x128xf32>
    tpu.vector_store %arg19[%c0_394, %c0_395, %c0_396], %1241 {strides = array<i32>} : memref<4x8x128xf32, #tpu.memory_space<vmem>>, vector<1x8x128xf32>,
    %c1 = arith.constant 1 : index
    %c0_397 = arith.constant 0 : index
    %c0_398 = arith.constant 0 : index
    %1242 = vector.load %arg19[%c1, %c0_397, %c0_398] : memref<4x8x128xf32, #tpu.memory_space<vmem>>, vector<1x8x128xf32>
    %1243 = vector.shape_cast %1242 : vector<1x8x128xf32> to vector<8x128xf32>
    %1244 = vector.shape_cast %635 : vector<8x128xf32> to vector<1x8x128xf32>
    tpu.vector_store %arg19[%c1, %c0_397, %c0_398], %1244 {strides = array<i32>} : memref<4x8x128xf32, #tpu.memory_space<vmem>>, vector<1x8x128xf32>,
    %c2 = arith.constant 2 : index
    %c0_399 = arith.constant 0 : index
    %c0_400 = arith.constant 0 : index
    %1245 = vector.load %arg19[%c2, %c0_399, %c0_400] : memref<4x8x128xf32, #tpu.memory_space<vmem>>, vector<1x8x128xf32>
    %1246 = vector.shape_cast %1245 : vector<1x8x128xf32> to vector<8x128xf32>
    %1247 = vector.shape_cast %1195 : vector<8x128xf32> to vector<1x8x128xf32>
    tpu.vector_store %arg19[%c2, %c0_399, %c0_400], %1247 {strides = array<i32>} : memref<4x8x128xf32, #tpu.memory_space<vmem>>, vector<1x8x128xf32>,
    %c3 = arith.constant 3 : index
    %c0_401 = arith.constant 0 : index
    %c0_402 = arith.constant 0 : index
    %1248 = vector.load %arg19[%c3, %c0_401, %c0_402] : memref<4x8x128xf32, #tpu.memory_space<vmem>>, vector<1x8x128xf32>
    %1249 = vector.shape_cast %1248 : vector<1x8x128xf32> to vector<8x128xf32>
    %1250 = vector.shape_cast %1230 : vector<8x128xf32> to vector<1x8x128xf32>
    tpu.vector_store %arg19[%c3, %c0_401, %c0_402], %1250 {strides = array<i32>} : memref<4x8x128xf32, #tpu.memory_space<vmem>>, vector<1x8x128xf32>,
    return
  }
}

</mosaic_0001>

<llo_original>
// kernel: encoder_rnn_forward.1
$region0: #{encoder_rnn_forward.1}
  #allocation0 [shape = 'u32[]', space=smem, size = 0x4, offset = 0x4, fixed_abs, tag = 'smem constant byte address 0x4 - core index']
  #allocation1 [shape = 'u32[144,128]{1,0:T(1,128)}', space=vmem, size = 0x12000, scoped, tag = 'internal scratch']
  #allocation2 [shape = 'f32[64,384]{1,0:T(8,128)}', space=vmem, size = 0x18000, scoped, tag = 'scratch operand']
  #allocation3 [shape = 'f32[64,384]{1,0:T(8,128)}', space=vmem, size = 0x18000, scoped, tag = 'scratch operand']
  #allocation4 [shape = 'bf16[64,256]{1,0:T(8,128)(2,1)}', space=vmem, size = 0x8000, scoped, tag = 'scratch operand']
  #allocation5 [shape = 'f32[64,128]{1,0:T(8,128)}', space=vmem, size = 0x8000, scoped, tag = 'scratch operand']
  %s0 = inlined_call_operand.vmem [shape: s32[8,1], index: 0, kind: input, shape index: {}]
  %s1 = inlined_call_operand.vmem [shape: bf16[64,32], index: 1, kind: input, shape index: {}]
  %s2 = inlined_call_operand.vmem [shape: bf16[32,384], index: 2, kind: input, shape index: {}]
  %s3 = inlined_call_operand.vmem [shape: bf16[128,384], index: 3, kind: input, shape index: {}]
  %s4 = inlined_call_operand.vmem [shape: f32[1,384], index: 4, kind: input, shape index: {}]
  %s5 = inlined_call_operand.vmem [shape: f32[1,384], index: 5, kind: input, shape index: {}]
  %s6 = inlined_call_operand.vmem [shape: bf16[32,384], index: 6, kind: input, shape index: {}]
  %s7 = inlined_call_operand.vmem [shape: bf16[128,384], index: 7, kind: input, shape index: {}]
  %s8 = inlined_call_operand.vmem [shape: f32[1,384], index: 8, kind: input, shape index: {}]
  %s9 = inlined_call_operand.vmem [shape: f32[1,384], index: 9, kind: input, shape index: {}]
  %s10 = inlined_call_operand.vmem [shape: bf16[256,384], index: 10, kind: input, shape index: {}]
  %s11 = inlined_call_operand.vmem [shape: bf16[128,384], index: 11, kind: input, shape index: {}]
  %s12 = inlined_call_operand.vmem [shape: f32[1,384], index: 12, kind: input, shape index: {}]
  %s13 = inlined_call_operand.vmem [shape: f32[1,384], index: 13, kind: input, shape index: {}]
  %s14 = inlined_call_operand.vmem [shape: bf16[256,384], index: 14, kind: input, shape index: {}]
  %s15 = inlined_call_operand.vmem [shape: bf16[128,384], index: 15, kind: input, shape index: {}]
  %s16 = inlined_call_operand.vmem [shape: f32[1,384], index: 16, kind: input, shape index: {}]
  %s17 = inlined_call_operand.vmem [shape: f32[1,384], index: 17, kind: input, shape index: {}]
  %s18 = inlined_call_operand.hbm [shape: f32[64,128], index: 18, kind: output, shape index: {0}]
  %s19 = inlined_call_operand.hbm [shape: f32[4,8,128], index: 19, kind: output, shape index: {1}]
  %20 = xla_tuple %s18, %s19
  %s21 = sld [smem:[#allocation0]]
  $region90: #{encoder_rnn_forward.1} parent=0
    _
  %s23 = ssub.s32 1, %s21
  %s24 = scalar_select 0, %s23, %s21
  $region1: #{encoder_rnn_forward.1} parent=0
    #allocation6 [shape = 'u8[32768]{0}', space=vmem, size = 0x8000, scoped, tag = 'output window, operand 0, single buffered']
    #allocation7 [shape = 's32[1]{0}', space=sflag, size = 0x4, scoped, tag = 'scoped memory for encoder_rnn_forward.1']
    #allocation8 [shape = 'u8[16384]{0}', space=vmem, size = 0x4000, scoped, tag = 'output window, operand 1, single buffered']
    #allocation9 [shape = 's32[1]{0}', space=sflag, size = 0x4, scoped, tag = 'scoped memory for encoder_rnn_forward.1']
    %25 = vsyncpa [#allocation7], 0
    %26 = vsyncpa [#allocation9], 0
    // Predicated region
    $region2: #{encoder_rnn_forward.1} parent=1 // pred_check
      _
    $region3: #{encoder_rnn_forward.1} parent=1 // pred_check_branch
      %28 = sbr.rel (0) target = $region5
    $region4: #{encoder_rnn_forward.1} parent=1 // pred_region
      _
    $region5: #{encoder_rnn_forward.1} parent=1 // pred_fallthru
      _
    // Predicated region
    $region6: #{encoder_rnn_forward.1} parent=1 // pred_check
      _
    $region7: #{encoder_rnn_forward.1} parent=1 // pred_check_branch
      %30 = sbr.rel (0) target = $region9
    $region8: #{encoder_rnn_forward.1} parent=1 // pred_region
      _
    $region9: #{encoder_rnn_forward.1} parent=1 // pred_fallthru
      _
    // Predicated region
    $region10: #{encoder_rnn_forward.1} parent=1 // pred_check
      _
    $region11: #{encoder_rnn_forward.1} parent=1 // pred_check_branch
      %32 = sbr.rel (0) target = $region13
    $region12: #{encoder_rnn_forward.1} parent=1 // pred_region
      _
    $region13: #{encoder_rnn_forward.1} parent=1 // pred_fallthru
      _
    // Predicated region
    $region14: #{encoder_rnn_forward.1} parent=1 // pred_check
      _
    $region15: #{encoder_rnn_forward.1} parent=1 // pred_check_branch
      %34 = sbr.rel (0) target = $region17
    $region16: #{encoder_rnn_forward.1} parent=1 // pred_region
      _
    $region17: #{encoder_rnn_forward.1} parent=1 // pred_fallthru
      _
    // Predicated region
    $region18: #{encoder_rnn_forward.1} parent=1 // pred_check
      _
    $region19: #{encoder_rnn_forward.1} parent=1 // pred_check_branch
      %36 = sbr.rel (0) target = $region21
    $region20: #{encoder_rnn_forward.1} parent=1 // pred_region
      _
    $region21: #{encoder_rnn_forward.1} parent=1 // pred_fallthru
      _
    // Predicated region
    $region22: #{encoder_rnn_forward.1} parent=1 // pred_check
      _
    $region23: #{encoder_rnn_forward.1} parent=1 // pred_check_branch
      %38 = sbr.rel (0) target = $region25
    $region24: #{encoder_rnn_forward.1} parent=1 // pred_region
      _
    $region25: #{encoder_rnn_forward.1} parent=1 // pred_fallthru
      _
    // Predicated region
    $region26: #{encoder_rnn_forward.1} parent=1 // pred_check
      _
    $region27: #{encoder_rnn_forward.1} parent=1 // pred_check_branch
      %40 = sbr.rel (0) target = $region29
    $region28: #{encoder_rnn_forward.1} parent=1 // pred_region
      _
    $region29: #{encoder_rnn_forward.1} parent=1 // pred_fallthru
      _
    // Predicated region
    $region30: #{encoder_rnn_forward.1} parent=1 // pred_check
      _
    $region31: #{encoder_rnn_forward.1} parent=1 // pred_check_branch
      %42 = sbr.rel (0) target = $region33
    $region32: #{encoder_rnn_forward.1} parent=1 // pred_region
      _
    $region33: #{encoder_rnn_forward.1} parent=1 // pred_fallthru
      _
    // Predicated region
    $region34: #{encoder_rnn_forward.1} parent=1 // pred_check
      _
    $region35: #{encoder_rnn_forward.1} parent=1 // pred_check_branch
      %44 = sbr.rel (0) target = $region37
    $region36: #{encoder_rnn_forward.1} parent=1 // pred_region
      _
    $region37: #{encoder_rnn_forward.1} parent=1 // pred_fallthru
      _
    // Predicated region
    $region38: #{encoder_rnn_forward.1} parent=1 // pred_check
      _
    $region39: #{encoder_rnn_forward.1} parent=1 // pred_check_branch
      %46 = sbr.rel (0) target = $region41
    $region40: #{encoder_rnn_forward.1} parent=1 // pred_region
      _
    $region41: #{encoder_rnn_forward.1} parent=1 // pred_fallthru
      _
    // Predicated region
    $region42: #{encoder_rnn_forward.1} parent=1 // pred_check
      _
    $region43: #{encoder_rnn_forward.1} parent=1 // pred_check_branch
      %48 = sbr.rel (0) target = $region45
    $region44: #{encoder_rnn_forward.1} parent=1 // pred_region
      _
    $region45: #{encoder_rnn_forward.1} parent=1 // pred_fallthru
      _
    // Predicated region
    $region46: #{encoder_rnn_forward.1} parent=1 // pred_check
      _
    $region47: #{encoder_rnn_forward.1} parent=1 // pred_check_branch
      %50 = sbr.rel (0) target = $region49
    $region48: #{encoder_rnn_forward.1} parent=1 // pred_region
      _
    $region49: #{encoder_rnn_forward.1} parent=1 // pred_fallthru
      _
    // Predicated region
    $region50: #{encoder_rnn_forward.1} parent=1 // pred_check
      _
    $region51: #{encoder_rnn_forward.1} parent=1 // pred_check_branch
      %52 = sbr.rel (0) target = $region53
    $region52: #{encoder_rnn_forward.1} parent=1 // pred_region
      _
    $region53: #{encoder_rnn_forward.1} parent=1 // pred_fallthru
      _
    // Predicated region
    $region54: #{encoder_rnn_forward.1} parent=1 // pred_check
      _
    $region55: #{encoder_rnn_forward.1} parent=1 // pred_check_branch
      %54 = sbr.rel (0) target = $region57
    $region56: #{encoder_rnn_forward.1} parent=1 // pred_region
      _
    $region57: #{encoder_rnn_forward.1} parent=1 // pred_fallthru
      _
    // Predicated region
    $region58: #{encoder_rnn_forward.1} parent=1 // pred_check
      _
    $region59: #{encoder_rnn_forward.1} parent=1 // pred_check_branch
      %56 = sbr.rel (0) target = $region61
    $region60: #{encoder_rnn_forward.1} parent=1 // pred_region
      _
    $region61: #{encoder_rnn_forward.1} parent=1 // pred_fallthru
      _
    // Predicated region
    $region62: #{encoder_rnn_forward.1} parent=1 // pred_check
      _
    $region63: #{encoder_rnn_forward.1} parent=1 // pred_check_branch
      %58 = sbr.rel (0) target = $region65
    $region64: #{encoder_rnn_forward.1} parent=1 // pred_region
      _
    $region65: #{encoder_rnn_forward.1} parent=1 // pred_fallthru
      _
    // Predicated region
    $region66: #{encoder_rnn_forward.1} parent=1 // pred_check
      _
    $region67: #{encoder_rnn_forward.1} parent=1 // pred_check_branch
      %60 = sbr.rel (0) target = $region69
    $region68: #{encoder_rnn_forward.1} parent=1 // pred_region
      _
    $region69: #{encoder_rnn_forward.1} parent=1 // pred_fallthru
      _
    // Predicated region
    $region70: #{encoder_rnn_forward.1} parent=1 // pred_check
      _
    $region71: #{encoder_rnn_forward.1} parent=1 // pred_check_branch
      %62 = sbr.rel (0) target = $region73
    $region72: #{encoder_rnn_forward.1} parent=1 // pred_region
      _
    $region73: #{encoder_rnn_forward.1} parent=1 // pred_fallthru
      _
    %v64 = vld [vmem:[%s0] sm:$0xff]
    %vm65 = vcmp.gt.s32.totalorder %v64, 0
    %v66 = vsel %vm65, 1, 0
    %67 = vset.pattern.permute.xlu0 0
    %68 = vperm.xlu0 %67, %v66
    %v69 = vpop.permute.xlu0 %68
    %vm70 = vcmp.eq.s32.totalorder %v69, 1
    %vm71 = vcmp.gt.s32.totalorder %v64, 1
    %v72 = vsel %vm71, 1, 0
    %73 = vset.pattern.permute.xlu0 0
    %74 = vperm.xlu0 %73, %v72
    %v75 = vpop.permute.xlu0 %74
    %vm76 = vcmp.eq.s32.totalorder %v75, 1
    %vm77 = vcmp.gt.s32.totalorder %v64, 2
    %v78 = vsel %vm77, 1, 0
    %79 = vset.pattern.permute.xlu0 0
    %80 = vperm.xlu0 %79, %v78
    %v81 = vpop.permute.xlu0 %80
    %vm82 = vcmp.eq.s32.totalorder %v81, 1
    %vm83 = vcmp.gt.s32.totalorder %v64, 3
    %v84 = vsel %vm83, 1, 0
    %85 = vset.pattern.permute.xlu0 0
    %86 = vperm.xlu0 %85, %v84
    %v87 = vpop.permute.xlu0 %86
    %vm88 = vcmp.eq.s32.totalorder %v87, 1
    %vm89 = vcmp.gt.s32.totalorder %v64, 4
    %v90 = vsel %vm89, 1, 0
    %91 = vset.pattern.permute.xlu0 0
    %92 = vperm.xlu0 %91, %v90
    %v93 = vpop.permute.xlu0 %92
    %vm94 = vcmp.eq.s32.totalorder %v93, 1
    %vm95 = vcmp.gt.s32.totalorder %v64, 5
    %v96 = vsel %vm95, 1, 0
    %97 = vset.pattern.permute.xlu0 0
    %98 = vperm.xlu0 %97, %v96
    %v99 = vpop.permute.xlu0 %98
    %vm100 = vcmp.eq.s32.totalorder %v99, 1
    %vm101 = vcmp.gt.s32.totalorder %v64, 6
    %v102 = vsel %vm101, 1, 0
    %103 = vset.pattern.permute.xlu0 0
    %104 = vperm.xlu0 %103, %v102
    %v105 = vpop.permute.xlu0 %104
    %vm106 = vcmp.eq.s32.totalorder %v105, 1
    %vm107 = vcmp.gt.s32.totalorder %v64, 7
    %v108 = vsel %vm107, 1, 0
    %109 = vset.pattern.permute.xlu0 0
    %110 = vperm.xlu0 %109, %v108
    %v111 = vpop.permute.xlu0 %110
    %vm112 = vcmp.eq.s32.totalorder %v111, 1
    %v113 = vld [vmem:[%s1] sm:$0xf]
    %v114 = vld [vmem:[%s1 + $0x4] sm:$0xf]
    %v115 = vld [vmem:[%s1 + $0x8] sm:$0xf]
    %v116 = vld [vmem:[%s1 + $0xc] sm:$0xf]
    %v117 = vld [vmem:[%s1 + $0x10] sm:$0xf]
    %v118 = vld [vmem:[%s1 + $0x14] sm:$0xf]
    %v119 = vld [vmem:[%s1 + $0x18] sm:$0xf]
    %v120 = vld [vmem:[%s1 + $0x1c] sm:$0xf]
    %v121 = vld [vmem:[%s2] sm:$0xff]
    %v122 = vld [vmem:[%s2 + $0x8] sm:$0xf]
    %v123 = vld [vmem:[%s2 + $0xc] sm:$0xff]
    %v124 = vld [vmem:[%s2 + $0x14] sm:$0xf]
    %v125 = vld [vmem:[%s2 + $0x18] sm:$0xff]
    %v126 = vld [vmem:[%s2 + $0x20] sm:$0xf]
    %v127 = vld [vmem:[%s2 + $0x24] sm:$0xff]
    %v128 = vld [vmem:[%s2 + $0x2c] sm:$0xf]
    %v129 = vld [vmem:[%s4] sm:$0x7]
    %v131 = vlaneseq
    %v132 = vshrl.u32 %v131, 7
    %v133 = vsub.s32 0, %v132
    %v134 = vrot.slane %v129, %v133
    %v135 = vlaneseq
    %v136 = vshrl.u32 %v135, 7
    %v137 = vsub.s32 1, %v136
    %v138 = vrot.slane %v129, %v137
    %v139 = vlaneseq
    %v140 = vshrl.u32 %v139, 7
    %v141 = vsub.s32 2, %v140
    %v142 = vrot.slane %v129, %v141
    %v154 = vunpack.c.l.b16 %v113
    %v155 = vunpack.c.l.b16 %v114
    %v156 = vunpack.c.l.b16 %v115
    %v157 = vunpack.c.l.b16 %v116
    %v158 = vunpack.c.l.b16 %v117
    %v159 = vunpack.c.l.b16 %v118
    %v160 = vunpack.c.l.b16 %v119
    %v161 = vunpack.c.l.b16 %v120
    %v162 = vpack.c.b16 %v155, %v154
    %v163 = vpack.c.b16 %v157, %v156
    %v164 = vpack.c.b16 %v159, %v158
    %v165 = vpack.c.b16 %v161, %v160
    %v174 = vunpack.c.l.b16 %v121
    %v175 = vunpack.c.h.b16 %v121
    %v176 = vunpack.c.l.b16 %v122
    %v177 = vunpack.c.l.b16 %v123
    %v178 = vunpack.c.h.b16 %v123
    %v179 = vunpack.c.l.b16 %v124
    %v180 = vunpack.c.l.b16 %v125
    %v181 = vunpack.c.h.b16 %v125
    %v182 = vunpack.c.l.b16 %v126
    %v183 = vunpack.c.l.b16 %v127
    %v184 = vunpack.c.h.b16 %v127
    %v185 = vunpack.c.l.b16 %v128
    %v186 = vpack.c.b16 %v177, %v174
    %v187 = vpack.c.b16 %v178, %v175
    %v188 = vpack.c.b16 %v179, %v176
    %v189 = vpack.c.b16 %v183, %v180
    %v190 = vpack.c.b16 %v184, %v181
    %v191 = vpack.c.b16 %v185, %v182
    %vm198 = vcmask 261120
    %v200 = vsel %vm198, %v162, 0
    %v203 = vsel %vm198, %v163, 0
    %v206 = vsel %vm198, %v164, 0
    %v209 = vsel %vm198, %v165, 0
    %211 = vmatprep.subr.bf16.mxu0 0
    %212 = vmatpush1.bf16.msra.mxu0 0
    %213 = vmatprep.subr.bf16.mxu0 0
    %214 = vmatpush1.bf16.msra.mxu0 0
    %215 = vmatprep.subr.bf16.mxu0 0
    %216 = vmatpush1.bf16.msra.mxu0 0
    %217 = vmatprep.subr.bf16.mxu0 0
    %218 = vmatpush1.bf16.msra.mxu0 0
    %219 = vmatprep.subr.bf16.mxu0 0
    %220 = vmatpush1.bf16.msra.mxu0 0
    %221 = vmatprep.subr.bf16.mxu0 0
    %222 = vmatpush1.bf16.msra.mxu0 0
    %223 = vmatprep.subr.bf16.mxu0 %v190
    %224 = vmatpush1.bf16.msra.mxu0 %v189
    %225 = vmatprep.subr.bf16.mxu0 %v187
    %226 = vmatpush1.bf16.msra.mxu0 %v186
    %227 = vmatprep.subr.bf16.mxu0 0
    %228 = vmatpush2.bf16.msra.mxu0 0
    %229 = vmatprep.subr.bf16.mxu0 0
    %230 = vmatpush2.bf16.msra.mxu0 0
    %231 = vmatprep.subr.bf16.mxu0 0
    %232 = vmatpush2.bf16.msra.mxu0 0
    %233 = vmatprep.subr.bf16.mxu0 0
    %234 = vmatpush2.bf16.msra.mxu0 0
    %235 = vmatprep.subr.bf16.mxu0 0
    %236 = vmatpush2.bf16.msra.mxu0 0
    %237 = vmatprep.subr.bf16.mxu0 0
    %238 = vmatpush2.bf16.msra.mxu0 0
    %239 = vmatprep.subr.bf16.mxu0 0
    %240 = vmatpush2.bf16.msra.mxu0 0
    %241 = vmatprep.subr.bf16.mxu0 0
    %242 = vmatpush2.bf16.msra.mxu0 0
    %243 = vmatprep.mubr.bf16.mxu0 0
    %244 = vmatmul.mubr.bf16.gmra.mxu0 %v200
    %v245 = vpop.f32.mrf.mxu0
    %v246 = vadd.f32 %v134, %v245
    %v247 = vpop.f32.mrf.mxu0
    %v248 = vadd.f32 %v138, %v247
    %v249 = vpop.f32.mrf.mxu0
    %v250 = vadd.f32 %v134, %v249
    %v251 = vpop.f32.mrf.mxu0
    %v252 = vadd.f32 %v138, %v251
    %253 = vmatprep.mubr.bf16.mxu0 0
    %254 = vmatmul.mubr.bf16.gmra.mxu0 %v203
    %v255 = vpop.f32.mrf.mxu0
    %v256 = vadd.f32 %v134, %v255
    %v257 = vpop.f32.mrf.mxu0
    %v258 = vadd.f32 %v138, %v257
    %v259 = vpop.f32.mrf.mxu0
    %v260 = vadd.f32 %v134, %v259
    %v261 = vpop.f32.mrf.mxu0
    %v262 = vadd.f32 %v138, %v261
    %263 = vmatprep.mubr.bf16.mxu0 0
    %264 = vmatmul.mubr.bf16.gmra.mxu0 %v206
    %v265 = vpop.f32.mrf.mxu0
    %v266 = vadd.f32 %v134, %v265
    %v267 = vpop.f32.mrf.mxu0
    %v268 = vadd.f32 %v138, %v267
    %v269 = vpop.f32.mrf.mxu0
    %v270 = vadd.f32 %v134, %v269
    %v271 = vpop.f32.mrf.mxu0
    %v272 = vadd.f32 %v138, %v271
    %273 = vmatprep.mubr.bf16.mxu0 0
    %274 = vmatmul.mubr.bf16.gmra.mxu0 %v209
    %v275 = vpop.f32.mrf.mxu0
    %v276 = vadd.f32 %v134, %v275
    %v277 = vpop.f32.mrf.mxu0
    %v278 = vadd.f32 %v138, %v277
    %v279 = vpop.f32.mrf.mxu0
    %v280 = vadd.f32 %v134, %v279
    %v281 = vpop.f32.mrf.mxu0
    %v282 = vadd.f32 %v138, %v281
    %283 = vdwg.mxu0
    %284 = vmatprep.subr.bf16.mxu0 0
    %285 = vmatpush1.bf16.msra.mxu0 0
    %286 = vmatprep.subr.bf16.mxu0 0
    %287 = vmatpush1.bf16.msra.mxu0 0
    %288 = vmatprep.subr.bf16.mxu0 0
    %289 = vmatpush1.bf16.msra.mxu0 0
    %290 = vmatprep.subr.bf16.mxu0 0
    %291 = vmatpush1.bf16.msra.mxu0 0
    %292 = vmatprep.subr.bf16.mxu0 0
    %293 = vmatpush1.bf16.msra.mxu0 0
    %294 = vmatprep.subr.bf16.mxu0 0
    %295 = vmatpush1.bf16.msra.mxu0 0
    %296 = vmatprep.subr.bf16.mxu0 0
    %297 = vmatpush1.bf16.msra.mxu0 %v191
    %298 = vmatprep.subr.bf16.mxu0 0
    %299 = vmatpush1.bf16.msra.mxu0 %v188
    %300 = vmatprep.subr.bf16.mxu0 0
    %301 = vmatpush2.bf16.msra.mxu0 0
    %302 = vmatprep.subr.bf16.mxu0 0
    %303 = vmatpush2.bf16.msra.mxu0 0
    %304 = vmatprep.subr.bf16.mxu0 0
    %305 = vmatpush2.bf16.msra.mxu0 0
    %306 = vmatprep.subr.bf16.mxu0 0
    %307 = vmatpush2.bf16.msra.mxu0 0
    %308 = vmatprep.subr.bf16.mxu0 0
    %309 = vmatpush2.bf16.msra.mxu0 0
    %310 = vmatprep.subr.bf16.mxu0 0
    %311 = vmatpush2.bf16.msra.mxu0 0
    %312 = vmatprep.subr.bf16.mxu0 0
    %313 = vmatpush2.bf16.msra.mxu0 0
    %314 = vmatprep.subr.bf16.mxu0 0
    %315 = vmatpush2.bf16.msra.mxu0 0
    %316 = vmatprep.mubr.bf16.mxu0 0
    %317 = vmatmul.mubr.bf16.gmra.mxu0 %v200
    %v318 = vpop.f32.mrf.mxu0
    %v319 = vadd.f32 %v142, %v318
    %v320 = vpop.f32.mrf.mxu0
    %v321 = vpop.f32.mrf.mxu0
    %v322 = vadd.f32 %v142, %v321
    %v323 = vpop.f32.mrf.mxu0
    %324 = vmatprep.mubr.bf16.mxu0 0
    %325 = vmatmul.mubr.bf16.gmra.mxu0 %v203
    %v326 = vpop.f32.mrf.mxu0
    %v327 = vadd.f32 %v142, %v326
    %v328 = vpop.f32.mrf.mxu0
    %v329 = vpop.f32.mrf.mxu0
    %v330 = vadd.f32 %v142, %v329
    %v331 = vpop.f32.mrf.mxu0
    %332 = vmatprep.mubr.bf16.mxu0 0
    %333 = vmatmul.mubr.bf16.gmra.mxu0 %v206
    %v334 = vpop.f32.mrf.mxu0
    %v335 = vadd.f32 %v142, %v334
    %v336 = vpop.f32.mrf.mxu0
    %v337 = vpop.f32.mrf.mxu0
    %v338 = vadd.f32 %v142, %v337
    %v339 = vpop.f32.mrf.mxu0
    %340 = vmatprep.mubr.bf16.mxu0 0
    %341 = vmatmul.mubr.bf16.gmra.mxu0 %v209
    %v342 = vpop.f32.mrf.mxu0
    %v343 = vadd.f32 %v142, %v342
    %v344 = vpop.f32.mrf.mxu0
    %v345 = vpop.f32.mrf.mxu0
    %v346 = vadd.f32 %v142, %v345
    %v347 = vpop.f32.mrf.mxu0
    %348 = vdwg.mxu0
    %349 = vst [vmem:[#allocation2] sm:$0xff] %v246
    %350 = vst [vmem:[#allocation2 + $0x8] sm:$0xff] %v248
    %351 = vst [vmem:[#allocation2 + $0x10] sm:$0xff] %v319
    %352 = vst [vmem:[#allocation2 + $0x18] sm:$0xff] %v250
    %353 = vst [vmem:[#allocation2 + $0x20] sm:$0xff] %v252
    %354 = vst [vmem:[#allocation2 + $0x28] sm:$0xff] %v322
    %355 = vst [vmem:[#allocation2 + $0x30] sm:$0xff] %v256
    %356 = vst [vmem:[#allocation2 + $0x38] sm:$0xff] %v258
    %357 = vst [vmem:[#allocation2 + $0x40] sm:$0xff] %v327
    %358 = vst [vmem:[#allocation2 + $0x48] sm:$0xff] %v260
    %359 = vst [vmem:[#allocation2 + $0x50] sm:$0xff] %v262
    %360 = vst [vmem:[#allocation2 + $0x58] sm:$0xff] %v330
    %361 = vst [vmem:[#allocation2 + $0x60] sm:$0xff] %v266
    %362 = vst [vmem:[#allocation2 + $0x68] sm:$0xff] %v268
    %363 = vst [vmem:[#allocation2 + $0x70] sm:$0xff] %v335
    %364 = vst [vmem:[#allocation2 + $0x78] sm:$0xff] %v270
    %365 = vst [vmem:[#allocation2 + $0x80] sm:$0xff] %v272
    %366 = vst [vmem:[#allocation2 + $0x88] sm:$0xff] %v338
    %367 = vst [vmem:[#allocation2 + $0x90] sm:$0xff] %v276
    %368 = vst [vmem:[#allocation2 + $0x98] sm:$0xff] %v278
    %369 = vst [vmem:[#allocation2 + $0xa0] sm:$0xff] %v343
    %370 = vst [vmem:[#allocation2 + $0xa8] sm:$0xff] %v280
    %371 = vst [vmem:[#allocation2 + $0xb0] sm:$0xff] %v282
    %372 = vst [vmem:[#allocation2 + $0xb8] sm:$0xff] %v346
    %v373 = vld [vmem:[%s6] sm:$0xff]
    %v374 = vld [vmem:[%s6 + $0x8] sm:$0xf]
    %v375 = vld [vmem:[%s6 + $0xc] sm:$0xff]
    %v376 = vld [vmem:[%s6 + $0x14] sm:$0xf]
    %v377 = vld [vmem:[%s6 + $0x18] sm:$0xff]
    %v378 = vld [vmem:[%s6 + $0x20] sm:$0xf]
    %v379 = vld [vmem:[%s6 + $0x24] sm:$0xff]
    %v380 = vld [vmem:[%s6 + $0x2c] sm:$0xf]
    %v381 = vld [vmem:[%s8] sm:$0x7]
    %v383 = vlaneseq
    %v384 = vshrl.u32 %v383, 7
    %v385 = vsub.s32 0, %v384
    %v386 = vrot.slane %v381, %v385
    %v387 = vlaneseq
    %v388 = vshrl.u32 %v387, 7
    %v389 = vsub.s32 1, %v388
    %v390 = vrot.slane %v381, %v389
    %v391 = vlaneseq
    %v392 = vshrl.u32 %v391, 7
    %v393 = vsub.s32 2, %v392
    %v394 = vrot.slane %v381, %v393
    %v406 = vunpack.c.l.b16 %v373
    %v407 = vunpack.c.h.b16 %v373
    %v408 = vunpack.c.l.b16 %v374
    %v409 = vunpack.c.l.b16 %v375
    %v410 = vunpack.c.h.b16 %v375
    %v411 = vunpack.c.l.b16 %v376
    %v412 = vunpack.c.l.b16 %v377
    %v413 = vunpack.c.h.b16 %v377
    %v414 = vunpack.c.l.b16 %v378
    %v415 = vunpack.c.l.b16 %v379
    %v416 = vunpack.c.h.b16 %v379
    %v417 = vunpack.c.l.b16 %v380
    %v418 = vpack.c.b16 %v409, %v406
    %v419 = vpack.c.b16 %v410, %v407
    %v420 = vpack.c.b16 %v411, %v408
    %v421 = vpack.c.b16 %v415, %v412
    %v422 = vpack.c.b16 %v416, %v413
    %v423 = vpack.c.b16 %v417, %v414
    %430 = vmatprep.subr.bf16.mxu0 0
    %431 = vmatpush1.bf16.msra.mxu0 0
    %432 = vmatprep.subr.bf16.mxu0 0
    %433 = vmatpush1.bf16.msra.mxu0 0
    %434 = vmatprep.subr.bf16.mxu0 0
    %435 = vmatpush1.bf16.msra.mxu0 0
    %436 = vmatprep.subr.bf16.mxu0 0
    %437 = vmatpush1.bf16.msra.mxu0 0
    %438 = vmatprep.subr.bf16.mxu0 0
    %439 = vmatpush1.bf16.msra.mxu0 0
    %440 = vmatprep.subr.bf16.mxu0 0
    %441 = vmatpush1.bf16.msra.mxu0 0
    %442 = vmatprep.subr.bf16.mxu0 %v422
    %443 = vmatpush1.bf16.msra.mxu0 %v421
    %444 = vmatprep.subr.bf16.mxu0 %v419
    %445 = vmatpush1.bf16.msra.mxu0 %v418
    %446 = vmatprep.subr.bf16.mxu0 0
    %447 = vmatpush2.bf16.msra.mxu0 0
    %448 = vmatprep.subr.bf16.mxu0 0
    %449 = vmatpush2.bf16.msra.mxu0 0
    %450 = vmatprep.subr.bf16.mxu0 0
    %451 = vmatpush2.bf16.msra.mxu0 0
    %452 = vmatprep.subr.bf16.mxu0 0
    %453 = vmatpush2.bf16.msra.mxu0 0
    %454 = vmatprep.subr.bf16.mxu0 0
    %455 = vmatpush2.bf16.msra.mxu0 0
    %456 = vmatprep.subr.bf16.mxu0 0
    %457 = vmatpush2.bf16.msra.mxu0 0
    %458 = vmatprep.subr.bf16.mxu0 0
    %459 = vmatpush2.bf16.msra.mxu0 0
    %460 = vmatprep.subr.bf16.mxu0 0
    %461 = vmatpush2.bf16.msra.mxu0 0
    %462 = vmatprep.mubr.bf16.mxu0 0
    %463 = vmatmul.mubr.bf16.gmra.mxu0 %v200
    %v464 = vpop.f32.mrf.mxu0
    %v465 = vadd.f32 %v386, %v464
    %v466 = vpop.f32.mrf.mxu0
    %v467 = vadd.f32 %v390, %v466
    %v468 = vpop.f32.mrf.mxu0
    %v469 = vadd.f32 %v386, %v468
    %v470 = vpop.f32.mrf.mxu0
    %v471 = vadd.f32 %v390, %v470
    %472 = vmatprep.mubr.bf16.mxu0 0
    %473 = vmatmul.mubr.bf16.gmra.mxu0 %v203
    %v474 = vpop.f32.mrf.mxu0
    %v475 = vadd.f32 %v386, %v474
    %v476 = vpop.f32.mrf.mxu0
    %v477 = vadd.f32 %v390, %v476
    %v478 = vpop.f32.mrf.mxu0
    %v479 = vadd.f32 %v386, %v478
    %v480 = vpop.f32.mrf.mxu0
    %v481 = vadd.f32 %v390, %v480
    %482 = vmatprep.mubr.bf16.mxu0 0
    %483 = vmatmul.mubr.bf16.gmra.mxu0 %v206
    %v484 = vpop.f32.mrf.mxu0
    %v485 = vadd.f32 %v386, %v484
    %v486 = vpop.f32.mrf.mxu0
    %v487 = vadd.f32 %v390, %v486
    %v488 = vpop.f32.mrf.mxu0
    %v489 = vadd.f32 %v386, %v488
    %v490 = vpop.f32.mrf.mxu0
    %v491 = vadd.f32 %v390, %v490
    %492 = vmatprep.mubr.bf16.mxu0 0
    %493 = vmatmul.mubr.bf16.gmra.mxu0 %v209
    %v494 = vpop.f32.mrf.mxu0
    %v495 = vadd.f32 %v386, %v494
    %v496 = vpop.f32.mrf.mxu0
    %v497 = vadd.f32 %v390, %v496
    %v498 = vpop.f32.mrf.mxu0
    %v499 = vadd.f32 %v386, %v498
    %v500 = vpop.f32.mrf.mxu0
    %v501 = vadd.f32 %v390, %v500
    %502 = vdwg.mxu0
    %503 = vmatprep.subr.bf16.mxu0 0
    %504 = vmatpush1.bf16.msra.mxu0 0
    %505 = vmatprep.subr.bf16.mxu0 0
    %506 = vmatpush1.bf16.msra.mxu0 0
    %507 = vmatprep.subr.bf16.mxu0 0
    %508 = vmatpush1.bf16.msra.mxu0 0
    %509 = vmatprep.subr.bf16.mxu0 0
    %510 = vmatpush1.bf16.msra.mxu0 0
    %511 = vmatprep.subr.bf16.mxu0 0
    %512 = vmatpush1.bf16.msra.mxu0 0
    %513 = vmatprep.subr.bf16.mxu0 0
    %514 = vmatpush1.bf16.msra.mxu0 0
    %515 = vmatprep.subr.bf16.mxu0 0
    %516 = vmatpush1.bf16.msra.mxu0 %v423
    %517 = vmatprep.subr.bf16.mxu0 0
    %518 = vmatpush1.bf16.msra.mxu0 %v420
    %519 = vmatprep.subr.bf16.mxu0 0
    %520 = vmatpush2.bf16.msra.mxu0 0
    %521 = vmatprep.subr.bf16.mxu0 0
    %522 = vmatpush2.bf16.msra.mxu0 0
    %523 = vmatprep.subr.bf16.mxu0 0
    %524 = vmatpush2.bf16.msra.mxu0 0
    %525 = vmatprep.subr.bf16.mxu0 0
    %526 = vmatpush2.bf16.msra.mxu0 0
    %527 = vmatprep.subr.bf16.mxu0 0
    %528 = vmatpush2.bf16.msra.mxu0 0
    %529 = vmatprep.subr.bf16.mxu0 0
    %530 = vmatpush2.bf16.msra.mxu0 0
    %531 = vmatprep.subr.bf16.mxu0 0
    %532 = vmatpush2.bf16.msra.mxu0 0
    %533 = vmatprep.subr.bf16.mxu0 0
    %534 = vmatpush2.bf16.msra.mxu0 0
    %535 = vmatprep.mubr.bf16.mxu0 0
    %536 = vmatmul.mubr.bf16.gmra.mxu0 %v200
    %v537 = vpop.f32.mrf.mxu0
    %v538 = vadd.f32 %v394, %v537
    %v539 = vpop.f32.mrf.mxu0
    %v540 = vpop.f32.mrf.mxu0
    %v541 = vadd.f32 %v394, %v540
    %v542 = vpop.f32.mrf.mxu0
    %543 = vmatprep.mubr.bf16.mxu0 0
    %544 = vmatmul.mubr.bf16.gmra.mxu0 %v203
    %v545 = vpop.f32.mrf.mxu0
    %v546 = vadd.f32 %v394, %v545
    %v547 = vpop.f32.mrf.mxu0
    %v548 = vpop.f32.mrf.mxu0
    %v549 = vadd.f32 %v394, %v548
    %v550 = vpop.f32.mrf.mxu0
    %551 = vmatprep.mubr.bf16.mxu0 0
    %552 = vmatmul.mubr.bf16.gmra.mxu0 %v206
    %v553 = vpop.f32.mrf.mxu0
    %v554 = vadd.f32 %v394, %v553
    %v555 = vpop.f32.mrf.mxu0
    %v556 = vpop.f32.mrf.mxu0
    %v557 = vadd.f32 %v394, %v556
    %v558 = vpop.f32.mrf.mxu0
    %559 = vmatprep.mubr.bf16.mxu0 0
    %560 = vmatmul.mubr.bf16.gmra.mxu0 %v209
    %v561 = vpop.f32.mrf.mxu0
    %v562 = vadd.f32 %v394, %v561
    %v563 = vpop.f32.mrf.mxu0
    %v564 = vpop.f32.mrf.mxu0
    %v565 = vadd.f32 %v394, %v564
    %v566 = vpop.f32.mrf.mxu0
    %567 = vdwg.mxu0
    %568 = vst [vmem:[#allocation3] sm:$0xff] %v465
    %569 = vst [vmem:[#allocation3 + $0x8] sm:$0xff] %v467
    %570 = vst [vmem:[#allocation3 + $0x10] sm:$0xff] %v538
    %571 = vst [vmem:[#allocation3 + $0x18] sm:$0xff] %v469
    %572 = vst [vmem:[#allocation3 + $0x20] sm:$0xff] %v471
    %573 = vst [vmem:[#allocation3 + $0x28] sm:$0xff] %v541
    %574 = vst [vmem:[#allocation3 + $0x30] sm:$0xff] %v475
    %575 = vst [vmem:[#allocation3 + $0x38] sm:$0xff] %v477
    %576 = vst [vmem:[#allocation3 + $0x40] sm:$0xff] %v546
    %577 = vst [vmem:[#allocation3 + $0x48] sm:$0xff] %v479
    %578 = vst [vmem:[#allocation3 + $0x50] sm:$0xff] %v481
    %579 = vst [vmem:[#allocation3 + $0x58] sm:$0xff] %v549
    %580 = vst [vmem:[#allocation3 + $0x60] sm:$0xff] %v485
    %581 = vst [vmem:[#allocation3 + $0x68] sm:$0xff] %v487
    %582 = vst [vmem:[#allocation3 + $0x70] sm:$0xff] %v554
    %583 = vst [vmem:[#allocation3 + $0x78] sm:$0xff] %v489
    %584 = vst [vmem:[#allocation3 + $0x80] sm:$0xff] %v491
    %585 = vst [vmem:[#allocation3 + $0x88] sm:$0xff] %v557
    %586 = vst [vmem:[#allocation3 + $0x90] sm:$0xff] %v495
    %587 = vst [vmem:[#allocation3 + $0x98] sm:$0xff] %v497
    %588 = vst [vmem:[#allocation3 + $0xa0] sm:$0xff] %v562
    %589 = vst [vmem:[#allocation3 + $0xa8] sm:$0xff] %v499
    %590 = vst [vmem:[#allocation3 + $0xb0] sm:$0xff] %v501
    %591 = vst [vmem:[#allocation3 + $0xb8] sm:$0xff] %v565
    %v592 = vld [vmem:[%s5] sm:$0x7]
    %v593 = vld [vmem:[%s9] sm:$0x7]
    %v594 = vld [vmem:[%s3] sm:$0xff]
    %v595 = vld [vmem:[%s3 + $0x8] sm:$0xf]
    %v596 = vld [vmem:[%s3 + $0xc] sm:$0xff]
    %v597 = vld [vmem:[%s3 + $0x14] sm:$0xf]
    %v598 = vld [vmem:[%s3 + $0x18] sm:$0xff]
    %v599 = vld [vmem:[%s3 + $0x20] sm:$0xf]
    %v600 = vld [vmem:[%s3 + $0x24] sm:$0xff]
    %v601 = vld [vmem:[%s3 + $0x2c] sm:$0xf]
    %v602 = vld [vmem:[%s3 + $0x30] sm:$0xff]
    %v603 = vld [vmem:[%s3 + $0x38] sm:$0xf]
    %v604 = vld [vmem:[%s3 + $0x3c] sm:$0xff]
    %v605 = vld [vmem:[%s3 + $0x44] sm:$0xf]
    %v606 = vld [vmem:[%s3 + $0x48] sm:$0xff]
    %v607 = vld [vmem:[%s3 + $0x50] sm:$0xf]
    %v608 = vld [vmem:[%s3 + $0x54] sm:$0xff]
    %v609 = vld [vmem:[%s3 + $0x5c] sm:$0xf]
    %v610 = vld [vmem:[%s3 + $0x60] sm:$0xff]
    %v611 = vld [vmem:[%s3 + $0x68] sm:$0xf]
    %v612 = vld [vmem:[%s3 + $0x6c] sm:$0xff]
    %v613 = vld [vmem:[%s3 + $0x74] sm:$0xf]
    %v614 = vld [vmem:[%s3 + $0x78] sm:$0xff]
    %v615 = vld [vmem:[%s3 + $0x80] sm:$0xf]
    %v616 = vld [vmem:[%s3 + $0x84] sm:$0xff]
    %v617 = vld [vmem:[%s3 + $0x8c] sm:$0xf]
    %v618 = vld [vmem:[%s3 + $0x90] sm:$0xff]
    %v619 = vld [vmem:[%s3 + $0x98] sm:$0xf]
    %v620 = vld [vmem:[%s3 + $0x9c] sm:$0xff]
    %v621 = vld [vmem:[%s3 + $0xa4] sm:$0xf]
    %v622 = vld [vmem:[%s3 + $0xa8] sm:$0xff]
    %v623 = vld [vmem:[%s3 + $0xb0] sm:$0xf]
    %v624 = vld [vmem:[%s3 + $0xb4] sm:$0xff]
    %v625 = vld [vmem:[%s3 + $0xbc] sm:$0xf]
    %v627 = vlaneseq
    %v628 = vshrl.u32 %v627, 7
    %v629 = vsub.s32 0, %v628
    %v630 = vrot.slane %v592, %v629
    %v631 = vlaneseq
    %v632 = vshrl.u32 %v631, 7
    %v633 = vsub.s32 1, %v632
    %v634 = vrot.slane %v592, %v633
    %v635 = vlaneseq
    %v636 = vshrl.u32 %v635, 7
    %v637 = vsub.s32 2, %v636
    %v638 = vrot.slane %v592, %v637
    %v674 = vunpack.c.l.b16 %v594
    %v675 = vunpack.c.h.b16 %v594
    %v676 = vunpack.c.l.b16 %v595
    %v677 = vunpack.c.l.b16 %v596
    %v678 = vunpack.c.h.b16 %v596
    %v679 = vunpack.c.l.b16 %v597
    %v680 = vunpack.c.l.b16 %v598
    %v681 = vunpack.c.h.b16 %v598
    %v682 = vunpack.c.l.b16 %v599
    %v683 = vunpack.c.l.b16 %v600
    %v684 = vunpack.c.h.b16 %v600
    %v685 = vunpack.c.l.b16 %v601
    %v686 = vunpack.c.l.b16 %v602
    %v687 = vunpack.c.h.b16 %v602
    %v688 = vunpack.c.l.b16 %v603
    %v689 = vunpack.c.l.b16 %v604
    %v690 = vunpack.c.h.b16 %v604
    %v691 = vunpack.c.l.b16 %v605
    %v692 = vunpack.c.l.b16 %v606
    %v693 = vunpack.c.h.b16 %v606
    %v694 = vunpack.c.l.b16 %v607
    %v695 = vunpack.c.l.b16 %v608
    %v696 = vunpack.c.h.b16 %v608
    %v697 = vunpack.c.l.b16 %v609
    %v698 = vunpack.c.l.b16 %v610
    %v699 = vunpack.c.h.b16 %v610
    %v700 = vunpack.c.l.b16 %v611
    %v701 = vunpack.c.l.b16 %v612
    %v702 = vunpack.c.h.b16 %v612
    %v703 = vunpack.c.l.b16 %v613
    %v704 = vunpack.c.l.b16 %v614
    %v705 = vunpack.c.h.b16 %v614
    %v706 = vunpack.c.l.b16 %v615
    %v707 = vunpack.c.l.b16 %v616
    %v708 = vunpack.c.h.b16 %v616
    %v709 = vunpack.c.l.b16 %v617
    %v710 = vunpack.c.l.b16 %v618
    %v711 = vunpack.c.h.b16 %v618
    %v712 = vunpack.c.l.b16 %v619
    %v713 = vunpack.c.l.b16 %v620
    %v714 = vunpack.c.h.b16 %v620
    %v715 = vunpack.c.l.b16 %v621
    %v716 = vunpack.c.l.b16 %v622
    %v717 = vunpack.c.h.b16 %v622
    %v718 = vunpack.c.l.b16 %v623
    %v719 = vunpack.c.l.b16 %v624
    %v720 = vunpack.c.h.b16 %v624
    %v721 = vunpack.c.l.b16 %v625
    %v722 = vpack.c.b16 %v677, %v674
    %v723 = vpack.c.b16 %v678, %v675
    %v724 = vpack.c.b16 %v679, %v676
    %v725 = vpack.c.b16 %v683, %v680
    %v726 = vpack.c.b16 %v684, %v681
    %v727 = vpack.c.b16 %v685, %v682
    %v728 = vpack.c.b16 %v689, %v686
    %v729 = vpack.c.b16 %v690, %v687
    %v730 = vpack.c.b16 %v691, %v688
    %v731 = vpack.c.b16 %v695, %v692
    %v732 = vpack.c.b16 %v696, %v693
    %v733 = vpack.c.b16 %v697, %v694
    %v734 = vpack.c.b16 %v701, %v698
    %v735 = vpack.c.b16 %v702, %v699
    %v736 = vpack.c.b16 %v703, %v700
    %v737 = vpack.c.b16 %v707, %v704
    %v738 = vpack.c.b16 %v708, %v705
    %v739 = vpack.c.b16 %v709, %v706
    %v740 = vpack.c.b16 %v713, %v710
    %v741 = vpack.c.b16 %v714, %v711
    %v742 = vpack.c.b16 %v715, %v712
    %v743 = vpack.c.b16 %v719, %v716
    %v744 = vpack.c.b16 %v720, %v717
    %v745 = vpack.c.b16 %v721, %v718
    %770 = vmatprep.subr.bf16.mxu0 %v744
    %771 = vmatpush1.bf16.msra.mxu0 %v743
    %772 = vmatprep.subr.bf16.mxu0 %v741
    %773 = vmatpush1.bf16.msra.mxu0 %v740
    %774 = vmatprep.subr.bf16.mxu0 %v738
    %775 = vmatpush1.bf16.msra.mxu0 %v737
    %776 = vmatprep.subr.bf16.mxu0 %v735
    %777 = vmatpush1.bf16.msra.mxu0 %v734
    %778 = vmatprep.subr.bf16.mxu0 %v732
    %779 = vmatpush1.bf16.msra.mxu0 %v731
    %780 = vmatprep.subr.bf16.mxu0 %v729
    %781 = vmatpush1.bf16.msra.mxu0 %v728
    %782 = vmatprep.subr.bf16.mxu0 %v726
    %783 = vmatpush1.bf16.msra.mxu0 %v725
    %784 = vmatprep.subr.bf16.mxu0 %v723
    %785 = vmatpush1.bf16.msra.mxu0 %v722
    %786 = vmatprep.subr.bf16.mxu0 0
    %787 = vmatpush2.bf16.msra.mxu0 0
    %788 = vmatprep.subr.bf16.mxu0 0
    %789 = vmatpush2.bf16.msra.mxu0 0
    %790 = vmatprep.subr.bf16.mxu0 0
    %791 = vmatpush2.bf16.msra.mxu0 0
    %792 = vmatprep.subr.bf16.mxu0 0
    %793 = vmatpush2.bf16.msra.mxu0 0
    %794 = vmatprep.subr.bf16.mxu0 0
    %795 = vmatpush2.bf16.msra.mxu0 0
    %796 = vmatprep.subr.bf16.mxu0 0
    %797 = vmatpush2.bf16.msra.mxu0 0
    %798 = vmatprep.subr.bf16.mxu0 0
    %799 = vmatpush2.bf16.msra.mxu0 0
    %800 = vmatprep.subr.bf16.mxu0 0
    %801 = vmatpush2.bf16.msra.mxu0 0
    %802 = vmatprep.mubr.bf16.mxu0 0
    %803 = vmatmul.mubr.bf16.gmra.mxu0 0
    %v804 = vpop.f32.mrf.mxu0
    %v805 = vadd.f32 %v630, %v804
    %v806 = vpop.f32.mrf.mxu0
    %v807 = vadd.f32 %v634, %v806
    %v808 = vpop.f32.mrf.mxu0
    %v809 = vpop.f32.mrf.mxu0
    %810 = vdwg.mxu0
    %811 = vmatprep.subr.bf16.mxu0 0
    %812 = vmatpush1.bf16.msra.mxu0 %v745
    %813 = vmatprep.subr.bf16.mxu0 0
    %814 = vmatpush1.bf16.msra.mxu0 %v742
    %815 = vmatprep.subr.bf16.mxu0 0
    %816 = vmatpush1.bf16.msra.mxu0 %v739
    %817 = vmatprep.subr.bf16.mxu0 0
    %818 = vmatpush1.bf16.msra.mxu0 %v736
    %819 = vmatprep.subr.bf16.mxu0 0
    %820 = vmatpush1.bf16.msra.mxu0 %v733
    %821 = vmatprep.subr.bf16.mxu0 0
    %822 = vmatpush1.bf16.msra.mxu0 %v730
    %823 = vmatprep.subr.bf16.mxu0 0
    %824 = vmatpush1.bf16.msra.mxu0 %v727
    %825 = vmatprep.subr.bf16.mxu0 0
    %826 = vmatpush1.bf16.msra.mxu0 %v724
    %827 = vmatprep.subr.bf16.mxu0 0
    %828 = vmatpush2.bf16.msra.mxu0 0
    %829 = vmatprep.subr.bf16.mxu0 0
    %830 = vmatpush2.bf16.msra.mxu0 0
    %831 = vmatprep.subr.bf16.mxu0 0
    %832 = vmatpush2.bf16.msra.mxu0 0
    %833 = vmatprep.subr.bf16.mxu0 0
    %834 = vmatpush2.bf16.msra.mxu0 0
    %835 = vmatprep.subr.bf16.mxu0 0
    %836 = vmatpush2.bf16.msra.mxu0 0
    %837 = vmatprep.subr.bf16.mxu0 0
    %838 = vmatpush2.bf16.msra.mxu0 0
    %839 = vmatprep.subr.bf16.mxu0 0
    %840 = vmatpush2.bf16.msra.mxu0 0
    %841 = vmatprep.subr.bf16.mxu0 0
    %842 = vmatpush2.bf16.msra.mxu0 0
    %843 = vmatprep.mubr.bf16.mxu0 0
    %844 = vmatmul.mubr.bf16.gmra.mxu0 0
    %v845 = vpop.f32.mrf.mxu0
    %v846 = vadd.f32 %v638, %v845
    %v847 = vpop.f32.mrf.mxu0
    %v848 = vpop.f32.mrf.mxu0
    %v849 = vpop.f32.mrf.mxu0
    %850 = vdwg.mxu0
    %v851 = vld [vmem:[#allocation2] sm:$0xff]
    %v852 = vld [vmem:[#allocation2 + $0x8] sm:$0xff]
    %v853 = vld [vmem:[#allocation2 + $0x10] sm:$0xff]
    %v854 = vadd.f32 %v851, %v805
    %v855 = vxor.u32 %v854, 2147483648
    %v856 = vmul.f32 %v855, 1.442695
    %v857 = vpow.pop %v856
    %v858 = vadd.f32 %v857, 1.0
    %v859 = vrcp.pop %v858
    %v860 = vmul.f32 1.0, %v859
    %v861 = vadd.f32 %v852, %v807
    %v862 = vxor.u32 %v861, 2147483648
    %v863 = vmul.f32 %v862, 1.442695
    %v864 = vpow.pop %v863
    %v865 = vadd.f32 %v864, 1.0
    %v866 = vrcp.pop %v865
    %v867 = vmul.f32 1.0, %v866
    %v868 = vmul.f32 %v860, %v846
    %v869 = vadd.f32 %v853, %v868
    %v870 = vtanh.pop %v869
    %v871 = vsub.f32 1.0, %v867
    %v872 = vmul.f32 %v871, %v870
    %v873 = vmul.f32 %v867, 0.0
    %v874 = vadd.f32 %v872, %v873
    %v875 = vsel %vm70, %v874, 0.0
    %v876 = vld [vmem:[%s7] sm:$0xff]
    %v877 = vld [vmem:[%s7 + $0x8] sm:$0xf]
    %v878 = vld [vmem:[%s7 + $0xc] sm:$0xff]
    %v879 = vld [vmem:[%s7 + $0x14] sm:$0xf]
    %v880 = vld [vmem:[%s7 + $0x18] sm:$0xff]
    %v881 = vld [vmem:[%s7 + $0x20] sm:$0xf]
    %v882 = vld [vmem:[%s7 + $0x24] sm:$0xff]
    %v883 = vld [vmem:[%s7 + $0x2c] sm:$0xf]
    %v884 = vld [vmem:[%s7 + $0x30] sm:$0xff]
    %v885 = vld [vmem:[%s7 + $0x38] sm:$0xf]
    %v886 = vld [vmem:[%s7 + $0x3c] sm:$0xff]
    %v887 = vld [vmem:[%s7 + $0x44] sm:$0xf]
    %v888 = vld [vmem:[%s7 + $0x48] sm:$0xff]
    %v889 = vld [vmem:[%s7 + $0x50] sm:$0xf]
    %v890 = vld [vmem:[%s7 + $0x54] sm:$0xff]
    %v891 = vld [vmem:[%s7 + $0x5c] sm:$0xf]
    %v892 = vld [vmem:[%s7 + $0x60] sm:$0xff]
    %v893 = vld [vmem:[%s7 + $0x68] sm:$0xf]
    %v894 = vld [vmem:[%s7 + $0x6c] sm:$0xff]
    %v895 = vld [vmem:[%s7 + $0x74] sm:$0xf]
    %v896 = vld [vmem:[%s7 + $0x78] sm:$0xff]
    %v897 = vld [vmem:[%s7 + $0x80] sm:$0xf]
    %v898 = vld [vmem:[%s7 + $0x84] sm:$0xff]
    %v899 = vld [vmem:[%s7 + $0x8c] sm:$0xf]
    %v900 = vld [vmem:[%s7 + $0x90] sm:$0xff]
    %v901 = vld [vmem:[%s7 + $0x98] sm:$0xf]
    %v902 = vld [vmem:[%s7 + $0x9c] sm:$0xff]
    %v903 = vld [vmem:[%s7 + $0xa4] sm:$0xf]
    %v904 = vld [vmem:[%s7 + $0xa8] sm:$0xff]
    %v905 = vld [vmem:[%s7 + $0xb0] sm:$0xf]
    %v906 = vld [vmem:[%s7 + $0xb4] sm:$0xff]
    %v907 = vld [vmem:[%s7 + $0xbc] sm:$0xf]
    %v909 = vlaneseq
    %v910 = vshrl.u32 %v909, 7
    %v911 = vsub.s32 0, %v910
    %v912 = vrot.slane %v593, %v911
    %v913 = vlaneseq
    %v914 = vshrl.u32 %v913, 7
    %v915 = vsub.s32 1, %v914
    %v916 = vrot.slane %v593, %v915
    %v917 = vlaneseq
    %v918 = vshrl.u32 %v917, 7
    %v919 = vsub.s32 2, %v918
    %v920 = vrot.slane %v593, %v919
    %v956 = vunpack.c.l.b16 %v876
    %v957 = vunpack.c.h.b16 %v876
    %v958 = vunpack.c.l.b16 %v877
    %v959 = vunpack.c.l.b16 %v878
    %v960 = vunpack.c.h.b16 %v878
    %v961 = vunpack.c.l.b16 %v879
    %v962 = vunpack.c.l.b16 %v880
    %v963 = vunpack.c.h.b16 %v880
    %v964 = vunpack.c.l.b16 %v881
    %v965 = vunpack.c.l.b16 %v882
    %v966 = vunpack.c.h.b16 %v882
    %v967 = vunpack.c.l.b16 %v883
    %v968 = vunpack.c.l.b16 %v884
    %v969 = vunpack.c.h.b16 %v884
    %v970 = vunpack.c.l.b16 %v885
    %v971 = vunpack.c.l.b16 %v886
    %v972 = vunpack.c.h.b16 %v886
    %v973 = vunpack.c.l.b16 %v887
    %v974 = vunpack.c.l.b16 %v888
    %v975 = vunpack.c.h.b16 %v888
    %v976 = vunpack.c.l.b16 %v889
    %v977 = vunpack.c.l.b16 %v890
    %v978 = vunpack.c.h.b16 %v890
    %v979 = vunpack.c.l.b16 %v891
    %v980 = vunpack.c.l.b16 %v892
    %v981 = vunpack.c.h.b16 %v892
    %v982 = vunpack.c.l.b16 %v893
    %v983 = vunpack.c.l.b16 %v894
    %v984 = vunpack.c.h.b16 %v894
    %v985 = vunpack.c.l.b16 %v895
    %v986 = vunpack.c.l.b16 %v896
    %v987 = vunpack.c.h.b16 %v896
    %v988 = vunpack.c.l.b16 %v897
    %v989 = vunpack.c.l.b16 %v898
    %v990 = vunpack.c.h.b16 %v898
    %v991 = vunpack.c.l.b16 %v899
    %v992 = vunpack.c.l.b16 %v900
    %v993 = vunpack.c.h.b16 %v900
    %v994 = vunpack.c.l.b16 %v901
    %v995 = vunpack.c.l.b16 %v902
    %v996 = vunpack.c.h.b16 %v902
    %v997 = vunpack.c.l.b16 %v903
    %v998 = vunpack.c.l.b16 %v904
    %v999 = vunpack.c.h.b16 %v904
    %v1000 = vunpack.c.l.b16 %v905
    %v1001 = vunpack.c.l.b16 %v906
    %v1002 = vunpack.c.h.b16 %v906
    %v1003 = vunpack.c.l.b16 %v907
    %v1004 = vpack.c.b16 %v959, %v956
    %v1005 = vpack.c.b16 %v960, %v957
    %v1006 = vpack.c.b16 %v961, %v958
    %v1007 = vpack.c.b16 %v965, %v962
    %v1008 = vpack.c.b16 %v966, %v963
    %v1009 = vpack.c.b16 %v967, %v964
    %v1010 = vpack.c.b16 %v971, %v968
    %v1011 = vpack.c.b16 %v972, %v969
    %v1012 = vpack.c.b16 %v973, %v970
    %v1013 = vpack.c.b16 %v977, %v974
    %v1014 = vpack.c.b16 %v978, %v975
    %v1015 = vpack.c.b16 %v979, %v976
    %v1016 = vpack.c.b16 %v983, %v980
    %v1017 = vpack.c.b16 %v984, %v981
    %v1018 = vpack.c.b16 %v985, %v982
    %v1019 = vpack.c.b16 %v989, %v986
    %v1020 = vpack.c.b16 %v990, %v987
    %v1021 = vpack.c.b16 %v991, %v988
    %v1022 = vpack.c.b16 %v995, %v992
    %v1023 = vpack.c.b16 %v996, %v993
    %v1024 = vpack.c.b16 %v997, %v994
    %v1025 = vpack.c.b16 %v1001, %v998
    %v1026 = vpack.c.b16 %v1002, %v999
    %v1027 = vpack.c.b16 %v1003, %v1000
    %1052 = vmatprep.subr.bf16.mxu0 %v1026
    %1053 = vmatpush1.bf16.msra.mxu0 %v1025
    %1054 = vmatprep.subr.bf16.mxu0 %v1023
    %1055 = vmatpush1.bf16.msra.mxu0 %v1022
    %1056 = vmatprep.subr.bf16.mxu0 %v1020
    %1057 = vmatpush1.bf16.msra.mxu0 %v1019
    %1058 = vmatprep.subr.bf16.mxu0 %v1017
    %1059 = vmatpush1.bf16.msra.mxu0 %v1016
    %1060 = vmatprep.subr.bf16.mxu0 %v1014
    %1061 = vmatpush1.bf16.msra.mxu0 %v1013
    %1062 = vmatprep.subr.bf16.mxu0 %v1011
    %1063 = vmatpush1.bf16.msra.mxu0 %v1010
    %1064 = vmatprep.subr.bf16.mxu0 %v1008
    %1065 = vmatpush1.bf16.msra.mxu0 %v1007
    %1066 = vmatprep.subr.bf16.mxu0 %v1005
    %1067 = vmatpush1.bf16.msra.mxu0 %v1004
    %1068 = vmatprep.subr.bf16.mxu0 0
    %1069 = vmatpush2.bf16.msra.mxu0 0
    %1070 = vmatprep.subr.bf16.mxu0 0
    %1071 = vmatpush2.bf16.msra.mxu0 0
    %1072 = vmatprep.subr.bf16.mxu0 0
    %1073 = vmatpush2.bf16.msra.mxu0 0
    %1074 = vmatprep.subr.bf16.mxu0 0
    %1075 = vmatpush2.bf16.msra.mxu0 0
    %1076 = vmatprep.subr.bf16.mxu0 0
    %1077 = vmatpush2.bf16.msra.mxu0 0
    %1078 = vmatprep.subr.bf16.mxu0 0
    %1079 = vmatpush2.bf16.msra.mxu0 0
    %1080 = vmatprep.subr.bf16.mxu0 0
    %1081 = vmatpush2.bf16.msra.mxu0 0
    %1082 = vmatprep.subr.bf16.mxu0 0
    %1083 = vmatpush2.bf16.msra.mxu0 0
    %1084 = vmatprep.mubr.bf16.mxu0 0
    %1085 = vmatmul.mubr.bf16.gmra.mxu0 0
    %v1086 = vpop.f32.mrf.mxu0
    %v1087 = vadd.f32 %v912, %v1086
    %v1088 = vpop.f32.mrf.mxu0
    %v1089 = vadd.f32 %v916, %v1088
    %v1090 = vpop.f32.mrf.mxu0
    %v1091 = vpop.f32.mrf.mxu0
    %1092 = vdwg.mxu0
    %1093 = vmatprep.subr.bf16.mxu0 0
    %1094 = vmatpush1.bf16.msra.mxu0 %v1027
    %1095 = vmatprep.subr.bf16.mxu0 0
    %1096 = vmatpush1.bf16.msra.mxu0 %v1024
    %1097 = vmatprep.subr.bf16.mxu0 0
    %1098 = vmatpush1.bf16.msra.mxu0 %v1021
    %1099 = vmatprep.subr.bf16.mxu0 0
    %1100 = vmatpush1.bf16.msra.mxu0 %v1018
    %1101 = vmatprep.subr.bf16.mxu0 0
    %1102 = vmatpush1.bf16.msra.mxu0 %v1015
    %1103 = vmatprep.subr.bf16.mxu0 0
    %1104 = vmatpush1.bf16.msra.mxu0 %v1012
    %1105 = vmatprep.subr.bf16.mxu0 0
    %1106 = vmatpush1.bf16.msra.mxu0 %v1009
    %1107 = vmatprep.subr.bf16.mxu0 0
    %1108 = vmatpush1.bf16.msra.mxu0 %v1006
    %1109 = vmatprep.subr.bf16.mxu0 0
    %1110 = vmatpush2.bf16.msra.mxu0 0
    %1111 = vmatprep.subr.bf16.mxu0 0
    %1112 = vmatpush2.bf16.msra.mxu0 0
    %1113 = vmatprep.subr.bf16.mxu0 0
    %1114 = vmatpush2.bf16.msra.mxu0 0
    %1115 = vmatprep.subr.bf16.mxu0 0
    %1116 = vmatpush2.bf16.msra.mxu0 0
    %1117 = vmatprep.subr.bf16.mxu0 0
    %1118 = vmatpush2.bf16.msra.mxu0 0
    %1119 = vmatprep.subr.bf16.mxu0 0
    %1120 = vmatpush2.bf16.msra.mxu0 0
    %1121 = vmatprep.subr.bf16.mxu0 0
    %1122 = vmatpush2.bf16.msra.mxu0 0
    %1123 = vmatprep.subr.bf16.mxu0 0
    %1124 = vmatpush2.bf16.msra.mxu0 0
    %1125 = vmatprep.mubr.bf16.mxu0 0
    %1126 = vmatmul.mubr.bf16.gmra.mxu0 0
    %v1127 = vpop.f32.mrf.mxu0
    %v1128 = vadd.f32 %v920, %v1127
    %v1129 = vpop.f32.mrf.mxu0
    %v1130 = vpop.f32.mrf.mxu0
    %v1131 = vpop.f32.mrf.mxu0
    %1132 = vdwg.mxu0
    %v1133 = vld [vmem:[#allocation3 + $0xa8] sm:$0xff]
    %v1134 = vld [vmem:[#allocation3 + $0xb0] sm:$0xff]
    %v1135 = vld [vmem:[#allocation3 + $0xb8] sm:$0xff]
    %v1136 = vadd.f32 %v1133, %v1087
    %v1137 = vxor.u32 %v1136, 2147483648
    %v1138 = vmul.f32 %v1137, 1.442695
    %v1139 = vpow.pop %v1138
    %v1140 = vadd.f32 %v1139, 1.0
    %v1141 = vrcp.pop %v1140
    %v1142 = vmul.f32 1.0, %v1141
    %v1143 = vadd.f32 %v1134, %v1089
    %v1144 = vxor.u32 %v1143, 2147483648
    %v1145 = vmul.f32 %v1144, 1.442695
    %v1146 = vpow.pop %v1145
    %v1147 = vadd.f32 %v1146, 1.0
    %v1148 = vrcp.pop %v1147
    %v1149 = vmul.f32 1.0, %v1148
    %v1150 = vmul.f32 %v1142, %v1128
    %v1151 = vadd.f32 %v1135, %v1150
    %v1152 = vtanh.pop %v1151
    %v1153 = vsub.f32 1.0, %v1149
    %v1154 = vmul.f32 %v1153, %v1152
    %v1155 = vmul.f32 %v1149, 0.0
    %v1156 = vadd.f32 %v1154, %v1155
    %v1157 = vsel %vm112, %v1156, 0.0
    %v1158 = vpack.c.bf16 %v875, %v875
    %1159 = vst [vmem:[#allocation4] sm:$0xf] %v1158
    %v1160 = vpack.c.bf16 %v1157, %v1157
    %1161 = vst [vmem:[#allocation4 + $0x3c] sm:$0xf] %v1160
    %v1162 = vld [vmem:[%s3] sm:$0xff]
    %v1163 = vld [vmem:[%s3 + $0x8] sm:$0xf]
    %v1164 = vld [vmem:[%s3 + $0xc] sm:$0xff]
    %v1165 = vld [vmem:[%s3 + $0x14] sm:$0xf]
    %v1166 = vld [vmem:[%s3 + $0x18] sm:$0xff]
    %v1167 = vld [vmem:[%s3 + $0x20] sm:$0xf]
    %v1168 = vld [vmem:[%s3 + $0x24] sm:$0xff]
    %v1169 = vld [vmem:[%s3 + $0x2c] sm:$0xf]
    %v1170 = vld [vmem:[%s3 + $0x30] sm:$0xff]
    %v1171 = vld [vmem:[%s3 + $0x38] sm:$0xf]
    %v1172 = vld [vmem:[%s3 + $0x3c] sm:$0xff]
    %v1173 = vld [vmem:[%s3 + $0x44] sm:$0xf]
    %v1174 = vld [vmem:[%s3 + $0x48] sm:$0xff]
    %v1175 = vld [vmem:[%s3 + $0x50] sm:$0xf]
    %v1176 = vld [vmem:[%s3 + $0x54] sm:$0xff]
    %v1177 = vld [vmem:[%s3 + $0x5c] sm:$0xf]
    %v1178 = vld [vmem:[%s3 + $0x60] sm:$0xff]
    %v1179 = vld [vmem:[%s3 + $0x68] sm:$0xf]
    %v1180 = vld [vmem:[%s3 + $0x6c] sm:$0xff]
    %v1181 = vld [vmem:[%s3 + $0x74] sm:$0xf]
    %v1182 = vld [vmem:[%s3 + $0x78] sm:$0xff]
    %v1183 = vld [vmem:[%s3 + $0x80] sm:$0xf]
    %v1184 = vld [vmem:[%s3 + $0x84] sm:$0xff]
    %v1185 = vld [vmem:[%s3 + $0x8c] sm:$0xf]
    %v1186 = vld [vmem:[%s3 + $0x90] sm:$0xff]
    %v1187 = vld [vmem:[%s3 + $0x98] sm:$0xf]
    %v1188 = vld [vmem:[%s3 + $0x9c] sm:$0xff]
    %v1189 = vld [vmem:[%s3 + $0xa4] sm:$0xf]
    %v1190 = vld [vmem:[%s3 + $0xa8] sm:$0xff]
    %v1191 = vld [vmem:[%s3 + $0xb0] sm:$0xf]
    %v1192 = vld [vmem:[%s3 + $0xb4] sm:$0xff]
    %v1193 = vld [vmem:[%s3 + $0xbc] sm:$0xf]
    %v1226 = vunpack.c.l.b16 %v1162
    %v1227 = vunpack.c.h.b16 %v1162
    %v1228 = vunpack.c.l.b16 %v1163
    %v1229 = vunpack.c.l.b16 %v1164
    %v1230 = vunpack.c.h.b16 %v1164
    %v1231 = vunpack.c.l.b16 %v1165
    %v1232 = vunpack.c.l.b16 %v1166
    %v1233 = vunpack.c.h.b16 %v1166
    %v1234 = vunpack.c.l.b16 %v1167
    %v1235 = vunpack.c.l.b16 %v1168
    %v1236 = vunpack.c.h.b16 %v1168
    %v1237 = vunpack.c.l.b16 %v1169
    %v1238 = vunpack.c.l.b16 %v1170
    %v1239 = vunpack.c.h.b16 %v1170
    %v1240 = vunpack.c.l.b16 %v1171
    %v1241 = vunpack.c.l.b16 %v1172
    %v1242 = vunpack.c.h.b16 %v1172
    %v1243 = vunpack.c.l.b16 %v1173
    %v1244 = vunpack.c.l.b16 %v1174
    %v1245 = vunpack.c.h.b16 %v1174
    %v1246 = vunpack.c.l.b16 %v1175
    %v1247 = vunpack.c.l.b16 %v1176
    %v1248 = vunpack.c.h.b16 %v1176
    %v1249 = vunpack.c.l.b16 %v1177
    %v1250 = vunpack.c.l.b16 %v1178
    %v1251 = vunpack.c.h.b16 %v1178
    %v1252 = vunpack.c.l.b16 %v1179
    %v1253 = vunpack.c.l.b16 %v1180
    %v1254 = vunpack.c.h.b16 %v1180
    %v1255 = vunpack.c.l.b16 %v1181
    %v1256 = vunpack.c.l.b16 %v1182
    %v1257 = vunpack.c.h.b16 %v1182
    %v1258 = vunpack.c.l.b16 %v1183
    %v1259 = vunpack.c.l.b16 %v1184
    %v1260 = vunpack.c.h.b16 %v1184
    %v1261 = vunpack.c.l.b16 %v1185
    %v1262 = vunpack.c.l.b16 %v1186
    %v1263 = vunpack.c.h.b16 %v1186
    %v1264 = vunpack.c.l.b16 %v1187
    %v1265 = vunpack.c.l.b16 %v1188
    %v1266 = vunpack.c.h.b16 %v1188
    %v1267 = vunpack.c.l.b16 %v1189
    %v1268 = vunpack.c.l.b16 %v1190
    %v1269 = vunpack.c.h.b16 %v1190
    %v1270 = vunpack.c.l.b16 %v1191
    %v1271 = vunpack.c.l.b16 %v1192
    %v1272 = vunpack.c.h.b16 %v1192
    %v1273 = vunpack.c.l.b16 %v1193
    %v1274 = vpack.c.b16 %v1229, %v1226
    %v1275 = vpack.c.b16 %v1230, %v1227
    %v1276 = vpack.c.b16 %v1231, %v1228
    %v1277 = vpack.c.b16 %v1235, %v1232
    %v1278 = vpack.c.b16 %v1236, %v1233
    %v1279 = vpack.c.b16 %v1237, %v1234
    %v1280 = vpack.c.b16 %v1241, %v1238
    %v1281 = vpack.c.b16 %v1242, %v1239
    %v1282 = vpack.c.b16 %v1243, %v1240
    %v1283 = vpack.c.b16 %v1247, %v1244
    %v1284 = vpack.c.b16 %v1248, %v1245
    %v1285 = vpack.c.b16 %v1249, %v1246
    %v1286 = vpack.c.b16 %v1253, %v1250
    %v1287 = vpack.c.b16 %v1254, %v1251
    %v1288 = vpack.c.b16 %v1255, %v1252
    %v1289 = vpack.c.b16 %v1259, %v1256
    %v1290 = vpack.c.b16 %v1260, %v1257
    %v1291 = vpack.c.b16 %v1261, %v1258
    %v1292 = vpack.c.b16 %v1265, %v1262
    %v1293 = vpack.c.b16 %v1266, %v1263
    %v1294 = vpack.c.b16 %v1267, %v1264
    %v1295 = vpack.c.b16 %v1271, %v1268
    %v1296 = vpack.c.b16 %v1272, %v1269
    %v1297 = vpack.c.b16 %v1273, %v1270
    %1322 = vmatprep.subr.bf16.mxu0 %v1296
    %1323 = vmatpush1.bf16.msra.mxu0 %v1295
    %1324 = vmatprep.subr.bf16.mxu0 %v1293
    %1325 = vmatpush1.bf16.msra.mxu0 %v1292
    %1326 = vmatprep.subr.bf16.mxu0 %v1290
    %1327 = vmatpush1.bf16.msra.mxu0 %v1289
    %1328 = vmatprep.subr.bf16.mxu0 %v1287
    %1329 = vmatpush1.bf16.msra.mxu0 %v1286
    %1330 = vmatprep.subr.bf16.mxu0 %v1284
    %1331 = vmatpush1.bf16.msra.mxu0 %v1283
    %1332 = vmatprep.subr.bf16.mxu0 %v1281
    %1333 = vmatpush1.bf16.msra.mxu0 %v1280
    %1334 = vmatprep.subr.bf16.mxu0 %v1278
    %1335 = vmatpush1.bf16.msra.mxu0 %v1277
    %1336 = vmatprep.subr.bf16.mxu0 %v1275
    %1337 = vmatpush1.bf16.msra.mxu0 %v1274
    %1338 = vmatprep.subr.bf16.mxu0 0
    %1339 = vmatpush2.bf16.msra.mxu0 0
    %1340 = vmatprep.subr.bf16.mxu0 0
    %1341 = vmatpush2.bf16.msra.mxu0 0
    %1342 = vmatprep.subr.bf16.mxu0 0
    %1343 = vmatpush2.bf16.msra.mxu0 0
    %1344 = vmatprep.subr.bf16.mxu0 0
    %1345 = vmatpush2.bf16.msra.mxu0 0
    %1346 = vmatprep.subr.bf16.mxu0 0
    %1347 = vmatpush2.bf16.msra.mxu0 0
    %1348 = vmatprep.subr.bf16.mxu0 0
    %1349 = vmatpush2.bf16.msra.mxu0 0
    %1350 = vmatprep.subr.bf16.mxu0 0
    %1351 = vmatpush2.bf16.msra.mxu0 0
    %1352 = vmatprep.subr.bf16.mxu0 0
    %1353 = vmatpush2.bf16.msra.mxu0 0
    %1354 = vmatprep.mubr.bf16.mxu0 0
    %1355 = vmatmul.mubr.bf16.gmra.mxu0 %v1158
    %v1356 = vpop.f32.mrf.mxu0
    %v1357 = vadd.f32 %v630, %v1356
    %v1358 = vpop.f32.mrf.mxu0
    %v1359 = vadd.f32 %v634, %v1358
    %v1360 = vpop.f32.mrf.mxu0
    %v1361 = vpop.f32.mrf.mxu0
    %1362 = vdwg.mxu0
    %1363 = vmatprep.subr.bf16.mxu0 0
    %1364 = vmatpush1.bf16.msra.mxu0 %v1297
    %1365 = vmatprep.subr.bf16.mxu0 0
    %1366 = vmatpush1.bf16.msra.mxu0 %v1294
    %1367 = vmatprep.subr.bf16.mxu0 0
    %1368 = vmatpush1.bf16.msra.mxu0 %v1291
    %1369 = vmatprep.subr.bf16.mxu0 0
    %1370 = vmatpush1.bf16.msra.mxu0 %v1288
    %1371 = vmatprep.subr.bf16.mxu0 0
    %1372 = vmatpush1.bf16.msra.mxu0 %v1285
    %1373 = vmatprep.subr.bf16.mxu0 0
    %1374 = vmatpush1.bf16.msra.mxu0 %v1282
    %1375 = vmatprep.subr.bf16.mxu0 0
    %1376 = vmatpush1.bf16.msra.mxu0 %v1279
    %1377 = vmatprep.subr.bf16.mxu0 0
    %1378 = vmatpush1.bf16.msra.mxu0 %v1276
    %1379 = vmatprep.subr.bf16.mxu0 0
    %1380 = vmatpush2.bf16.msra.mxu0 0
    %1381 = vmatprep.subr.bf16.mxu0 0
    %1382 = vmatpush2.bf16.msra.mxu0 0
    %1383 = vmatprep.subr.bf16.mxu0 0
    %1384 = vmatpush2.bf16.msra.mxu0 0
    %1385 = vmatprep.subr.bf16.mxu0 0
    %1386 = vmatpush2.bf16.msra.mxu0 0
    %1387 = vmatprep.subr.bf16.mxu0 0
    %1388 = vmatpush2.bf16.msra.mxu0 0
    %1389 = vmatprep.subr.bf16.mxu0 0
    %1390 = vmatpush2.bf16.msra.mxu0 0
    %1391 = vmatprep.subr.bf16.mxu0 0
    %1392 = vmatpush2.bf16.msra.mxu0 0
    %1393 = vmatprep.subr.bf16.mxu0 0
    %1394 = vmatpush2.bf16.msra.mxu0 0
    %1395 = vmatprep.mubr.bf16.mxu0 0
    %1396 = vmatmul.mubr.bf16.gmra.mxu0 %v1158
    %v1397 = vpop.f32.mrf.mxu0
    %v1398 = vadd.f32 %v638, %v1397
    %v1399 = vpop.f32.mrf.mxu0
    %v1400 = vpop.f32.mrf.mxu0
    %v1401 = vpop.f32.mrf.mxu0
    %1402 = vdwg.mxu0
    %v1403 = vld [vmem:[#allocation2 + $0x18] sm:$0xff]
    %v1404 = vld [vmem:[#allocation2 + $0x20] sm:$0xff]
    %v1405 = vld [vmem:[#allocation2 + $0x28] sm:$0xff]
    %v1406 = vadd.f32 %v1403, %v1357
    %v1407 = vxor.u32 %v1406, 2147483648
    %v1408 = vmul.f32 %v1407, 1.442695
    %v1409 = vpow.pop %v1408
    %v1410 = vadd.f32 %v1409, 1.0
    %v1411 = vrcp.pop %v1410
    %v1412 = vmul.f32 1.0, %v1411
    %v1413 = vadd.f32 %v1404, %v1359
    %v1414 = vxor.u32 %v1413, 2147483648
    %v1415 = vmul.f32 %v1414, 1.442695
    %v1416 = vpow.pop %v1415
    %v1417 = vadd.f32 %v1416, 1.0
    %v1418 = vrcp.pop %v1417
    %v1419 = vmul.f32 1.0, %v1418
    %v1420 = vmul.f32 %v1412, %v1398
    %v1421 = vadd.f32 %v1405, %v1420
    %v1422 = vtanh.pop %v1421
    %v1423 = vsub.f32 1.0, %v1419
    %v1424 = vmul.f32 %v1423, %v1422
    %v1425 = vmul.f32 %v1419, %v875
    %v1426 = vadd.f32 %v1424, %v1425
    %v1427 = vsel %vm76, %v1426, %v875
    %v1428 = vsel %vm76, %v1426, 0.0
    %v1429 = vld [vmem:[%s7] sm:$0xff]
    %v1430 = vld [vmem:[%s7 + $0x8] sm:$0xf]
    %v1431 = vld [vmem:[%s7 + $0xc] sm:$0xff]
    %v1432 = vld [vmem:[%s7 + $0x14] sm:$0xf]
    %v1433 = vld [vmem:[%s7 + $0x18] sm:$0xff]
    %v1434 = vld [vmem:[%s7 + $0x20] sm:$0xf]
    %v1435 = vld [vmem:[%s7 + $0x24] sm:$0xff]
    %v1436 = vld [vmem:[%s7 + $0x2c] sm:$0xf]
    %v1437 = vld [vmem:[%s7 + $0x30] sm:$0xff]
    %v1438 = vld [vmem:[%s7 + $0x38] sm:$0xf]
    %v1439 = vld [vmem:[%s7 + $0x3c] sm:$0xff]
    %v1440 = vld [vmem:[%s7 + $0x44] sm:$0xf]
    %v1441 = vld [vmem:[%s7 + $0x48] sm:$0xff]
    %v1442 = vld [vmem:[%s7 + $0x50] sm:$0xf]
    %v1443 = vld [vmem:[%s7 + $0x54] sm:$0xff]
    %v1444 = vld [vmem:[%s7 + $0x5c] sm:$0xf]
    %v1445 = vld [vmem:[%s7 + $0x60] sm:$0xff]
    %v1446 = vld [vmem:[%s7 + $0x68] sm:$0xf]
    %v1447 = vld [vmem:[%s7 + $0x6c] sm:$0xff]
    %v1448 = vld [vmem:[%s7 + $0x74] sm:$0xf]
    %v1449 = vld [vmem:[%s7 + $0x78] sm:$0xff]
    %v1450 = vld [vmem:[%s7 + $0x80] sm:$0xf]
    %v1451 = vld [vmem:[%s7 + $0x84] sm:$0xff]
    %v1452 = vld [vmem:[%s7 + $0x8c] sm:$0xf]
    %v1453 = vld [vmem:[%s7 + $0x90] sm:$0xff]
    %v1454 = vld [vmem:[%s7 + $0x98] sm:$0xf]
    %v1455 = vld [vmem:[%s7 + $0x9c] sm:$0xff]
    %v1456 = vld [vmem:[%s7 + $0xa4] sm:$0xf]
    %v1457 = vld [vmem:[%s7 + $0xa8] sm:$0xff]
    %v1458 = vld [vmem:[%s7 + $0xb0] sm:$0xf]
    %v1459 = vld [vmem:[%s7 + $0xb4] sm:$0xff]
    %v1460 = vld [vmem:[%s7 + $0xbc] sm:$0xf]
    %v1493 = vunpack.c.l.b16 %v1429
    %v1494 = vunpack.c.h.b16 %v1429
    %v1495 = vunpack.c.l.b16 %v1430
    %v1496 = vunpack.c.l.b16 %v1431
    %v1497 = vunpack.c.h.b16 %v1431
    %v1498 = vunpack.c.l.b16 %v1432
    %v1499 = vunpack.c.l.b16 %v1433
    %v1500 = vunpack.c.h.b16 %v1433
    %v1501 = vunpack.c.l.b16 %v1434
    %v1502 = vunpack.c.l.b16 %v1435
    %v1503 = vunpack.c.h.b16 %v1435
    %v1504 = vunpack.c.l.b16 %v1436
    %v1505 = vunpack.c.l.b16 %v1437
    %v1506 = vunpack.c.h.b16 %v1437
    %v1507 = vunpack.c.l.b16 %v1438
    %v1508 = vunpack.c.l.b16 %v1439
    %v1509 = vunpack.c.h.b16 %v1439
    %v1510 = vunpack.c.l.b16 %v1440
    %v1511 = vunpack.c.l.b16 %v1441
    %v1512 = vunpack.c.h.b16 %v1441
    %v1513 = vunpack.c.l.b16 %v1442
    %v1514 = vunpack.c.l.b16 %v1443
    %v1515 = vunpack.c.h.b16 %v1443
    %v1516 = vunpack.c.l.b16 %v1444
    %v1517 = vunpack.c.l.b16 %v1445
    %v1518 = vunpack.c.h.b16 %v1445
    %v1519 = vunpack.c.l.b16 %v1446
    %v1520 = vunpack.c.l.b16 %v1447
    %v1521 = vunpack.c.h.b16 %v1447
    %v1522 = vunpack.c.l.b16 %v1448
    %v1523 = vunpack.c.l.b16 %v1449
    %v1524 = vunpack.c.h.b16 %v1449
    %v1525 = vunpack.c.l.b16 %v1450
    %v1526 = vunpack.c.l.b16 %v1451
    %v1527 = vunpack.c.h.b16 %v1451
    %v1528 = vunpack.c.l.b16 %v1452
    %v1529 = vunpack.c.l.b16 %v1453
    %v1530 = vunpack.c.h.b16 %v1453
    %v1531 = vunpack.c.l.b16 %v1454
    %v1532 = vunpack.c.l.b16 %v1455
    %v1533 = vunpack.c.h.b16 %v1455
    %v1534 = vunpack.c.l.b16 %v1456
    %v1535 = vunpack.c.l.b16 %v1457
    %v1536 = vunpack.c.h.b16 %v1457
    %v1537 = vunpack.c.l.b16 %v1458
    %v1538 = vunpack.c.l.b16 %v1459
    %v1539 = vunpack.c.h.b16 %v1459
    %v1540 = vunpack.c.l.b16 %v1460
    %v1541 = vpack.c.b16 %v1496, %v1493
    %v1542 = vpack.c.b16 %v1497, %v1494
    %v1543 = vpack.c.b16 %v1498, %v1495
    %v1544 = vpack.c.b16 %v1502, %v1499
    %v1545 = vpack.c.b16 %v1503, %v1500
    %v1546 = vpack.c.b16 %v1504, %v1501
    %v1547 = vpack.c.b16 %v1508, %v1505
    %v1548 = vpack.c.b16 %v1509, %v1506
    %v1549 = vpack.c.b16 %v1510, %v1507
    %v1550 = vpack.c.b16 %v1514, %v1511
    %v1551 = vpack.c.b16 %v1515, %v1512
    %v1552 = vpack.c.b16 %v1516, %v1513
    %v1553 = vpack.c.b16 %v1520, %v1517
    %v1554 = vpack.c.b16 %v1521, %v1518
    %v1555 = vpack.c.b16 %v1522, %v1519
    %v1556 = vpack.c.b16 %v1526, %v1523
    %v1557 = vpack.c.b16 %v1527, %v1524
    %v1558 = vpack.c.b16 %v1528, %v1525
    %v1559 = vpack.c.b16 %v1532, %v1529
    %v1560 = vpack.c.b16 %v1533, %v1530
    %v1561 = vpack.c.b16 %v1534, %v1531
    %v1562 = vpack.c.b16 %v1538, %v1535
    %v1563 = vpack.c.b16 %v1539, %v1536
    %v1564 = vpack.c.b16 %v1540, %v1537
    %1589 = vmatprep.subr.bf16.mxu0 %v1563
    %1590 = vmatpush1.bf16.msra.mxu0 %v1562
    %1591 = vmatprep.subr.bf16.mxu0 %v1560
    %1592 = vmatpush1.bf16.msra.mxu0 %v1559
    %1593 = vmatprep.subr.bf16.mxu0 %v1557
    %1594 = vmatpush1.bf16.msra.mxu0 %v1556
    %1595 = vmatprep.subr.bf16.mxu0 %v1554
    %1596 = vmatpush1.bf16.msra.mxu0 %v1553
    %1597 = vmatprep.subr.bf16.mxu0 %v1551
    %1598 = vmatpush1.bf16.msra.mxu0 %v1550
    %1599 = vmatprep.subr.bf16.mxu0 %v1548
    %1600 = vmatpush1.bf16.msra.mxu0 %v1547
    %1601 = vmatprep.subr.bf16.mxu0 %v1545
    %1602 = vmatpush1.bf16.msra.mxu0 %v1544
    %1603 = vmatprep.subr.bf16.mxu0 %v1542
    %1604 = vmatpush1.bf16.msra.mxu0 %v1541
    %1605 = vmatprep.subr.bf16.mxu0 0
    %1606 = vmatpush2.bf16.msra.mxu0 0
    %1607 = vmatprep.subr.bf16.mxu0 0
    %1608 = vmatpush2.bf16.msra.mxu0 0
    %1609 = vmatprep.subr.bf16.mxu0 0
    %1610 = vmatpush2.bf16.msra.mxu0 0
    %1611 = vmatprep.subr.bf16.mxu0 0
    %1612 = vmatpush2.bf16.msra.mxu0 0
    %1613 = vmatprep.subr.bf16.mxu0 0
    %1614 = vmatpush2.bf16.msra.mxu0 0
    %1615 = vmatprep.subr.bf16.mxu0 0
    %1616 = vmatpush2.bf16.msra.mxu0 0
    %1617 = vmatprep.subr.bf16.mxu0 0
    %1618 = vmatpush2.bf16.msra.mxu0 0
    %1619 = vmatprep.subr.bf16.mxu0 0
    %1620 = vmatpush2.bf16.msra.mxu0 0
    %1621 = vmatprep.mubr.bf16.mxu0 0
    %1622 = vmatmul.mubr.bf16.gmra.mxu0 %v1160
    %v1623 = vpop.f32.mrf.mxu0
    %v1624 = vadd.f32 %v912, %v1623
    %v1625 = vpop.f32.mrf.mxu0
    %v1626 = vadd.f32 %v916, %v1625
    %v1627 = vpop.f32.mrf.mxu0
    %v1628 = vpop.f32.mrf.mxu0
    %1629 = vdwg.mxu0
    %1630 = vmatprep.subr.bf16.mxu0 0
    %1631 = vmatpush1.bf16.msra.mxu0 %v1564
    %1632 = vmatprep.subr.bf16.mxu0 0
    %1633 = vmatpush1.bf16.msra.mxu0 %v1561
    %1634 = vmatprep.subr.bf16.mxu0 0
    %1635 = vmatpush1.bf16.msra.mxu0 %v1558
    %1636 = vmatprep.subr.bf16.mxu0 0
    %1637 = vmatpush1.bf16.msra.mxu0 %v1555
    %1638 = vmatprep.subr.bf16.mxu0 0
    %1639 = vmatpush1.bf16.msra.mxu0 %v1552
    %1640 = vmatprep.subr.bf16.mxu0 0
    %1641 = vmatpush1.bf16.msra.mxu0 %v1549
    %1642 = vmatprep.subr.bf16.mxu0 0
    %1643 = vmatpush1.bf16.msra.mxu0 %v1546
    %1644 = vmatprep.subr.bf16.mxu0 0
    %1645 = vmatpush1.bf16.msra.mxu0 %v1543
    %1646 = vmatprep.subr.bf16.mxu0 0
    %1647 = vmatpush2.bf16.msra.mxu0 0
    %1648 = vmatprep.subr.bf16.mxu0 0
    %1649 = vmatpush2.bf16.msra.mxu0 0
    %1650 = vmatprep.subr.bf16.mxu0 0
    %1651 = vmatpush2.bf16.msra.mxu0 0
    %1652 = vmatprep.subr.bf16.mxu0 0
    %1653 = vmatpush2.bf16.msra.mxu0 0
    %1654 = vmatprep.subr.bf16.mxu0 0
    %1655 = vmatpush2.bf16.msra.mxu0 0
    %1656 = vmatprep.subr.bf16.mxu0 0
    %1657 = vmatpush2.bf16.msra.mxu0 0
    %1658 = vmatprep.subr.bf16.mxu0 0
    %1659 = vmatpush2.bf16.msra.mxu0 0
    %1660 = vmatprep.subr.bf16.mxu0 0
    %1661 = vmatpush2.bf16.msra.mxu0 0
    %1662 = vmatprep.mubr.bf16.mxu0 0
    %1663 = vmatmul.mubr.bf16.gmra.mxu0 %v1160
    %v1664 = vpop.f32.mrf.mxu0
    %v1665 = vadd.f32 %v920, %v1664
    %v1666 = vpop.f32.mrf.mxu0
    %v1667 = vpop.f32.mrf.mxu0
    %v1668 = vpop.f32.mrf.mxu0
    %1669 = vdwg.mxu0
    %v1670 = vld [vmem:[#allocation3 + $0x90] sm:$0xff]
    %v1671 = vld [vmem:[#allocation3 + $0x98] sm:$0xff]
    %v1672 = vld [vmem:[#allocation3 + $0xa0] sm:$0xff]
    %v1673 = vadd.f32 %v1670, %v1624
    %v1674 = vxor.u32 %v1673, 2147483648
    %v1675 = vmul.f32 %v1674, 1.442695
    %v1676 = vpow.pop %v1675
    %v1677 = vadd.f32 %v1676, 1.0
    %v1678 = vrcp.pop %v1677
    %v1679 = vmul.f32 1.0, %v1678
    %v1680 = vadd.f32 %v1671, %v1626
    %v1681 = vxor.u32 %v1680, 2147483648
    %v1682 = vmul.f32 %v1681, 1.442695
    %v1683 = vpow.pop %v1682
    %v1684 = vadd.f32 %v1683, 1.0
    %v1685 = vrcp.pop %v1684
    %v1686 = vmul.f32 1.0, %v1685
    %v1687 = vmul.f32 %v1679, %v1665
    %v1688 = vadd.f32 %v1672, %v1687
    %v1689 = vtanh.pop %v1688
    %v1690 = vsub.f32 1.0, %v1686
    %v1691 = vmul.f32 %v1690, %v1689
    %v1692 = vmul.f32 %v1686, %v1157
    %v1693 = vadd.f32 %v1691, %v1692
    %v1694 = vsel %vm106, %v1693, %v1157
    %v1695 = vsel %vm106, %v1693, 0.0
    %v1696 = vpack.c.bf16 %v1428, %v1428
    %1697 = vst [vmem:[#allocation4 + $0x8] sm:$0xf] %v1696
    %v1698 = vpack.c.bf16 %v1695, %v1695
    %1699 = vst [vmem:[#allocation4 + $0x34] sm:$0xf] %v1698
    %v1700 = vpack.c.bf16 %v1427, %v1427
    %v1701 = vld [vmem:[%s3] sm:$0xff]
    %v1702 = vld [vmem:[%s3 + $0x8] sm:$0xf]
    %v1703 = vld [vmem:[%s3 + $0xc] sm:$0xff]
    %v1704 = vld [vmem:[%s3 + $0x14] sm:$0xf]
    %v1705 = vld [vmem:[%s3 + $0x18] sm:$0xff]
    %v1706 = vld [vmem:[%s3 + $0x20] sm:$0xf]
    %v1707 = vld [vmem:[%s3 + $0x24] sm:$0xff]
    %v1708 = vld [vmem:[%s3 + $0x2c] sm:$0xf]
    %v1709 = vld [vmem:[%s3 + $0x30] sm:$0xff]
    %v1710 = vld [vmem:[%s3 + $0x38] sm:$0xf]
    %v1711 = vld [vmem:[%s3 + $0x3c] sm:$0xff]
    %v1712 = vld [vmem:[%s3 + $0x44] sm:$0xf]
    %v1713 = vld [vmem:[%s3 + $0x48] sm:$0xff]
    %v1714 = vld [vmem:[%s3 + $0x50] sm:$0xf]
    %v1715 = vld [vmem:[%s3 + $0x54] sm:$0xff]
    %v1716 = vld [vmem:[%s3 + $0x5c] sm:$0xf]
    %v1717 = vld [vmem:[%s3 + $0x60] sm:$0xff]
    %v1718 = vld [vmem:[%s3 + $0x68] sm:$0xf]
    %v1719 = vld [vmem:[%s3 + $0x6c] sm:$0xff]
    %v1720 = vld [vmem:[%s3 + $0x74] sm:$0xf]
    %v1721 = vld [vmem:[%s3 + $0x78] sm:$0xff]
    %v1722 = vld [vmem:[%s3 + $0x80] sm:$0xf]
    %v1723 = vld [vmem:[%s3 + $0x84] sm:$0xff]
    %v1724 = vld [vmem:[%s3 + $0x8c] sm:$0xf]
    %v1725 = vld [vmem:[%s3 + $0x90] sm:$0xff]
    %v1726 = vld [vmem:[%s3 + $0x98] sm:$0xf]
    %v1727 = vld [vmem:[%s3 + $0x9c] sm:$0xff]
    %v1728 = vld [vmem:[%s3 + $0xa4] sm:$0xf]
    %v1729 = vld [vmem:[%s3 + $0xa8] sm:$0xff]
    %v1730 = vld [vmem:[%s3 + $0xb0] sm:$0xf]
    %v1731 = vld [vmem:[%s3 + $0xb4] sm:$0xff]
    %v1732 = vld [vmem:[%s3 + $0xbc] sm:$0xf]
    %v1765 = vunpack.c.l.b16 %v1701
    %v1766 = vunpack.c.h.b16 %v1701
    %v1767 = vunpack.c.l.b16 %v1702
    %v1768 = vunpack.c.l.b16 %v1703
    %v1769 = vunpack.c.h.b16 %v1703
    %v1770 = vunpack.c.l.b16 %v1704
    %v1771 = vunpack.c.l.b16 %v1705
    %v1772 = vunpack.c.h.b16 %v1705
    %v1773 = vunpack.c.l.b16 %v1706
    %v1774 = vunpack.c.l.b16 %v1707
    %v1775 = vunpack.c.h.b16 %v1707
    %v1776 = vunpack.c.l.b16 %v1708
    %v1777 = vunpack.c.l.b16 %v1709
    %v1778 = vunpack.c.h.b16 %v1709
    %v1779 = vunpack.c.l.b16 %v1710
    %v1780 = vunpack.c.l.b16 %v1711
    %v1781 = vunpack.c.h.b16 %v1711
    %v1782 = vunpack.c.l.b16 %v1712
    %v1783 = vunpack.c.l.b16 %v1713
    %v1784 = vunpack.c.h.b16 %v1713
    %v1785 = vunpack.c.l.b16 %v1714
    %v1786 = vunpack.c.l.b16 %v1715
    %v1787 = vunpack.c.h.b16 %v1715
    %v1788 = vunpack.c.l.b16 %v1716
    %v1789 = vunpack.c.l.b16 %v1717
    %v1790 = vunpack.c.h.b16 %v1717
    %v1791 = vunpack.c.l.b16 %v1718
    %v1792 = vunpack.c.l.b16 %v1719
    %v1793 = vunpack.c.h.b16 %v1719
    %v1794 = vunpack.c.l.b16 %v1720
    %v1795 = vunpack.c.l.b16 %v1721
    %v1796 = vunpack.c.h.b16 %v1721
    %v1797 = vunpack.c.l.b16 %v1722
    %v1798 = vunpack.c.l.b16 %v1723
    %v1799 = vunpack.c.h.b16 %v1723
    %v1800 = vunpack.c.l.b16 %v1724
    %v1801 = vunpack.c.l.b16 %v1725
    %v1802 = vunpack.c.h.b16 %v1725
    %v1803 = vunpack.c.l.b16 %v1726
    %v1804 = vunpack.c.l.b16 %v1727
    %v1805 = vunpack.c.h.b16 %v1727
    %v1806 = vunpack.c.l.b16 %v1728
    %v1807 = vunpack.c.l.b16 %v1729
    %v1808 = vunpack.c.h.b16 %v1729
    %v1809 = vunpack.c.l.b16 %v1730
    %v1810 = vunpack.c.l.b16 %v1731
    %v1811 = vunpack.c.h.b16 %v1731
    %v1812 = vunpack.c.l.b16 %v1732
    %v1813 = vpack.c.b16 %v1768, %v1765
    %v1814 = vpack.c.b16 %v1769, %v1766
    %v1815 = vpack.c.b16 %v1770, %v1767
    %v1816 = vpack.c.b16 %v1774, %v1771
    %v1817 = vpack.c.b16 %v1775, %v1772
    %v1818 = vpack.c.b16 %v1776, %v1773
    %v1819 = vpack.c.b16 %v1780, %v1777
    %v1820 = vpack.c.b16 %v1781, %v1778
    %v1821 = vpack.c.b16 %v1782, %v1779
    %v1822 = vpack.c.b16 %v1786, %v1783
    %v1823 = vpack.c.b16 %v1787, %v1784
    %v1824 = vpack.c.b16 %v1788, %v1785
    %v1825 = vpack.c.b16 %v1792, %v1789
    %v1826 = vpack.c.b16 %v1793, %v1790
    %v1827 = vpack.c.b16 %v1794, %v1791
    %v1828 = vpack.c.b16 %v1798, %v1795
    %v1829 = vpack.c.b16 %v1799, %v1796
    %v1830 = vpack.c.b16 %v1800, %v1797
    %v1831 = vpack.c.b16 %v1804, %v1801
    %v1832 = vpack.c.b16 %v1805, %v1802
    %v1833 = vpack.c.b16 %v1806, %v1803
    %v1834 = vpack.c.b16 %v1810, %v1807
    %v1835 = vpack.c.b16 %v1811, %v1808
    %v1836 = vpack.c.b16 %v1812, %v1809
    %1861 = vmatprep.subr.bf16.mxu0 %v1835
    %1862 = vmatpush1.bf16.msra.mxu0 %v1834
    %1863 = vmatprep.subr.bf16.mxu0 %v1832
    %1864 = vmatpush1.bf16.msra.mxu0 %v1831
    %1865 = vmatprep.subr.bf16.mxu0 %v1829
    %1866 = vmatpush1.bf16.msra.mxu0 %v1828
    %1867 = vmatprep.subr.bf16.mxu0 %v1826
    %1868 = vmatpush1.bf16.msra.mxu0 %v1825
    %1869 = vmatprep.subr.bf16.mxu0 %v1823
    %1870 = vmatpush1.bf16.msra.mxu0 %v1822
    %1871 = vmatprep.subr.bf16.mxu0 %v1820
    %1872 = vmatpush1.bf16.msra.mxu0 %v1819
    %1873 = vmatprep.subr.bf16.mxu0 %v1817
    %1874 = vmatpush1.bf16.msra.mxu0 %v1816
    %1875 = vmatprep.subr.bf16.mxu0 %v1814
    %1876 = vmatpush1.bf16.msra.mxu0 %v1813
    %1877 = vmatprep.subr.bf16.mxu0 0
    %1878 = vmatpush2.bf16.msra.mxu0 0
    %1879 = vmatprep.subr.bf16.mxu0 0
    %1880 = vmatpush2.bf16.msra.mxu0 0
    %1881 = vmatprep.subr.bf16.mxu0 0
    %1882 = vmatpush2.bf16.msra.mxu0 0
    %1883 = vmatprep.subr.bf16.mxu0 0
    %1884 = vmatpush2.bf16.msra.mxu0 0
    %1885 = vmatprep.subr.bf16.mxu0 0
    %1886 = vmatpush2.bf16.msra.mxu0 0
    %1887 = vmatprep.subr.bf16.mxu0 0
    %1888 = vmatpush2.bf16.msra.mxu0 0
    %1889 = vmatprep.subr.bf16.mxu0 0
    %1890 = vmatpush2.bf16.msra.mxu0 0
    %1891 = vmatprep.subr.bf16.mxu0 0
    %1892 = vmatpush2.bf16.msra.mxu0 0
    %1893 = vmatprep.mubr.bf16.mxu0 0
    %1894 = vmatmul.mubr.bf16.gmra.mxu0 %v1700
    %v1895 = vpop.f32.mrf.mxu0
    %v1896 = vadd.f32 %v630, %v1895
    %v1897 = vpop.f32.mrf.mxu0
    %v1898 = vadd.f32 %v634, %v1897
    %v1899 = vpop.f32.mrf.mxu0
    %v1900 = vpop.f32.mrf.mxu0
    %1901 = vdwg.mxu0
    %1902 = vmatprep.subr.bf16.mxu0 0
    %1903 = vmatpush1.bf16.msra.mxu0 %v1836
    %1904 = vmatprep.subr.bf16.mxu0 0
    %1905 = vmatpush1.bf16.msra.mxu0 %v1833
    %1906 = vmatprep.subr.bf16.mxu0 0
    %1907 = vmatpush1.bf16.msra.mxu0 %v1830
    %1908 = vmatprep.subr.bf16.mxu0 0
    %1909 = vmatpush1.bf16.msra.mxu0 %v1827
    %1910 = vmatprep.subr.bf16.mxu0 0
    %1911 = vmatpush1.bf16.msra.mxu0 %v1824
    %1912 = vmatprep.subr.bf16.mxu0 0
    %1913 = vmatpush1.bf16.msra.mxu0 %v1821
    %1914 = vmatprep.subr.bf16.mxu0 0
    %1915 = vmatpush1.bf16.msra.mxu0 %v1818
    %1916 = vmatprep.subr.bf16.mxu0 0
    %1917 = vmatpush1.bf16.msra.mxu0 %v1815
    %1918 = vmatprep.subr.bf16.mxu0 0
    %1919 = vmatpush2.bf16.msra.mxu0 0
    %1920 = vmatprep.subr.bf16.mxu0 0
    %1921 = vmatpush2.bf16.msra.mxu0 0
    %1922 = vmatprep.subr.bf16.mxu0 0
    %1923 = vmatpush2.bf16.msra.mxu0 0
    %1924 = vmatprep.subr.bf16.mxu0 0
    %1925 = vmatpush2.bf16.msra.mxu0 0
    %1926 = vmatprep.subr.bf16.mxu0 0
    %1927 = vmatpush2.bf16.msra.mxu0 0
    %1928 = vmatprep.subr.bf16.mxu0 0
    %1929 = vmatpush2.bf16.msra.mxu0 0
    %1930 = vmatprep.subr.bf16.mxu0 0
    %1931 = vmatpush2.bf16.msra.mxu0 0
    %1932 = vmatprep.subr.bf16.mxu0 0
    %1933 = vmatpush2.bf16.msra.mxu0 0
    %1934 = vmatprep.mubr.bf16.mxu0 0
    %1935 = vmatmul.mubr.bf16.gmra.mxu0 %v1700
    %v1936 = vpop.f32.mrf.mxu0
    %v1937 = vadd.f32 %v638, %v1936
    %v1938 = vpop.f32.mrf.mxu0
    %v1939 = vpop.f32.mrf.mxu0
    %v1940 = vpop.f32.mrf.mxu0
    %1941 = vdwg.mxu0
    %v1942 = vld [vmem:[#allocation2 + $0x30] sm:$0xff]
    %v1943 = vld [vmem:[#allocation2 + $0x38] sm:$0xff]
    %v1944 = vld [vmem:[#allocation2 + $0x40] sm:$0xff]
    %v1945 = vadd.f32 %v1942, %v1896
    %v1946 = vxor.u32 %v1945, 2147483648
    %v1947 = vmul.f32 %v1946, 1.442695
    %v1948 = vpow.pop %v1947
    %v1949 = vadd.f32 %v1948, 1.0
    %v1950 = vrcp.pop %v1949
    %v1951 = vmul.f32 1.0, %v1950
    %v1952 = vadd.f32 %v1943, %v1898
    %v1953 = vxor.u32 %v1952, 2147483648
    %v1954 = vmul.f32 %v1953, 1.442695
    %v1955 = vpow.pop %v1954
    %v1956 = vadd.f32 %v1955, 1.0
    %v1957 = vrcp.pop %v1956
    %v1958 = vmul.f32 1.0, %v1957
    %v1959 = vmul.f32 %v1951, %v1937
    %v1960 = vadd.f32 %v1944, %v1959
    %v1961 = vtanh.pop %v1960
    %v1962 = vsub.f32 1.0, %v1958
    %v1963 = vmul.f32 %v1962, %v1961
    %v1964 = vmul.f32 %v1958, %v1427
    %v1965 = vadd.f32 %v1963, %v1964
    %v1966 = vsel %vm82, %v1965, %v1427
    %v1967 = vsel %vm82, %v1965, 0.0
    %v1968 = vpack.c.bf16 %v1694, %v1694
    %v1969 = vld [vmem:[%s7] sm:$0xff]
    %v1970 = vld [vmem:[%s7 + $0x8] sm:$0xf]
    %v1971 = vld [vmem:[%s7 + $0xc] sm:$0xff]
    %v1972 = vld [vmem:[%s7 + $0x14] sm:$0xf]
    %v1973 = vld [vmem:[%s7 + $0x18] sm:$0xff]
    %v1974 = vld [vmem:[%s7 + $0x20] sm:$0xf]
    %v1975 = vld [vmem:[%s7 + $0x24] sm:$0xff]
    %v1976 = vld [vmem:[%s7 + $0x2c] sm:$0xf]
    %v1977 = vld [vmem:[%s7 + $0x30] sm:$0xff]
    %v1978 = vld [vmem:[%s7 + $0x38] sm:$0xf]
    %v1979 = vld [vmem:[%s7 + $0x3c] sm:$0xff]
    %v1980 = vld [vmem:[%s7 + $0x44] sm:$0xf]
    %v1981 = vld [vmem:[%s7 + $0x48] sm:$0xff]
    %v1982 = vld [vmem:[%s7 + $0x50] sm:$0xf]
    %v1983 = vld [vmem:[%s7 + $0x54] sm:$0xff]
    %v1984 = vld [vmem:[%s7 + $0x5c] sm:$0xf]
    %v1985 = vld [vmem:[%s7 + $0x60] sm:$0xff]
    %v1986 = vld [vmem:[%s7 + $0x68] sm:$0xf]
    %v1987 = vld [vmem:[%s7 + $0x6c] sm:$0xff]
    %v1988 = vld [vmem:[%s7 + $0x74] sm:$0xf]
    %v1989 = vld [vmem:[%s7 + $0x78] sm:$0xff]
    %v1990 = vld [vmem:[%s7 + $0x80] sm:$0xf]
    %v1991 = vld [vmem:[%s7 + $0x84] sm:$0xff]
    %v1992 = vld [vmem:[%s7 + $0x8c] sm:$0xf]
    %v1993 = vld [vmem:[%s7 + $0x90] sm:$0xff]
    %v1994 = vld [vmem:[%s7 + $0x98] sm:$0xf]
    %v1995 = vld [vmem:[%s7 + $0x9c] sm:$0xff]
    %v1996 = vld [vmem:[%s7 + $0xa4] sm:$0xf]
    %v1997 = vld [vmem:[%s7 + $0xa8] sm:$0xff]
    %v1998 = vld [vmem:[%s7 + $0xb0] sm:$0xf]
    %v1999 = vld [vmem:[%s7 + $0xb4] sm:$0xff]
    %v2000 = vld [vmem:[%s7 + $0xbc] sm:$0xf]
    %v2033 = vunpack.c.l.b16 %v1969
    %v2034 = vunpack.c.h.b16 %v1969
    %v2035 = vunpack.c.l.b16 %v1970
    %v2036 = vunpack.c.l.b16 %v1971
    %v2037 = vunpack.c.h.b16 %v1971
    %v2038 = vunpack.c.l.b16 %v1972
    %v2039 = vunpack.c.l.b16 %v1973
    %v2040 = vunpack.c.h.b16 %v1973
    %v2041 = vunpack.c.l.b16 %v1974
    %v2042 = vunpack.c.l.b16 %v1975
    %v2043 = vunpack.c.h.b16 %v1975
    %v2044 = vunpack.c.l.b16 %v1976
    %v2045 = vunpack.c.l.b16 %v1977
    %v2046 = vunpack.c.h.b16 %v1977
    %v2047 = vunpack.c.l.b16 %v1978
    %v2048 = vunpack.c.l.b16 %v1979
    %v2049 = vunpack.c.h.b16 %v1979
    %v2050 = vunpack.c.l.b16 %v1980
    %v2051 = vunpack.c.l.b16 %v1981
    %v2052 = vunpack.c.h.b16 %v1981
    %v2053 = vunpack.c.l.b16 %v1982
    %v2054 = vunpack.c.l.b16 %v1983
    %v2055 = vunpack.c.h.b16 %v1983
    %v2056 = vunpack.c.l.b16 %v1984
    %v2057 = vunpack.c.l.b16 %v1985
    %v2058 = vunpack.c.h.b16 %v1985
    %v2059 = vunpack.c.l.b16 %v1986
    %v2060 = vunpack.c.l.b16 %v1987
    %v2061 = vunpack.c.h.b16 %v1987
    %v2062 = vunpack.c.l.b16 %v1988
    %v2063 = vunpack.c.l.b16 %v1989
    %v2064 = vunpack.c.h.b16 %v1989
    %v2065 = vunpack.c.l.b16 %v1990
    %v2066 = vunpack.c.l.b16 %v1991
    %v2067 = vunpack.c.h.b16 %v1991
    %v2068 = vunpack.c.l.b16 %v1992
    %v2069 = vunpack.c.l.b16 %v1993
    %v2070 = vunpack.c.h.b16 %v1993
    %v2071 = vunpack.c.l.b16 %v1994
    %v2072 = vunpack.c.l.b16 %v1995
    %v2073 = vunpack.c.h.b16 %v1995
    %v2074 = vunpack.c.l.b16 %v1996
    %v2075 = vunpack.c.l.b16 %v1997
    %v2076 = vunpack.c.h.b16 %v1997
    %v2077 = vunpack.c.l.b16 %v1998
    %v2078 = vunpack.c.l.b16 %v1999
    %v2079 = vunpack.c.h.b16 %v1999
    %v2080 = vunpack.c.l.b16 %v2000
    %v2081 = vpack.c.b16 %v2036, %v2033
    %v2082 = vpack.c.b16 %v2037, %v2034
    %v2083 = vpack.c.b16 %v2038, %v2035
    %v2084 = vpack.c.b16 %v2042, %v2039
    %v2085 = vpack.c.b16 %v2043, %v2040
    %v2086 = vpack.c.b16 %v2044, %v2041
    %v2087 = vpack.c.b16 %v2048, %v2045
    %v2088 = vpack.c.b16 %v2049, %v2046
    %v2089 = vpack.c.b16 %v2050, %v2047
    %v2090 = vpack.c.b16 %v2054, %v2051
    %v2091 = vpack.c.b16 %v2055, %v2052
    %v2092 = vpack.c.b16 %v2056, %v2053
    %v2093 = vpack.c.b16 %v2060, %v2057
    %v2094 = vpack.c.b16 %v2061, %v2058
    %v2095 = vpack.c.b16 %v2062, %v2059
    %v2096 = vpack.c.b16 %v2066, %v2063
    %v2097 = vpack.c.b16 %v2067, %v2064
    %v2098 = vpack.c.b16 %v2068, %v2065
    %v2099 = vpack.c.b16 %v2072, %v2069
    %v2100 = vpack.c.b16 %v2073, %v2070
    %v2101 = vpack.c.b16 %v2074, %v2071
    %v2102 = vpack.c.b16 %v2078, %v2075
    %v2103 = vpack.c.b16 %v2079, %v2076
    %v2104 = vpack.c.b16 %v2080, %v2077
    %2129 = vmatprep.subr.bf16.mxu0 %v2103
    %2130 = vmatpush1.bf16.msra.mxu0 %v2102
    %2131 = vmatprep.subr.bf16.mxu0 %v2100
    %2132 = vmatpush1.bf16.msra.mxu0 %v2099
    %2133 = vmatprep.subr.bf16.mxu0 %v2097
    %2134 = vmatpush1.bf16.msra.mxu0 %v2096
    %2135 = vmatprep.subr.bf16.mxu0 %v2094
    %2136 = vmatpush1.bf16.msra.mxu0 %v2093
    %2137 = vmatprep.subr.bf16.mxu0 %v2091
    %2138 = vmatpush1.bf16.msra.mxu0 %v2090
    %2139 = vmatprep.subr.bf16.mxu0 %v2088
    %2140 = vmatpush1.bf16.msra.mxu0 %v2087
    %2141 = vmatprep.subr.bf16.mxu0 %v2085
    %2142 = vmatpush1.bf16.msra.mxu0 %v2084
    %2143 = vmatprep.subr.bf16.mxu0 %v2082
    %2144 = vmatpush1.bf16.msra.mxu0 %v2081
    %2145 = vmatprep.subr.bf16.mxu0 0
    %2146 = vmatpush2.bf16.msra.mxu0 0
    %2147 = vmatprep.subr.bf16.mxu0 0
    %2148 = vmatpush2.bf16.msra.mxu0 0
    %2149 = vmatprep.subr.bf16.mxu0 0
    %2150 = vmatpush2.bf16.msra.mxu0 0
    %2151 = vmatprep.subr.bf16.mxu0 0
    %2152 = vmatpush2.bf16.msra.mxu0 0
    %2153 = vmatprep.subr.bf16.mxu0 0
    %2154 = vmatpush2.bf16.msra.mxu0 0
    %2155 = vmatprep.subr.bf16.mxu0 0
    %2156 = vmatpush2.bf16.msra.mxu0 0
    %2157 = vmatprep.subr.bf16.mxu0 0
    %2158 = vmatpush2.bf16.msra.mxu0 0
    %2159 = vmatprep.subr.bf16.mxu0 0
    %2160 = vmatpush2.bf16.msra.mxu0 0
    %2161 = vmatprep.mubr.bf16.mxu0 0
    %2162 = vmatmul.mubr.bf16.gmra.mxu0 %v1968
    %v2163 = vpop.f32.mrf.mxu0
    %v2164 = vadd.f32 %v912, %v2163
    %v2165 = vpop.f32.mrf.mxu0
    %v2166 = vadd.f32 %v916, %v2165
    %v2167 = vpop.f32.mrf.mxu0
    %v2168 = vpop.f32.mrf.mxu0
    %2169 = vdwg.mxu0
    %2170 = vmatprep.subr.bf16.mxu0 0
    %2171 = vmatpush1.bf16.msra.mxu0 %v2104
    %2172 = vmatprep.subr.bf16.mxu0 0
    %2173 = vmatpush1.bf16.msra.mxu0 %v2101
    %2174 = vmatprep.subr.bf16.mxu0 0
    %2175 = vmatpush1.bf16.msra.mxu0 %v2098
    %2176 = vmatprep.subr.bf16.mxu0 0
    %2177 = vmatpush1.bf16.msra.mxu0 %v2095
    %2178 = vmatprep.subr.bf16.mxu0 0
    %2179 = vmatpush1.bf16.msra.mxu0 %v2092
    %2180 = vmatprep.subr.bf16.mxu0 0
    %2181 = vmatpush1.bf16.msra.mxu0 %v2089
    %2182 = vmatprep.subr.bf16.mxu0 0
    %2183 = vmatpush1.bf16.msra.mxu0 %v2086
    %2184 = vmatprep.subr.bf16.mxu0 0
    %2185 = vmatpush1.bf16.msra.mxu0 %v2083
    %2186 = vmatprep.subr.bf16.mxu0 0
    %2187 = vmatpush2.bf16.msra.mxu0 0
    %2188 = vmatprep.subr.bf16.mxu0 0
    %2189 = vmatpush2.bf16.msra.mxu0 0
    %2190 = vmatprep.subr.bf16.mxu0 0
    %2191 = vmatpush2.bf16.msra.mxu0 0
    %2192 = vmatprep.subr.bf16.mxu0 0
    %2193 = vmatpush2.bf16.msra.mxu0 0
    %2194 = vmatprep.subr.bf16.mxu0 0
    %2195 = vmatpush2.bf16.msra.mxu0 0
    %2196 = vmatprep.subr.bf16.mxu0 0
    %2197 = vmatpush2.bf16.msra.mxu0 0
    %2198 = vmatprep.subr.bf16.mxu0 0
    %2199 = vmatpush2.bf16.msra.mxu0 0
    %2200 = vmatprep.subr.bf16.mxu0 0
    %2201 = vmatpush2.bf16.msra.mxu0 0
    %2202 = vmatprep.mubr.bf16.mxu0 0
    %2203 = vmatmul.mubr.bf16.gmra.mxu0 %v1968
    %v2204 = vpop.f32.mrf.mxu0
    %v2205 = vadd.f32 %v920, %v2204
    %v2206 = vpop.f32.mrf.mxu0
    %v2207 = vpop.f32.mrf.mxu0
    %v2208 = vpop.f32.mrf.mxu0
    %2209 = vdwg.mxu0
    %v2210 = vld [vmem:[#allocation3 + $0x78] sm:$0xff]
    %v2211 = vld [vmem:[#allocation3 + $0x80] sm:$0xff]
    %v2212 = vld [vmem:[#allocation3 + $0x88] sm:$0xff]
    %v2213 = vadd.f32 %v2210, %v2164
    %v2214 = vxor.u32 %v2213, 2147483648
    %v2215 = vmul.f32 %v2214, 1.442695
    %v2216 = vpow.pop %v2215
    %v2217 = vadd.f32 %v2216, 1.0
    %v2218 = vrcp.pop %v2217
    %v2219 = vmul.f32 1.0, %v2218
    %v2220 = vadd.f32 %v2211, %v2166
    %v2221 = vxor.u32 %v2220, 2147483648
    %v2222 = vmul.f32 %v2221, 1.442695
    %v2223 = vpow.pop %v2222
    %v2224 = vadd.f32 %v2223, 1.0
    %v2225 = vrcp.pop %v2224
    %v2226 = vmul.f32 1.0, %v2225
    %v2227 = vmul.f32 %v2219, %v2205
    %v2228 = vadd.f32 %v2212, %v2227
    %v2229 = vtanh.pop %v2228
    %v2230 = vsub.f32 1.0, %v2226
    %v2231 = vmul.f32 %v2230, %v2229
    %v2232 = vmul.f32 %v2226, %v1694
    %v2233 = vadd.f32 %v2231, %v2232
    %v2234 = vsel %vm100, %v2233, %v1694
    %v2235 = vsel %vm100, %v2233, 0.0
    %v2236 = vpack.c.bf16 %v1967, %v1967
    %2237 = vst [vmem:[#allocation4 + $0x10] sm:$0xf] %v2236
    %v2238 = vpack.c.bf16 %v2235, %v2235
    %2239 = vst [vmem:[#allocation4 + $0x2c] sm:$0xf] %v2238
    %v2240 = vpack.c.bf16 %v1966, %v1966
    %v2241 = vld [vmem:[%s3] sm:$0xff]
    %v2242 = vld [vmem:[%s3 + $0x8] sm:$0xf]
    %v2243 = vld [vmem:[%s3 + $0xc] sm:$0xff]
    %v2244 = vld [vmem:[%s3 + $0x14] sm:$0xf]
    %v2245 = vld [vmem:[%s3 + $0x18] sm:$0xff]
    %v2246 = vld [vmem:[%s3 + $0x20] sm:$0xf]
    %v2247 = vld [vmem:[%s3 + $0x24] sm:$0xff]
    %v2248 = vld [vmem:[%s3 + $0x2c] sm:$0xf]
    %v2249 = vld [vmem:[%s3 + $0x30] sm:$0xff]
    %v2250 = vld [vmem:[%s3 + $0x38] sm:$0xf]
    %v2251 = vld [vmem:[%s3 + $0x3c] sm:$0xff]
    %v2252 = vld [vmem:[%s3 + $0x44] sm:$0xf]
    %v2253 = vld [vmem:[%s3 + $0x48] sm:$0xff]
    %v2254 = vld [vmem:[%s3 + $0x50] sm:$0xf]
    %v2255 = vld [vmem:[%s3 + $0x54] sm:$0xff]
    %v2256 = vld [vmem:[%s3 + $0x5c] sm:$0xf]
    %v2257 = vld [vmem:[%s3 + $0x60] sm:$0xff]
    %v2258 = vld [vmem:[%s3 + $0x68] sm:$0xf]
    %v2259 = vld [vmem:[%s3 + $0x6c] sm:$0xff]
    %v2260 = vld [vmem:[%s3 + $0x74] sm:$0xf]
    %v2261 = vld [vmem:[%s3 + $0x78] sm:$0xff]
    %v2262 = vld [vmem:[%s3 + $0x80] sm:$0xf]
    %v2263 = vld [vmem:[%s3 + $0x84] sm:$0xff]
    %v2264 = vld [vmem:[%s3 + $0x8c] sm:$0xf]
    %v2265 = vld [vmem:[%s3 + $0x90] sm:$0xff]
    %v2266 = vld [vmem:[%s3 + $0x98] sm:$0xf]
    %v2267 = vld [vmem:[%s3 + $0x9c] sm:$0xff]
    %v2268 = vld [vmem:[%s3 + $0xa4] sm:$0xf]
    %v2269 = vld [vmem:[%s3 + $0xa8] sm:$0xff]
    %v2270 = vld [vmem:[%s3 + $0xb0] sm:$0xf]
    %v2271 = vld [vmem:[%s3 + $0xb4] sm:$0xff]
    %v2272 = vld [vmem:[%s3 + $0xbc] sm:$0xf]
    %v2305 = vunpack.c.l.b16 %v2241
    %v2306 = vunpack.c.h.b16 %v2241
    %v2307 = vunpack.c.l.b16 %v2242
    %v2308 = vunpack.c.l.b16 %v2243
    %v2309 = vunpack.c.h.b16 %v2243
    %v2310 = vunpack.c.l.b16 %v2244
    %v2311 = vunpack.c.l.b16 %v2245
    %v2312 = vunpack.c.h.b16 %v2245
    %v2313 = vunpack.c.l.b16 %v2246
    %v2314 = vunpack.c.l.b16 %v2247
    %v2315 = vunpack.c.h.b16 %v2247
    %v2316 = vunpack.c.l.b16 %v2248
    %v2317 = vunpack.c.l.b16 %v2249
    %v2318 = vunpack.c.h.b16 %v2249
    %v2319 = vunpack.c.l.b16 %v2250
    %v2320 = vunpack.c.l.b16 %v2251
    %v2321 = vunpack.c.h.b16 %v2251
    %v2322 = vunpack.c.l.b16 %v2252
    %v2323 = vunpack.c.l.b16 %v2253
    %v2324 = vunpack.c.h.b16 %v2253
    %v2325 = vunpack.c.l.b16 %v2254
    %v2326 = vunpack.c.l.b16 %v2255
    %v2327 = vunpack.c.h.b16 %v2255
    %v2328 = vunpack.c.l.b16 %v2256
    %v2329 = vunpack.c.l.b16 %v2257
    %v2330 = vunpack.c.h.b16 %v2257
    %v2331 = vunpack.c.l.b16 %v2258
    %v2332 = vunpack.c.l.b16 %v2259
    %v2333 = vunpack.c.h.b16 %v2259
    %v2334 = vunpack.c.l.b16 %v2260
    %v2335 = vunpack.c.l.b16 %v2261
    %v2336 = vunpack.c.h.b16 %v2261
    %v2337 = vunpack.c.l.b16 %v2262
    %v2338 = vunpack.c.l.b16 %v2263
    %v2339 = vunpack.c.h.b16 %v2263
    %v2340 = vunpack.c.l.b16 %v2264
    %v2341 = vunpack.c.l.b16 %v2265
    %v2342 = vunpack.c.h.b16 %v2265
    %v2343 = vunpack.c.l.b16 %v2266
    %v2344 = vunpack.c.l.b16 %v2267
    %v2345 = vunpack.c.h.b16 %v2267
    %v2346 = vunpack.c.l.b16 %v2268
    %v2347 = vunpack.c.l.b16 %v2269
    %v2348 = vunpack.c.h.b16 %v2269
    %v2349 = vunpack.c.l.b16 %v2270
    %v2350 = vunpack.c.l.b16 %v2271
    %v2351 = vunpack.c.h.b16 %v2271
    %v2352 = vunpack.c.l.b16 %v2272
    %v2353 = vpack.c.b16 %v2308, %v2305
    %v2354 = vpack.c.b16 %v2309, %v2306
    %v2355 = vpack.c.b16 %v2310, %v2307
    %v2356 = vpack.c.b16 %v2314, %v2311
    %v2357 = vpack.c.b16 %v2315, %v2312
    %v2358 = vpack.c.b16 %v2316, %v2313
    %v2359 = vpack.c.b16 %v2320, %v2317
    %v2360 = vpack.c.b16 %v2321, %v2318
    %v2361 = vpack.c.b16 %v2322, %v2319
    %v2362 = vpack.c.b16 %v2326, %v2323
    %v2363 = vpack.c.b16 %v2327, %v2324
    %v2364 = vpack.c.b16 %v2328, %v2325
    %v2365 = vpack.c.b16 %v2332, %v2329
    %v2366 = vpack.c.b16 %v2333, %v2330
    %v2367 = vpack.c.b16 %v2334, %v2331
    %v2368 = vpack.c.b16 %v2338, %v2335
    %v2369 = vpack.c.b16 %v2339, %v2336
    %v2370 = vpack.c.b16 %v2340, %v2337
    %v2371 = vpack.c.b16 %v2344, %v2341
    %v2372 = vpack.c.b16 %v2345, %v2342
    %v2373 = vpack.c.b16 %v2346, %v2343
    %v2374 = vpack.c.b16 %v2350, %v2347
    %v2375 = vpack.c.b16 %v2351, %v2348
    %v2376 = vpack.c.b16 %v2352, %v2349
    %2401 = vmatprep.subr.bf16.mxu0 %v2375
    %2402 = vmatpush1.bf16.msra.mxu0 %v2374
    %2403 = vmatprep.subr.bf16.mxu0 %v2372
    %2404 = vmatpush1.bf16.msra.mxu0 %v2371
    %2405 = vmatprep.subr.bf16.mxu0 %v2369
    %2406 = vmatpush1.bf16.msra.mxu0 %v2368
    %2407 = vmatprep.subr.bf16.mxu0 %v2366
    %2408 = vmatpush1.bf16.msra.mxu0 %v2365
    %2409 = vmatprep.subr.bf16.mxu0 %v2363
    %2410 = vmatpush1.bf16.msra.mxu0 %v2362
    %2411 = vmatprep.subr.bf16.mxu0 %v2360
    %2412 = vmatpush1.bf16.msra.mxu0 %v2359
    %2413 = vmatprep.subr.bf16.mxu0 %v2357
    %2414 = vmatpush1.bf16.msra.mxu0 %v2356
    %2415 = vmatprep.subr.bf16.mxu0 %v2354
    %2416 = vmatpush1.bf16.msra.mxu0 %v2353
    %2417 = vmatprep.subr.bf16.mxu0 0
    %2418 = vmatpush2.bf16.msra.mxu0 0
    %2419 = vmatprep.subr.bf16.mxu0 0
    %2420 = vmatpush2.bf16.msra.mxu0 0
    %2421 = vmatprep.subr.bf16.mxu0 0
    %2422 = vmatpush2.bf16.msra.mxu0 0
    %2423 = vmatprep.subr.bf16.mxu0 0
    %2424 = vmatpush2.bf16.msra.mxu0 0
    %2425 = vmatprep.subr.bf16.mxu0 0
    %2426 = vmatpush2.bf16.msra.mxu0 0
    %2427 = vmatprep.subr.bf16.mxu0 0
    %2428 = vmatpush2.bf16.msra.mxu0 0
    %2429 = vmatprep.subr.bf16.mxu0 0
    %2430 = vmatpush2.bf16.msra.mxu0 0
    %2431 = vmatprep.subr.bf16.mxu0 0
    %2432 = vmatpush2.bf16.msra.mxu0 0
    %2433 = vmatprep.mubr.bf16.mxu0 0
    %2434 = vmatmul.mubr.bf16.gmra.mxu0 %v2240
    %v2435 = vpop.f32.mrf.mxu0
    %v2436 = vadd.f32 %v630, %v2435
    %v2437 = vpop.f32.mrf.mxu0
    %v2438 = vadd.f32 %v634, %v2437
    %v2439 = vpop.f32.mrf.mxu0
    %v2440 = vpop.f32.mrf.mxu0
    %2441 = vdwg.mxu0
    %2442 = vmatprep.subr.bf16.mxu0 0
    %2443 = vmatpush1.bf16.msra.mxu0 %v2376
    %2444 = vmatprep.subr.bf16.mxu0 0
    %2445 = vmatpush1.bf16.msra.mxu0 %v2373
    %2446 = vmatprep.subr.bf16.mxu0 0
    %2447 = vmatpush1.bf16.msra.mxu0 %v2370
    %2448 = vmatprep.subr.bf16.mxu0 0
    %2449 = vmatpush1.bf16.msra.mxu0 %v2367
    %2450 = vmatprep.subr.bf16.mxu0 0
    %2451 = vmatpush1.bf16.msra.mxu0 %v2364
    %2452 = vmatprep.subr.bf16.mxu0 0
    %2453 = vmatpush1.bf16.msra.mxu0 %v2361
    %2454 = vmatprep.subr.bf16.mxu0 0
    %2455 = vmatpush1.bf16.msra.mxu0 %v2358
    %2456 = vmatprep.subr.bf16.mxu0 0
    %2457 = vmatpush1.bf16.msra.mxu0 %v2355
    %2458 = vmatprep.subr.bf16.mxu0 0
    %2459 = vmatpush2.bf16.msra.mxu0 0
    %2460 = vmatprep.subr.bf16.mxu0 0
    %2461 = vmatpush2.bf16.msra.mxu0 0
    %2462 = vmatprep.subr.bf16.mxu0 0
    %2463 = vmatpush2.bf16.msra.mxu0 0
    %2464 = vmatprep.subr.bf16.mxu0 0
    %2465 = vmatpush2.bf16.msra.mxu0 0
    %2466 = vmatprep.subr.bf16.mxu0 0
    %2467 = vmatpush2.bf16.msra.mxu0 0
    %2468 = vmatprep.subr.bf16.mxu0 0
    %2469 = vmatpush2.bf16.msra.mxu0 0
    %2470 = vmatprep.subr.bf16.mxu0 0
    %2471 = vmatpush2.bf16.msra.mxu0 0
    %2472 = vmatprep.subr.bf16.mxu0 0
    %2473 = vmatpush2.bf16.msra.mxu0 0
    %2474 = vmatprep.mubr.bf16.mxu0 0
    %2475 = vmatmul.mubr.bf16.gmra.mxu0 %v2240
    %v2476 = vpop.f32.mrf.mxu0
    %v2477 = vadd.f32 %v638, %v2476
    %v2478 = vpop.f32.mrf.mxu0
    %v2479 = vpop.f32.mrf.mxu0
    %v2480 = vpop.f32.mrf.mxu0
    %2481 = vdwg.mxu0
    %v2482 = vld [vmem:[#allocation2 + $0x48] sm:$0xff]
    %v2483 = vld [vmem:[#allocation2 + $0x50] sm:$0xff]
    %v2484 = vld [vmem:[#allocation2 + $0x58] sm:$0xff]
    %v2485 = vadd.f32 %v2482, %v2436
    %v2486 = vxor.u32 %v2485, 2147483648
    %v2487 = vmul.f32 %v2486, 1.442695
    %v2488 = vpow.pop %v2487
    %v2489 = vadd.f32 %v2488, 1.0
    %v2490 = vrcp.pop %v2489
    %v2491 = vmul.f32 1.0, %v2490
    %v2492 = vadd.f32 %v2483, %v2438
    %v2493 = vxor.u32 %v2492, 2147483648
    %v2494 = vmul.f32 %v2493, 1.442695
    %v2495 = vpow.pop %v2494
    %v2496 = vadd.f32 %v2495, 1.0
    %v2497 = vrcp.pop %v2496
    %v2498 = vmul.f32 1.0, %v2497
    %v2499 = vmul.f32 %v2491, %v2477
    %v2500 = vadd.f32 %v2484, %v2499
    %v2501 = vtanh.pop %v2500
    %v2502 = vsub.f32 1.0, %v2498
    %v2503 = vmul.f32 %v2502, %v2501
    %v2504 = vmul.f32 %v2498, %v1966
    %v2505 = vadd.f32 %v2503, %v2504
    %v2506 = vsel %vm88, %v2505, %v1966
    %v2507 = vsel %vm88, %v2505, 0.0
    %v2508 = vpack.c.bf16 %v2234, %v2234
    %v2509 = vld [vmem:[%s7] sm:$0xff]
    %v2510 = vld [vmem:[%s7 + $0x8] sm:$0xf]
    %v2511 = vld [vmem:[%s7 + $0xc] sm:$0xff]
    %v2512 = vld [vmem:[%s7 + $0x14] sm:$0xf]
    %v2513 = vld [vmem:[%s7 + $0x18] sm:$0xff]
    %v2514 = vld [vmem:[%s7 + $0x20] sm:$0xf]
    %v2515 = vld [vmem:[%s7 + $0x24] sm:$0xff]
    %v2516 = vld [vmem:[%s7 + $0x2c] sm:$0xf]
    %v2517 = vld [vmem:[%s7 + $0x30] sm:$0xff]
    %v2518 = vld [vmem:[%s7 + $0x38] sm:$0xf]
    %v2519 = vld [vmem:[%s7 + $0x3c] sm:$0xff]
    %v2520 = vld [vmem:[%s7 + $0x44] sm:$0xf]
    %v2521 = vld [vmem:[%s7 + $0x48] sm:$0xff]
    %v2522 = vld [vmem:[%s7 + $0x50] sm:$0xf]
    %v2523 = vld [vmem:[%s7 + $0x54] sm:$0xff]
    %v2524 = vld [vmem:[%s7 + $0x5c] sm:$0xf]
    %v2525 = vld [vmem:[%s7 + $0x60] sm:$0xff]
    %v2526 = vld [vmem:[%s7 + $0x68] sm:$0xf]
    %v2527 = vld [vmem:[%s7 + $0x6c] sm:$0xff]
    %v2528 = vld [vmem:[%s7 + $0x74] sm:$0xf]
    %v2529 = vld [vmem:[%s7 + $0x78] sm:$0xff]
    %v2530 = vld [vmem:[%s7 + $0x80] sm:$0xf]
    %v2531 = vld [vmem:[%s7 + $0x84] sm:$0xff]
    %v2532 = vld [vmem:[%s7 + $0x8c] sm:$0xf]
    %v2533 = vld [vmem:[%s7 + $0x90] sm:$0xff]
    %v2534 = vld [vmem:[%s7 + $0x98] sm:$0xf]
    %v2535 = vld [vmem:[%s7 + $0x9c] sm:$0xff]
    %v2536 = vld [vmem:[%s7 + $0xa4] sm:$0xf]
    %v2537 = vld [vmem:[%s7 + $0xa8] sm:$0xff]
    %v2538 = vld [vmem:[%s7 + $0xb0] sm:$0xf]
    %v2539 = vld [vmem:[%s7 + $0xb4] sm:$0xff]
    %v2540 = vld [vmem:[%s7 + $0xbc] sm:$0xf]
    %v2573 = vunpack.c.l.b16 %v2509
    %v2574 = vunpack.c.h.b16 %v2509
    %v2575 = vunpack.c.l.b16 %v2510
    %v2576 = vunpack.c.l.b16 %v2511
    %v2577 = vunpack.c.h.b16 %v2511
    %v2578 = vunpack.c.l.b16 %v2512
    %v2579 = vunpack.c.l.b16 %v2513
    %v2580 = vunpack.c.h.b16 %v2513
    %v2581 = vunpack.c.l.b16 %v2514
    %v2582 = vunpack.c.l.b16 %v2515
    %v2583 = vunpack.c.h.b16 %v2515
    %v2584 = vunpack.c.l.b16 %v2516
    %v2585 = vunpack.c.l.b16 %v2517
    %v2586 = vunpack.c.h.b16 %v2517
    %v2587 = vunpack.c.l.b16 %v2518
    %v2588 = vunpack.c.l.b16 %v2519
    %v2589 = vunpack.c.h.b16 %v2519
    %v2590 = vunpack.c.l.b16 %v2520
    %v2591 = vunpack.c.l.b16 %v2521
    %v2592 = vunpack.c.h.b16 %v2521
    %v2593 = vunpack.c.l.b16 %v2522
    %v2594 = vunpack.c.l.b16 %v2523
    %v2595 = vunpack.c.h.b16 %v2523
    %v2596 = vunpack.c.l.b16 %v2524
    %v2597 = vunpack.c.l.b16 %v2525
    %v2598 = vunpack.c.h.b16 %v2525
    %v2599 = vunpack.c.l.b16 %v2526
    %v2600 = vunpack.c.l.b16 %v2527
    %v2601 = vunpack.c.h.b16 %v2527
    %v2602 = vunpack.c.l.b16 %v2528
    %v2603 = vunpack.c.l.b16 %v2529
    %v2604 = vunpack.c.h.b16 %v2529
    %v2605 = vunpack.c.l.b16 %v2530
    %v2606 = vunpack.c.l.b16 %v2531
    %v2607 = vunpack.c.h.b16 %v2531
    %v2608 = vunpack.c.l.b16 %v2532
    %v2609 = vunpack.c.l.b16 %v2533
    %v2610 = vunpack.c.h.b16 %v2533
    %v2611 = vunpack.c.l.b16 %v2534
    %v2612 = vunpack.c.l.b16 %v2535
    %v2613 = vunpack.c.h.b16 %v2535
    %v2614 = vunpack.c.l.b16 %v2536
    %v2615 = vunpack.c.l.b16 %v2537
    %v2616 = vunpack.c.h.b16 %v2537
    %v2617 = vunpack.c.l.b16 %v2538
    %v2618 = vunpack.c.l.b16 %v2539
    %v2619 = vunpack.c.h.b16 %v2539
    %v2620 = vunpack.c.l.b16 %v2540
    %v2621 = vpack.c.b16 %v2576, %v2573
    %v2622 = vpack.c.b16 %v2577, %v2574
    %v2623 = vpack.c.b16 %v2578, %v2575
    %v2624 = vpack.c.b16 %v2582, %v2579
    %v2625 = vpack.c.b16 %v2583, %v2580
    %v2626 = vpack.c.b16 %v2584, %v2581
    %v2627 = vpack.c.b16 %v2588, %v2585
    %v2628 = vpack.c.b16 %v2589, %v2586
    %v2629 = vpack.c.b16 %v2590, %v2587
    %v2630 = vpack.c.b16 %v2594, %v2591
    %v2631 = vpack.c.b16 %v2595, %v2592
    %v2632 = vpack.c.b16 %v2596, %v2593
    %v2633 = vpack.c.b16 %v2600, %v2597
    %v2634 = vpack.c.b16 %v2601, %v2598
    %v2635 = vpack.c.b16 %v2602, %v2599
    %v2636 = vpack.c.b16 %v2606, %v2603
    %v2637 = vpack.c.b16 %v2607, %v2604
    %v2638 = vpack.c.b16 %v2608, %v2605
    %v2639 = vpack.c.b16 %v2612, %v2609
    %v2640 = vpack.c.b16 %v2613, %v2610
    %v2641 = vpack.c.b16 %v2614, %v2611
    %v2642 = vpack.c.b16 %v2618, %v2615
    %v2643 = vpack.c.b16 %v2619, %v2616
    %v2644 = vpack.c.b16 %v2620, %v2617
    %2669 = vmatprep.subr.bf16.mxu0 %v2643
    %2670 = vmatpush1.bf16.msra.mxu0 %v2642
    %2671 = vmatprep.subr.bf16.mxu0 %v2640
    %2672 = vmatpush1.bf16.msra.mxu0 %v2639
    %2673 = vmatprep.subr.bf16.mxu0 %v2637
    %2674 = vmatpush1.bf16.msra.mxu0 %v2636
    %2675 = vmatprep.subr.bf16.mxu0 %v2634
    %2676 = vmatpush1.bf16.msra.mxu0 %v2633
    %2677 = vmatprep.subr.bf16.mxu0 %v2631
    %2678 = vmatpush1.bf16.msra.mxu0 %v2630
    %2679 = vmatprep.subr.bf16.mxu0 %v2628
    %2680 = vmatpush1.bf16.msra.mxu0 %v2627
    %2681 = vmatprep.subr.bf16.mxu0 %v2625
    %2682 = vmatpush1.bf16.msra.mxu0 %v2624
    %2683 = vmatprep.subr.bf16.mxu0 %v2622
    %2684 = vmatpush1.bf16.msra.mxu0 %v2621
    %2685 = vmatprep.subr.bf16.mxu0 0
    %2686 = vmatpush2.bf16.msra.mxu0 0
    %2687 = vmatprep.subr.bf16.mxu0 0
    %2688 = vmatpush2.bf16.msra.mxu0 0
    %2689 = vmatprep.subr.bf16.mxu0 0
    %2690 = vmatpush2.bf16.msra.mxu0 0
    %2691 = vmatprep.subr.bf16.mxu0 0
    %2692 = vmatpush2.bf16.msra.mxu0 0
    %2693 = vmatprep.subr.bf16.mxu0 0
    %2694 = vmatpush2.bf16.msra.mxu0 0
    %2695 = vmatprep.subr.bf16.mxu0 0
    %2696 = vmatpush2.bf16.msra.mxu0 0
    %2697 = vmatprep.subr.bf16.mxu0 0
    %2698 = vmatpush2.bf16.msra.mxu0 0
    %2699 = vmatprep.subr.bf16.mxu0 0
    %2700 = vmatpush2.bf16.msra.mxu0 0
    %2701 = vmatprep.mubr.bf16.mxu0 0
    %2702 = vmatmul.mubr.bf16.gmra.mxu0 %v2508
    %v2703 = vpop.f32.mrf.mxu0
    %v2704 = vadd.f32 %v912, %v2703
    %v2705 = vpop.f32.mrf.mxu0
    %v2706 = vadd.f32 %v916, %v2705
    %v2707 = vpop.f32.mrf.mxu0
    %v2708 = vpop.f32.mrf.mxu0
    %2709 = vdwg.mxu0
    %2710 = vmatprep.subr.bf16.mxu0 0
    %2711 = vmatpush1.bf16.msra.mxu0 %v2644
    %2712 = vmatprep.subr.bf16.mxu0 0
    %2713 = vmatpush1.bf16.msra.mxu0 %v2641
    %2714 = vmatprep.subr.bf16.mxu0 0
    %2715 = vmatpush1.bf16.msra.mxu0 %v2638
    %2716 = vmatprep.subr.bf16.mxu0 0
    %2717 = vmatpush1.bf16.msra.mxu0 %v2635
    %2718 = vmatprep.subr.bf16.mxu0 0
    %2719 = vmatpush1.bf16.msra.mxu0 %v2632
    %2720 = vmatprep.subr.bf16.mxu0 0
    %2721 = vmatpush1.bf16.msra.mxu0 %v2629
    %2722 = vmatprep.subr.bf16.mxu0 0
    %2723 = vmatpush1.bf16.msra.mxu0 %v2626
    %2724 = vmatprep.subr.bf16.mxu0 0
    %2725 = vmatpush1.bf16.msra.mxu0 %v2623
    %2726 = vmatprep.subr.bf16.mxu0 0
    %2727 = vmatpush2.bf16.msra.mxu0 0
    %2728 = vmatprep.subr.bf16.mxu0 0
    %2729 = vmatpush2.bf16.msra.mxu0 0
    %2730 = vmatprep.subr.bf16.mxu0 0
    %2731 = vmatpush2.bf16.msra.mxu0 0
    %2732 = vmatprep.subr.bf16.mxu0 0
    %2733 = vmatpush2.bf16.msra.mxu0 0
    %2734 = vmatprep.subr.bf16.mxu0 0
    %2735 = vmatpush2.bf16.msra.mxu0 0
    %2736 = vmatprep.subr.bf16.mxu0 0
    %2737 = vmatpush2.bf16.msra.mxu0 0
    %2738 = vmatprep.subr.bf16.mxu0 0
    %2739 = vmatpush2.bf16.msra.mxu0 0
    %2740 = vmatprep.subr.bf16.mxu0 0
    %2741 = vmatpush2.bf16.msra.mxu0 0
    %2742 = vmatprep.mubr.bf16.mxu0 0
    %2743 = vmatmul.mubr.bf16.gmra.mxu0 %v2508
    %v2744 = vpop.f32.mrf.mxu0
    %v2745 = vadd.f32 %v920, %v2744
    %v2746 = vpop.f32.mrf.mxu0
    %v2747 = vpop.f32.mrf.mxu0
    %v2748 = vpop.f32.mrf.mxu0
    %2749 = vdwg.mxu0
    %v2750 = vld [vmem:[#allocation3 + $0x60] sm:$0xff]
    %v2751 = vld [vmem:[#allocation3 + $0x68] sm:$0xff]
    %v2752 = vld [vmem:[#allocation3 + $0x70] sm:$0xff]
    %v2753 = vadd.f32 %v2750, %v2704
    %v2754 = vxor.u32 %v2753, 2147483648
    %v2755 = vmul.f32 %v2754, 1.442695
    %v2756 = vpow.pop %v2755
    %v2757 = vadd.f32 %v2756, 1.0
    %v2758 = vrcp.pop %v2757
    %v2759 = vmul.f32 1.0, %v2758
    %v2760 = vadd.f32 %v2751, %v2706
    %v2761 = vxor.u32 %v2760, 2147483648
    %v2762 = vmul.f32 %v2761, 1.442695
    %v2763 = vpow.pop %v2762
    %v2764 = vadd.f32 %v2763, 1.0
    %v2765 = vrcp.pop %v2764
    %v2766 = vmul.f32 1.0, %v2765
    %v2767 = vmul.f32 %v2759, %v2745
    %v2768 = vadd.f32 %v2752, %v2767
    %v2769 = vtanh.pop %v2768
    %v2770 = vsub.f32 1.0, %v2766
    %v2771 = vmul.f32 %v2770, %v2769
    %v2772 = vmul.f32 %v2766, %v2234
    %v2773 = vadd.f32 %v2771, %v2772
    %v2774 = vsel %vm94, %v2773, %v2234
    %v2775 = vsel %vm94, %v2773, 0.0
    %v2776 = vpack.c.bf16 %v2507, %v2507
    %2777 = vst [vmem:[#allocation4 + $0x18] sm:$0xf] %v2776
    %v2778 = vpack.c.bf16 %v2775, %v2775
    %2779 = vst [vmem:[#allocation4 + $0x24] sm:$0xf] %v2778
    %v2780 = vpack.c.bf16 %v2506, %v2506
    %v2781 = vld [vmem:[%s3] sm:$0xff]
    %v2782 = vld [vmem:[%s3 + $0x8] sm:$0xf]
    %v2783 = vld [vmem:[%s3 + $0xc] sm:$0xff]
    %v2784 = vld [vmem:[%s3 + $0x14] sm:$0xf]
    %v2785 = vld [vmem:[%s3 + $0x18] sm:$0xff]
    %v2786 = vld [vmem:[%s3 + $0x20] sm:$0xf]
    %v2787 = vld [vmem:[%s3 + $0x24] sm:$0xff]
    %v2788 = vld [vmem:[%s3 + $0x2c] sm:$0xf]
    %v2789 = vld [vmem:[%s3 + $0x30] sm:$0xff]
    %v2790 = vld [vmem:[%s3 + $0x38] sm:$0xf]
    %v2791 = vld [vmem:[%s3 + $0x3c] sm:$0xff]
    %v2792 = vld [vmem:[%s3 + $0x44] sm:$0xf]
    %v2793 = vld [vmem:[%s3 + $0x48] sm:$0xff]
    %v2794 = vld [vmem:[%s3 + $0x50] sm:$0xf]
    %v2795 = vld [vmem:[%s3 + $0x54] sm:$0xff]
    %v2796 = vld [vmem:[%s3 + $0x5c] sm:$0xf]
    %v2797 = vld [vmem:[%s3 + $0x60] sm:$0xff]
    %v2798 = vld [vmem:[%s3 + $0x68] sm:$0xf]
    %v2799 = vld [vmem:[%s3 + $0x6c] sm:$0xff]
    %v2800 = vld [vmem:[%s3 + $0x74] sm:$0xf]
    %v2801 = vld [vmem:[%s3 + $0x78] sm:$0xff]
    %v2802 = vld [vmem:[%s3 + $0x80] sm:$0xf]
    %v2803 = vld [vmem:[%s3 + $0x84] sm:$0xff]
    %v2804 = vld [vmem:[%s3 + $0x8c] sm:$0xf]
    %v2805 = vld [vmem:[%s3 + $0x90] sm:$0xff]
    %v2806 = vld [vmem:[%s3 + $0x98] sm:$0xf]
    %v2807 = vld [vmem:[%s3 + $0x9c] sm:$0xff]
    %v2808 = vld [vmem:[%s3 + $0xa4] sm:$0xf]
    %v2809 = vld [vmem:[%s3 + $0xa8] sm:$0xff]
    %v2810 = vld [vmem:[%s3 + $0xb0] sm:$0xf]
    %v2811 = vld [vmem:[%s3 + $0xb4] sm:$0xff]
    %v2812 = vld [vmem:[%s3 + $0xbc] sm:$0xf]
    %v2845 = vunpack.c.l.b16 %v2781
    %v2846 = vunpack.c.h.b16 %v2781
    %v2847 = vunpack.c.l.b16 %v2782
    %v2848 = vunpack.c.l.b16 %v2783
    %v2849 = vunpack.c.h.b16 %v2783
    %v2850 = vunpack.c.l.b16 %v2784
    %v2851 = vunpack.c.l.b16 %v2785
    %v2852 = vunpack.c.h.b16 %v2785
    %v2853 = vunpack.c.l.b16 %v2786
    %v2854 = vunpack.c.l.b16 %v2787
    %v2855 = vunpack.c.h.b16 %v2787
    %v2856 = vunpack.c.l.b16 %v2788
    %v2857 = vunpack.c.l.b16 %v2789
    %v2858 = vunpack.c.h.b16 %v2789
    %v2859 = vunpack.c.l.b16 %v2790
    %v2860 = vunpack.c.l.b16 %v2791
    %v2861 = vunpack.c.h.b16 %v2791
    %v2862 = vunpack.c.l.b16 %v2792
    %v2863 = vunpack.c.l.b16 %v2793
    %v2864 = vunpack.c.h.b16 %v2793
    %v2865 = vunpack.c.l.b16 %v2794
    %v2866 = vunpack.c.l.b16 %v2795
    %v2867 = vunpack.c.h.b16 %v2795
    %v2868 = vunpack.c.l.b16 %v2796
    %v2869 = vunpack.c.l.b16 %v2797
    %v2870 = vunpack.c.h.b16 %v2797
    %v2871 = vunpack.c.l.b16 %v2798
    %v2872 = vunpack.c.l.b16 %v2799
    %v2873 = vunpack.c.h.b16 %v2799
    %v2874 = vunpack.c.l.b16 %v2800
    %v2875 = vunpack.c.l.b16 %v2801
    %v2876 = vunpack.c.h.b16 %v2801
    %v2877 = vunpack.c.l.b16 %v2802
    %v2878 = vunpack.c.l.b16 %v2803
    %v2879 = vunpack.c.h.b16 %v2803
    %v2880 = vunpack.c.l.b16 %v2804
    %v2881 = vunpack.c.l.b16 %v2805
    %v2882 = vunpack.c.h.b16 %v2805
    %v2883 = vunpack.c.l.b16 %v2806
    %v2884 = vunpack.c.l.b16 %v2807
    %v2885 = vunpack.c.h.b16 %v2807
    %v2886 = vunpack.c.l.b16 %v2808
    %v2887 = vunpack.c.l.b16 %v2809
    %v2888 = vunpack.c.h.b16 %v2809
    %v2889 = vunpack.c.l.b16 %v2810
    %v2890 = vunpack.c.l.b16 %v2811
    %v2891 = vunpack.c.h.b16 %v2811
    %v2892 = vunpack.c.l.b16 %v2812
    %v2893 = vpack.c.b16 %v2848, %v2845
    %v2894 = vpack.c.b16 %v2849, %v2846
    %v2895 = vpack.c.b16 %v2850, %v2847
    %v2896 = vpack.c.b16 %v2854, %v2851
    %v2897 = vpack.c.b16 %v2855, %v2852
    %v2898 = vpack.c.b16 %v2856, %v2853
    %v2899 = vpack.c.b16 %v2860, %v2857
    %v2900 = vpack.c.b16 %v2861, %v2858
    %v2901 = vpack.c.b16 %v2862, %v2859
    %v2902 = vpack.c.b16 %v2866, %v2863
    %v2903 = vpack.c.b16 %v2867, %v2864
    %v2904 = vpack.c.b16 %v2868, %v2865
    %v2905 = vpack.c.b16 %v2872, %v2869
    %v2906 = vpack.c.b16 %v2873, %v2870
    %v2907 = vpack.c.b16 %v2874, %v2871
    %v2908 = vpack.c.b16 %v2878, %v2875
    %v2909 = vpack.c.b16 %v2879, %v2876
    %v2910 = vpack.c.b16 %v2880, %v2877
    %v2911 = vpack.c.b16 %v2884, %v2881
    %v2912 = vpack.c.b16 %v2885, %v2882
    %v2913 = vpack.c.b16 %v2886, %v2883
    %v2914 = vpack.c.b16 %v2890, %v2887
    %v2915 = vpack.c.b16 %v2891, %v2888
    %v2916 = vpack.c.b16 %v2892, %v2889
    %2941 = vmatprep.subr.bf16.mxu0 %v2915
    %2942 = vmatpush1.bf16.msra.mxu0 %v2914
    %2943 = vmatprep.subr.bf16.mxu0 %v2912
    %2944 = vmatpush1.bf16.msra.mxu0 %v2911
    %2945 = vmatprep.subr.bf16.mxu0 %v2909
    %2946 = vmatpush1.bf16.msra.mxu0 %v2908
    %2947 = vmatprep.subr.bf16.mxu0 %v2906
    %2948 = vmatpush1.bf16.msra.mxu0 %v2905
    %2949 = vmatprep.subr.bf16.mxu0 %v2903
    %2950 = vmatpush1.bf16.msra.mxu0 %v2902
    %2951 = vmatprep.subr.bf16.mxu0 %v2900
    %2952 = vmatpush1.bf16.msra.mxu0 %v2899
    %2953 = vmatprep.subr.bf16.mxu0 %v2897
    %2954 = vmatpush1.bf16.msra.mxu0 %v2896
    %2955 = vmatprep.subr.bf16.mxu0 %v2894
    %2956 = vmatpush1.bf16.msra.mxu0 %v2893
    %2957 = vmatprep.subr.bf16.mxu0 0
    %2958 = vmatpush2.bf16.msra.mxu0 0
    %2959 = vmatprep.subr.bf16.mxu0 0
    %2960 = vmatpush2.bf16.msra.mxu0 0
    %2961 = vmatprep.subr.bf16.mxu0 0
    %2962 = vmatpush2.bf16.msra.mxu0 0
    %2963 = vmatprep.subr.bf16.mxu0 0
    %2964 = vmatpush2.bf16.msra.mxu0 0
    %2965 = vmatprep.subr.bf16.mxu0 0
    %2966 = vmatpush2.bf16.msra.mxu0 0
    %2967 = vmatprep.subr.bf16.mxu0 0
    %2968 = vmatpush2.bf16.msra.mxu0 0
    %2969 = vmatprep.subr.bf16.mxu0 0
    %2970 = vmatpush2.bf16.msra.mxu0 0
    %2971 = vmatprep.subr.bf16.mxu0 0
    %2972 = vmatpush2.bf16.msra.mxu0 0
    %2973 = vmatprep.mubr.bf16.mxu0 0
    %2974 = vmatmul.mubr.bf16.gmra.mxu0 %v2780
    %v2975 = vpop.f32.mrf.mxu0
    %v2976 = vadd.f32 %v630, %v2975
    %v2977 = vpop.f32.mrf.mxu0
    %v2978 = vadd.f32 %v634, %v2977
    %v2979 = vpop.f32.mrf.mxu0
    %v2980 = vpop.f32.mrf.mxu0
    %2981 = vdwg.mxu0
    %2982 = vmatprep.subr.bf16.mxu0 0
    %2983 = vmatpush1.bf16.msra.mxu0 %v2916
    %2984 = vmatprep.subr.bf16.mxu0 0
    %2985 = vmatpush1.bf16.msra.mxu0 %v2913
    %2986 = vmatprep.subr.bf16.mxu0 0
    %2987 = vmatpush1.bf16.msra.mxu0 %v2910
    %2988 = vmatprep.subr.bf16.mxu0 0
    %2989 = vmatpush1.bf16.msra.mxu0 %v2907
    %2990 = vmatprep.subr.bf16.mxu0 0
    %2991 = vmatpush1.bf16.msra.mxu0 %v2904
    %2992 = vmatprep.subr.bf16.mxu0 0
    %2993 = vmatpush1.bf16.msra.mxu0 %v2901
    %2994 = vmatprep.subr.bf16.mxu0 0
    %2995 = vmatpush1.bf16.msra.mxu0 %v2898
    %2996 = vmatprep.subr.bf16.mxu0 0
    %2997 = vmatpush1.bf16.msra.mxu0 %v2895
    %2998 = vmatprep.subr.bf16.mxu0 0
    %2999 = vmatpush2.bf16.msra.mxu0 0
    %3000 = vmatprep.subr.bf16.mxu0 0
    %3001 = vmatpush2.bf16.msra.mxu0 0
    %3002 = vmatprep.subr.bf16.mxu0 0
    %3003 = vmatpush2.bf16.msra.mxu0 0
    %3004 = vmatprep.subr.bf16.mxu0 0
    %3005 = vmatpush2.bf16.msra.mxu0 0
    %3006 = vmatprep.subr.bf16.mxu0 0
    %3007 = vmatpush2.bf16.msra.mxu0 0
    %3008 = vmatprep.subr.bf16.mxu0 0
    %3009 = vmatpush2.bf16.msra.mxu0 0
    %3010 = vmatprep.subr.bf16.mxu0 0
    %3011 = vmatpush2.bf16.msra.mxu0 0
    %3012 = vmatprep.subr.bf16.mxu0 0
    %3013 = vmatpush2.bf16.msra.mxu0 0
    %3014 = vmatprep.mubr.bf16.mxu0 0
    %3015 = vmatmul.mubr.bf16.gmra.mxu0 %v2780
    %v3016 = vpop.f32.mrf.mxu0
    %v3017 = vadd.f32 %v638, %v3016
    %v3018 = vpop.f32.mrf.mxu0
    %v3019 = vpop.f32.mrf.mxu0
    %v3020 = vpop.f32.mrf.mxu0
    %3021 = vdwg.mxu0
    %v3022 = vld [vmem:[#allocation2 + $0x60] sm:$0xff]
    %v3023 = vld [vmem:[#allocation2 + $0x68] sm:$0xff]
    %v3024 = vld [vmem:[#allocation2 + $0x70] sm:$0xff]
    %v3025 = vadd.f32 %v3022, %v2976
    %v3026 = vxor.u32 %v3025, 2147483648
    %v3027 = vmul.f32 %v3026, 1.442695
    %v3028 = vpow.pop %v3027
    %v3029 = vadd.f32 %v3028, 1.0
    %v3030 = vrcp.pop %v3029
    %v3031 = vmul.f32 1.0, %v3030
    %v3032 = vadd.f32 %v3023, %v2978
    %v3033 = vxor.u32 %v3032, 2147483648
    %v3034 = vmul.f32 %v3033, 1.442695
    %v3035 = vpow.pop %v3034
    %v3036 = vadd.f32 %v3035, 1.0
    %v3037 = vrcp.pop %v3036
    %v3038 = vmul.f32 1.0, %v3037
    %v3039 = vmul.f32 %v3031, %v3017
    %v3040 = vadd.f32 %v3024, %v3039
    %v3041 = vtanh.pop %v3040
    %v3042 = vsub.f32 1.0, %v3038
    %v3043 = vmul.f32 %v3042, %v3041
    %v3044 = vmul.f32 %v3038, %v2506
    %v3045 = vadd.f32 %v3043, %v3044
    %v3046 = vsel %vm94, %v3045, %v2506
    %v3047 = vsel %vm94, %v3045, 0.0
    %v3048 = vpack.c.bf16 %v2774, %v2774
    %v3049 = vld [vmem:[%s7] sm:$0xff]
    %v3050 = vld [vmem:[%s7 + $0x8] sm:$0xf]
    %v3051 = vld [vmem:[%s7 + $0xc] sm:$0xff]
    %v3052 = vld [vmem:[%s7 + $0x14] sm:$0xf]
    %v3053 = vld [vmem:[%s7 + $0x18] sm:$0xff]
    %v3054 = vld [vmem:[%s7 + $0x20] sm:$0xf]
    %v3055 = vld [vmem:[%s7 + $0x24] sm:$0xff]
    %v3056 = vld [vmem:[%s7 + $0x2c] sm:$0xf]
    %v3057 = vld [vmem:[%s7 + $0x30] sm:$0xff]
    %v3058 = vld [vmem:[%s7 + $0x38] sm:$0xf]
    %v3059 = vld [vmem:[%s7 + $0x3c] sm:$0xff]
    %v3060 = vld [vmem:[%s7 + $0x44] sm:$0xf]
    %v3061 = vld [vmem:[%s7 + $0x48] sm:$0xff]
    %v3062 = vld [vmem:[%s7 + $0x50] sm:$0xf]
    %v3063 = vld [vmem:[%s7 + $0x54] sm:$0xff]
    %v3064 = vld [vmem:[%s7 + $0x5c] sm:$0xf]
    %v3065 = vld [vmem:[%s7 + $0x60] sm:$0xff]
    %v3066 = vld [vmem:[%s7 + $0x68] sm:$0xf]
    %v3067 = vld [vmem:[%s7 + $0x6c] sm:$0xff]
    %v3068 = vld [vmem:[%s7 + $0x74] sm:$0xf]
    %v3069 = vld [vmem:[%s7 + $0x78] sm:$0xff]
    %v3070 = vld [vmem:[%s7 + $0x80] sm:$0xf]
    %v3071 = vld [vmem:[%s7 + $0x84] sm:$0xff]
    %v3072 = vld [vmem:[%s7 + $0x8c] sm:$0xf]
    %v3073 = vld [vmem:[%s7 + $0x90] sm:$0xff]
    %v3074 = vld [vmem:[%s7 + $0x98] sm:$0xf]
    %v3075 = vld [vmem:[%s7 + $0x9c] sm:$0xff]
    %v3076 = vld [vmem:[%s7 + $0xa4] sm:$0xf]
    %v3077 = vld [vmem:[%s7 + $0xa8] sm:$0xff]
    %v3078 = vld [vmem:[%s7 + $0xb0] sm:$0xf]
    %v3079 = vld [vmem:[%s7 + $0xb4] sm:$0xff]
    %v3080 = vld [vmem:[%s7 + $0xbc] sm:$0xf]
    %v3113 = vunpack.c.l.b16 %v3049
    %v3114 = vunpack.c.h.b16 %v3049
    %v3115 = vunpack.c.l.b16 %v3050
    %v3116 = vunpack.c.l.b16 %v3051
    %v3117 = vunpack.c.h.b16 %v3051
    %v3118 = vunpack.c.l.b16 %v3052
    %v3119 = vunpack.c.l.b16 %v3053
    %v3120 = vunpack.c.h.b16 %v3053
    %v3121 = vunpack.c.l.b16 %v3054
    %v3122 = vunpack.c.l.b16 %v3055
    %v3123 = vunpack.c.h.b16 %v3055
    %v3124 = vunpack.c.l.b16 %v3056
    %v3125 = vunpack.c.l.b16 %v3057
    %v3126 = vunpack.c.h.b16 %v3057
    %v3127 = vunpack.c.l.b16 %v3058
    %v3128 = vunpack.c.l.b16 %v3059
    %v3129 = vunpack.c.h.b16 %v3059
    %v3130 = vunpack.c.l.b16 %v3060
    %v3131 = vunpack.c.l.b16 %v3061
    %v3132 = vunpack.c.h.b16 %v3061
    %v3133 = vunpack.c.l.b16 %v3062
    %v3134 = vunpack.c.l.b16 %v3063
    %v3135 = vunpack.c.h.b16 %v3063
    %v3136 = vunpack.c.l.b16 %v3064
    %v3137 = vunpack.c.l.b16 %v3065
    %v3138 = vunpack.c.h.b16 %v3065
    %v3139 = vunpack.c.l.b16 %v3066
    %v3140 = vunpack.c.l.b16 %v3067
    %v3141 = vunpack.c.h.b16 %v3067
    %v3142 = vunpack.c.l.b16 %v3068
    %v3143 = vunpack.c.l.b16 %v3069
    %v3144 = vunpack.c.h.b16 %v3069
    %v3145 = vunpack.c.l.b16 %v3070
    %v3146 = vunpack.c.l.b16 %v3071
    %v3147 = vunpack.c.h.b16 %v3071
    %v3148 = vunpack.c.l.b16 %v3072
    %v3149 = vunpack.c.l.b16 %v3073
    %v3150 = vunpack.c.h.b16 %v3073
    %v3151 = vunpack.c.l.b16 %v3074
    %v3152 = vunpack.c.l.b16 %v3075
    %v3153 = vunpack.c.h.b16 %v3075
    %v3154 = vunpack.c.l.b16 %v3076
    %v3155 = vunpack.c.l.b16 %v3077
    %v3156 = vunpack.c.h.b16 %v3077
    %v3157 = vunpack.c.l.b16 %v3078
    %v3158 = vunpack.c.l.b16 %v3079
    %v3159 = vunpack.c.h.b16 %v3079
    %v3160 = vunpack.c.l.b16 %v3080
    %v3161 = vpack.c.b16 %v3116, %v3113
    %v3162 = vpack.c.b16 %v3117, %v3114
    %v3163 = vpack.c.b16 %v3118, %v3115
    %v3164 = vpack.c.b16 %v3122, %v3119
    %v3165 = vpack.c.b16 %v3123, %v3120
    %v3166 = vpack.c.b16 %v3124, %v3121
    %v3167 = vpack.c.b16 %v3128, %v3125
    %v3168 = vpack.c.b16 %v3129, %v3126
    %v3169 = vpack.c.b16 %v3130, %v3127
    %v3170 = vpack.c.b16 %v3134, %v3131
    %v3171 = vpack.c.b16 %v3135, %v3132
    %v3172 = vpack.c.b16 %v3136, %v3133
    %v3173 = vpack.c.b16 %v3140, %v3137
    %v3174 = vpack.c.b16 %v3141, %v3138
    %v3175 = vpack.c.b16 %v3142, %v3139
    %v3176 = vpack.c.b16 %v3146, %v3143
    %v3177 = vpack.c.b16 %v3147, %v3144
    %v3178 = vpack.c.b16 %v3148, %v3145
    %v3179 = vpack.c.b16 %v3152, %v3149
    %v3180 = vpack.c.b16 %v3153, %v3150
    %v3181 = vpack.c.b16 %v3154, %v3151
    %v3182 = vpack.c.b16 %v3158, %v3155
    %v3183 = vpack.c.b16 %v3159, %v3156
    %v3184 = vpack.c.b16 %v3160, %v3157
    %3209 = vmatprep.subr.bf16.mxu0 %v3183
    %3210 = vmatpush1.bf16.msra.mxu0 %v3182
    %3211 = vmatprep.subr.bf16.mxu0 %v3180
    %3212 = vmatpush1.bf16.msra.mxu0 %v3179
    %3213 = vmatprep.subr.bf16.mxu0 %v3177
    %3214 = vmatpush1.bf16.msra.mxu0 %v3176
    %3215 = vmatprep.subr.bf16.mxu0 %v3174
    %3216 = vmatpush1.bf16.msra.mxu0 %v3173
    %3217 = vmatprep.subr.bf16.mxu0 %v3171
    %3218 = vmatpush1.bf16.msra.mxu0 %v3170
    %3219 = vmatprep.subr.bf16.mxu0 %v3168
    %3220 = vmatpush1.bf16.msra.mxu0 %v3167
    %3221 = vmatprep.subr.bf16.mxu0 %v3165
    %3222 = vmatpush1.bf16.msra.mxu0 %v3164
    %3223 = vmatprep.subr.bf16.mxu0 %v3162
    %3224 = vmatpush1.bf16.msra.mxu0 %v3161
    %3225 = vmatprep.subr.bf16.mxu0 0
    %3226 = vmatpush2.bf16.msra.mxu0 0
    %3227 = vmatprep.subr.bf16.mxu0 0
    %3228 = vmatpush2.bf16.msra.mxu0 0
    %3229 = vmatprep.subr.bf16.mxu0 0
    %3230 = vmatpush2.bf16.msra.mxu0 0
    %3231 = vmatprep.subr.bf16.mxu0 0
    %3232 = vmatpush2.bf16.msra.mxu0 0
    %3233 = vmatprep.subr.bf16.mxu0 0
    %3234 = vmatpush2.bf16.msra.mxu0 0
    %3235 = vmatprep.subr.bf16.mxu0 0
    %3236 = vmatpush2.bf16.msra.mxu0 0
    %3237 = vmatprep.subr.bf16.mxu0 0
    %3238 = vmatpush2.bf16.msra.mxu0 0
    %3239 = vmatprep.subr.bf16.mxu0 0
    %3240 = vmatpush2.bf16.msra.mxu0 0
    %3241 = vmatprep.mubr.bf16.mxu0 0
    %3242 = vmatmul.mubr.bf16.gmra.mxu0 %v3048
    %v3243 = vpop.f32.mrf.mxu0
    %v3244 = vadd.f32 %v912, %v3243
    %v3245 = vpop.f32.mrf.mxu0
    %v3246 = vadd.f32 %v916, %v3245
    %v3247 = vpop.f32.mrf.mxu0
    %v3248 = vpop.f32.mrf.mxu0
    %3249 = vdwg.mxu0
    %3250 = vmatprep.subr.bf16.mxu0 0
    %3251 = vmatpush1.bf16.msra.mxu0 %v3184
    %3252 = vmatprep.subr.bf16.mxu0 0
    %3253 = vmatpush1.bf16.msra.mxu0 %v3181
    %3254 = vmatprep.subr.bf16.mxu0 0
    %3255 = vmatpush1.bf16.msra.mxu0 %v3178
    %3256 = vmatprep.subr.bf16.mxu0 0
    %3257 = vmatpush1.bf16.msra.mxu0 %v3175
    %3258 = vmatprep.subr.bf16.mxu0 0
    %3259 = vmatpush1.bf16.msra.mxu0 %v3172
    %3260 = vmatprep.subr.bf16.mxu0 0
    %3261 = vmatpush1.bf16.msra.mxu0 %v3169
    %3262 = vmatprep.subr.bf16.mxu0 0
    %3263 = vmatpush1.bf16.msra.mxu0 %v3166
    %3264 = vmatprep.subr.bf16.mxu0 0
    %3265 = vmatpush1.bf16.msra.mxu0 %v3163
    %3266 = vmatprep.subr.bf16.mxu0 0
    %3267 = vmatpush2.bf16.msra.mxu0 0
    %3268 = vmatprep.subr.bf16.mxu0 0
    %3269 = vmatpush2.bf16.msra.mxu0 0
    %3270 = vmatprep.subr.bf16.mxu0 0
    %3271 = vmatpush2.bf16.msra.mxu0 0
    %3272 = vmatprep.subr.bf16.mxu0 0
    %3273 = vmatpush2.bf16.msra.mxu0 0
    %3274 = vmatprep.subr.bf16.mxu0 0
    %3275 = vmatpush2.bf16.msra.mxu0 0
    %3276 = vmatprep.subr.bf16.mxu0 0
    %3277 = vmatpush2.bf16.msra.mxu0 0
    %3278 = vmatprep.subr.bf16.mxu0 0
    %3279 = vmatpush2.bf16.msra.mxu0 0
    %3280 = vmatprep.subr.bf16.mxu0 0
    %3281 = vmatpush2.bf16.msra.mxu0 0
    %3282 = vmatprep.mubr.bf16.mxu0 0
    %3283 = vmatmul.mubr.bf16.gmra.mxu0 %v3048
    %v3284 = vpop.f32.mrf.mxu0
    %v3285 = vadd.f32 %v920, %v3284
    %v3286 = vpop.f32.mrf.mxu0
    %v3287 = vpop.f32.mrf.mxu0
    %v3288 = vpop.f32.mrf.mxu0
    %3289 = vdwg.mxu0
    %v3290 = vld [vmem:[#allocation3 + $0x48] sm:$0xff]
    %v3291 = vld [vmem:[#allocation3 + $0x50] sm:$0xff]
    %v3292 = vld [vmem:[#allocation3 + $0x58] sm:$0xff]
    %v3293 = vadd.f32 %v3290, %v3244
    %v3294 = vxor.u32 %v3293, 2147483648
    %v3295 = vmul.f32 %v3294, 1.442695
    %v3296 = vpow.pop %v3295
    %v3297 = vadd.f32 %v3296, 1.0
    %v3298 = vrcp.pop %v3297
    %v3299 = vmul.f32 1.0, %v3298
    %v3300 = vadd.f32 %v3291, %v3246
    %v3301 = vxor.u32 %v3300, 2147483648
    %v3302 = vmul.f32 %v3301, 1.442695
    %v3303 = vpow.pop %v3302
    %v3304 = vadd.f32 %v3303, 1.0
    %v3305 = vrcp.pop %v3304
    %v3306 = vmul.f32 1.0, %v3305
    %v3307 = vmul.f32 %v3299, %v3285
    %v3308 = vadd.f32 %v3292, %v3307
    %v3309 = vtanh.pop %v3308
    %v3310 = vsub.f32 1.0, %v3306
    %v3311 = vmul.f32 %v3310, %v3309
    %v3312 = vmul.f32 %v3306, %v2774
    %v3313 = vadd.f32 %v3311, %v3312
    %v3314 = vsel %vm88, %v3313, %v2774
    %v3315 = vsel %vm88, %v3313, 0.0
    %v3316 = vpack.c.bf16 %v3047, %v3047
    %3317 = vst [vmem:[#allocation4 + $0x20] sm:$0xf] %v3316
    %v3318 = vpack.c.bf16 %v3315, %v3315
    %3319 = vst [vmem:[#allocation4 + $0x1c] sm:$0xf] %v3318
    %v3320 = vpack.c.bf16 %v3046, %v3046
    %v3321 = vld [vmem:[%s3] sm:$0xff]
    %v3322 = vld [vmem:[%s3 + $0x8] sm:$0xf]
    %v3323 = vld [vmem:[%s3 + $0xc] sm:$0xff]
    %v3324 = vld [vmem:[%s3 + $0x14] sm:$0xf]
    %v3325 = vld [vmem:[%s3 + $0x18] sm:$0xff]
    %v3326 = vld [vmem:[%s3 + $0x20] sm:$0xf]
    %v3327 = vld [vmem:[%s3 + $0x24] sm:$0xff]
    %v3328 = vld [vmem:[%s3 + $0x2c] sm:$0xf]
    %v3329 = vld [vmem:[%s3 + $0x30] sm:$0xff]
    %v3330 = vld [vmem:[%s3 + $0x38] sm:$0xf]
    %v3331 = vld [vmem:[%s3 + $0x3c] sm:$0xff]
    %v3332 = vld [vmem:[%s3 + $0x44] sm:$0xf]
    %v3333 = vld [vmem:[%s3 + $0x48] sm:$0xff]
    %v3334 = vld [vmem:[%s3 + $0x50] sm:$0xf]
    %v3335 = vld [vmem:[%s3 + $0x54] sm:$0xff]
    %v3336 = vld [vmem:[%s3 + $0x5c] sm:$0xf]
    %v3337 = vld [vmem:[%s3 + $0x60] sm:$0xff]
    %v3338 = vld [vmem:[%s3 + $0x68] sm:$0xf]
    %v3339 = vld [vmem:[%s3 + $0x6c] sm:$0xff]
    %v3340 = vld [vmem:[%s3 + $0x74] sm:$0xf]
    %v3341 = vld [vmem:[%s3 + $0x78] sm:$0xff]
    %v3342 = vld [vmem:[%s3 + $0x80] sm:$0xf]
    %v3343 = vld [vmem:[%s3 + $0x84] sm:$0xff]
    %v3344 = vld [vmem:[%s3 + $0x8c] sm:$0xf]
    %v3345 = vld [vmem:[%s3 + $0x90] sm:$0xff]
    %v3346 = vld [vmem:[%s3 + $0x98] sm:$0xf]
    %v3347 = vld [vmem:[%s3 + $0x9c] sm:$0xff]
    %v3348 = vld [vmem:[%s3 + $0xa4] sm:$0xf]
    %v3349 = vld [vmem:[%s3 + $0xa8] sm:$0xff]
    %v3350 = vld [vmem:[%s3 + $0xb0] sm:$0xf]
    %v3351 = vld [vmem:[%s3 + $0xb4] sm:$0xff]
    %v3352 = vld [vmem:[%s3 + $0xbc] sm:$0xf]
    %v3385 = vunpack.c.l.b16 %v3321
    %v3386 = vunpack.c.h.b16 %v3321
    %v3387 = vunpack.c.l.b16 %v3322
    %v3388 = vunpack.c.l.b16 %v3323
    %v3389 = vunpack.c.h.b16 %v3323
    %v3390 = vunpack.c.l.b16 %v3324
    %v3391 = vunpack.c.l.b16 %v3325
    %v3392 = vunpack.c.h.b16 %v3325
    %v3393 = vunpack.c.l.b16 %v3326
    %v3394 = vunpack.c.l.b16 %v3327
    %v3395 = vunpack.c.h.b16 %v3327
    %v3396 = vunpack.c.l.b16 %v3328
    %v3397 = vunpack.c.l.b16 %v3329
    %v3398 = vunpack.c.h.b16 %v3329
    %v3399 = vunpack.c.l.b16 %v3330
    %v3400 = vunpack.c.l.b16 %v3331
    %v3401 = vunpack.c.h.b16 %v3331
    %v3402 = vunpack.c.l.b16 %v3332
    %v3403 = vunpack.c.l.b16 %v3333
    %v3404 = vunpack.c.h.b16 %v3333
    %v3405 = vunpack.c.l.b16 %v3334
    %v3406 = vunpack.c.l.b16 %v3335
    %v3407 = vunpack.c.h.b16 %v3335
    %v3408 = vunpack.c.l.b16 %v3336
    %v3409 = vunpack.c.l.b16 %v3337
    %v3410 = vunpack.c.h.b16 %v3337
    %v3411 = vunpack.c.l.b16 %v3338
    %v3412 = vunpack.c.l.b16 %v3339
    %v3413 = vunpack.c.h.b16 %v3339
    %v3414 = vunpack.c.l.b16 %v3340
    %v3415 = vunpack.c.l.b16 %v3341
    %v3416 = vunpack.c.h.b16 %v3341
    %v3417 = vunpack.c.l.b16 %v3342
    %v3418 = vunpack.c.l.b16 %v3343
    %v3419 = vunpack.c.h.b16 %v3343
    %v3420 = vunpack.c.l.b16 %v3344
    %v3421 = vunpack.c.l.b16 %v3345
    %v3422 = vunpack.c.h.b16 %v3345
    %v3423 = vunpack.c.l.b16 %v3346
    %v3424 = vunpack.c.l.b16 %v3347
    %v3425 = vunpack.c.h.b16 %v3347
    %v3426 = vunpack.c.l.b16 %v3348
    %v3427 = vunpack.c.l.b16 %v3349
    %v3428 = vunpack.c.h.b16 %v3349
    %v3429 = vunpack.c.l.b16 %v3350
    %v3430 = vunpack.c.l.b16 %v3351
    %v3431 = vunpack.c.h.b16 %v3351
    %v3432 = vunpack.c.l.b16 %v3352
    %v3433 = vpack.c.b16 %v3388, %v3385
    %v3434 = vpack.c.b16 %v3389, %v3386
    %v3435 = vpack.c.b16 %v3390, %v3387
    %v3436 = vpack.c.b16 %v3394, %v3391
    %v3437 = vpack.c.b16 %v3395, %v3392
    %v3438 = vpack.c.b16 %v3396, %v3393
    %v3439 = vpack.c.b16 %v3400, %v3397
    %v3440 = vpack.c.b16 %v3401, %v3398
    %v3441 = vpack.c.b16 %v3402, %v3399
    %v3442 = vpack.c.b16 %v3406, %v3403
    %v3443 = vpack.c.b16 %v3407, %v3404
    %v3444 = vpack.c.b16 %v3408, %v3405
    %v3445 = vpack.c.b16 %v3412, %v3409
    %v3446 = vpack.c.b16 %v3413, %v3410
    %v3447 = vpack.c.b16 %v3414, %v3411
    %v3448 = vpack.c.b16 %v3418, %v3415
    %v3449 = vpack.c.b16 %v3419, %v3416
    %v3450 = vpack.c.b16 %v3420, %v3417
    %v3451 = vpack.c.b16 %v3424, %v3421
    %v3452 = vpack.c.b16 %v3425, %v3422
    %v3453 = vpack.c.b16 %v3426, %v3423
    %v3454 = vpack.c.b16 %v3430, %v3427
    %v3455 = vpack.c.b16 %v3431, %v3428
    %v3456 = vpack.c.b16 %v3432, %v3429
    %3481 = vmatprep.subr.bf16.mxu0 %v3455
    %3482 = vmatpush1.bf16.msra.mxu0 %v3454
    %3483 = vmatprep.subr.bf16.mxu0 %v3452
    %3484 = vmatpush1.bf16.msra.mxu0 %v3451
    %3485 = vmatprep.subr.bf16.mxu0 %v3449
    %3486 = vmatpush1.bf16.msra.mxu0 %v3448
    %3487 = vmatprep.subr.bf16.mxu0 %v3446
    %3488 = vmatpush1.bf16.msra.mxu0 %v3445
    %3489 = vmatprep.subr.bf16.mxu0 %v3443
    %3490 = vmatpush1.bf16.msra.mxu0 %v3442
    %3491 = vmatprep.subr.bf16.mxu0 %v3440
    %3492 = vmatpush1.bf16.msra.mxu0 %v3439
    %3493 = vmatprep.subr.bf16.mxu0 %v3437
    %3494 = vmatpush1.bf16.msra.mxu0 %v3436
    %3495 = vmatprep.subr.bf16.mxu0 %v3434
    %3496 = vmatpush1.bf16.msra.mxu0 %v3433
    %3497 = vmatprep.subr.bf16.mxu0 0
    %3498 = vmatpush2.bf16.msra.mxu0 0
    %3499 = vmatprep.subr.bf16.mxu0 0
    %3500 = vmatpush2.bf16.msra.mxu0 0
    %3501 = vmatprep.subr.bf16.mxu0 0
    %3502 = vmatpush2.bf16.msra.mxu0 0
    %3503 = vmatprep.subr.bf16.mxu0 0
    %3504 = vmatpush2.bf16.msra.mxu0 0
    %3505 = vmatprep.subr.bf16.mxu0 0
    %3506 = vmatpush2.bf16.msra.mxu0 0
    %3507 = vmatprep.subr.bf16.mxu0 0
    %3508 = vmatpush2.bf16.msra.mxu0 0
    %3509 = vmatprep.subr.bf16.mxu0 0
    %3510 = vmatpush2.bf16.msra.mxu0 0
    %3511 = vmatprep.subr.bf16.mxu0 0
    %3512 = vmatpush2.bf16.msra.mxu0 0
    %3513 = vmatprep.mubr.bf16.mxu0 0
    %3514 = vmatmul.mubr.bf16.gmra.mxu0 %v3320
    %v3515 = vpop.f32.mrf.mxu0
    %v3516 = vadd.f32 %v630, %v3515
    %v3517 = vpop.f32.mrf.mxu0
    %v3518 = vadd.f32 %v634, %v3517
    %v3519 = vpop.f32.mrf.mxu0
    %v3520 = vpop.f32.mrf.mxu0
    %3521 = vdwg.mxu0
    %3522 = vmatprep.subr.bf16.mxu0 0
    %3523 = vmatpush1.bf16.msra.mxu0 %v3456
    %3524 = vmatprep.subr.bf16.mxu0 0
    %3525 = vmatpush1.bf16.msra.mxu0 %v3453
    %3526 = vmatprep.subr.bf16.mxu0 0
    %3527 = vmatpush1.bf16.msra.mxu0 %v3450
    %3528 = vmatprep.subr.bf16.mxu0 0
    %3529 = vmatpush1.bf16.msra.mxu0 %v3447
    %3530 = vmatprep.subr.bf16.mxu0 0
    %3531 = vmatpush1.bf16.msra.mxu0 %v3444
    %3532 = vmatprep.subr.bf16.mxu0 0
    %3533 = vmatpush1.bf16.msra.mxu0 %v3441
    %3534 = vmatprep.subr.bf16.mxu0 0
    %3535 = vmatpush1.bf16.msra.mxu0 %v3438
    %3536 = vmatprep.subr.bf16.mxu0 0
    %3537 = vmatpush1.bf16.msra.mxu0 %v3435
    %3538 = vmatprep.subr.bf16.mxu0 0
    %3539 = vmatpush2.bf16.msra.mxu0 0
    %3540 = vmatprep.subr.bf16.mxu0 0
    %3541 = vmatpush2.bf16.msra.mxu0 0
    %3542 = vmatprep.subr.bf16.mxu0 0
    %3543 = vmatpush2.bf16.msra.mxu0 0
    %3544 = vmatprep.subr.bf16.mxu0 0
    %3545 = vmatpush2.bf16.msra.mxu0 0
    %3546 = vmatprep.subr.bf16.mxu0 0
    %3547 = vmatpush2.bf16.msra.mxu0 0
    %3548 = vmatprep.subr.bf16.mxu0 0
    %3549 = vmatpush2.bf16.msra.mxu0 0
    %3550 = vmatprep.subr.bf16.mxu0 0
    %3551 = vmatpush2.bf16.msra.mxu0 0
    %3552 = vmatprep.subr.bf16.mxu0 0
    %3553 = vmatpush2.bf16.msra.mxu0 0
    %3554 = vmatprep.mubr.bf16.mxu0 0
    %3555 = vmatmul.mubr.bf16.gmra.mxu0 %v3320
    %v3556 = vpop.f32.mrf.mxu0
    %v3557 = vadd.f32 %v638, %v3556
    %v3558 = vpop.f32.mrf.mxu0
    %v3559 = vpop.f32.mrf.mxu0
    %v3560 = vpop.f32.mrf.mxu0
    %3561 = vdwg.mxu0
    %v3562 = vld [vmem:[#allocation2 + $0x78] sm:$0xff]
    %v3563 = vld [vmem:[#allocation2 + $0x80] sm:$0xff]
    %v3564 = vld [vmem:[#allocation2 + $0x88] sm:$0xff]
    %v3565 = vadd.f32 %v3562, %v3516
    %v3566 = vxor.u32 %v3565, 2147483648
    %v3567 = vmul.f32 %v3566, 1.442695
    %v3568 = vpow.pop %v3567
    %v3569 = vadd.f32 %v3568, 1.0
    %v3570 = vrcp.pop %v3569
    %v3571 = vmul.f32 1.0, %v3570
    %v3572 = vadd.f32 %v3563, %v3518
    %v3573 = vxor.u32 %v3572, 2147483648
    %v3574 = vmul.f32 %v3573, 1.442695
    %v3575 = vpow.pop %v3574
    %v3576 = vadd.f32 %v3575, 1.0
    %v3577 = vrcp.pop %v3576
    %v3578 = vmul.f32 1.0, %v3577
    %v3579 = vmul.f32 %v3571, %v3557
    %v3580 = vadd.f32 %v3564, %v3579
    %v3581 = vtanh.pop %v3580
    %v3582 = vsub.f32 1.0, %v3578
    %v3583 = vmul.f32 %v3582, %v3581
    %v3584 = vmul.f32 %v3578, %v3046
    %v3585 = vadd.f32 %v3583, %v3584
    %v3586 = vsel %vm100, %v3585, %v3046
    %v3587 = vsel %vm100, %v3585, 0.0
    %v3588 = vpack.c.bf16 %v3314, %v3314
    %v3589 = vld [vmem:[%s7] sm:$0xff]
    %v3590 = vld [vmem:[%s7 + $0x8] sm:$0xf]
    %v3591 = vld [vmem:[%s7 + $0xc] sm:$0xff]
    %v3592 = vld [vmem:[%s7 + $0x14] sm:$0xf]
    %v3593 = vld [vmem:[%s7 + $0x18] sm:$0xff]
    %v3594 = vld [vmem:[%s7 + $0x20] sm:$0xf]
    %v3595 = vld [vmem:[%s7 + $0x24] sm:$0xff]
    %v3596 = vld [vmem:[%s7 + $0x2c] sm:$0xf]
    %v3597 = vld [vmem:[%s7 + $0x30] sm:$0xff]
    %v3598 = vld [vmem:[%s7 + $0x38] sm:$0xf]
    %v3599 = vld [vmem:[%s7 + $0x3c] sm:$0xff]
    %v3600 = vld [vmem:[%s7 + $0x44] sm:$0xf]
    %v3601 = vld [vmem:[%s7 + $0x48] sm:$0xff]
    %v3602 = vld [vmem:[%s7 + $0x50] sm:$0xf]
    %v3603 = vld [vmem:[%s7 + $0x54] sm:$0xff]
    %v3604 = vld [vmem:[%s7 + $0x5c] sm:$0xf]
    %v3605 = vld [vmem:[%s7 + $0x60] sm:$0xff]
    %v3606 = vld [vmem:[%s7 + $0x68] sm:$0xf]
    %v3607 = vld [vmem:[%s7 + $0x6c] sm:$0xff]
    %v3608 = vld [vmem:[%s7 + $0x74] sm:$0xf]
    %v3609 = vld [vmem:[%s7 + $0x78] sm:$0xff]
    %v3610 = vld [vmem:[%s7 + $0x80] sm:$0xf]
    %v3611 = vld [vmem:[%s7 + $0x84] sm:$0xff]
    %v3612 = vld [vmem:[%s7 + $0x8c] sm:$0xf]
    %v3613 = vld [vmem:[%s7 + $0x90] sm:$0xff]
    %v3614 = vld [vmem:[%s7 + $0x98] sm:$0xf]
    %v3615 = vld [vmem:[%s7 + $0x9c] sm:$0xff]
    %v3616 = vld [vmem:[%s7 + $0xa4] sm:$0xf]
    %v3617 = vld [vmem:[%s7 + $0xa8] sm:$0xff]
    %v3618 = vld [vmem:[%s7 + $0xb0] sm:$0xf]
    %v3619 = vld [vmem:[%s7 + $0xb4] sm:$0xff]
    %v3620 = vld [vmem:[%s7 + $0xbc] sm:$0xf]
    %v3653 = vunpack.c.l.b16 %v3589
    %v3654 = vunpack.c.h.b16 %v3589
    %v3655 = vunpack.c.l.b16 %v3590
    %v3656 = vunpack.c.l.b16 %v3591
    %v3657 = vunpack.c.h.b16 %v3591
    %v3658 = vunpack.c.l.b16 %v3592
    %v3659 = vunpack.c.l.b16 %v3593
    %v3660 = vunpack.c.h.b16 %v3593
    %v3661 = vunpack.c.l.b16 %v3594
    %v3662 = vunpack.c.l.b16 %v3595
    %v3663 = vunpack.c.h.b16 %v3595
    %v3664 = vunpack.c.l.b16 %v3596
    %v3665 = vunpack.c.l.b16 %v3597
    %v3666 = vunpack.c.h.b16 %v3597
    %v3667 = vunpack.c.l.b16 %v3598
    %v3668 = vunpack.c.l.b16 %v3599
    %v3669 = vunpack.c.h.b16 %v3599
    %v3670 = vunpack.c.l.b16 %v3600
    %v3671 = vunpack.c.l.b16 %v3601
    %v3672 = vunpack.c.h.b16 %v3601
    %v3673 = vunpack.c.l.b16 %v3602
    %v3674 = vunpack.c.l.b16 %v3603
    %v3675 = vunpack.c.h.b16 %v3603
    %v3676 = vunpack.c.l.b16 %v3604
    %v3677 = vunpack.c.l.b16 %v3605
    %v3678 = vunpack.c.h.b16 %v3605
    %v3679 = vunpack.c.l.b16 %v3606
    %v3680 = vunpack.c.l.b16 %v3607
    %v3681 = vunpack.c.h.b16 %v3607
    %v3682 = vunpack.c.l.b16 %v3608
    %v3683 = vunpack.c.l.b16 %v3609
    %v3684 = vunpack.c.h.b16 %v3609
    %v3685 = vunpack.c.l.b16 %v3610
    %v3686 = vunpack.c.l.b16 %v3611
    %v3687 = vunpack.c.h.b16 %v3611
    %v3688 = vunpack.c.l.b16 %v3612
    %v3689 = vunpack.c.l.b16 %v3613
    %v3690 = vunpack.c.h.b16 %v3613
    %v3691 = vunpack.c.l.b16 %v3614
    %v3692 = vunpack.c.l.b16 %v3615
    %v3693 = vunpack.c.h.b16 %v3615
    %v3694 = vunpack.c.l.b16 %v3616
    %v3695 = vunpack.c.l.b16 %v3617
    %v3696 = vunpack.c.h.b16 %v3617
    %v3697 = vunpack.c.l.b16 %v3618
    %v3698 = vunpack.c.l.b16 %v3619
    %v3699 = vunpack.c.h.b16 %v3619
    %v3700 = vunpack.c.l.b16 %v3620
    %v3701 = vpack.c.b16 %v3656, %v3653
    %v3702 = vpack.c.b16 %v3657, %v3654
    %v3703 = vpack.c.b16 %v3658, %v3655
    %v3704 = vpack.c.b16 %v3662, %v3659
    %v3705 = vpack.c.b16 %v3663, %v3660
    %v3706 = vpack.c.b16 %v3664, %v3661
    %v3707 = vpack.c.b16 %v3668, %v3665
    %v3708 = vpack.c.b16 %v3669, %v3666
    %v3709 = vpack.c.b16 %v3670, %v3667
    %v3710 = vpack.c.b16 %v3674, %v3671
    %v3711 = vpack.c.b16 %v3675, %v3672
    %v3712 = vpack.c.b16 %v3676, %v3673
    %v3713 = vpack.c.b16 %v3680, %v3677
    %v3714 = vpack.c.b16 %v3681, %v3678
    %v3715 = vpack.c.b16 %v3682, %v3679
    %v3716 = vpack.c.b16 %v3686, %v3683
    %v3717 = vpack.c.b16 %v3687, %v3684
    %v3718 = vpack.c.b16 %v3688, %v3685
    %v3719 = vpack.c.b16 %v3692, %v3689
    %v3720 = vpack.c.b16 %v3693, %v3690
    %v3721 = vpack.c.b16 %v3694, %v3691
    %v3722 = vpack.c.b16 %v3698, %v3695
    %v3723 = vpack.c.b16 %v3699, %v3696
    %v3724 = vpack.c.b16 %v3700, %v3697
    %3749 = vmatprep.subr.bf16.mxu0 %v3723
    %3750 = vmatpush1.bf16.msra.mxu0 %v3722
    %3751 = vmatprep.subr.bf16.mxu0 %v3720
    %3752 = vmatpush1.bf16.msra.mxu0 %v3719
    %3753 = vmatprep.subr.bf16.mxu0 %v3717
    %3754 = vmatpush1.bf16.msra.mxu0 %v3716
    %3755 = vmatprep.subr.bf16.mxu0 %v3714
    %3756 = vmatpush1.bf16.msra.mxu0 %v3713
    %3757 = vmatprep.subr.bf16.mxu0 %v3711
    %3758 = vmatpush1.bf16.msra.mxu0 %v3710
    %3759 = vmatprep.subr.bf16.mxu0 %v3708
    %3760 = vmatpush1.bf16.msra.mxu0 %v3707
    %3761 = vmatprep.subr.bf16.mxu0 %v3705
    %3762 = vmatpush1.bf16.msra.mxu0 %v3704
    %3763 = vmatprep.subr.bf16.mxu0 %v3702
    %3764 = vmatpush1.bf16.msra.mxu0 %v3701
    %3765 = vmatprep.subr.bf16.mxu0 0
    %3766 = vmatpush2.bf16.msra.mxu0 0
    %3767 = vmatprep.subr.bf16.mxu0 0
    %3768 = vmatpush2.bf16.msra.mxu0 0
    %3769 = vmatprep.subr.bf16.mxu0 0
    %3770 = vmatpush2.bf16.msra.mxu0 0
    %3771 = vmatprep.subr.bf16.mxu0 0
    %3772 = vmatpush2.bf16.msra.mxu0 0
    %3773 = vmatprep.subr.bf16.mxu0 0
    %3774 = vmatpush2.bf16.msra.mxu0 0
    %3775 = vmatprep.subr.bf16.mxu0 0
    %3776 = vmatpush2.bf16.msra.mxu0 0
    %3777 = vmatprep.subr.bf16.mxu0 0
    %3778 = vmatpush2.bf16.msra.mxu0 0
    %3779 = vmatprep.subr.bf16.mxu0 0
    %3780 = vmatpush2.bf16.msra.mxu0 0
    %3781 = vmatprep.mubr.bf16.mxu0 0
    %3782 = vmatmul.mubr.bf16.gmra.mxu0 %v3588
    %v3783 = vpop.f32.mrf.mxu0
    %v3784 = vadd.f32 %v912, %v3783
    %v3785 = vpop.f32.mrf.mxu0
    %v3786 = vadd.f32 %v916, %v3785
    %v3787 = vpop.f32.mrf.mxu0
    %v3788 = vpop.f32.mrf.mxu0
    %3789 = vdwg.mxu0
    %3790 = vmatprep.subr.bf16.mxu0 0
    %3791 = vmatpush1.bf16.msra.mxu0 %v3724
    %3792 = vmatprep.subr.bf16.mxu0 0
    %3793 = vmatpush1.bf16.msra.mxu0 %v3721
    %3794 = vmatprep.subr.bf16.mxu0 0
    %3795 = vmatpush1.bf16.msra.mxu0 %v3718
    %3796 = vmatprep.subr.bf16.mxu0 0
    %3797 = vmatpush1.bf16.msra.mxu0 %v3715
    %3798 = vmatprep.subr.bf16.mxu0 0
    %3799 = vmatpush1.bf16.msra.mxu0 %v3712
    %3800 = vmatprep.subr.bf16.mxu0 0
    %3801 = vmatpush1.bf16.msra.mxu0 %v3709
    %3802 = vmatprep.subr.bf16.mxu0 0
    %3803 = vmatpush1.bf16.msra.mxu0 %v3706
    %3804 = vmatprep.subr.bf16.mxu0 0
    %3805 = vmatpush1.bf16.msra.mxu0 %v3703
    %3806 = vmatprep.subr.bf16.mxu0 0
    %3807 = vmatpush2.bf16.msra.mxu0 0
    %3808 = vmatprep.subr.bf16.mxu0 0
    %3809 = vmatpush2.bf16.msra.mxu0 0
    %3810 = vmatprep.subr.bf16.mxu0 0
    %3811 = vmatpush2.bf16.msra.mxu0 0
    %3812 = vmatprep.subr.bf16.mxu0 0
    %3813 = vmatpush2.bf16.msra.mxu0 0
    %3814 = vmatprep.subr.bf16.mxu0 0
    %3815 = vmatpush2.bf16.msra.mxu0 0
    %3816 = vmatprep.subr.bf16.mxu0 0
    %3817 = vmatpush2.bf16.msra.mxu0 0
    %3818 = vmatprep.subr.bf16.mxu0 0
    %3819 = vmatpush2.bf16.msra.mxu0 0
    %3820 = vmatprep.subr.bf16.mxu0 0
    %3821 = vmatpush2.bf16.msra.mxu0 0
    %3822 = vmatprep.mubr.bf16.mxu0 0
    %3823 = vmatmul.mubr.bf16.gmra.mxu0 %v3588
    %v3824 = vpop.f32.mrf.mxu0
    %v3825 = vadd.f32 %v920, %v3824
    %v3826 = vpop.f32.mrf.mxu0
    %v3827 = vpop.f32.mrf.mxu0
    %v3828 = vpop.f32.mrf.mxu0
    %3829 = vdwg.mxu0
    %v3830 = vld [vmem:[#allocation3 + $0x30] sm:$0xff]
    %v3831 = vld [vmem:[#allocation3 + $0x38] sm:$0xff]
    %v3832 = vld [vmem:[#allocation3 + $0x40] sm:$0xff]
    %v3833 = vadd.f32 %v3830, %v3784
    %v3834 = vxor.u32 %v3833, 2147483648
    %v3835 = vmul.f32 %v3834, 1.442695
    %v3836 = vpow.pop %v3835
    %v3837 = vadd.f32 %v3836, 1.0
    %v3838 = vrcp.pop %v3837
    %v3839 = vmul.f32 1.0, %v3838
    %v3840 = vadd.f32 %v3831, %v3786
    %v3841 = vxor.u32 %v3840, 2147483648
    %v3842 = vmul.f32 %v3841, 1.442695
    %v3843 = vpow.pop %v3842
    %v3844 = vadd.f32 %v3843, 1.0
    %v3845 = vrcp.pop %v3844
    %v3846 = vmul.f32 1.0, %v3845
    %v3847 = vmul.f32 %v3839, %v3825
    %v3848 = vadd.f32 %v3832, %v3847
    %v3849 = vtanh.pop %v3848
    %v3850 = vsub.f32 1.0, %v3846
    %v3851 = vmul.f32 %v3850, %v3849
    %v3852 = vmul.f32 %v3846, %v3314
    %v3853 = vadd.f32 %v3851, %v3852
    %v3854 = vsel %vm82, %v3853, %v3314
    %v3855 = vsel %vm82, %v3853, 0.0
    %v3856 = vpack.c.bf16 %v3587, %v3587
    %3857 = vst [vmem:[#allocation4 + $0x28] sm:$0xf] %v3856
    %v3858 = vpack.c.bf16 %v3855, %v3855
    %3859 = vst [vmem:[#allocation4 + $0x14] sm:$0xf] %v3858
    %v3860 = vpack.c.bf16 %v3586, %v3586
    %v3861 = vld [vmem:[%s3] sm:$0xff]
    %v3862 = vld [vmem:[%s3 + $0x8] sm:$0xf]
    %v3863 = vld [vmem:[%s3 + $0xc] sm:$0xff]
    %v3864 = vld [vmem:[%s3 + $0x14] sm:$0xf]
    %v3865 = vld [vmem:[%s3 + $0x18] sm:$0xff]
    %v3866 = vld [vmem:[%s3 + $0x20] sm:$0xf]
    %v3867 = vld [vmem:[%s3 + $0x24] sm:$0xff]
    %v3868 = vld [vmem:[%s3 + $0x2c] sm:$0xf]
    %v3869 = vld [vmem:[%s3 + $0x30] sm:$0xff]
    %v3870 = vld [vmem:[%s3 + $0x38] sm:$0xf]
    %v3871 = vld [vmem:[%s3 + $0x3c] sm:$0xff]
    %v3872 = vld [vmem:[%s3 + $0x44] sm:$0xf]
    %v3873 = vld [vmem:[%s3 + $0x48] sm:$0xff]
    %v3874 = vld [vmem:[%s3 + $0x50] sm:$0xf]
    %v3875 = vld [vmem:[%s3 + $0x54] sm:$0xff]
    %v3876 = vld [vmem:[%s3 + $0x5c] sm:$0xf]
    %v3877 = vld [vmem:[%s3 + $0x60] sm:$0xff]
    %v3878 = vld [vmem:[%s3 + $0x68] sm:$0xf]
    %v3879 = vld [vmem:[%s3 + $0x6c] sm:$0xff]
    %v3880 = vld [vmem:[%s3 + $0x74] sm:$0xf]
    %v3881 = vld [vmem:[%s3 + $0x78] sm:$0xff]
    %v3882 = vld [vmem:[%s3 + $0x80] sm:$0xf]
    %v3883 = vld [vmem:[%s3 + $0x84] sm:$0xff]
    %v3884 = vld [vmem:[%s3 + $0x8c] sm:$0xf]
    %v3885 = vld [vmem:[%s3 + $0x90] sm:$0xff]
    %v3886 = vld [vmem:[%s3 + $0x98] sm:$0xf]
    %v3887 = vld [vmem:[%s3 + $0x9c] sm:$0xff]
    %v3888 = vld [vmem:[%s3 + $0xa4] sm:$0xf]
    %v3889 = vld [vmem:[%s3 + $0xa8] sm:$0xff]
    %v3890 = vld [vmem:[%s3 + $0xb0] sm:$0xf]
    %v3891 = vld [vmem:[%s3 + $0xb4] sm:$0xff]
    %v3892 = vld [vmem:[%s3 + $0xbc] sm:$0xf]
    %v3925 = vunpack.c.l.b16 %v3861
    %v3926 = vunpack.c.h.b16 %v3861
    %v3927 = vunpack.c.l.b16 %v3862
    %v3928 = vunpack.c.l.b16 %v3863
    %v3929 = vunpack.c.h.b16 %v3863
    %v3930 = vunpack.c.l.b16 %v3864
    %v3931 = vunpack.c.l.b16 %v3865
    %v3932 = vunpack.c.h.b16 %v3865
    %v3933 = vunpack.c.l.b16 %v3866
    %v3934 = vunpack.c.l.b16 %v3867
    %v3935 = vunpack.c.h.b16 %v3867
    %v3936 = vunpack.c.l.b16 %v3868
    %v3937 = vunpack.c.l.b16 %v3869
    %v3938 = vunpack.c.h.b16 %v3869
    %v3939 = vunpack.c.l.b16 %v3870
    %v3940 = vunpack.c.l.b16 %v3871
    %v3941 = vunpack.c.h.b16 %v3871
    %v3942 = vunpack.c.l.b16 %v3872
    %v3943 = vunpack.c.l.b16 %v3873
    %v3944 = vunpack.c.h.b16 %v3873
    %v3945 = vunpack.c.l.b16 %v3874
    %v3946 = vunpack.c.l.b16 %v3875
    %v3947 = vunpack.c.h.b16 %v3875
    %v3948 = vunpack.c.l.b16 %v3876
    %v3949 = vunpack.c.l.b16 %v3877
    %v3950 = vunpack.c.h.b16 %v3877
    %v3951 = vunpack.c.l.b16 %v3878
    %v3952 = vunpack.c.l.b16 %v3879
    %v3953 = vunpack.c.h.b16 %v3879
    %v3954 = vunpack.c.l.b16 %v3880
    %v3955 = vunpack.c.l.b16 %v3881
    %v3956 = vunpack.c.h.b16 %v3881
    %v3957 = vunpack.c.l.b16 %v3882
    %v3958 = vunpack.c.l.b16 %v3883
    %v3959 = vunpack.c.h.b16 %v3883
    %v3960 = vunpack.c.l.b16 %v3884
    %v3961 = vunpack.c.l.b16 %v3885
    %v3962 = vunpack.c.h.b16 %v3885
    %v3963 = vunpack.c.l.b16 %v3886
    %v3964 = vunpack.c.l.b16 %v3887
    %v3965 = vunpack.c.h.b16 %v3887
    %v3966 = vunpack.c.l.b16 %v3888
    %v3967 = vunpack.c.l.b16 %v3889
    %v3968 = vunpack.c.h.b16 %v3889
    %v3969 = vunpack.c.l.b16 %v3890
    %v3970 = vunpack.c.l.b16 %v3891
    %v3971 = vunpack.c.h.b16 %v3891
    %v3972 = vunpack.c.l.b16 %v3892
    %v3973 = vpack.c.b16 %v3928, %v3925
    %v3974 = vpack.c.b16 %v3929, %v3926
    %v3975 = vpack.c.b16 %v3930, %v3927
    %v3976 = vpack.c.b16 %v3934, %v3931
    %v3977 = vpack.c.b16 %v3935, %v3932
    %v3978 = vpack.c.b16 %v3936, %v3933
    %v3979 = vpack.c.b16 %v3940, %v3937
    %v3980 = vpack.c.b16 %v3941, %v3938
    %v3981 = vpack.c.b16 %v3942, %v3939
    %v3982 = vpack.c.b16 %v3946, %v3943
    %v3983 = vpack.c.b16 %v3947, %v3944
    %v3984 = vpack.c.b16 %v3948, %v3945
    %v3985 = vpack.c.b16 %v3952, %v3949
    %v3986 = vpack.c.b16 %v3953, %v3950
    %v3987 = vpack.c.b16 %v3954, %v3951
    %v3988 = vpack.c.b16 %v3958, %v3955
    %v3989 = vpack.c.b16 %v3959, %v3956
    %v3990 = vpack.c.b16 %v3960, %v3957
    %v3991 = vpack.c.b16 %v3964, %v3961
    %v3992 = vpack.c.b16 %v3965, %v3962
    %v3993 = vpack.c.b16 %v3966, %v3963
    %v3994 = vpack.c.b16 %v3970, %v3967
    %v3995 = vpack.c.b16 %v3971, %v3968
    %v3996 = vpack.c.b16 %v3972, %v3969
    %4021 = vmatprep.subr.bf16.mxu0 %v3995
    %4022 = vmatpush1.bf16.msra.mxu0 %v3994
    %4023 = vmatprep.subr.bf16.mxu0 %v3992
    %4024 = vmatpush1.bf16.msra.mxu0 %v3991
    %4025 = vmatprep.subr.bf16.mxu0 %v3989
    %4026 = vmatpush1.bf16.msra.mxu0 %v3988
    %4027 = vmatprep.subr.bf16.mxu0 %v3986
    %4028 = vmatpush1.bf16.msra.mxu0 %v3985
    %4029 = vmatprep.subr.bf16.mxu0 %v3983
    %4030 = vmatpush1.bf16.msra.mxu0 %v3982
    %4031 = vmatprep.subr.bf16.mxu0 %v3980
    %4032 = vmatpush1.bf16.msra.mxu0 %v3979
    %4033 = vmatprep.subr.bf16.mxu0 %v3977
    %4034 = vmatpush1.bf16.msra.mxu0 %v3976
    %4035 = vmatprep.subr.bf16.mxu0 %v3974
    %4036 = vmatpush1.bf16.msra.mxu0 %v3973
    %4037 = vmatprep.subr.bf16.mxu0 0
    %4038 = vmatpush2.bf16.msra.mxu0 0
    %4039 = vmatprep.subr.bf16.mxu0 0
    %4040 = vmatpush2.bf16.msra.mxu0 0
    %4041 = vmatprep.subr.bf16.mxu0 0
    %4042 = vmatpush2.bf16.msra.mxu0 0
    %4043 = vmatprep.subr.bf16.mxu0 0
    %4044 = vmatpush2.bf16.msra.mxu0 0
    %4045 = vmatprep.subr.bf16.mxu0 0
    %4046 = vmatpush2.bf16.msra.mxu0 0
    %4047 = vmatprep.subr.bf16.mxu0 0
    %4048 = vmatpush2.bf16.msra.mxu0 0
    %4049 = vmatprep.subr.bf16.mxu0 0
    %4050 = vmatpush2.bf16.msra.mxu0 0
    %4051 = vmatprep.subr.bf16.mxu0 0
    %4052 = vmatpush2.bf16.msra.mxu0 0
    %4053 = vmatprep.mubr.bf16.mxu0 0
    %4054 = vmatmul.mubr.bf16.gmra.mxu0 %v3860
    %v4055 = vpop.f32.mrf.mxu0
    %v4056 = vadd.f32 %v630, %v4055
    %v4057 = vpop.f32.mrf.mxu0
    %v4058 = vadd.f32 %v634, %v4057
    %v4059 = vpop.f32.mrf.mxu0
    %v4060 = vpop.f32.mrf.mxu0
    %4061 = vdwg.mxu0
    %4062 = vmatprep.subr.bf16.mxu0 0
    %4063 = vmatpush1.bf16.msra.mxu0 %v3996
    %4064 = vmatprep.subr.bf16.mxu0 0
    %4065 = vmatpush1.bf16.msra.mxu0 %v3993
    %4066 = vmatprep.subr.bf16.mxu0 0
    %4067 = vmatpush1.bf16.msra.mxu0 %v3990
    %4068 = vmatprep.subr.bf16.mxu0 0
    %4069 = vmatpush1.bf16.msra.mxu0 %v3987
    %4070 = vmatprep.subr.bf16.mxu0 0
    %4071 = vmatpush1.bf16.msra.mxu0 %v3984
    %4072 = vmatprep.subr.bf16.mxu0 0
    %4073 = vmatpush1.bf16.msra.mxu0 %v3981
    %4074 = vmatprep.subr.bf16.mxu0 0
    %4075 = vmatpush1.bf16.msra.mxu0 %v3978
    %4076 = vmatprep.subr.bf16.mxu0 0
    %4077 = vmatpush1.bf16.msra.mxu0 %v3975
    %4078 = vmatprep.subr.bf16.mxu0 0
    %4079 = vmatpush2.bf16.msra.mxu0 0
    %4080 = vmatprep.subr.bf16.mxu0 0
    %4081 = vmatpush2.bf16.msra.mxu0 0
    %4082 = vmatprep.subr.bf16.mxu0 0
    %4083 = vmatpush2.bf16.msra.mxu0 0
    %4084 = vmatprep.subr.bf16.mxu0 0
    %4085 = vmatpush2.bf16.msra.mxu0 0
    %4086 = vmatprep.subr.bf16.mxu0 0
    %4087 = vmatpush2.bf16.msra.mxu0 0
    %4088 = vmatprep.subr.bf16.mxu0 0
    %4089 = vmatpush2.bf16.msra.mxu0 0
    %4090 = vmatprep.subr.bf16.mxu0 0
    %4091 = vmatpush2.bf16.msra.mxu0 0
    %4092 = vmatprep.subr.bf16.mxu0 0
    %4093 = vmatpush2.bf16.msra.mxu0 0
    %4094 = vmatprep.mubr.bf16.mxu0 0
    %4095 = vmatmul.mubr.bf16.gmra.mxu0 %v3860
    %v4096 = vpop.f32.mrf.mxu0
    %v4097 = vadd.f32 %v638, %v4096
    %v4098 = vpop.f32.mrf.mxu0
    %v4099 = vpop.f32.mrf.mxu0
    %v4100 = vpop.f32.mrf.mxu0
    %4101 = vdwg.mxu0
    %v4102 = vld [vmem:[#allocation2 + $0x90] sm:$0xff]
    %v4103 = vld [vmem:[#allocation2 + $0x98] sm:$0xff]
    %v4104 = vld [vmem:[#allocation2 + $0xa0] sm:$0xff]
    %v4105 = vadd.f32 %v4102, %v4056
    %v4106 = vxor.u32 %v4105, 2147483648
    %v4107 = vmul.f32 %v4106, 1.442695
    %v4108 = vpow.pop %v4107
    %v4109 = vadd.f32 %v4108, 1.0
    %v4110 = vrcp.pop %v4109
    %v4111 = vmul.f32 1.0, %v4110
    %v4112 = vadd.f32 %v4103, %v4058
    %v4113 = vxor.u32 %v4112, 2147483648
    %v4114 = vmul.f32 %v4113, 1.442695
    %v4115 = vpow.pop %v4114
    %v4116 = vadd.f32 %v4115, 1.0
    %v4117 = vrcp.pop %v4116
    %v4118 = vmul.f32 1.0, %v4117
    %v4119 = vmul.f32 %v4111, %v4097
    %v4120 = vadd.f32 %v4104, %v4119
    %v4121 = vtanh.pop %v4120
    %v4122 = vsub.f32 1.0, %v4118
    %v4123 = vmul.f32 %v4122, %v4121
    %v4124 = vmul.f32 %v4118, %v3586
    %v4125 = vadd.f32 %v4123, %v4124
    %v4126 = vsel %vm106, %v4125, %v3586
    %v4127 = vsel %vm106, %v4125, 0.0
    %v4128 = vpack.c.bf16 %v3854, %v3854
    %v4129 = vld [vmem:[%s7] sm:$0xff]
    %v4130 = vld [vmem:[%s7 + $0x8] sm:$0xf]
    %v4131 = vld [vmem:[%s7 + $0xc] sm:$0xff]
    %v4132 = vld [vmem:[%s7 + $0x14] sm:$0xf]
    %v4133 = vld [vmem:[%s7 + $0x18] sm:$0xff]
    %v4134 = vld [vmem:[%s7 + $0x20] sm:$0xf]
    %v4135 = vld [vmem:[%s7 + $0x24] sm:$0xff]
    %v4136 = vld [vmem:[%s7 + $0x2c] sm:$0xf]
    %v4137 = vld [vmem:[%s7 + $0x30] sm:$0xff]
    %v4138 = vld [vmem:[%s7 + $0x38] sm:$0xf]
    %v4139 = vld [vmem:[%s7 + $0x3c] sm:$0xff]
    %v4140 = vld [vmem:[%s7 + $0x44] sm:$0xf]
    %v4141 = vld [vmem:[%s7 + $0x48] sm:$0xff]
    %v4142 = vld [vmem:[%s7 + $0x50] sm:$0xf]
    %v4143 = vld [vmem:[%s7 + $0x54] sm:$0xff]
    %v4144 = vld [vmem:[%s7 + $0x5c] sm:$0xf]
    %v4145 = vld [vmem:[%s7 + $0x60] sm:$0xff]
    %v4146 = vld [vmem:[%s7 + $0x68] sm:$0xf]
    %v4147 = vld [vmem:[%s7 + $0x6c] sm:$0xff]
    %v4148 = vld [vmem:[%s7 + $0x74] sm:$0xf]
    %v4149 = vld [vmem:[%s7 + $0x78] sm:$0xff]
    %v4150 = vld [vmem:[%s7 + $0x80] sm:$0xf]
    %v4151 = vld [vmem:[%s7 + $0x84] sm:$0xff]
    %v4152 = vld [vmem:[%s7 + $0x8c] sm:$0xf]
    %v4153 = vld [vmem:[%s7 + $0x90] sm:$0xff]
    %v4154 = vld [vmem:[%s7 + $0x98] sm:$0xf]
    %v4155 = vld [vmem:[%s7 + $0x9c] sm:$0xff]
    %v4156 = vld [vmem:[%s7 + $0xa4] sm:$0xf]
    %v4157 = vld [vmem:[%s7 + $0xa8] sm:$0xff]
    %v4158 = vld [vmem:[%s7 + $0xb0] sm:$0xf]
    %v4159 = vld [vmem:[%s7 + $0xb4] sm:$0xff]
    %v4160 = vld [vmem:[%s7 + $0xbc] sm:$0xf]
    %v4193 = vunpack.c.l.b16 %v4129
    %v4194 = vunpack.c.h.b16 %v4129
    %v4195 = vunpack.c.l.b16 %v4130
    %v4196 = vunpack.c.l.b16 %v4131
    %v4197 = vunpack.c.h.b16 %v4131
    %v4198 = vunpack.c.l.b16 %v4132
    %v4199 = vunpack.c.l.b16 %v4133
    %v4200 = vunpack.c.h.b16 %v4133
    %v4201 = vunpack.c.l.b16 %v4134
    %v4202 = vunpack.c.l.b16 %v4135
    %v4203 = vunpack.c.h.b16 %v4135
    %v4204 = vunpack.c.l.b16 %v4136
    %v4205 = vunpack.c.l.b16 %v4137
    %v4206 = vunpack.c.h.b16 %v4137
    %v4207 = vunpack.c.l.b16 %v4138
    %v4208 = vunpack.c.l.b16 %v4139
    %v4209 = vunpack.c.h.b16 %v4139
    %v4210 = vunpack.c.l.b16 %v4140
    %v4211 = vunpack.c.l.b16 %v4141
    %v4212 = vunpack.c.h.b16 %v4141
    %v4213 = vunpack.c.l.b16 %v4142
    %v4214 = vunpack.c.l.b16 %v4143
    %v4215 = vunpack.c.h.b16 %v4143
    %v4216 = vunpack.c.l.b16 %v4144
    %v4217 = vunpack.c.l.b16 %v4145
    %v4218 = vunpack.c.h.b16 %v4145
    %v4219 = vunpack.c.l.b16 %v4146
    %v4220 = vunpack.c.l.b16 %v4147
    %v4221 = vunpack.c.h.b16 %v4147
    %v4222 = vunpack.c.l.b16 %v4148
    %v4223 = vunpack.c.l.b16 %v4149
    %v4224 = vunpack.c.h.b16 %v4149
    %v4225 = vunpack.c.l.b16 %v4150
    %v4226 = vunpack.c.l.b16 %v4151
    %v4227 = vunpack.c.h.b16 %v4151
    %v4228 = vunpack.c.l.b16 %v4152
    %v4229 = vunpack.c.l.b16 %v4153
    %v4230 = vunpack.c.h.b16 %v4153
    %v4231 = vunpack.c.l.b16 %v4154
    %v4232 = vunpack.c.l.b16 %v4155
    %v4233 = vunpack.c.h.b16 %v4155
    %v4234 = vunpack.c.l.b16 %v4156
    %v4235 = vunpack.c.l.b16 %v4157
    %v4236 = vunpack.c.h.b16 %v4157
    %v4237 = vunpack.c.l.b16 %v4158
    %v4238 = vunpack.c.l.b16 %v4159
    %v4239 = vunpack.c.h.b16 %v4159
    %v4240 = vunpack.c.l.b16 %v4160
    %v4241 = vpack.c.b16 %v4196, %v4193
    %v4242 = vpack.c.b16 %v4197, %v4194
    %v4243 = vpack.c.b16 %v4198, %v4195
    %v4244 = vpack.c.b16 %v4202, %v4199
    %v4245 = vpack.c.b16 %v4203, %v4200
    %v4246 = vpack.c.b16 %v4204, %v4201
    %v4247 = vpack.c.b16 %v4208, %v4205
    %v4248 = vpack.c.b16 %v4209, %v4206
    %v4249 = vpack.c.b16 %v4210, %v4207
    %v4250 = vpack.c.b16 %v4214, %v4211
    %v4251 = vpack.c.b16 %v4215, %v4212
    %v4252 = vpack.c.b16 %v4216, %v4213
    %v4253 = vpack.c.b16 %v4220, %v4217
    %v4254 = vpack.c.b16 %v4221, %v4218
    %v4255 = vpack.c.b16 %v4222, %v4219
    %v4256 = vpack.c.b16 %v4226, %v4223
    %v4257 = vpack.c.b16 %v4227, %v4224
    %v4258 = vpack.c.b16 %v4228, %v4225
    %v4259 = vpack.c.b16 %v4232, %v4229
    %v4260 = vpack.c.b16 %v4233, %v4230
    %v4261 = vpack.c.b16 %v4234, %v4231
    %v4262 = vpack.c.b16 %v4238, %v4235
    %v4263 = vpack.c.b16 %v4239, %v4236
    %v4264 = vpack.c.b16 %v4240, %v4237
    %4289 = vmatprep.subr.bf16.mxu0 %v4263
    %4290 = vmatpush1.bf16.msra.mxu0 %v4262
    %4291 = vmatprep.subr.bf16.mxu0 %v4260
    %4292 = vmatpush1.bf16.msra.mxu0 %v4259
    %4293 = vmatprep.subr.bf16.mxu0 %v4257
    %4294 = vmatpush1.bf16.msra.mxu0 %v4256
    %4295 = vmatprep.subr.bf16.mxu0 %v4254
    %4296 = vmatpush1.bf16.msra.mxu0 %v4253
    %4297 = vmatprep.subr.bf16.mxu0 %v4251
    %4298 = vmatpush1.bf16.msra.mxu0 %v4250
    %4299 = vmatprep.subr.bf16.mxu0 %v4248
    %4300 = vmatpush1.bf16.msra.mxu0 %v4247
    %4301 = vmatprep.subr.bf16.mxu0 %v4245
    %4302 = vmatpush1.bf16.msra.mxu0 %v4244
    %4303 = vmatprep.subr.bf16.mxu0 %v4242
    %4304 = vmatpush1.bf16.msra.mxu0 %v4241
    %4305 = vmatprep.subr.bf16.mxu0 0
    %4306 = vmatpush2.bf16.msra.mxu0 0
    %4307 = vmatprep.subr.bf16.mxu0 0
    %4308 = vmatpush2.bf16.msra.mxu0 0
    %4309 = vmatprep.subr.bf16.mxu0 0
    %4310 = vmatpush2.bf16.msra.mxu0 0
    %4311 = vmatprep.subr.bf16.mxu0 0
    %4312 = vmatpush2.bf16.msra.mxu0 0
    %4313 = vmatprep.subr.bf16.mxu0 0
    %4314 = vmatpush2.bf16.msra.mxu0 0
    %4315 = vmatprep.subr.bf16.mxu0 0
    %4316 = vmatpush2.bf16.msra.mxu0 0
    %4317 = vmatprep.subr.bf16.mxu0 0
    %4318 = vmatpush2.bf16.msra.mxu0 0
    %4319 = vmatprep.subr.bf16.mxu0 0
    %4320 = vmatpush2.bf16.msra.mxu0 0
    %4321 = vmatprep.mubr.bf16.mxu0 0
    %4322 = vmatmul.mubr.bf16.gmra.mxu0 %v4128
    %v4323 = vpop.f32.mrf.mxu0
    %v4324 = vadd.f32 %v912, %v4323
    %v4325 = vpop.f32.mrf.mxu0
    %v4326 = vadd.f32 %v916, %v4325
    %v4327 = vpop.f32.mrf.mxu0
    %v4328 = vpop.f32.mrf.mxu0
    %4329 = vdwg.mxu0
    %4330 = vmatprep.subr.bf16.mxu0 0
    %4331 = vmatpush1.bf16.msra.mxu0 %v4264
    %4332 = vmatprep.subr.bf16.mxu0 0
    %4333 = vmatpush1.bf16.msra.mxu0 %v4261
    %4334 = vmatprep.subr.bf16.mxu0 0
    %4335 = vmatpush1.bf16.msra.mxu0 %v4258
    %4336 = vmatprep.subr.bf16.mxu0 0
    %4337 = vmatpush1.bf16.msra.mxu0 %v4255
    %4338 = vmatprep.subr.bf16.mxu0 0
    %4339 = vmatpush1.bf16.msra.mxu0 %v4252
    %4340 = vmatprep.subr.bf16.mxu0 0
    %4341 = vmatpush1.bf16.msra.mxu0 %v4249
    %4342 = vmatprep.subr.bf16.mxu0 0
    %4343 = vmatpush1.bf16.msra.mxu0 %v4246
    %4344 = vmatprep.subr.bf16.mxu0 0
    %4345 = vmatpush1.bf16.msra.mxu0 %v4243
    %4346 = vmatprep.subr.bf16.mxu0 0
    %4347 = vmatpush2.bf16.msra.mxu0 0
    %4348 = vmatprep.subr.bf16.mxu0 0
    %4349 = vmatpush2.bf16.msra.mxu0 0
    %4350 = vmatprep.subr.bf16.mxu0 0
    %4351 = vmatpush2.bf16.msra.mxu0 0
    %4352 = vmatprep.subr.bf16.mxu0 0
    %4353 = vmatpush2.bf16.msra.mxu0 0
    %4354 = vmatprep.subr.bf16.mxu0 0
    %4355 = vmatpush2.bf16.msra.mxu0 0
    %4356 = vmatprep.subr.bf16.mxu0 0
    %4357 = vmatpush2.bf16.msra.mxu0 0
    %4358 = vmatprep.subr.bf16.mxu0 0
    %4359 = vmatpush2.bf16.msra.mxu0 0
    %4360 = vmatprep.subr.bf16.mxu0 0
    %4361 = vmatpush2.bf16.msra.mxu0 0
    %4362 = vmatprep.mubr.bf16.mxu0 0
    %4363 = vmatmul.mubr.bf16.gmra.mxu0 %v4128
    %v4364 = vpop.f32.mrf.mxu0
    %v4365 = vadd.f32 %v920, %v4364
    %v4366 = vpop.f32.mrf.mxu0
    %v4367 = vpop.f32.mrf.mxu0
    %v4368 = vpop.f32.mrf.mxu0
    %4369 = vdwg.mxu0
    %v4370 = vld [vmem:[#allocation3 + $0x18] sm:$0xff]
    %v4371 = vld [vmem:[#allocation3 + $0x20] sm:$0xff]
    %v4372 = vld [vmem:[#allocation3 + $0x28] sm:$0xff]
    %v4373 = vadd.f32 %v4370, %v4324
    %v4374 = vxor.u32 %v4373, 2147483648
    %v4375 = vmul.f32 %v4374, 1.442695
    %v4376 = vpow.pop %v4375
    %v4377 = vadd.f32 %v4376, 1.0
    %v4378 = vrcp.pop %v4377
    %v4379 = vmul.f32 1.0, %v4378
    %v4380 = vadd.f32 %v4371, %v4326
    %v4381 = vxor.u32 %v4380, 2147483648
    %v4382 = vmul.f32 %v4381, 1.442695
    %v4383 = vpow.pop %v4382
    %v4384 = vadd.f32 %v4383, 1.0
    %v4385 = vrcp.pop %v4384
    %v4386 = vmul.f32 1.0, %v4385
    %v4387 = vmul.f32 %v4379, %v4365
    %v4388 = vadd.f32 %v4372, %v4387
    %v4389 = vtanh.pop %v4388
    %v4390 = vsub.f32 1.0, %v4386
    %v4391 = vmul.f32 %v4390, %v4389
    %v4392 = vmul.f32 %v4386, %v3854
    %v4393 = vadd.f32 %v4391, %v4392
    %v4394 = vsel %vm76, %v4393, %v3854
    %v4395 = vsel %vm76, %v4393, 0.0
    %v4396 = vpack.c.bf16 %v4127, %v4127
    %4397 = vst [vmem:[#allocation4 + $0x30] sm:$0xf] %v4396
    %v4398 = vpack.c.bf16 %v4395, %v4395
    %4399 = vst [vmem:[#allocation4 + $0xc] sm:$0xf] %v4398
    %v4400 = vpack.c.bf16 %v4126, %v4126
    %v4401 = vld [vmem:[%s3] sm:$0xff]
    %v4402 = vld [vmem:[%s3 + $0x8] sm:$0xf]
    %v4403 = vld [vmem:[%s3 + $0xc] sm:$0xff]
    %v4404 = vld [vmem:[%s3 + $0x14] sm:$0xf]
    %v4405 = vld [vmem:[%s3 + $0x18] sm:$0xff]
    %v4406 = vld [vmem:[%s3 + $0x20] sm:$0xf]
    %v4407 = vld [vmem:[%s3 + $0x24] sm:$0xff]
    %v4408 = vld [vmem:[%s3 + $0x2c] sm:$0xf]
    %v4409 = vld [vmem:[%s3 + $0x30] sm:$0xff]
    %v4410 = vld [vmem:[%s3 + $0x38] sm:$0xf]
    %v4411 = vld [vmem:[%s3 + $0x3c] sm:$0xff]
    %v4412 = vld [vmem:[%s3 + $0x44] sm:$0xf]
    %v4413 = vld [vmem:[%s3 + $0x48] sm:$0xff]
    %v4414 = vld [vmem:[%s3 + $0x50] sm:$0xf]
    %v4415 = vld [vmem:[%s3 + $0x54] sm:$0xff]
    %v4416 = vld [vmem:[%s3 + $0x5c] sm:$0xf]
    %v4417 = vld [vmem:[%s3 + $0x60] sm:$0xff]
    %v4418 = vld [vmem:[%s3 + $0x68] sm:$0xf]
    %v4419 = vld [vmem:[%s3 + $0x6c] sm:$0xff]
    %v4420 = vld [vmem:[%s3 + $0x74] sm:$0xf]
    %v4421 = vld [vmem:[%s3 + $0x78] sm:$0xff]
    %v4422 = vld [vmem:[%s3 + $0x80] sm:$0xf]
    %v4423 = vld [vmem:[%s3 + $0x84] sm:$0xff]
    %v4424 = vld [vmem:[%s3 + $0x8c] sm:$0xf]
    %v4425 = vld [vmem:[%s3 + $0x90] sm:$0xff]
    %v4426 = vld [vmem:[%s3 + $0x98] sm:$0xf]
    %v4427 = vld [vmem:[%s3 + $0x9c] sm:$0xff]
    %v4428 = vld [vmem:[%s3 + $0xa4] sm:$0xf]
    %v4429 = vld [vmem:[%s3 + $0xa8] sm:$0xff]
    %v4430 = vld [vmem:[%s3 + $0xb0] sm:$0xf]
    %v4431 = vld [vmem:[%s3 + $0xb4] sm:$0xff]
    %v4432 = vld [vmem:[%s3 + $0xbc] sm:$0xf]
    %v4465 = vunpack.c.l.b16 %v4401
    %v4466 = vunpack.c.h.b16 %v4401
    %v4467 = vunpack.c.l.b16 %v4402
    %v4468 = vunpack.c.l.b16 %v4403
    %v4469 = vunpack.c.h.b16 %v4403
    %v4470 = vunpack.c.l.b16 %v4404
    %v4471 = vunpack.c.l.b16 %v4405
    %v4472 = vunpack.c.h.b16 %v4405
    %v4473 = vunpack.c.l.b16 %v4406
    %v4474 = vunpack.c.l.b16 %v4407
    %v4475 = vunpack.c.h.b16 %v4407
    %v4476 = vunpack.c.l.b16 %v4408
    %v4477 = vunpack.c.l.b16 %v4409
    %v4478 = vunpack.c.h.b16 %v4409
    %v4479 = vunpack.c.l.b16 %v4410
    %v4480 = vunpack.c.l.b16 %v4411
    %v4481 = vunpack.c.h.b16 %v4411
    %v4482 = vunpack.c.l.b16 %v4412
    %v4483 = vunpack.c.l.b16 %v4413
    %v4484 = vunpack.c.h.b16 %v4413
    %v4485 = vunpack.c.l.b16 %v4414
    %v4486 = vunpack.c.l.b16 %v4415
    %v4487 = vunpack.c.h.b16 %v4415
    %v4488 = vunpack.c.l.b16 %v4416
    %v4489 = vunpack.c.l.b16 %v4417
    %v4490 = vunpack.c.h.b16 %v4417
    %v4491 = vunpack.c.l.b16 %v4418
    %v4492 = vunpack.c.l.b16 %v4419
    %v4493 = vunpack.c.h.b16 %v4419
    %v4494 = vunpack.c.l.b16 %v4420
    %v4495 = vunpack.c.l.b16 %v4421
    %v4496 = vunpack.c.h.b16 %v4421
    %v4497 = vunpack.c.l.b16 %v4422
    %v4498 = vunpack.c.l.b16 %v4423
    %v4499 = vunpack.c.h.b16 %v4423
    %v4500 = vunpack.c.l.b16 %v4424
    %v4501 = vunpack.c.l.b16 %v4425
    %v4502 = vunpack.c.h.b16 %v4425
    %v4503 = vunpack.c.l.b16 %v4426
    %v4504 = vunpack.c.l.b16 %v4427
    %v4505 = vunpack.c.h.b16 %v4427
    %v4506 = vunpack.c.l.b16 %v4428
    %v4507 = vunpack.c.l.b16 %v4429
    %v4508 = vunpack.c.h.b16 %v4429
    %v4509 = vunpack.c.l.b16 %v4430
    %v4510 = vunpack.c.l.b16 %v4431
    %v4511 = vunpack.c.h.b16 %v4431
    %v4512 = vunpack.c.l.b16 %v4432
    %v4513 = vpack.c.b16 %v4468, %v4465
    %v4514 = vpack.c.b16 %v4469, %v4466
    %v4515 = vpack.c.b16 %v4470, %v4467
    %v4516 = vpack.c.b16 %v4474, %v4471
    %v4517 = vpack.c.b16 %v4475, %v4472
    %v4518 = vpack.c.b16 %v4476, %v4473
    %v4519 = vpack.c.b16 %v4480, %v4477
    %v4520 = vpack.c.b16 %v4481, %v4478
    %v4521 = vpack.c.b16 %v4482, %v4479
    %v4522 = vpack.c.b16 %v4486, %v4483
    %v4523 = vpack.c.b16 %v4487, %v4484
    %v4524 = vpack.c.b16 %v4488, %v4485
    %v4525 = vpack.c.b16 %v4492, %v4489
    %v4526 = vpack.c.b16 %v4493, %v4490
    %v4527 = vpack.c.b16 %v4494, %v4491
    %v4528 = vpack.c.b16 %v4498, %v4495
    %v4529 = vpack.c.b16 %v4499, %v4496
    %v4530 = vpack.c.b16 %v4500, %v4497
    %v4531 = vpack.c.b16 %v4504, %v4501
    %v4532 = vpack.c.b16 %v4505, %v4502
    %v4533 = vpack.c.b16 %v4506, %v4503
    %v4534 = vpack.c.b16 %v4510, %v4507
    %v4535 = vpack.c.b16 %v4511, %v4508
    %v4536 = vpack.c.b16 %v4512, %v4509
    %4561 = vmatprep.subr.bf16.mxu0 %v4535
    %4562 = vmatpush1.bf16.msra.mxu0 %v4534
    %4563 = vmatprep.subr.bf16.mxu0 %v4532
    %4564 = vmatpush1.bf16.msra.mxu0 %v4531
    %4565 = vmatprep.subr.bf16.mxu0 %v4529
    %4566 = vmatpush1.bf16.msra.mxu0 %v4528
    %4567 = vmatprep.subr.bf16.mxu0 %v4526
    %4568 = vmatpush1.bf16.msra.mxu0 %v4525
    %4569 = vmatprep.subr.bf16.mxu0 %v4523
    %4570 = vmatpush1.bf16.msra.mxu0 %v4522
    %4571 = vmatprep.subr.bf16.mxu0 %v4520
    %4572 = vmatpush1.bf16.msra.mxu0 %v4519
    %4573 = vmatprep.subr.bf16.mxu0 %v4517
    %4574 = vmatpush1.bf16.msra.mxu0 %v4516
    %4575 = vmatprep.subr.bf16.mxu0 %v4514
    %4576 = vmatpush1.bf16.msra.mxu0 %v4513
    %4577 = vmatprep.subr.bf16.mxu0 0
    %4578 = vmatpush2.bf16.msra.mxu0 0
    %4579 = vmatprep.subr.bf16.mxu0 0
    %4580 = vmatpush2.bf16.msra.mxu0 0
    %4581 = vmatprep.subr.bf16.mxu0 0
    %4582 = vmatpush2.bf16.msra.mxu0 0
    %4583 = vmatprep.subr.bf16.mxu0 0
    %4584 = vmatpush2.bf16.msra.mxu0 0
    %4585 = vmatprep.subr.bf16.mxu0 0
    %4586 = vmatpush2.bf16.msra.mxu0 0
    %4587 = vmatprep.subr.bf16.mxu0 0
    %4588 = vmatpush2.bf16.msra.mxu0 0
    %4589 = vmatprep.subr.bf16.mxu0 0
    %4590 = vmatpush2.bf16.msra.mxu0 0
    %4591 = vmatprep.subr.bf16.mxu0 0
    %4592 = vmatpush2.bf16.msra.mxu0 0
    %4593 = vmatprep.mubr.bf16.mxu0 0
    %4594 = vmatmul.mubr.bf16.gmra.mxu0 %v4400
    %v4595 = vpop.f32.mrf.mxu0
    %v4596 = vadd.f32 %v630, %v4595
    %v4597 = vpop.f32.mrf.mxu0
    %v4598 = vadd.f32 %v634, %v4597
    %v4599 = vpop.f32.mrf.mxu0
    %v4600 = vpop.f32.mrf.mxu0
    %4601 = vdwg.mxu0
    %4602 = vmatprep.subr.bf16.mxu0 0
    %4603 = vmatpush1.bf16.msra.mxu0 %v4536
    %4604 = vmatprep.subr.bf16.mxu0 0
    %4605 = vmatpush1.bf16.msra.mxu0 %v4533
    %4606 = vmatprep.subr.bf16.mxu0 0
    %4607 = vmatpush1.bf16.msra.mxu0 %v4530
    %4608 = vmatprep.subr.bf16.mxu0 0
    %4609 = vmatpush1.bf16.msra.mxu0 %v4527
    %4610 = vmatprep.subr.bf16.mxu0 0
    %4611 = vmatpush1.bf16.msra.mxu0 %v4524
    %4612 = vmatprep.subr.bf16.mxu0 0
    %4613 = vmatpush1.bf16.msra.mxu0 %v4521
    %4614 = vmatprep.subr.bf16.mxu0 0
    %4615 = vmatpush1.bf16.msra.mxu0 %v4518
    %4616 = vmatprep.subr.bf16.mxu0 0
    %4617 = vmatpush1.bf16.msra.mxu0 %v4515
    %4618 = vmatprep.subr.bf16.mxu0 0
    %4619 = vmatpush2.bf16.msra.mxu0 0
    %4620 = vmatprep.subr.bf16.mxu0 0
    %4621 = vmatpush2.bf16.msra.mxu0 0
    %4622 = vmatprep.subr.bf16.mxu0 0
    %4623 = vmatpush2.bf16.msra.mxu0 0
    %4624 = vmatprep.subr.bf16.mxu0 0
    %4625 = vmatpush2.bf16.msra.mxu0 0
    %4626 = vmatprep.subr.bf16.mxu0 0
    %4627 = vmatpush2.bf16.msra.mxu0 0
    %4628 = vmatprep.subr.bf16.mxu0 0
    %4629 = vmatpush2.bf16.msra.mxu0 0
    %4630 = vmatprep.subr.bf16.mxu0 0
    %4631 = vmatpush2.bf16.msra.mxu0 0
    %4632 = vmatprep.subr.bf16.mxu0 0
    %4633 = vmatpush2.bf16.msra.mxu0 0
    %4634 = vmatprep.mubr.bf16.mxu0 0
    %4635 = vmatmul.mubr.bf16.gmra.mxu0 %v4400
    %v4636 = vpop.f32.mrf.mxu0
    %v4637 = vadd.f32 %v638, %v4636
    %v4638 = vpop.f32.mrf.mxu0
    %v4639 = vpop.f32.mrf.mxu0
    %v4640 = vpop.f32.mrf.mxu0
    %4641 = vdwg.mxu0
    %v4642 = vld [vmem:[#allocation2 + $0xa8] sm:$0xff]
    %v4643 = vld [vmem:[#allocation2 + $0xb0] sm:$0xff]
    %v4644 = vld [vmem:[#allocation2 + $0xb8] sm:$0xff]
    %v4645 = vadd.f32 %v4642, %v4596
    %v4646 = vxor.u32 %v4645, 2147483648
    %v4647 = vmul.f32 %v4646, 1.442695
    %v4648 = vpow.pop %v4647
    %v4649 = vadd.f32 %v4648, 1.0
    %v4650 = vrcp.pop %v4649
    %v4651 = vmul.f32 1.0, %v4650
    %v4652 = vadd.f32 %v4643, %v4598
    %v4653 = vxor.u32 %v4652, 2147483648
    %v4654 = vmul.f32 %v4653, 1.442695
    %v4655 = vpow.pop %v4654
    %v4656 = vadd.f32 %v4655, 1.0
    %v4657 = vrcp.pop %v4656
    %v4658 = vmul.f32 1.0, %v4657
    %v4659 = vmul.f32 %v4651, %v4637
    %v4660 = vadd.f32 %v4644, %v4659
    %v4661 = vtanh.pop %v4660
    %v4662 = vsub.f32 1.0, %v4658
    %v4663 = vmul.f32 %v4662, %v4661
    %v4664 = vmul.f32 %v4658, %v4126
    %v4665 = vadd.f32 %v4663, %v4664
    %v4666 = vsel %vm112, %v4665, %v4126
    %v4667 = vsel %vm112, %v4665, 0.0
    %v4668 = vpack.c.bf16 %v4394, %v4394
    %v4669 = vld [vmem:[%s7] sm:$0xff]
    %v4670 = vld [vmem:[%s7 + $0x8] sm:$0xf]
    %v4671 = vld [vmem:[%s7 + $0xc] sm:$0xff]
    %v4672 = vld [vmem:[%s7 + $0x14] sm:$0xf]
    %v4673 = vld [vmem:[%s7 + $0x18] sm:$0xff]
    %v4674 = vld [vmem:[%s7 + $0x20] sm:$0xf]
    %v4675 = vld [vmem:[%s7 + $0x24] sm:$0xff]
    %v4676 = vld [vmem:[%s7 + $0x2c] sm:$0xf]
    %v4677 = vld [vmem:[%s7 + $0x30] sm:$0xff]
    %v4678 = vld [vmem:[%s7 + $0x38] sm:$0xf]
    %v4679 = vld [vmem:[%s7 + $0x3c] sm:$0xff]
    %v4680 = vld [vmem:[%s7 + $0x44] sm:$0xf]
    %v4681 = vld [vmem:[%s7 + $0x48] sm:$0xff]
    %v4682 = vld [vmem:[%s7 + $0x50] sm:$0xf]
    %v4683 = vld [vmem:[%s7 + $0x54] sm:$0xff]
    %v4684 = vld [vmem:[%s7 + $0x5c] sm:$0xf]
    %v4685 = vld [vmem:[%s7 + $0x60] sm:$0xff]
    %v4686 = vld [vmem:[%s7 + $0x68] sm:$0xf]
    %v4687 = vld [vmem:[%s7 + $0x6c] sm:$0xff]
    %v4688 = vld [vmem:[%s7 + $0x74] sm:$0xf]
    %v4689 = vld [vmem:[%s7 + $0x78] sm:$0xff]
    %v4690 = vld [vmem:[%s7 + $0x80] sm:$0xf]
    %v4691 = vld [vmem:[%s7 + $0x84] sm:$0xff]
    %v4692 = vld [vmem:[%s7 + $0x8c] sm:$0xf]
    %v4693 = vld [vmem:[%s7 + $0x90] sm:$0xff]
    %v4694 = vld [vmem:[%s7 + $0x98] sm:$0xf]
    %v4695 = vld [vmem:[%s7 + $0x9c] sm:$0xff]
    %v4696 = vld [vmem:[%s7 + $0xa4] sm:$0xf]
    %v4697 = vld [vmem:[%s7 + $0xa8] sm:$0xff]
    %v4698 = vld [vmem:[%s7 + $0xb0] sm:$0xf]
    %v4699 = vld [vmem:[%s7 + $0xb4] sm:$0xff]
    %v4700 = vld [vmem:[%s7 + $0xbc] sm:$0xf]
    %v4733 = vunpack.c.l.b16 %v4669
    %v4734 = vunpack.c.h.b16 %v4669
    %v4735 = vunpack.c.l.b16 %v4670
    %v4736 = vunpack.c.l.b16 %v4671
    %v4737 = vunpack.c.h.b16 %v4671
    %v4738 = vunpack.c.l.b16 %v4672
    %v4739 = vunpack.c.l.b16 %v4673
    %v4740 = vunpack.c.h.b16 %v4673
    %v4741 = vunpack.c.l.b16 %v4674
    %v4742 = vunpack.c.l.b16 %v4675
    %v4743 = vunpack.c.h.b16 %v4675
    %v4744 = vunpack.c.l.b16 %v4676
    %v4745 = vunpack.c.l.b16 %v4677
    %v4746 = vunpack.c.h.b16 %v4677
    %v4747 = vunpack.c.l.b16 %v4678
    %v4748 = vunpack.c.l.b16 %v4679
    %v4749 = vunpack.c.h.b16 %v4679
    %v4750 = vunpack.c.l.b16 %v4680
    %v4751 = vunpack.c.l.b16 %v4681
    %v4752 = vunpack.c.h.b16 %v4681
    %v4753 = vunpack.c.l.b16 %v4682
    %v4754 = vunpack.c.l.b16 %v4683
    %v4755 = vunpack.c.h.b16 %v4683
    %v4756 = vunpack.c.l.b16 %v4684
    %v4757 = vunpack.c.l.b16 %v4685
    %v4758 = vunpack.c.h.b16 %v4685
    %v4759 = vunpack.c.l.b16 %v4686
    %v4760 = vunpack.c.l.b16 %v4687
    %v4761 = vunpack.c.h.b16 %v4687
    %v4762 = vunpack.c.l.b16 %v4688
    %v4763 = vunpack.c.l.b16 %v4689
    %v4764 = vunpack.c.h.b16 %v4689
    %v4765 = vunpack.c.l.b16 %v4690
    %v4766 = vunpack.c.l.b16 %v4691
    %v4767 = vunpack.c.h.b16 %v4691
    %v4768 = vunpack.c.l.b16 %v4692
    %v4769 = vunpack.c.l.b16 %v4693
    %v4770 = vunpack.c.h.b16 %v4693
    %v4771 = vunpack.c.l.b16 %v4694
    %v4772 = vunpack.c.l.b16 %v4695
    %v4773 = vunpack.c.h.b16 %v4695
    %v4774 = vunpack.c.l.b16 %v4696
    %v4775 = vunpack.c.l.b16 %v4697
    %v4776 = vunpack.c.h.b16 %v4697
    %v4777 = vunpack.c.l.b16 %v4698
    %v4778 = vunpack.c.l.b16 %v4699
    %v4779 = vunpack.c.h.b16 %v4699
    %v4780 = vunpack.c.l.b16 %v4700
    %v4781 = vpack.c.b16 %v4736, %v4733
    %v4782 = vpack.c.b16 %v4737, %v4734
    %v4783 = vpack.c.b16 %v4738, %v4735
    %v4784 = vpack.c.b16 %v4742, %v4739
    %v4785 = vpack.c.b16 %v4743, %v4740
    %v4786 = vpack.c.b16 %v4744, %v4741
    %v4787 = vpack.c.b16 %v4748, %v4745
    %v4788 = vpack.c.b16 %v4749, %v4746
    %v4789 = vpack.c.b16 %v4750, %v4747
    %v4790 = vpack.c.b16 %v4754, %v4751
    %v4791 = vpack.c.b16 %v4755, %v4752
    %v4792 = vpack.c.b16 %v4756, %v4753
    %v4793 = vpack.c.b16 %v4760, %v4757
    %v4794 = vpack.c.b16 %v4761, %v4758
    %v4795 = vpack.c.b16 %v4762, %v4759
    %v4796 = vpack.c.b16 %v4766, %v4763
    %v4797 = vpack.c.b16 %v4767, %v4764
    %v4798 = vpack.c.b16 %v4768, %v4765
    %v4799 = vpack.c.b16 %v4772, %v4769
    %v4800 = vpack.c.b16 %v4773, %v4770
    %v4801 = vpack.c.b16 %v4774, %v4771
    %v4802 = vpack.c.b16 %v4778, %v4775
    %v4803 = vpack.c.b16 %v4779, %v4776
    %v4804 = vpack.c.b16 %v4780, %v4777
    %4829 = vmatprep.subr.bf16.mxu0 %v4803
    %4830 = vmatpush1.bf16.msra.mxu0 %v4802
    %4831 = vmatprep.subr.bf16.mxu0 %v4800
    %4832 = vmatpush1.bf16.msra.mxu0 %v4799
    %4833 = vmatprep.subr.bf16.mxu0 %v4797
    %4834 = vmatpush1.bf16.msra.mxu0 %v4796
    %4835 = vmatprep.subr.bf16.mxu0 %v4794
    %4836 = vmatpush1.bf16.msra.mxu0 %v4793
    %4837 = vmatprep.subr.bf16.mxu0 %v4791
    %4838 = vmatpush1.bf16.msra.mxu0 %v4790
    %4839 = vmatprep.subr.bf16.mxu0 %v4788
    %4840 = vmatpush1.bf16.msra.mxu0 %v4787
    %4841 = vmatprep.subr.bf16.mxu0 %v4785
    %4842 = vmatpush1.bf16.msra.mxu0 %v4784
    %4843 = vmatprep.subr.bf16.mxu0 %v4782
    %4844 = vmatpush1.bf16.msra.mxu0 %v4781
    %4845 = vmatprep.subr.bf16.mxu0 0
    %4846 = vmatpush2.bf16.msra.mxu0 0
    %4847 = vmatprep.subr.bf16.mxu0 0
    %4848 = vmatpush2.bf16.msra.mxu0 0
    %4849 = vmatprep.subr.bf16.mxu0 0
    %4850 = vmatpush2.bf16.msra.mxu0 0
    %4851 = vmatprep.subr.bf16.mxu0 0
    %4852 = vmatpush2.bf16.msra.mxu0 0
    %4853 = vmatprep.subr.bf16.mxu0 0
    %4854 = vmatpush2.bf16.msra.mxu0 0
    %4855 = vmatprep.subr.bf16.mxu0 0
    %4856 = vmatpush2.bf16.msra.mxu0 0
    %4857 = vmatprep.subr.bf16.mxu0 0
    %4858 = vmatpush2.bf16.msra.mxu0 0
    %4859 = vmatprep.subr.bf16.mxu0 0
    %4860 = vmatpush2.bf16.msra.mxu0 0
    %4861 = vmatprep.mubr.bf16.mxu0 0
    %4862 = vmatmul.mubr.bf16.gmra.mxu0 %v4668
    %v4863 = vpop.f32.mrf.mxu0
    %v4864 = vadd.f32 %v912, %v4863
    %v4865 = vpop.f32.mrf.mxu0
    %v4866 = vadd.f32 %v916, %v4865
    %v4867 = vpop.f32.mrf.mxu0
    %v4868 = vpop.f32.mrf.mxu0
    %4869 = vdwg.mxu0
    %4870 = vmatprep.subr.bf16.mxu0 0
    %4871 = vmatpush1.bf16.msra.mxu0 %v4804
    %4872 = vmatprep.subr.bf16.mxu0 0
    %4873 = vmatpush1.bf16.msra.mxu0 %v4801
    %4874 = vmatprep.subr.bf16.mxu0 0
    %4875 = vmatpush1.bf16.msra.mxu0 %v4798
    %4876 = vmatprep.subr.bf16.mxu0 0
    %4877 = vmatpush1.bf16.msra.mxu0 %v4795
    %4878 = vmatprep.subr.bf16.mxu0 0
    %4879 = vmatpush1.bf16.msra.mxu0 %v4792
    %4880 = vmatprep.subr.bf16.mxu0 0
    %4881 = vmatpush1.bf16.msra.mxu0 %v4789
    %4882 = vmatprep.subr.bf16.mxu0 0
    %4883 = vmatpush1.bf16.msra.mxu0 %v4786
    %4884 = vmatprep.subr.bf16.mxu0 0
    %4885 = vmatpush1.bf16.msra.mxu0 %v4783
    %4886 = vmatprep.subr.bf16.mxu0 0
    %4887 = vmatpush2.bf16.msra.mxu0 0
    %4888 = vmatprep.subr.bf16.mxu0 0
    %4889 = vmatpush2.bf16.msra.mxu0 0
    %4890 = vmatprep.subr.bf16.mxu0 0
    %4891 = vmatpush2.bf16.msra.mxu0 0
    %4892 = vmatprep.subr.bf16.mxu0 0
    %4893 = vmatpush2.bf16.msra.mxu0 0
    %4894 = vmatprep.subr.bf16.mxu0 0
    %4895 = vmatpush2.bf16.msra.mxu0 0
    %4896 = vmatprep.subr.bf16.mxu0 0
    %4897 = vmatpush2.bf16.msra.mxu0 0
    %4898 = vmatprep.subr.bf16.mxu0 0
    %4899 = vmatpush2.bf16.msra.mxu0 0
    %4900 = vmatprep.subr.bf16.mxu0 0
    %4901 = vmatpush2.bf16.msra.mxu0 0
    %4902 = vmatprep.mubr.bf16.mxu0 0
    %4903 = vmatmul.mubr.bf16.gmra.mxu0 %v4668
    %v4904 = vpop.f32.mrf.mxu0
    %v4905 = vadd.f32 %v920, %v4904
    %v4906 = vpop.f32.mrf.mxu0
    %v4907 = vpop.f32.mrf.mxu0
    %v4908 = vpop.f32.mrf.mxu0
    %4909 = vdwg.mxu0
    %v4910 = vld [vmem:[#allocation3] sm:$0xff]
    %v4911 = vld [vmem:[#allocation3 + $0x8] sm:$0xff]
    %v4912 = vld [vmem:[#allocation3 + $0x10] sm:$0xff]
    %v4913 = vadd.f32 %v4910, %v4864
    %v4914 = vxor.u32 %v4913, 2147483648
    %v4915 = vmul.f32 %v4914, 1.442695
    %v4916 = vpow.pop %v4915
    %v4917 = vadd.f32 %v4916, 1.0
    %v4918 = vrcp.pop %v4917
    %v4919 = vmul.f32 1.0, %v4918
    %v4920 = vadd.f32 %v4911, %v4866
    %v4921 = vxor.u32 %v4920, 2147483648
    %v4922 = vmul.f32 %v4921, 1.442695
    %v4923 = vpow.pop %v4922
    %v4924 = vadd.f32 %v4923, 1.0
    %v4925 = vrcp.pop %v4924
    %v4926 = vmul.f32 1.0, %v4925
    %v4927 = vmul.f32 %v4919, %v4905
    %v4928 = vadd.f32 %v4912, %v4927
    %v4929 = vtanh.pop %v4928
    %v4930 = vsub.f32 1.0, %v4926
    %v4931 = vmul.f32 %v4930, %v4929
    %v4932 = vmul.f32 %v4926, %v4394
    %v4933 = vadd.f32 %v4931, %v4932
    %v4934 = vsel %vm70, %v4933, %v4394
    %v4935 = vsel %vm70, %v4933, 0.0
    %v4936 = vpack.c.bf16 %v4667, %v4667
    %4937 = vst [vmem:[#allocation4 + $0x38] sm:$0xf] %v4936
    %v4938 = vpack.c.bf16 %v4935, %v4935
    %4939 = vst [vmem:[#allocation4 + $0x4] sm:$0xf] %v4938
    %v4940 = vld [vmem:[#allocation4] sm:$0xff]
    %v4941 = vld [vmem:[#allocation4 + $0x8] sm:$0xff]
    %v4942 = vld [vmem:[#allocation4 + $0x10] sm:$0xff]
    %v4943 = vld [vmem:[#allocation4 + $0x18] sm:$0xff]
    %v4944 = vld [vmem:[#allocation4 + $0x20] sm:$0xff]
    %v4945 = vld [vmem:[#allocation4 + $0x28] sm:$0xff]
    %v4946 = vld [vmem:[#allocation4 + $0x30] sm:$0xff]
    %v4947 = vld [vmem:[#allocation4 + $0x38] sm:$0xff]
    %v4948 = vld [vmem:[%s10] sm:$0xff]
    %v4949 = vld [vmem:[%s10 + $0x8] sm:$0xf]
    %v4950 = vld [vmem:[%s10 + $0xc] sm:$0xff]
    %v4951 = vld [vmem:[%s10 + $0x14] sm:$0xf]
    %v4952 = vld [vmem:[%s10 + $0x18] sm:$0xff]
    %v4953 = vld [vmem:[%s10 + $0x20] sm:$0xf]
    %v4954 = vld [vmem:[%s10 + $0x24] sm:$0xff]
    %v4955 = vld [vmem:[%s10 + $0x2c] sm:$0xf]
    %v4956 = vld [vmem:[%s10 + $0x30] sm:$0xff]
    %v4957 = vld [vmem:[%s10 + $0x38] sm:$0xf]
    %v4958 = vld [vmem:[%s10 + $0x3c] sm:$0xff]
    %v4959 = vld [vmem:[%s10 + $0x44] sm:$0xf]
    %v4960 = vld [vmem:[%s10 + $0x48] sm:$0xff]
    %v4961 = vld [vmem:[%s10 + $0x50] sm:$0xf]
    %v4962 = vld [vmem:[%s10 + $0x54] sm:$0xff]
    %v4963 = vld [vmem:[%s10 + $0x5c] sm:$0xf]
    %v4964 = vld [vmem:[%s10 + $0x60] sm:$0xff]
    %v4965 = vld [vmem:[%s10 + $0x68] sm:$0xf]
    %v4966 = vld [vmem:[%s10 + $0x6c] sm:$0xff]
    %v4967 = vld [vmem:[%s10 + $0x74] sm:$0xf]
    %v4968 = vld [vmem:[%s10 + $0x78] sm:$0xff]
    %v4969 = vld [vmem:[%s10 + $0x80] sm:$0xf]
    %v4970 = vld [vmem:[%s10 + $0x84] sm:$0xff]
    %v4971 = vld [vmem:[%s10 + $0x8c] sm:$0xf]
    %v4972 = vld [vmem:[%s10 + $0x90] sm:$0xff]
    %v4973 = vld [vmem:[%s10 + $0x98] sm:$0xf]
    %v4974 = vld [vmem:[%s10 + $0x9c] sm:$0xff]
    %v4975 = vld [vmem:[%s10 + $0xa4] sm:$0xf]
    %v4976 = vld [vmem:[%s10 + $0xa8] sm:$0xff]
    %v4977 = vld [vmem:[%s10 + $0xb0] sm:$0xf]
    %v4978 = vld [vmem:[%s10 + $0xb4] sm:$0xff]
    %v4979 = vld [vmem:[%s10 + $0xbc] sm:$0xf]
    %v4980 = vld [vmem:[%s10 + $0xc0] sm:$0xff]
    %v4981 = vld [vmem:[%s10 + $0xc8] sm:$0xf]
    %v4982 = vld [vmem:[%s10 + $0xcc] sm:$0xff]
    %v4983 = vld [vmem:[%s10 + $0xd4] sm:$0xf]
    %v4984 = vld [vmem:[%s10 + $0xd8] sm:$0xff]
    %v4985 = vld [vmem:[%s10 + $0xe0] sm:$0xf]
    %v4986 = vld [vmem:[%s10 + $0xe4] sm:$0xff]
    %v4987 = vld [vmem:[%s10 + $0xec] sm:$0xf]
    %v4988 = vld [vmem:[%s10 + $0xf0] sm:$0xff]
    %v4989 = vld [vmem:[%s10 + $0xf8] sm:$0xf]
    %v4990 = vld [vmem:[%s10 + $0xfc] sm:$0xff]
    %v4991 = vld [vmem:[%s10 + $0x104] sm:$0xf]
    %v4992 = vld [vmem:[%s10 + $0x108] sm:$0xff]
    %v4993 = vld [vmem:[%s10 + $0x110] sm:$0xf]
    %v4994 = vld [vmem:[%s10 + $0x114] sm:$0xff]
    %v4995 = vld [vmem:[%s10 + $0x11c] sm:$0xf]
    %v4996 = vld [vmem:[%s10 + $0x120] sm:$0xff]
    %v4997 = vld [vmem:[%s10 + $0x128] sm:$0xf]
    %v4998 = vld [vmem:[%s10 + $0x12c] sm:$0xff]
    %v4999 = vld [vmem:[%s10 + $0x134] sm:$0xf]
    %v5000 = vld [vmem:[%s10 + $0x138] sm:$0xff]
    %v5001 = vld [vmem:[%s10 + $0x140] sm:$0xf]
    %v5002 = vld [vmem:[%s10 + $0x144] sm:$0xff]
    %v5003 = vld [vmem:[%s10 + $0x14c] sm:$0xf]
    %v5004 = vld [vmem:[%s10 + $0x150] sm:$0xff]
    %v5005 = vld [vmem:[%s10 + $0x158] sm:$0xf]
    %v5006 = vld [vmem:[%s10 + $0x15c] sm:$0xff]
    %v5007 = vld [vmem:[%s10 + $0x164] sm:$0xf]
    %v5008 = vld [vmem:[%s10 + $0x168] sm:$0xff]
    %v5009 = vld [vmem:[%s10 + $0x170] sm:$0xf]
    %v5010 = vld [vmem:[%s10 + $0x174] sm:$0xff]
    %v5011 = vld [vmem:[%s10 + $0x17c] sm:$0xf]
    %v5012 = vld [vmem:[%s12] sm:$0x7]
    %v5014 = vlaneseq
    %v5015 = vshrl.u32 %v5014, 7
    %v5016 = vsub.s32 0, %v5015
    %v5017 = vrot.slane %v5012, %v5016
    %v5018 = vlaneseq
    %v5019 = vshrl.u32 %v5018, 7
    %v5020 = vsub.s32 1, %v5019
    %v5021 = vrot.slane %v5012, %v5020
    %v5022 = vlaneseq
    %v5023 = vshrl.u32 %v5022, 7
    %v5024 = vsub.s32 2, %v5023
    %v5025 = vrot.slane %v5012, %v5024
    %v5037 = vunpack.c.l.b16 %v4940
    %v5038 = vunpack.c.h.b16 %v4940
    %v5039 = vunpack.c.l.b16 %v4941
    %v5040 = vunpack.c.h.b16 %v4941
    %v5041 = vunpack.c.l.b16 %v4942
    %v5042 = vunpack.c.h.b16 %v4942
    %v5043 = vunpack.c.l.b16 %v4943
    %v5044 = vunpack.c.h.b16 %v4943
    %v5045 = vunpack.c.l.b16 %v4944
    %v5046 = vunpack.c.h.b16 %v4944
    %v5047 = vunpack.c.l.b16 %v4945
    %v5048 = vunpack.c.h.b16 %v4945
    %v5049 = vunpack.c.l.b16 %v4946
    %v5050 = vunpack.c.h.b16 %v4946
    %v5051 = vunpack.c.l.b16 %v4947
    %v5052 = vunpack.c.h.b16 %v4947
    %v5053 = vpack.c.b16 %v5039, %v5037
    %v5054 = vpack.c.b16 %v5040, %v5038
    %v5055 = vpack.c.b16 %v5043, %v5041
    %v5056 = vpack.c.b16 %v5044, %v5042
    %v5057 = vpack.c.b16 %v5047, %v5045
    %v5058 = vpack.c.b16 %v5048, %v5046
    %v5059 = vpack.c.b16 %v5051, %v5049
    %v5060 = vpack.c.b16 %v5052, %v5050
    %v5133 = vunpack.c.l.b16 %v4948
    %v5134 = vunpack.c.h.b16 %v4948
    %v5135 = vunpack.c.l.b16 %v4949
    %v5136 = vunpack.c.l.b16 %v4950
    %v5137 = vunpack.c.h.b16 %v4950
    %v5138 = vunpack.c.l.b16 %v4951
    %v5139 = vunpack.c.l.b16 %v4952
    %v5140 = vunpack.c.h.b16 %v4952
    %v5141 = vunpack.c.l.b16 %v4953
    %v5142 = vunpack.c.l.b16 %v4954
    %v5143 = vunpack.c.h.b16 %v4954
    %v5144 = vunpack.c.l.b16 %v4955
    %v5145 = vunpack.c.l.b16 %v4956
    %v5146 = vunpack.c.h.b16 %v4956
    %v5147 = vunpack.c.l.b16 %v4957
    %v5148 = vunpack.c.l.b16 %v4958
    %v5149 = vunpack.c.h.b16 %v4958
    %v5150 = vunpack.c.l.b16 %v4959
    %v5151 = vunpack.c.l.b16 %v4960
    %v5152 = vunpack.c.h.b16 %v4960
    %v5153 = vunpack.c.l.b16 %v4961
    %v5154 = vunpack.c.l.b16 %v4962
    %v5155 = vunpack.c.h.b16 %v4962
    %v5156 = vunpack.c.l.b16 %v4963
    %v5157 = vunpack.c.l.b16 %v4964
    %v5158 = vunpack.c.h.b16 %v4964
    %v5159 = vunpack.c.l.b16 %v4965
    %v5160 = vunpack.c.l.b16 %v4966
    %v5161 = vunpack.c.h.b16 %v4966
    %v5162 = vunpack.c.l.b16 %v4967
    %v5163 = vunpack.c.l.b16 %v4968
    %v5164 = vunpack.c.h.b16 %v4968
    %v5165 = vunpack.c.l.b16 %v4969
    %v5166 = vunpack.c.l.b16 %v4970
    %v5167 = vunpack.c.h.b16 %v4970
    %v5168 = vunpack.c.l.b16 %v4971
    %v5169 = vunpack.c.l.b16 %v4972
    %v5170 = vunpack.c.h.b16 %v4972
    %v5171 = vunpack.c.l.b16 %v4973
    %v5172 = vunpack.c.l.b16 %v4974
    %v5173 = vunpack.c.h.b16 %v4974
    %v5174 = vunpack.c.l.b16 %v4975
    %v5175 = vunpack.c.l.b16 %v4976
    %v5176 = vunpack.c.h.b16 %v4976
    %v5177 = vunpack.c.l.b16 %v4977
    %v5178 = vunpack.c.l.b16 %v4978
    %v5179 = vunpack.c.h.b16 %v4978
    %v5180 = vunpack.c.l.b16 %v4979
    %v5181 = vunpack.c.l.b16 %v4980
    %v5182 = vunpack.c.h.b16 %v4980
    %v5183 = vunpack.c.l.b16 %v4981
    %v5184 = vunpack.c.l.b16 %v4982
    %v5185 = vunpack.c.h.b16 %v4982
    %v5186 = vunpack.c.l.b16 %v4983
    %v5187 = vunpack.c.l.b16 %v4984
    %v5188 = vunpack.c.h.b16 %v4984
    %v5189 = vunpack.c.l.b16 %v4985
    %v5190 = vunpack.c.l.b16 %v4986
    %v5191 = vunpack.c.h.b16 %v4986
    %v5192 = vunpack.c.l.b16 %v4987
    %v5193 = vunpack.c.l.b16 %v4988
    %v5194 = vunpack.c.h.b16 %v4988
    %v5195 = vunpack.c.l.b16 %v4989
    %v5196 = vunpack.c.l.b16 %v4990
    %v5197 = vunpack.c.h.b16 %v4990
    %v5198 = vunpack.c.l.b16 %v4991
    %v5199 = vunpack.c.l.b16 %v4992
    %v5200 = vunpack.c.h.b16 %v4992
    %v5201 = vunpack.c.l.b16 %v4993
    %v5202 = vunpack.c.l.b16 %v4994
    %v5203 = vunpack.c.h.b16 %v4994
    %v5204 = vunpack.c.l.b16 %v4995
    %v5205 = vunpack.c.l.b16 %v4996
    %v5206 = vunpack.c.h.b16 %v4996
    %v5207 = vunpack.c.l.b16 %v4997
    %v5208 = vunpack.c.l.b16 %v4998
    %v5209 = vunpack.c.h.b16 %v4998
    %v5210 = vunpack.c.l.b16 %v4999
    %v5211 = vunpack.c.l.b16 %v5000
    %v5212 = vunpack.c.h.b16 %v5000
    %v5213 = vunpack.c.l.b16 %v5001
    %v5214 = vunpack.c.l.b16 %v5002
    %v5215 = vunpack.c.h.b16 %v5002
    %v5216 = vunpack.c.l.b16 %v5003
    %v5217 = vunpack.c.l.b16 %v5004
    %v5218 = vunpack.c.h.b16 %v5004
    %v5219 = vunpack.c.l.b16 %v5005
    %v5220 = vunpack.c.l.b16 %v5006
    %v5221 = vunpack.c.h.b16 %v5006
    %v5222 = vunpack.c.l.b16 %v5007
    %v5223 = vunpack.c.l.b16 %v5008
    %v5224 = vunpack.c.h.b16 %v5008
    %v5225 = vunpack.c.l.b16 %v5009
    %v5226 = vunpack.c.l.b16 %v5010
    %v5227 = vunpack.c.h.b16 %v5010
    %v5228 = vunpack.c.l.b16 %v5011
    %v5229 = vpack.c.b16 %v5136, %v5133
    %v5230 = vpack.c.b16 %v5137, %v5134
    %v5231 = vpack.c.b16 %v5138, %v5135
    %v5232 = vpack.c.b16 %v5142, %v5139
    %v5233 = vpack.c.b16 %v5143, %v5140
    %v5234 = vpack.c.b16 %v5144, %v5141
    %v5235 = vpack.c.b16 %v5148, %v5145
    %v5236 = vpack.c.b16 %v5149, %v5146
    %v5237 = vpack.c.b16 %v5150, %v5147
    %v5238 = vpack.c.b16 %v5154, %v5151
    %v5239 = vpack.c.b16 %v5155, %v5152
    %v5240 = vpack.c.b16 %v5156, %v5153
    %v5241 = vpack.c.b16 %v5160, %v5157
    %v5242 = vpack.c.b16 %v5161, %v5158
    %v5243 = vpack.c.b16 %v5162, %v5159
    %v5244 = vpack.c.b16 %v5166, %v5163
    %v5245 = vpack.c.b16 %v5167, %v5164
    %v5246 = vpack.c.b16 %v5168, %v5165
    %v5247 = vpack.c.b16 %v5172, %v5169
    %v5248 = vpack.c.b16 %v5173, %v5170
    %v5249 = vpack.c.b16 %v5174, %v5171
    %v5250 = vpack.c.b16 %v5178, %v5175
    %v5251 = vpack.c.b16 %v5179, %v5176
    %v5252 = vpack.c.b16 %v5180, %v5177
    %v5253 = vpack.c.b16 %v5184, %v5181
    %v5254 = vpack.c.b16 %v5185, %v5182
    %v5255 = vpack.c.b16 %v5186, %v5183
    %v5256 = vpack.c.b16 %v5190, %v5187
    %v5257 = vpack.c.b16 %v5191, %v5188
    %v5258 = vpack.c.b16 %v5192, %v5189
    %v5259 = vpack.c.b16 %v5196, %v5193
    %v5260 = vpack.c.b16 %v5197, %v5194
    %v5261 = vpack.c.b16 %v5198, %v5195
    %v5262 = vpack.c.b16 %v5202, %v5199
    %v5263 = vpack.c.b16 %v5203, %v5200
    %v5264 = vpack.c.b16 %v5204, %v5201
    %v5265 = vpack.c.b16 %v5208, %v5205
    %v5266 = vpack.c.b16 %v5209, %v5206
    %v5267 = vpack.c.b16 %v5210, %v5207
    %v5268 = vpack.c.b16 %v5214, %v5211
    %v5269 = vpack.c.b16 %v5215, %v5212
    %v5270 = vpack.c.b16 %v5216, %v5213
    %v5271 = vpack.c.b16 %v5220, %v5217
    %v5272 = vpack.c.b16 %v5221, %v5218
    %v5273 = vpack.c.b16 %v5222, %v5219
    %v5274 = vpack.c.b16 %v5226, %v5223
    %v5275 = vpack.c.b16 %v5227, %v5224
    %v5276 = vpack.c.b16 %v5228, %v5225
    %5325 = vmatprep.subr.bf16.mxu0 %v5251
    %5326 = vmatpush1.bf16.msra.mxu0 %v5250
    %5327 = vmatprep.subr.bf16.mxu0 %v5248
    %5328 = vmatpush1.bf16.msra.mxu0 %v5247
    %5329 = vmatprep.subr.bf16.mxu0 %v5245
    %5330 = vmatpush1.bf16.msra.mxu0 %v5244
    %5331 = vmatprep.subr.bf16.mxu0 %v5242
    %5332 = vmatpush1.bf16.msra.mxu0 %v5241
    %5333 = vmatprep.subr.bf16.mxu0 %v5239
    %5334 = vmatpush1.bf16.msra.mxu0 %v5238
    %5335 = vmatprep.subr.bf16.mxu0 %v5236
    %5336 = vmatpush1.bf16.msra.mxu0 %v5235
    %5337 = vmatprep.subr.bf16.mxu0 %v5233
    %5338 = vmatpush1.bf16.msra.mxu0 %v5232
    %5339 = vmatprep.subr.bf16.mxu0 %v5230
    %5340 = vmatpush1.bf16.msra.mxu0 %v5229
    %5341 = vmatprep.subr.bf16.mxu0 %v5275
    %5342 = vmatpush2.bf16.msra.mxu0 %v5274
    %5343 = vmatprep.subr.bf16.mxu0 %v5272
    %5344 = vmatpush2.bf16.msra.mxu0 %v5271
    %5345 = vmatprep.subr.bf16.mxu0 %v5269
    %5346 = vmatpush2.bf16.msra.mxu0 %v5268
    %5347 = vmatprep.subr.bf16.mxu0 %v5266
    %5348 = vmatpush2.bf16.msra.mxu0 %v5265
    %5349 = vmatprep.subr.bf16.mxu0 %v5263
    %5350 = vmatpush2.bf16.msra.mxu0 %v5262
    %5351 = vmatprep.subr.bf16.mxu0 %v5260
    %5352 = vmatpush2.bf16.msra.mxu0 %v5259
    %5353 = vmatprep.subr.bf16.mxu0 %v5257
    %5354 = vmatpush2.bf16.msra.mxu0 %v5256
    %5355 = vmatprep.subr.bf16.mxu0 %v5254
    %5356 = vmatpush2.bf16.msra.mxu0 %v5253
    %5357 = vmatprep.mubr.bf16.mxu0 %v5054
    %5358 = vmatmul.mubr.bf16.gmra.mxu0 %v5053
    %v5359 = vpop.f32.mrf.mxu0
    %v5360 = vadd.f32 %v5017, %v5359
    %v5361 = vpop.f32.mrf.mxu0
    %v5362 = vadd.f32 %v5021, %v5361
    %v5363 = vpop.f32.mrf.mxu0
    %v5364 = vadd.f32 %v5017, %v5363
    %v5365 = vpop.f32.mrf.mxu0
    %v5366 = vadd.f32 %v5021, %v5365
    %5367 = vmatprep.mubr.bf16.mxu0 %v5056
    %5368 = vmatmul.mubr.bf16.gmra.mxu0 %v5055
    %v5369 = vpop.f32.mrf.mxu0
    %v5370 = vadd.f32 %v5017, %v5369
    %v5371 = vpop.f32.mrf.mxu0
    %v5372 = vadd.f32 %v5021, %v5371
    %v5373 = vpop.f32.mrf.mxu0
    %v5374 = vadd.f32 %v5017, %v5373
    %v5375 = vpop.f32.mrf.mxu0
    %v5376 = vadd.f32 %v5021, %v5375
    %5377 = vmatprep.mubr.bf16.mxu0 %v5058
    %5378 = vmatmul.mubr.bf16.gmra.mxu0 %v5057
    %v5379 = vpop.f32.mrf.mxu0
    %v5380 = vadd.f32 %v5017, %v5379
    %v5381 = vpop.f32.mrf.mxu0
    %v5382 = vadd.f32 %v5021, %v5381
    %v5383 = vpop.f32.mrf.mxu0
    %v5384 = vadd.f32 %v5017, %v5383
    %v5385 = vpop.f32.mrf.mxu0
    %v5386 = vadd.f32 %v5021, %v5385
    %5387 = vmatprep.mubr.bf16.mxu0 %v5060
    %5388 = vmatmul.mubr.bf16.gmra.mxu0 %v5059
    %v5389 = vpop.f32.mrf.mxu0
    %v5390 = vadd.f32 %v5017, %v5389
    %v5391 = vpop.f32.mrf.mxu0
    %v5392 = vadd.f32 %v5021, %v5391
    %v5393 = vpop.f32.mrf.mxu0
    %v5394 = vadd.f32 %v5017, %v5393
    %v5395 = vpop.f32.mrf.mxu0
    %v5396 = vadd.f32 %v5021, %v5395
    %5397 = vdwg.mxu0
    %5398 = vmatprep.subr.bf16.mxu0 0
    %5399 = vmatpush1.bf16.msra.mxu0 %v5252
    %5400 = vmatprep.subr.bf16.mxu0 0
    %5401 = vmatpush1.bf16.msra.mxu0 %v5249
    %5402 = vmatprep.subr.bf16.mxu0 0
    %5403 = vmatpush1.bf16.msra.mxu0 %v5246
    %5404 = vmatprep.subr.bf16.mxu0 0
    %5405 = vmatpush1.bf16.msra.mxu0 %v5243
    %5406 = vmatprep.subr.bf16.mxu0 0
    %5407 = vmatpush1.bf16.msra.mxu0 %v5240
    %5408 = vmatprep.subr.bf16.mxu0 0
    %5409 = vmatpush1.bf16.msra.mxu0 %v5237
    %5410 = vmatprep.subr.bf16.mxu0 0
    %5411 = vmatpush1.bf16.msra.mxu0 %v5234
    %5412 = vmatprep.subr.bf16.mxu0 0
    %5413 = vmatpush1.bf16.msra.mxu0 %v5231
    %5414 = vmatprep.subr.bf16.mxu0 0
    %5415 = vmatpush2.bf16.msra.mxu0 %v5276
    %5416 = vmatprep.subr.bf16.mxu0 0
    %5417 = vmatpush2.bf16.msra.mxu0 %v5273
    %5418 = vmatprep.subr.bf16.mxu0 0
    %5419 = vmatpush2.bf16.msra.mxu0 %v5270
    %5420 = vmatprep.subr.bf16.mxu0 0
    %5421 = vmatpush2.bf16.msra.mxu0 %v5267
    %5422 = vmatprep.subr.bf16.mxu0 0
    %5423 = vmatpush2.bf16.msra.mxu0 %v5264
    %5424 = vmatprep.subr.bf16.mxu0 0
    %5425 = vmatpush2.bf16.msra.mxu0 %v5261
    %5426 = vmatprep.subr.bf16.mxu0 0
    %5427 = vmatpush2.bf16.msra.mxu0 %v5258
    %5428 = vmatprep.subr.bf16.mxu0 0
    %5429 = vmatpush2.bf16.msra.mxu0 %v5255
    %5430 = vmatprep.mubr.bf16.mxu0 %v5054
    %5431 = vmatmul.mubr.bf16.gmra.mxu0 %v5053
    %v5432 = vpop.f32.mrf.mxu0
    %v5433 = vadd.f32 %v5025, %v5432
    %v5434 = vpop.f32.mrf.mxu0
    %v5435 = vpop.f32.mrf.mxu0
    %v5436 = vadd.f32 %v5025, %v5435
    %v5437 = vpop.f32.mrf.mxu0
    %5438 = vmatprep.mubr.bf16.mxu0 %v5056
    %5439 = vmatmul.mubr.bf16.gmra.mxu0 %v5055
    %v5440 = vpop.f32.mrf.mxu0
    %v5441 = vadd.f32 %v5025, %v5440
    %v5442 = vpop.f32.mrf.mxu0
    %v5443 = vpop.f32.mrf.mxu0
    %v5444 = vadd.f32 %v5025, %v5443
    %v5445 = vpop.f32.mrf.mxu0
    %5446 = vmatprep.mubr.bf16.mxu0 %v5058
    %5447 = vmatmul.mubr.bf16.gmra.mxu0 %v5057
    %v5448 = vpop.f32.mrf.mxu0
    %v5449 = vadd.f32 %v5025, %v5448
    %v5450 = vpop.f32.mrf.mxu0
    %v5451 = vpop.f32.mrf.mxu0
    %v5452 = vadd.f32 %v5025, %v5451
    %v5453 = vpop.f32.mrf.mxu0
    %5454 = vmatprep.mubr.bf16.mxu0 %v5060
    %5455 = vmatmul.mubr.bf16.gmra.mxu0 %v5059
    %v5456 = vpop.f32.mrf.mxu0
    %v5457 = vadd.f32 %v5025, %v5456
    %v5458 = vpop.f32.mrf.mxu0
    %v5459 = vpop.f32.mrf.mxu0
    %v5460 = vadd.f32 %v5025, %v5459
    %v5461 = vpop.f32.mrf.mxu0
    %5462 = vdwg.mxu0
    %5463 = vst [vmem:[#allocation2] sm:$0xff] %v5360
    %5464 = vst [vmem:[#allocation2 + $0x8] sm:$0xff] %v5362
    %5465 = vst [vmem:[#allocation2 + $0x10] sm:$0xff] %v5433
    %5466 = vst [vmem:[#allocation2 + $0x18] sm:$0xff] %v5364
    %5467 = vst [vmem:[#allocation2 + $0x20] sm:$0xff] %v5366
    %5468 = vst [vmem:[#allocation2 + $0x28] sm:$0xff] %v5436
    %5469 = vst [vmem:[#allocation2 + $0x30] sm:$0xff] %v5370
    %5470 = vst [vmem:[#allocation2 + $0x38] sm:$0xff] %v5372
    %5471 = vst [vmem:[#allocation2 + $0x40] sm:$0xff] %v5441
    %5472 = vst [vmem:[#allocation2 + $0x48] sm:$0xff] %v5374
    %5473 = vst [vmem:[#allocation2 + $0x50] sm:$0xff] %v5376
    %5474 = vst [vmem:[#allocation2 + $0x58] sm:$0xff] %v5444
    %5475 = vst [vmem:[#allocation2 + $0x60] sm:$0xff] %v5380
    %5476 = vst [vmem:[#allocation2 + $0x68] sm:$0xff] %v5382
    %5477 = vst [vmem:[#allocation2 + $0x70] sm:$0xff] %v5449
    %5478 = vst [vmem:[#allocation2 + $0x78] sm:$0xff] %v5384
    %5479 = vst [vmem:[#allocation2 + $0x80] sm:$0xff] %v5386
    %5480 = vst [vmem:[#allocation2 + $0x88] sm:$0xff] %v5452
    %5481 = vst [vmem:[#allocation2 + $0x90] sm:$0xff] %v5390
    %5482 = vst [vmem:[#allocation2 + $0x98] sm:$0xff] %v5392
    %5483 = vst [vmem:[#allocation2 + $0xa0] sm:$0xff] %v5457
    %5484 = vst [vmem:[#allocation2 + $0xa8] sm:$0xff] %v5394
    %5485 = vst [vmem:[#allocation2 + $0xb0] sm:$0xff] %v5396
    %5486 = vst [vmem:[#allocation2 + $0xb8] sm:$0xff] %v5460
    %v5487 = vld [vmem:[%s14] sm:$0xff]
    %v5488 = vld [vmem:[%s14 + $0x8] sm:$0xf]
    %v5489 = vld [vmem:[%s14 + $0xc] sm:$0xff]
    %v5490 = vld [vmem:[%s14 + $0x14] sm:$0xf]
    %v5491 = vld [vmem:[%s14 + $0x18] sm:$0xff]
    %v5492 = vld [vmem:[%s14 + $0x20] sm:$0xf]
    %v5493 = vld [vmem:[%s14 + $0x24] sm:$0xff]
    %v5494 = vld [vmem:[%s14 + $0x2c] sm:$0xf]
    %v5495 = vld [vmem:[%s14 + $0x30] sm:$0xff]
    %v5496 = vld [vmem:[%s14 + $0x38] sm:$0xf]
    %v5497 = vld [vmem:[%s14 + $0x3c] sm:$0xff]
    %v5498 = vld [vmem:[%s14 + $0x44] sm:$0xf]
    %v5499 = vld [vmem:[%s14 + $0x48] sm:$0xff]
    %v5500 = vld [vmem:[%s14 + $0x50] sm:$0xf]
    %v5501 = vld [vmem:[%s14 + $0x54] sm:$0xff]
    %v5502 = vld [vmem:[%s14 + $0x5c] sm:$0xf]
    %v5503 = vld [vmem:[%s14 + $0x60] sm:$0xff]
    %v5504 = vld [vmem:[%s14 + $0x68] sm:$0xf]
    %v5505 = vld [vmem:[%s14 + $0x6c] sm:$0xff]
    %v5506 = vld [vmem:[%s14 + $0x74] sm:$0xf]
    %v5507 = vld [vmem:[%s14 + $0x78] sm:$0xff]
    %v5508 = vld [vmem:[%s14 + $0x80] sm:$0xf]
    %v5509 = vld [vmem:[%s14 + $0x84] sm:$0xff]
    %v5510 = vld [vmem:[%s14 + $0x8c] sm:$0xf]
    %v5511 = vld [vmem:[%s14 + $0x90] sm:$0xff]
    %v5512 = vld [vmem:[%s14 + $0x98] sm:$0xf]
    %v5513 = vld [vmem:[%s14 + $0x9c] sm:$0xff]
    %v5514 = vld [vmem:[%s14 + $0xa4] sm:$0xf]
    %v5515 = vld [vmem:[%s14 + $0xa8] sm:$0xff]
    %v5516 = vld [vmem:[%s14 + $0xb0] sm:$0xf]
    %v5517 = vld [vmem:[%s14 + $0xb4] sm:$0xff]
    %v5518 = vld [vmem:[%s14 + $0xbc] sm:$0xf]
    %v5519 = vld [vmem:[%s14 + $0xc0] sm:$0xff]
    %v5520 = vld [vmem:[%s14 + $0xc8] sm:$0xf]
    %v5521 = vld [vmem:[%s14 + $0xcc] sm:$0xff]
    %v5522 = vld [vmem:[%s14 + $0xd4] sm:$0xf]
    %v5523 = vld [vmem:[%s14 + $0xd8] sm:$0xff]
    %v5524 = vld [vmem:[%s14 + $0xe0] sm:$0xf]
    %v5525 = vld [vmem:[%s14 + $0xe4] sm:$0xff]
    %v5526 = vld [vmem:[%s14 + $0xec] sm:$0xf]
    %v5527 = vld [vmem:[%s14 + $0xf0] sm:$0xff]
    %v5528 = vld [vmem:[%s14 + $0xf8] sm:$0xf]
    %v5529 = vld [vmem:[%s14 + $0xfc] sm:$0xff]
    %v5530 = vld [vmem:[%s14 + $0x104] sm:$0xf]
    %v5531 = vld [vmem:[%s14 + $0x108] sm:$0xff]
    %v5532 = vld [vmem:[%s14 + $0x110] sm:$0xf]
    %v5533 = vld [vmem:[%s14 + $0x114] sm:$0xff]
    %v5534 = vld [vmem:[%s14 + $0x11c] sm:$0xf]
    %v5535 = vld [vmem:[%s14 + $0x120] sm:$0xff]
    %v5536 = vld [vmem:[%s14 + $0x128] sm:$0xf]
    %v5537 = vld [vmem:[%s14 + $0x12c] sm:$0xff]
    %v5538 = vld [vmem:[%s14 + $0x134] sm:$0xf]
    %v5539 = vld [vmem:[%s14 + $0x138] sm:$0xff]
    %v5540 = vld [vmem:[%s14 + $0x140] sm:$0xf]
    %v5541 = vld [vmem:[%s14 + $0x144] sm:$0xff]
    %v5542 = vld [vmem:[%s14 + $0x14c] sm:$0xf]
    %v5543 = vld [vmem:[%s14 + $0x150] sm:$0xff]
    %v5544 = vld [vmem:[%s14 + $0x158] sm:$0xf]
    %v5545 = vld [vmem:[%s14 + $0x15c] sm:$0xff]
    %v5546 = vld [vmem:[%s14 + $0x164] sm:$0xf]
    %v5547 = vld [vmem:[%s14 + $0x168] sm:$0xff]
    %v5548 = vld [vmem:[%s14 + $0x170] sm:$0xf]
    %v5549 = vld [vmem:[%s14 + $0x174] sm:$0xff]
    %v5550 = vld [vmem:[%s14 + $0x17c] sm:$0xf]
    %v5551 = vld [vmem:[%s16] sm:$0x7]
    %v5553 = vlaneseq
    %v5554 = vshrl.u32 %v5553, 7
    %v5555 = vsub.s32 0, %v5554
    %v5556 = vrot.slane %v5551, %v5555
    %v5557 = vlaneseq
    %v5558 = vshrl.u32 %v5557, 7
    %v5559 = vsub.s32 1, %v5558
    %v5560 = vrot.slane %v5551, %v5559
    %v5561 = vlaneseq
    %v5562 = vshrl.u32 %v5561, 7
    %v5563 = vsub.s32 2, %v5562
    %v5564 = vrot.slane %v5551, %v5563
    %v5632 = vunpack.c.l.b16 %v5487
    %v5633 = vunpack.c.h.b16 %v5487
    %v5634 = vunpack.c.l.b16 %v5488
    %v5635 = vunpack.c.l.b16 %v5489
    %v5636 = vunpack.c.h.b16 %v5489
    %v5637 = vunpack.c.l.b16 %v5490
    %v5638 = vunpack.c.l.b16 %v5491
    %v5639 = vunpack.c.h.b16 %v5491
    %v5640 = vunpack.c.l.b16 %v5492
    %v5641 = vunpack.c.l.b16 %v5493
    %v5642 = vunpack.c.h.b16 %v5493
    %v5643 = vunpack.c.l.b16 %v5494
    %v5644 = vunpack.c.l.b16 %v5495
    %v5645 = vunpack.c.h.b16 %v5495
    %v5646 = vunpack.c.l.b16 %v5496
    %v5647 = vunpack.c.l.b16 %v5497
    %v5648 = vunpack.c.h.b16 %v5497
    %v5649 = vunpack.c.l.b16 %v5498
    %v5650 = vunpack.c.l.b16 %v5499
    %v5651 = vunpack.c.h.b16 %v5499
    %v5652 = vunpack.c.l.b16 %v5500
    %v5653 = vunpack.c.l.b16 %v5501
    %v5654 = vunpack.c.h.b16 %v5501
    %v5655 = vunpack.c.l.b16 %v5502
    %v5656 = vunpack.c.l.b16 %v5503
    %v5657 = vunpack.c.h.b16 %v5503
    %v5658 = vunpack.c.l.b16 %v5504
    %v5659 = vunpack.c.l.b16 %v5505
    %v5660 = vunpack.c.h.b16 %v5505
    %v5661 = vunpack.c.l.b16 %v5506
    %v5662 = vunpack.c.l.b16 %v5507
    %v5663 = vunpack.c.h.b16 %v5507
    %v5664 = vunpack.c.l.b16 %v5508
    %v5665 = vunpack.c.l.b16 %v5509
    %v5666 = vunpack.c.h.b16 %v5509
    %v5667 = vunpack.c.l.b16 %v5510
    %v5668 = vunpack.c.l.b16 %v5511
    %v5669 = vunpack.c.h.b16 %v5511
    %v5670 = vunpack.c.l.b16 %v5512
    %v5671 = vunpack.c.l.b16 %v5513
    %v5672 = vunpack.c.h.b16 %v5513
    %v5673 = vunpack.c.l.b16 %v5514
    %v5674 = vunpack.c.l.b16 %v5515
    %v5675 = vunpack.c.h.b16 %v5515
    %v5676 = vunpack.c.l.b16 %v5516
    %v5677 = vunpack.c.l.b16 %v5517
    %v5678 = vunpack.c.h.b16 %v5517
    %v5679 = vunpack.c.l.b16 %v5518
    %v5680 = vunpack.c.l.b16 %v5519
    %v5681 = vunpack.c.h.b16 %v5519
    %v5682 = vunpack.c.l.b16 %v5520
    %v5683 = vunpack.c.l.b16 %v5521
    %v5684 = vunpack.c.h.b16 %v5521
    %v5685 = vunpack.c.l.b16 %v5522
    %v5686 = vunpack.c.l.b16 %v5523
    %v5687 = vunpack.c.h.b16 %v5523
    %v5688 = vunpack.c.l.b16 %v5524
    %v5689 = vunpack.c.l.b16 %v5525
    %v5690 = vunpack.c.h.b16 %v5525
    %v5691 = vunpack.c.l.b16 %v5526
    %v5692 = vunpack.c.l.b16 %v5527
    %v5693 = vunpack.c.h.b16 %v5527
    %v5694 = vunpack.c.l.b16 %v5528
    %v5695 = vunpack.c.l.b16 %v5529
    %v5696 = vunpack.c.h.b16 %v5529
    %v5697 = vunpack.c.l.b16 %v5530
    %v5698 = vunpack.c.l.b16 %v5531
    %v5699 = vunpack.c.h.b16 %v5531
    %v5700 = vunpack.c.l.b16 %v5532
    %v5701 = vunpack.c.l.b16 %v5533
    %v5702 = vunpack.c.h.b16 %v5533
    %v5703 = vunpack.c.l.b16 %v5534
    %v5704 = vunpack.c.l.b16 %v5535
    %v5705 = vunpack.c.h.b16 %v5535
    %v5706 = vunpack.c.l.b16 %v5536
    %v5707 = vunpack.c.l.b16 %v5537
    %v5708 = vunpack.c.h.b16 %v5537
    %v5709 = vunpack.c.l.b16 %v5538
    %v5710 = vunpack.c.l.b16 %v5539
    %v5711 = vunpack.c.h.b16 %v5539
    %v5712 = vunpack.c.l.b16 %v5540
    %v5713 = vunpack.c.l.b16 %v5541
    %v5714 = vunpack.c.h.b16 %v5541
    %v5715 = vunpack.c.l.b16 %v5542
    %v5716 = vunpack.c.l.b16 %v5543
    %v5717 = vunpack.c.h.b16 %v5543
    %v5718 = vunpack.c.l.b16 %v5544
    %v5719 = vunpack.c.l.b16 %v5545
    %v5720 = vunpack.c.h.b16 %v5545
    %v5721 = vunpack.c.l.b16 %v5546
    %v5722 = vunpack.c.l.b16 %v5547
    %v5723 = vunpack.c.h.b16 %v5547
    %v5724 = vunpack.c.l.b16 %v5548
    %v5725 = vunpack.c.l.b16 %v5549
    %v5726 = vunpack.c.h.b16 %v5549
    %v5727 = vunpack.c.l.b16 %v5550
    %v5728 = vpack.c.b16 %v5635, %v5632
    %v5729 = vpack.c.b16 %v5636, %v5633
    %v5730 = vpack.c.b16 %v5637, %v5634
    %v5731 = vpack.c.b16 %v5641, %v5638
    %v5732 = vpack.c.b16 %v5642, %v5639
    %v5733 = vpack.c.b16 %v5643, %v5640
    %v5734 = vpack.c.b16 %v5647, %v5644
    %v5735 = vpack.c.b16 %v5648, %v5645
    %v5736 = vpack.c.b16 %v5649, %v5646
    %v5737 = vpack.c.b16 %v5653, %v5650
    %v5738 = vpack.c.b16 %v5654, %v5651
    %v5739 = vpack.c.b16 %v5655, %v5652
    %v5740 = vpack.c.b16 %v5659, %v5656
    %v5741 = vpack.c.b16 %v5660, %v5657
    %v5742 = vpack.c.b16 %v5661, %v5658
    %v5743 = vpack.c.b16 %v5665, %v5662
    %v5744 = vpack.c.b16 %v5666, %v5663
    %v5745 = vpack.c.b16 %v5667, %v5664
    %v5746 = vpack.c.b16 %v5671, %v5668
    %v5747 = vpack.c.b16 %v5672, %v5669
    %v5748 = vpack.c.b16 %v5673, %v5670
    %v5749 = vpack.c.b16 %v5677, %v5674
    %v5750 = vpack.c.b16 %v5678, %v5675
    %v5751 = vpack.c.b16 %v5679, %v5676
    %v5752 = vpack.c.b16 %v5683, %v5680
    %v5753 = vpack.c.b16 %v5684, %v5681
    %v5754 = vpack.c.b16 %v5685, %v5682
    %v5755 = vpack.c.b16 %v5689, %v5686
    %v5756 = vpack.c.b16 %v5690, %v5687
    %v5757 = vpack.c.b16 %v5691, %v5688
    %v5758 = vpack.c.b16 %v5695, %v5692
    %v5759 = vpack.c.b16 %v5696, %v5693
    %v5760 = vpack.c.b16 %v5697, %v5694
    %v5761 = vpack.c.b16 %v5701, %v5698
    %v5762 = vpack.c.b16 %v5702, %v5699
    %v5763 = vpack.c.b16 %v5703, %v5700
    %v5764 = vpack.c.b16 %v5707, %v5704
    %v5765 = vpack.c.b16 %v5708, %v5705
    %v5766 = vpack.c.b16 %v5709, %v5706
    %v5767 = vpack.c.b16 %v5713, %v5710
    %v5768 = vpack.c.b16 %v5714, %v5711
    %v5769 = vpack.c.b16 %v5715, %v5712
    %v5770 = vpack.c.b16 %v5719, %v5716
    %v5771 = vpack.c.b16 %v5720, %v5717
    %v5772 = vpack.c.b16 %v5721, %v5718
    %v5773 = vpack.c.b16 %v5725, %v5722
    %v5774 = vpack.c.b16 %v5726, %v5723
    %v5775 = vpack.c.b16 %v5727, %v5724
    %5824 = vmatprep.subr.bf16.mxu0 %v5750
    %5825 = vmatpush1.bf16.msra.mxu0 %v5749
    %5826 = vmatprep.subr.bf16.mxu0 %v5747
    %5827 = vmatpush1.bf16.msra.mxu0 %v5746
    %5828 = vmatprep.subr.bf16.mxu0 %v5744
    %5829 = vmatpush1.bf16.msra.mxu0 %v5743
    %5830 = vmatprep.subr.bf16.mxu0 %v5741
    %5831 = vmatpush1.bf16.msra.mxu0 %v5740
    %5832 = vmatprep.subr.bf16.mxu0 %v5738
    %5833 = vmatpush1.bf16.msra.mxu0 %v5737
    %5834 = vmatprep.subr.bf16.mxu0 %v5735
    %5835 = vmatpush1.bf16.msra.mxu0 %v5734
    %5836 = vmatprep.subr.bf16.mxu0 %v5732
    %5837 = vmatpush1.bf16.msra.mxu0 %v5731
    %5838 = vmatprep.subr.bf16.mxu0 %v5729
    %5839 = vmatpush1.bf16.msra.mxu0 %v5728
    %5840 = vmatprep.subr.bf16.mxu0 %v5774
    %5841 = vmatpush2.bf16.msra.mxu0 %v5773
    %5842 = vmatprep.subr.bf16.mxu0 %v5771
    %5843 = vmatpush2.bf16.msra.mxu0 %v5770
    %5844 = vmatprep.subr.bf16.mxu0 %v5768
    %5845 = vmatpush2.bf16.msra.mxu0 %v5767
    %5846 = vmatprep.subr.bf16.mxu0 %v5765
    %5847 = vmatpush2.bf16.msra.mxu0 %v5764
    %5848 = vmatprep.subr.bf16.mxu0 %v5762
    %5849 = vmatpush2.bf16.msra.mxu0 %v5761
    %5850 = vmatprep.subr.bf16.mxu0 %v5759
    %5851 = vmatpush2.bf16.msra.mxu0 %v5758
    %5852 = vmatprep.subr.bf16.mxu0 %v5756
    %5853 = vmatpush2.bf16.msra.mxu0 %v5755
    %5854 = vmatprep.subr.bf16.mxu0 %v5753
    %5855 = vmatpush2.bf16.msra.mxu0 %v5752
    %5856 = vmatprep.mubr.bf16.mxu0 %v5054
    %5857 = vmatmul.mubr.bf16.gmra.mxu0 %v5053
    %v5858 = vpop.f32.mrf.mxu0
    %v5859 = vadd.f32 %v5556, %v5858
    %v5860 = vpop.f32.mrf.mxu0
    %v5861 = vadd.f32 %v5560, %v5860
    %v5862 = vpop.f32.mrf.mxu0
    %v5863 = vadd.f32 %v5556, %v5862
    %v5864 = vpop.f32.mrf.mxu0
    %v5865 = vadd.f32 %v5560, %v5864
    %5866 = vmatprep.mubr.bf16.mxu0 %v5056
    %5867 = vmatmul.mubr.bf16.gmra.mxu0 %v5055
    %v5868 = vpop.f32.mrf.mxu0
    %v5869 = vadd.f32 %v5556, %v5868
    %v5870 = vpop.f32.mrf.mxu0
    %v5871 = vadd.f32 %v5560, %v5870
    %v5872 = vpop.f32.mrf.mxu0
    %v5873 = vadd.f32 %v5556, %v5872
    %v5874 = vpop.f32.mrf.mxu0
    %v5875 = vadd.f32 %v5560, %v5874
    %5876 = vmatprep.mubr.bf16.mxu0 %v5058
    %5877 = vmatmul.mubr.bf16.gmra.mxu0 %v5057
    %v5878 = vpop.f32.mrf.mxu0
    %v5879 = vadd.f32 %v5556, %v5878
    %v5880 = vpop.f32.mrf.mxu0
    %v5881 = vadd.f32 %v5560, %v5880
    %v5882 = vpop.f32.mrf.mxu0
    %v5883 = vadd.f32 %v5556, %v5882
    %v5884 = vpop.f32.mrf.mxu0
    %v5885 = vadd.f32 %v5560, %v5884
    %5886 = vmatprep.mubr.bf16.mxu0 %v5060
    %5887 = vmatmul.mubr.bf16.gmra.mxu0 %v5059
    %v5888 = vpop.f32.mrf.mxu0
    %v5889 = vadd.f32 %v5556, %v5888
    %v5890 = vpop.f32.mrf.mxu0
    %v5891 = vadd.f32 %v5560, %v5890
    %v5892 = vpop.f32.mrf.mxu0
    %v5893 = vadd.f32 %v5556, %v5892
    %v5894 = vpop.f32.mrf.mxu0
    %v5895 = vadd.f32 %v5560, %v5894
    %5896 = vdwg.mxu0
    %5897 = vmatprep.subr.bf16.mxu0 0
    %5898 = vmatpush1.bf16.msra.mxu0 %v5751
    %5899 = vmatprep.subr.bf16.mxu0 0
    %5900 = vmatpush1.bf16.msra.mxu0 %v5748
    %5901 = vmatprep.subr.bf16.mxu0 0
    %5902 = vmatpush1.bf16.msra.mxu0 %v5745
    %5903 = vmatprep.subr.bf16.mxu0 0
    %5904 = vmatpush1.bf16.msra.mxu0 %v5742
    %5905 = vmatprep.subr.bf16.mxu0 0
    %5906 = vmatpush1.bf16.msra.mxu0 %v5739
    %5907 = vmatprep.subr.bf16.mxu0 0
    %5908 = vmatpush1.bf16.msra.mxu0 %v5736
    %5909 = vmatprep.subr.bf16.mxu0 0
    %5910 = vmatpush1.bf16.msra.mxu0 %v5733
    %5911 = vmatprep.subr.bf16.mxu0 0
    %5912 = vmatpush1.bf16.msra.mxu0 %v5730
    %5913 = vmatprep.subr.bf16.mxu0 0
    %5914 = vmatpush2.bf16.msra.mxu0 %v5775
    %5915 = vmatprep.subr.bf16.mxu0 0
    %5916 = vmatpush2.bf16.msra.mxu0 %v5772
    %5917 = vmatprep.subr.bf16.mxu0 0
    %5918 = vmatpush2.bf16.msra.mxu0 %v5769
    %5919 = vmatprep.subr.bf16.mxu0 0
    %5920 = vmatpush2.bf16.msra.mxu0 %v5766
    %5921 = vmatprep.subr.bf16.mxu0 0
    %5922 = vmatpush2.bf16.msra.mxu0 %v5763
    %5923 = vmatprep.subr.bf16.mxu0 0
    %5924 = vmatpush2.bf16.msra.mxu0 %v5760
    %5925 = vmatprep.subr.bf16.mxu0 0
    %5926 = vmatpush2.bf16.msra.mxu0 %v5757
    %5927 = vmatprep.subr.bf16.mxu0 0
    %5928 = vmatpush2.bf16.msra.mxu0 %v5754
    %5929 = vmatprep.mubr.bf16.mxu0 %v5054
    %5930 = vmatmul.mubr.bf16.gmra.mxu0 %v5053
    %v5931 = vpop.f32.mrf.mxu0
    %v5932 = vadd.f32 %v5564, %v5931
    %v5933 = vpop.f32.mrf.mxu0
    %v5934 = vpop.f32.mrf.mxu0
    %v5935 = vadd.f32 %v5564, %v5934
    %v5936 = vpop.f32.mrf.mxu0
    %5937 = vmatprep.mubr.bf16.mxu0 %v5056
    %5938 = vmatmul.mubr.bf16.gmra.mxu0 %v5055
    %v5939 = vpop.f32.mrf.mxu0
    %v5940 = vadd.f32 %v5564, %v5939
    %v5941 = vpop.f32.mrf.mxu0
    %v5942 = vpop.f32.mrf.mxu0
    %v5943 = vadd.f32 %v5564, %v5942
    %v5944 = vpop.f32.mrf.mxu0
    %5945 = vmatprep.mubr.bf16.mxu0 %v5058
    %5946 = vmatmul.mubr.bf16.gmra.mxu0 %v5057
    %v5947 = vpop.f32.mrf.mxu0
    %v5948 = vadd.f32 %v5564, %v5947
    %v5949 = vpop.f32.mrf.mxu0
    %v5950 = vpop.f32.mrf.mxu0
    %v5951 = vadd.f32 %v5564, %v5950
    %v5952 = vpop.f32.mrf.mxu0
    %5953 = vmatprep.mubr.bf16.mxu0 %v5060
    %5954 = vmatmul.mubr.bf16.gmra.mxu0 %v5059
    %v5955 = vpop.f32.mrf.mxu0
    %v5956 = vadd.f32 %v5564, %v5955
    %v5957 = vpop.f32.mrf.mxu0
    %v5958 = vpop.f32.mrf.mxu0
    %v5959 = vadd.f32 %v5564, %v5958
    %v5960 = vpop.f32.mrf.mxu0
    %5961 = vdwg.mxu0
    %5962 = vst [vmem:[#allocation3] sm:$0xff] %v5859
    %5963 = vst [vmem:[#allocation3 + $0x8] sm:$0xff] %v5861
    %5964 = vst [vmem:[#allocation3 + $0x10] sm:$0xff] %v5932
    %5965 = vst [vmem:[#allocation3 + $0x18] sm:$0xff] %v5863
    %5966 = vst [vmem:[#allocation3 + $0x20] sm:$0xff] %v5865
    %5967 = vst [vmem:[#allocation3 + $0x28] sm:$0xff] %v5935
    %5968 = vst [vmem:[#allocation3 + $0x30] sm:$0xff] %v5869
    %5969 = vst [vmem:[#allocation3 + $0x38] sm:$0xff] %v5871
    %5970 = vst [vmem:[#allocation3 + $0x40] sm:$0xff] %v5940
    %5971 = vst [vmem:[#allocation3 + $0x48] sm:$0xff] %v5873
    %5972 = vst [vmem:[#allocation3 + $0x50] sm:$0xff] %v5875
    %5973 = vst [vmem:[#allocation3 + $0x58] sm:$0xff] %v5943
    %5974 = vst [vmem:[#allocation3 + $0x60] sm:$0xff] %v5879
    %5975 = vst [vmem:[#allocation3 + $0x68] sm:$0xff] %v5881
    %5976 = vst [vmem:[#allocation3 + $0x70] sm:$0xff] %v5948
    %5977 = vst [vmem:[#allocation3 + $0x78] sm:$0xff] %v5883
    %5978 = vst [vmem:[#allocation3 + $0x80] sm:$0xff] %v5885
    %5979 = vst [vmem:[#allocation3 + $0x88] sm:$0xff] %v5951
    %5980 = vst [vmem:[#allocation3 + $0x90] sm:$0xff] %v5889
    %5981 = vst [vmem:[#allocation3 + $0x98] sm:$0xff] %v5891
    %5982 = vst [vmem:[#allocation3 + $0xa0] sm:$0xff] %v5956
    %5983 = vst [vmem:[#allocation3 + $0xa8] sm:$0xff] %v5893
    %5984 = vst [vmem:[#allocation3 + $0xb0] sm:$0xff] %v5895
    %5985 = vst [vmem:[#allocation3 + $0xb8] sm:$0xff] %v5959
    %v5986 = vld [vmem:[%s13] sm:$0x7]
    %v5987 = vld [vmem:[%s17] sm:$0x7]
    %v5988 = vld [vmem:[%s11] sm:$0xff]
    %v5989 = vld [vmem:[%s11 + $0x8] sm:$0xf]
    %v5990 = vld [vmem:[%s11 + $0xc] sm:$0xff]
    %v5991 = vld [vmem:[%s11 + $0x14] sm:$0xf]
    %v5992 = vld [vmem:[%s11 + $0x18] sm:$0xff]
    %v5993 = vld [vmem:[%s11 + $0x20] sm:$0xf]
    %v5994 = vld [vmem:[%s11 + $0x24] sm:$0xff]
    %v5995 = vld [vmem:[%s11 + $0x2c] sm:$0xf]
    %v5996 = vld [vmem:[%s11 + $0x30] sm:$0xff]
    %v5997 = vld [vmem:[%s11 + $0x38] sm:$0xf]
    %v5998 = vld [vmem:[%s11 + $0x3c] sm:$0xff]
    %v5999 = vld [vmem:[%s11 + $0x44] sm:$0xf]
    %v6000 = vld [vmem:[%s11 + $0x48] sm:$0xff]
    %v6001 = vld [vmem:[%s11 + $0x50] sm:$0xf]
    %v6002 = vld [vmem:[%s11 + $0x54] sm:$0xff]
    %v6003 = vld [vmem:[%s11 + $0x5c] sm:$0xf]
    %v6004 = vld [vmem:[%s11 + $0x60] sm:$0xff]
    %v6005 = vld [vmem:[%s11 + $0x68] sm:$0xf]
    %v6006 = vld [vmem:[%s11 + $0x6c] sm:$0xff]
    %v6007 = vld [vmem:[%s11 + $0x74] sm:$0xf]
    %v6008 = vld [vmem:[%s11 + $0x78] sm:$0xff]
    %v6009 = vld [vmem:[%s11 + $0x80] sm:$0xf]
    %v6010 = vld [vmem:[%s11 + $0x84] sm:$0xff]
    %v6011 = vld [vmem:[%s11 + $0x8c] sm:$0xf]
    %v6012 = vld [vmem:[%s11 + $0x90] sm:$0xff]
    %v6013 = vld [vmem:[%s11 + $0x98] sm:$0xf]
    %v6014 = vld [vmem:[%s11 + $0x9c] sm:$0xff]
    %v6015 = vld [vmem:[%s11 + $0xa4] sm:$0xf]
    %v6016 = vld [vmem:[%s11 + $0xa8] sm:$0xff]
    %v6017 = vld [vmem:[%s11 + $0xb0] sm:$0xf]
    %v6018 = vld [vmem:[%s11 + $0xb4] sm:$0xff]
    %v6019 = vld [vmem:[%s11 + $0xbc] sm:$0xf]
    %v6021 = vlaneseq
    %v6022 = vshrl.u32 %v6021, 7
    %v6023 = vsub.s32 0, %v6022
    %v6024 = vrot.slane %v5986, %v6023
    %v6025 = vlaneseq
    %v6026 = vshrl.u32 %v6025, 7
    %v6027 = vsub.s32 1, %v6026
    %v6028 = vrot.slane %v5986, %v6027
    %v6029 = vlaneseq
    %v6030 = vshrl.u32 %v6029, 7
    %v6031 = vsub.s32 2, %v6030
    %v6032 = vrot.slane %v5986, %v6031
    %v6068 = vunpack.c.l.b16 %v5988
    %v6069 = vunpack.c.h.b16 %v5988
    %v6070 = vunpack.c.l.b16 %v5989
    %v6071 = vunpack.c.l.b16 %v5990
    %v6072 = vunpack.c.h.b16 %v5990
    %v6073 = vunpack.c.l.b16 %v5991
    %v6074 = vunpack.c.l.b16 %v5992
    %v6075 = vunpack.c.h.b16 %v5992
    %v6076 = vunpack.c.l.b16 %v5993
    %v6077 = vunpack.c.l.b16 %v5994
    %v6078 = vunpack.c.h.b16 %v5994
    %v6079 = vunpack.c.l.b16 %v5995
    %v6080 = vunpack.c.l.b16 %v5996
    %v6081 = vunpack.c.h.b16 %v5996
    %v6082 = vunpack.c.l.b16 %v5997
    %v6083 = vunpack.c.l.b16 %v5998
    %v6084 = vunpack.c.h.b16 %v5998
    %v6085 = vunpack.c.l.b16 %v5999
    %v6086 = vunpack.c.l.b16 %v6000
    %v6087 = vunpack.c.h.b16 %v6000
    %v6088 = vunpack.c.l.b16 %v6001
    %v6089 = vunpack.c.l.b16 %v6002
    %v6090 = vunpack.c.h.b16 %v6002
    %v6091 = vunpack.c.l.b16 %v6003
    %v6092 = vunpack.c.l.b16 %v6004
    %v6093 = vunpack.c.h.b16 %v6004
    %v6094 = vunpack.c.l.b16 %v6005
    %v6095 = vunpack.c.l.b16 %v6006
    %v6096 = vunpack.c.h.b16 %v6006
    %v6097 = vunpack.c.l.b16 %v6007
    %v6098 = vunpack.c.l.b16 %v6008
    %v6099 = vunpack.c.h.b16 %v6008
    %v6100 = vunpack.c.l.b16 %v6009
    %v6101 = vunpack.c.l.b16 %v6010
    %v6102 = vunpack.c.h.b16 %v6010
    %v6103 = vunpack.c.l.b16 %v6011
    %v6104 = vunpack.c.l.b16 %v6012
    %v6105 = vunpack.c.h.b16 %v6012
    %v6106 = vunpack.c.l.b16 %v6013
    %v6107 = vunpack.c.l.b16 %v6014
    %v6108 = vunpack.c.h.b16 %v6014
    %v6109 = vunpack.c.l.b16 %v6015
    %v6110 = vunpack.c.l.b16 %v6016
    %v6111 = vunpack.c.h.b16 %v6016
    %v6112 = vunpack.c.l.b16 %v6017
    %v6113 = vunpack.c.l.b16 %v6018
    %v6114 = vunpack.c.h.b16 %v6018
    %v6115 = vunpack.c.l.b16 %v6019
    %v6116 = vpack.c.b16 %v6071, %v6068
    %v6117 = vpack.c.b16 %v6072, %v6069
    %v6118 = vpack.c.b16 %v6073, %v6070
    %v6119 = vpack.c.b16 %v6077, %v6074
    %v6120 = vpack.c.b16 %v6078, %v6075
    %v6121 = vpack.c.b16 %v6079, %v6076
    %v6122 = vpack.c.b16 %v6083, %v6080
    %v6123 = vpack.c.b16 %v6084, %v6081
    %v6124 = vpack.c.b16 %v6085, %v6082
    %v6125 = vpack.c.b16 %v6089, %v6086
    %v6126 = vpack.c.b16 %v6090, %v6087
    %v6127 = vpack.c.b16 %v6091, %v6088
    %v6128 = vpack.c.b16 %v6095, %v6092
    %v6129 = vpack.c.b16 %v6096, %v6093
    %v6130 = vpack.c.b16 %v6097, %v6094
    %v6131 = vpack.c.b16 %v6101, %v6098
    %v6132 = vpack.c.b16 %v6102, %v6099
    %v6133 = vpack.c.b16 %v6103, %v6100
    %v6134 = vpack.c.b16 %v6107, %v6104
    %v6135 = vpack.c.b16 %v6108, %v6105
    %v6136 = vpack.c.b16 %v6109, %v6106
    %v6137 = vpack.c.b16 %v6113, %v6110
    %v6138 = vpack.c.b16 %v6114, %v6111
    %v6139 = vpack.c.b16 %v6115, %v6112
    %6164 = vmatprep.subr.bf16.mxu0 %v6138
    %6165 = vmatpush1.bf16.msra.mxu0 %v6137
    %6166 = vmatprep.subr.bf16.mxu0 %v6135
    %6167 = vmatpush1.bf16.msra.mxu0 %v6134
    %6168 = vmatprep.subr.bf16.mxu0 %v6132
    %6169 = vmatpush1.bf16.msra.mxu0 %v6131
    %6170 = vmatprep.subr.bf16.mxu0 %v6129
    %6171 = vmatpush1.bf16.msra.mxu0 %v6128
    %6172 = vmatprep.subr.bf16.mxu0 %v6126
    %6173 = vmatpush1.bf16.msra.mxu0 %v6125
    %6174 = vmatprep.subr.bf16.mxu0 %v6123
    %6175 = vmatpush1.bf16.msra.mxu0 %v6122
    %6176 = vmatprep.subr.bf16.mxu0 %v6120
    %6177 = vmatpush1.bf16.msra.mxu0 %v6119
    %6178 = vmatprep.subr.bf16.mxu0 %v6117
    %6179 = vmatpush1.bf16.msra.mxu0 %v6116
    %6180 = vmatprep.subr.bf16.mxu0 0
    %6181 = vmatpush2.bf16.msra.mxu0 0
    %6182 = vmatprep.subr.bf16.mxu0 0
    %6183 = vmatpush2.bf16.msra.mxu0 0
    %6184 = vmatprep.subr.bf16.mxu0 0
    %6185 = vmatpush2.bf16.msra.mxu0 0
    %6186 = vmatprep.subr.bf16.mxu0 0
    %6187 = vmatpush2.bf16.msra.mxu0 0
    %6188 = vmatprep.subr.bf16.mxu0 0
    %6189 = vmatpush2.bf16.msra.mxu0 0
    %6190 = vmatprep.subr.bf16.mxu0 0
    %6191 = vmatpush2.bf16.msra.mxu0 0
    %6192 = vmatprep.subr.bf16.mxu0 0
    %6193 = vmatpush2.bf16.msra.mxu0 0
    %6194 = vmatprep.subr.bf16.mxu0 0
    %6195 = vmatpush2.bf16.msra.mxu0 0
    %6196 = vmatprep.mubr.bf16.mxu0 0
    %6197 = vmatmul.mubr.bf16.gmra.mxu0 0
    %v6198 = vpop.f32.mrf.mxu0
    %v6199 = vadd.f32 %v6024, %v6198
    %v6200 = vpop.f32.mrf.mxu0
    %v6201 = vadd.f32 %v6028, %v6200
    %v6202 = vpop.f32.mrf.mxu0
    %v6203 = vpop.f32.mrf.mxu0
    %6204 = vdwg.mxu0
    %6205 = vmatprep.subr.bf16.mxu0 0
    %6206 = vmatpush1.bf16.msra.mxu0 %v6139
    %6207 = vmatprep.subr.bf16.mxu0 0
    %6208 = vmatpush1.bf16.msra.mxu0 %v6136
    %6209 = vmatprep.subr.bf16.mxu0 0
    %6210 = vmatpush1.bf16.msra.mxu0 %v6133
    %6211 = vmatprep.subr.bf16.mxu0 0
    %6212 = vmatpush1.bf16.msra.mxu0 %v6130
    %6213 = vmatprep.subr.bf16.mxu0 0
    %6214 = vmatpush1.bf16.msra.mxu0 %v6127
    %6215 = vmatprep.subr.bf16.mxu0 0
    %6216 = vmatpush1.bf16.msra.mxu0 %v6124
    %6217 = vmatprep.subr.bf16.mxu0 0
    %6218 = vmatpush1.bf16.msra.mxu0 %v6121
    %6219 = vmatprep.subr.bf16.mxu0 0
    %6220 = vmatpush1.bf16.msra.mxu0 %v6118
    %6221 = vmatprep.subr.bf16.mxu0 0
    %6222 = vmatpush2.bf16.msra.mxu0 0
    %6223 = vmatprep.subr.bf16.mxu0 0
    %6224 = vmatpush2.bf16.msra.mxu0 0
    %6225 = vmatprep.subr.bf16.mxu0 0
    %6226 = vmatpush2.bf16.msra.mxu0 0
    %6227 = vmatprep.subr.bf16.mxu0 0
    %6228 = vmatpush2.bf16.msra.mxu0 0
    %6229 = vmatprep.subr.bf16.mxu0 0
    %6230 = vmatpush2.bf16.msra.mxu0 0
    %6231 = vmatprep.subr.bf16.mxu0 0
    %6232 = vmatpush2.bf16.msra.mxu0 0
    %6233 = vmatprep.subr.bf16.mxu0 0
    %6234 = vmatpush2.bf16.msra.mxu0 0
    %6235 = vmatprep.subr.bf16.mxu0 0
    %6236 = vmatpush2.bf16.msra.mxu0 0
    %6237 = vmatprep.mubr.bf16.mxu0 0
    %6238 = vmatmul.mubr.bf16.gmra.mxu0 0
    %v6239 = vpop.f32.mrf.mxu0
    %v6240 = vadd.f32 %v6032, %v6239
    %v6241 = vpop.f32.mrf.mxu0
    %v6242 = vpop.f32.mrf.mxu0
    %v6243 = vpop.f32.mrf.mxu0
    %6244 = vdwg.mxu0
    %v6245 = vld [vmem:[#allocation2] sm:$0xff]
    %v6246 = vld [vmem:[#allocation2 + $0x8] sm:$0xff]
    %v6247 = vld [vmem:[#allocation2 + $0x10] sm:$0xff]
    %v6248 = vadd.f32 %v6245, %v6199
    %v6249 = vxor.u32 %v6248, 2147483648
    %v6250 = vmul.f32 %v6249, 1.442695
    %v6251 = vpow.pop %v6250
    %v6252 = vadd.f32 %v6251, 1.0
    %v6253 = vrcp.pop %v6252
    %v6254 = vmul.f32 1.0, %v6253
    %v6255 = vadd.f32 %v6246, %v6201
    %v6256 = vxor.u32 %v6255, 2147483648
    %v6257 = vmul.f32 %v6256, 1.442695
    %v6258 = vpow.pop %v6257
    %v6259 = vadd.f32 %v6258, 1.0
    %v6260 = vrcp.pop %v6259
    %v6261 = vmul.f32 1.0, %v6260
    %v6262 = vmul.f32 %v6254, %v6240
    %v6263 = vadd.f32 %v6247, %v6262
    %v6264 = vtanh.pop %v6263
    %v6265 = vsub.f32 1.0, %v6261
    %v6266 = vmul.f32 %v6265, %v6264
    %v6267 = vmul.f32 %v6261, 0.0
    %v6268 = vadd.f32 %v6266, %v6267
    %v6269 = vsel %vm70, %v6268, 0.0
    %v6270 = vld [vmem:[%s15] sm:$0xff]
    %v6271 = vld [vmem:[%s15 + $0x8] sm:$0xf]
    %v6272 = vld [vmem:[%s15 + $0xc] sm:$0xff]
    %v6273 = vld [vmem:[%s15 + $0x14] sm:$0xf]
    %v6274 = vld [vmem:[%s15 + $0x18] sm:$0xff]
    %v6275 = vld [vmem:[%s15 + $0x20] sm:$0xf]
    %v6276 = vld [vmem:[%s15 + $0x24] sm:$0xff]
    %v6277 = vld [vmem:[%s15 + $0x2c] sm:$0xf]
    %v6278 = vld [vmem:[%s15 + $0x30] sm:$0xff]
    %v6279 = vld [vmem:[%s15 + $0x38] sm:$0xf]
    %v6280 = vld [vmem:[%s15 + $0x3c] sm:$0xff]
    %v6281 = vld [vmem:[%s15 + $0x44] sm:$0xf]
    %v6282 = vld [vmem:[%s15 + $0x48] sm:$0xff]
    %v6283 = vld [vmem:[%s15 + $0x50] sm:$0xf]
    %v6284 = vld [vmem:[%s15 + $0x54] sm:$0xff]
    %v6285 = vld [vmem:[%s15 + $0x5c] sm:$0xf]
    %v6286 = vld [vmem:[%s15 + $0x60] sm:$0xff]
    %v6287 = vld [vmem:[%s15 + $0x68] sm:$0xf]
    %v6288 = vld [vmem:[%s15 + $0x6c] sm:$0xff]
    %v6289 = vld [vmem:[%s15 + $0x74] sm:$0xf]
    %v6290 = vld [vmem:[%s15 + $0x78] sm:$0xff]
    %v6291 = vld [vmem:[%s15 + $0x80] sm:$0xf]
    %v6292 = vld [vmem:[%s15 + $0x84] sm:$0xff]
    %v6293 = vld [vmem:[%s15 + $0x8c] sm:$0xf]
    %v6294 = vld [vmem:[%s15 + $0x90] sm:$0xff]
    %v6295 = vld [vmem:[%s15 + $0x98] sm:$0xf]
    %v6296 = vld [vmem:[%s15 + $0x9c] sm:$0xff]
    %v6297 = vld [vmem:[%s15 + $0xa4] sm:$0xf]
    %v6298 = vld [vmem:[%s15 + $0xa8] sm:$0xff]
    %v6299 = vld [vmem:[%s15 + $0xb0] sm:$0xf]
    %v6300 = vld [vmem:[%s15 + $0xb4] sm:$0xff]
    %v6301 = vld [vmem:[%s15 + $0xbc] sm:$0xf]
    %v6303 = vlaneseq
    %v6304 = vshrl.u32 %v6303, 7
    %v6305 = vsub.s32 0, %v6304
    %v6306 = vrot.slane %v5987, %v6305
    %v6307 = vlaneseq
    %v6308 = vshrl.u32 %v6307, 7
    %v6309 = vsub.s32 1, %v6308
    %v6310 = vrot.slane %v5987, %v6309
    %v6311 = vlaneseq
    %v6312 = vshrl.u32 %v6311, 7
    %v6313 = vsub.s32 2, %v6312
    %v6314 = vrot.slane %v5987, %v6313
    %v6350 = vunpack.c.l.b16 %v6270
    %v6351 = vunpack.c.h.b16 %v6270
    %v6352 = vunpack.c.l.b16 %v6271
    %v6353 = vunpack.c.l.b16 %v6272
    %v6354 = vunpack.c.h.b16 %v6272
    %v6355 = vunpack.c.l.b16 %v6273
    %v6356 = vunpack.c.l.b16 %v6274
    %v6357 = vunpack.c.h.b16 %v6274
    %v6358 = vunpack.c.l.b16 %v6275
    %v6359 = vunpack.c.l.b16 %v6276
    %v6360 = vunpack.c.h.b16 %v6276
    %v6361 = vunpack.c.l.b16 %v6277
    %v6362 = vunpack.c.l.b16 %v6278
    %v6363 = vunpack.c.h.b16 %v6278
    %v6364 = vunpack.c.l.b16 %v6279
    %v6365 = vunpack.c.l.b16 %v6280
    %v6366 = vunpack.c.h.b16 %v6280
    %v6367 = vunpack.c.l.b16 %v6281
    %v6368 = vunpack.c.l.b16 %v6282
    %v6369 = vunpack.c.h.b16 %v6282
    %v6370 = vunpack.c.l.b16 %v6283
    %v6371 = vunpack.c.l.b16 %v6284
    %v6372 = vunpack.c.h.b16 %v6284
    %v6373 = vunpack.c.l.b16 %v6285
    %v6374 = vunpack.c.l.b16 %v6286
    %v6375 = vunpack.c.h.b16 %v6286
    %v6376 = vunpack.c.l.b16 %v6287
    %v6377 = vunpack.c.l.b16 %v6288
    %v6378 = vunpack.c.h.b16 %v6288
    %v6379 = vunpack.c.l.b16 %v6289
    %v6380 = vunpack.c.l.b16 %v6290
    %v6381 = vunpack.c.h.b16 %v6290
    %v6382 = vunpack.c.l.b16 %v6291
    %v6383 = vunpack.c.l.b16 %v6292
    %v6384 = vunpack.c.h.b16 %v6292
    %v6385 = vunpack.c.l.b16 %v6293
    %v6386 = vunpack.c.l.b16 %v6294
    %v6387 = vunpack.c.h.b16 %v6294
    %v6388 = vunpack.c.l.b16 %v6295
    %v6389 = vunpack.c.l.b16 %v6296
    %v6390 = vunpack.c.h.b16 %v6296
    %v6391 = vunpack.c.l.b16 %v6297
    %v6392 = vunpack.c.l.b16 %v6298
    %v6393 = vunpack.c.h.b16 %v6298
    %v6394 = vunpack.c.l.b16 %v6299
    %v6395 = vunpack.c.l.b16 %v6300
    %v6396 = vunpack.c.h.b16 %v6300
    %v6397 = vunpack.c.l.b16 %v6301
    %v6398 = vpack.c.b16 %v6353, %v6350
    %v6399 = vpack.c.b16 %v6354, %v6351
    %v6400 = vpack.c.b16 %v6355, %v6352
    %v6401 = vpack.c.b16 %v6359, %v6356
    %v6402 = vpack.c.b16 %v6360, %v6357
    %v6403 = vpack.c.b16 %v6361, %v6358
    %v6404 = vpack.c.b16 %v6365, %v6362
    %v6405 = vpack.c.b16 %v6366, %v6363
    %v6406 = vpack.c.b16 %v6367, %v6364
    %v6407 = vpack.c.b16 %v6371, %v6368
    %v6408 = vpack.c.b16 %v6372, %v6369
    %v6409 = vpack.c.b16 %v6373, %v6370
    %v6410 = vpack.c.b16 %v6377, %v6374
    %v6411 = vpack.c.b16 %v6378, %v6375
    %v6412 = vpack.c.b16 %v6379, %v6376
    %v6413 = vpack.c.b16 %v6383, %v6380
    %v6414 = vpack.c.b16 %v6384, %v6381
    %v6415 = vpack.c.b16 %v6385, %v6382
    %v6416 = vpack.c.b16 %v6389, %v6386
    %v6417 = vpack.c.b16 %v6390, %v6387
    %v6418 = vpack.c.b16 %v6391, %v6388
    %v6419 = vpack.c.b16 %v6395, %v6392
    %v6420 = vpack.c.b16 %v6396, %v6393
    %v6421 = vpack.c.b16 %v6397, %v6394
    %6446 = vmatprep.subr.bf16.mxu0 %v6420
    %6447 = vmatpush1.bf16.msra.mxu0 %v6419
    %6448 = vmatprep.subr.bf16.mxu0 %v6417
    %6449 = vmatpush1.bf16.msra.mxu0 %v6416
    %6450 = vmatprep.subr.bf16.mxu0 %v6414
    %6451 = vmatpush1.bf16.msra.mxu0 %v6413
    %6452 = vmatprep.subr.bf16.mxu0 %v6411
    %6453 = vmatpush1.bf16.msra.mxu0 %v6410
    %6454 = vmatprep.subr.bf16.mxu0 %v6408
    %6455 = vmatpush1.bf16.msra.mxu0 %v6407
    %6456 = vmatprep.subr.bf16.mxu0 %v6405
    %6457 = vmatpush1.bf16.msra.mxu0 %v6404
    %6458 = vmatprep.subr.bf16.mxu0 %v6402
    %6459 = vmatpush1.bf16.msra.mxu0 %v6401
    %6460 = vmatprep.subr.bf16.mxu0 %v6399
    %6461 = vmatpush1.bf16.msra.mxu0 %v6398
    %6462 = vmatprep.subr.bf16.mxu0 0
    %6463 = vmatpush2.bf16.msra.mxu0 0
    %6464 = vmatprep.subr.bf16.mxu0 0
    %6465 = vmatpush2.bf16.msra.mxu0 0
    %6466 = vmatprep.subr.bf16.mxu0 0
    %6467 = vmatpush2.bf16.msra.mxu0 0
    %6468 = vmatprep.subr.bf16.mxu0 0
    %6469 = vmatpush2.bf16.msra.mxu0 0
    %6470 = vmatprep.subr.bf16.mxu0 0
    %6471 = vmatpush2.bf16.msra.mxu0 0
    %6472 = vmatprep.subr.bf16.mxu0 0
    %6473 = vmatpush2.bf16.msra.mxu0 0
    %6474 = vmatprep.subr.bf16.mxu0 0
    %6475 = vmatpush2.bf16.msra.mxu0 0
    %6476 = vmatprep.subr.bf16.mxu0 0
    %6477 = vmatpush2.bf16.msra.mxu0 0
    %6478 = vmatprep.mubr.bf16.mxu0 0
    %6479 = vmatmul.mubr.bf16.gmra.mxu0 0
    %v6480 = vpop.f32.mrf.mxu0
    %v6481 = vadd.f32 %v6306, %v6480
    %v6482 = vpop.f32.mrf.mxu0
    %v6483 = vadd.f32 %v6310, %v6482
    %v6484 = vpop.f32.mrf.mxu0
    %v6485 = vpop.f32.mrf.mxu0
    %6486 = vdwg.mxu0
    %6487 = vmatprep.subr.bf16.mxu0 0
    %6488 = vmatpush1.bf16.msra.mxu0 %v6421
    %6489 = vmatprep.subr.bf16.mxu0 0
    %6490 = vmatpush1.bf16.msra.mxu0 %v6418
    %6491 = vmatprep.subr.bf16.mxu0 0
    %6492 = vmatpush1.bf16.msra.mxu0 %v6415
    %6493 = vmatprep.subr.bf16.mxu0 0
    %6494 = vmatpush1.bf16.msra.mxu0 %v6412
    %6495 = vmatprep.subr.bf16.mxu0 0
    %6496 = vmatpush1.bf16.msra.mxu0 %v6409
    %6497 = vmatprep.subr.bf16.mxu0 0
    %6498 = vmatpush1.bf16.msra.mxu0 %v6406
    %6499 = vmatprep.subr.bf16.mxu0 0
    %6500 = vmatpush1.bf16.msra.mxu0 %v6403
    %6501 = vmatprep.subr.bf16.mxu0 0
    %6502 = vmatpush1.bf16.msra.mxu0 %v6400
    %6503 = vmatprep.subr.bf16.mxu0 0
    %6504 = vmatpush2.bf16.msra.mxu0 0
    %6505 = vmatprep.subr.bf16.mxu0 0
    %6506 = vmatpush2.bf16.msra.mxu0 0
    %6507 = vmatprep.subr.bf16.mxu0 0
    %6508 = vmatpush2.bf16.msra.mxu0 0
    %6509 = vmatprep.subr.bf16.mxu0 0
    %6510 = vmatpush2.bf16.msra.mxu0 0
    %6511 = vmatprep.subr.bf16.mxu0 0
    %6512 = vmatpush2.bf16.msra.mxu0 0
    %6513 = vmatprep.subr.bf16.mxu0 0
    %6514 = vmatpush2.bf16.msra.mxu0 0
    %6515 = vmatprep.subr.bf16.mxu0 0
    %6516 = vmatpush2.bf16.msra.mxu0 0
    %6517 = vmatprep.subr.bf16.mxu0 0
    %6518 = vmatpush2.bf16.msra.mxu0 0
    %6519 = vmatprep.mubr.bf16.mxu0 0
    %6520 = vmatmul.mubr.bf16.gmra.mxu0 0
    %v6521 = vpop.f32.mrf.mxu0
    %v6522 = vadd.f32 %v6314, %v6521
    %v6523 = vpop.f32.mrf.mxu0
    %v6524 = vpop.f32.mrf.mxu0
    %v6525 = vpop.f32.mrf.mxu0
    %6526 = vdwg.mxu0
    %v6527 = vld [vmem:[#allocation3 + $0xa8] sm:$0xff]
    %v6528 = vld [vmem:[#allocation3 + $0xb0] sm:$0xff]
    %v6529 = vld [vmem:[#allocation3 + $0xb8] sm:$0xff]
    %v6530 = vadd.f32 %v6527, %v6481
    %v6531 = vxor.u32 %v6530, 2147483648
    %v6532 = vmul.f32 %v6531, 1.442695
    %v6533 = vpow.pop %v6532
    %v6534 = vadd.f32 %v6533, 1.0
    %v6535 = vrcp.pop %v6534
    %v6536 = vmul.f32 1.0, %v6535
    %v6537 = vadd.f32 %v6528, %v6483
    %v6538 = vxor.u32 %v6537, 2147483648
    %v6539 = vmul.f32 %v6538, 1.442695
    %v6540 = vpow.pop %v6539
    %v6541 = vadd.f32 %v6540, 1.0
    %v6542 = vrcp.pop %v6541
    %v6543 = vmul.f32 1.0, %v6542
    %v6544 = vmul.f32 %v6536, %v6522
    %v6545 = vadd.f32 %v6529, %v6544
    %v6546 = vtanh.pop %v6545
    %v6547 = vsub.f32 1.0, %v6543
    %v6548 = vmul.f32 %v6547, %v6546
    %v6549 = vmul.f32 %v6543, 0.0
    %v6550 = vadd.f32 %v6548, %v6549
    %v6551 = vsel %vm112, %v6550, 0.0
    %6552 = vst [vmem:[#allocation6] sm:$0xff] %v6269
    %6553 = vst [vmem:[#allocation5 + $0x38] sm:$0xff] %v6551
    %v6554 = vpack.c.bf16 %v6269, %v6269
    %v6555 = vld [vmem:[%s11] sm:$0xff]
    %v6556 = vld [vmem:[%s11 + $0x8] sm:$0xf]
    %v6557 = vld [vmem:[%s11 + $0xc] sm:$0xff]
    %v6558 = vld [vmem:[%s11 + $0x14] sm:$0xf]
    %v6559 = vld [vmem:[%s11 + $0x18] sm:$0xff]
    %v6560 = vld [vmem:[%s11 + $0x20] sm:$0xf]
    %v6561 = vld [vmem:[%s11 + $0x24] sm:$0xff]
    %v6562 = vld [vmem:[%s11 + $0x2c] sm:$0xf]
    %v6563 = vld [vmem:[%s11 + $0x30] sm:$0xff]
    %v6564 = vld [vmem:[%s11 + $0x38] sm:$0xf]
    %v6565 = vld [vmem:[%s11 + $0x3c] sm:$0xff]
    %v6566 = vld [vmem:[%s11 + $0x44] sm:$0xf]
    %v6567 = vld [vmem:[%s11 + $0x48] sm:$0xff]
    %v6568 = vld [vmem:[%s11 + $0x50] sm:$0xf]
    %v6569 = vld [vmem:[%s11 + $0x54] sm:$0xff]
    %v6570 = vld [vmem:[%s11 + $0x5c] sm:$0xf]
    %v6571 = vld [vmem:[%s11 + $0x60] sm:$0xff]
    %v6572 = vld [vmem:[%s11 + $0x68] sm:$0xf]
    %v6573 = vld [vmem:[%s11 + $0x6c] sm:$0xff]
    %v6574 = vld [vmem:[%s11 + $0x74] sm:$0xf]
    %v6575 = vld [vmem:[%s11 + $0x78] sm:$0xff]
    %v6576 = vld [vmem:[%s11 + $0x80] sm:$0xf]
    %v6577 = vld [vmem:[%s11 + $0x84] sm:$0xff]
    %v6578 = vld [vmem:[%s11 + $0x8c] sm:$0xf]
    %v6579 = vld [vmem:[%s11 + $0x90] sm:$0xff]
    %v6580 = vld [vmem:[%s11 + $0x98] sm:$0xf]
    %v6581 = vld [vmem:[%s11 + $0x9c] sm:$0xff]
    %v6582 = vld [vmem:[%s11 + $0xa4] sm:$0xf]
    %v6583 = vld [vmem:[%s11 + $0xa8] sm:$0xff]
    %v6584 = vld [vmem:[%s11 + $0xb0] sm:$0xf]
    %v6585 = vld [vmem:[%s11 + $0xb4] sm:$0xff]
    %v6586 = vld [vmem:[%s11 + $0xbc] sm:$0xf]
    %v6619 = vunpack.c.l.b16 %v6555
    %v6620 = vunpack.c.h.b16 %v6555
    %v6621 = vunpack.c.l.b16 %v6556
    %v6622 = vunpack.c.l.b16 %v6557
    %v6623 = vunpack.c.h.b16 %v6557
    %v6624 = vunpack.c.l.b16 %v6558
    %v6625 = vunpack.c.l.b16 %v6559
    %v6626 = vunpack.c.h.b16 %v6559
    %v6627 = vunpack.c.l.b16 %v6560
    %v6628 = vunpack.c.l.b16 %v6561
    %v6629 = vunpack.c.h.b16 %v6561
    %v6630 = vunpack.c.l.b16 %v6562
    %v6631 = vunpack.c.l.b16 %v6563
    %v6632 = vunpack.c.h.b16 %v6563
    %v6633 = vunpack.c.l.b16 %v6564
    %v6634 = vunpack.c.l.b16 %v6565
    %v6635 = vunpack.c.h.b16 %v6565
    %v6636 = vunpack.c.l.b16 %v6566
    %v6637 = vunpack.c.l.b16 %v6567
    %v6638 = vunpack.c.h.b16 %v6567
    %v6639 = vunpack.c.l.b16 %v6568
    %v6640 = vunpack.c.l.b16 %v6569
    %v6641 = vunpack.c.h.b16 %v6569
    %v6642 = vunpack.c.l.b16 %v6570
    %v6643 = vunpack.c.l.b16 %v6571
    %v6644 = vunpack.c.h.b16 %v6571
    %v6645 = vunpack.c.l.b16 %v6572
    %v6646 = vunpack.c.l.b16 %v6573
    %v6647 = vunpack.c.h.b16 %v6573
    %v6648 = vunpack.c.l.b16 %v6574
    %v6649 = vunpack.c.l.b16 %v6575
    %v6650 = vunpack.c.h.b16 %v6575
    %v6651 = vunpack.c.l.b16 %v6576
    %v6652 = vunpack.c.l.b16 %v6577
    %v6653 = vunpack.c.h.b16 %v6577
    %v6654 = vunpack.c.l.b16 %v6578
    %v6655 = vunpack.c.l.b16 %v6579
    %v6656 = vunpack.c.h.b16 %v6579
    %v6657 = vunpack.c.l.b16 %v6580
    %v6658 = vunpack.c.l.b16 %v6581
    %v6659 = vunpack.c.h.b16 %v6581
    %v6660 = vunpack.c.l.b16 %v6582
    %v6661 = vunpack.c.l.b16 %v6583
    %v6662 = vunpack.c.h.b16 %v6583
    %v6663 = vunpack.c.l.b16 %v6584
    %v6664 = vunpack.c.l.b16 %v6585
    %v6665 = vunpack.c.h.b16 %v6585
    %v6666 = vunpack.c.l.b16 %v6586
    %v6667 = vpack.c.b16 %v6622, %v6619
    %v6668 = vpack.c.b16 %v6623, %v6620
    %v6669 = vpack.c.b16 %v6624, %v6621
    %v6670 = vpack.c.b16 %v6628, %v6625
    %v6671 = vpack.c.b16 %v6629, %v6626
    %v6672 = vpack.c.b16 %v6630, %v6627
    %v6673 = vpack.c.b16 %v6634, %v6631
    %v6674 = vpack.c.b16 %v6635, %v6632
    %v6675 = vpack.c.b16 %v6636, %v6633
    %v6676 = vpack.c.b16 %v6640, %v6637
    %v6677 = vpack.c.b16 %v6641, %v6638
    %v6678 = vpack.c.b16 %v6642, %v6639
    %v6679 = vpack.c.b16 %v6646, %v6643
    %v6680 = vpack.c.b16 %v6647, %v6644
    %v6681 = vpack.c.b16 %v6648, %v6645
    %v6682 = vpack.c.b16 %v6652, %v6649
    %v6683 = vpack.c.b16 %v6653, %v6650
    %v6684 = vpack.c.b16 %v6654, %v6651
    %v6685 = vpack.c.b16 %v6658, %v6655
    %v6686 = vpack.c.b16 %v6659, %v6656
    %v6687 = vpack.c.b16 %v6660, %v6657
    %v6688 = vpack.c.b16 %v6664, %v6661
    %v6689 = vpack.c.b16 %v6665, %v6662
    %v6690 = vpack.c.b16 %v6666, %v6663
    %6715 = vmatprep.subr.bf16.mxu0 %v6689
    %6716 = vmatpush1.bf16.msra.mxu0 %v6688
    %6717 = vmatprep.subr.bf16.mxu0 %v6686
    %6718 = vmatpush1.bf16.msra.mxu0 %v6685
    %6719 = vmatprep.subr.bf16.mxu0 %v6683
    %6720 = vmatpush1.bf16.msra.mxu0 %v6682
    %6721 = vmatprep.subr.bf16.mxu0 %v6680
    %6722 = vmatpush1.bf16.msra.mxu0 %v6679
    %6723 = vmatprep.subr.bf16.mxu0 %v6677
    %6724 = vmatpush1.bf16.msra.mxu0 %v6676
    %6725 = vmatprep.subr.bf16.mxu0 %v6674
    %6726 = vmatpush1.bf16.msra.mxu0 %v6673
    %6727 = vmatprep.subr.bf16.mxu0 %v6671
    %6728 = vmatpush1.bf16.msra.mxu0 %v6670
    %6729 = vmatprep.subr.bf16.mxu0 %v6668
    %6730 = vmatpush1.bf16.msra.mxu0 %v6667
    %6731 = vmatprep.subr.bf16.mxu0 0
    %6732 = vmatpush2.bf16.msra.mxu0 0
    %6733 = vmatprep.subr.bf16.mxu0 0
    %6734 = vmatpush2.bf16.msra.mxu0 0
    %6735 = vmatprep.subr.bf16.mxu0 0
    %6736 = vmatpush2.bf16.msra.mxu0 0
    %6737 = vmatprep.subr.bf16.mxu0 0
    %6738 = vmatpush2.bf16.msra.mxu0 0
    %6739 = vmatprep.subr.bf16.mxu0 0
    %6740 = vmatpush2.bf16.msra.mxu0 0
    %6741 = vmatprep.subr.bf16.mxu0 0
    %6742 = vmatpush2.bf16.msra.mxu0 0
    %6743 = vmatprep.subr.bf16.mxu0 0
    %6744 = vmatpush2.bf16.msra.mxu0 0
    %6745 = vmatprep.subr.bf16.mxu0 0
    %6746 = vmatpush2.bf16.msra.mxu0 0
    %6747 = vmatprep.mubr.bf16.mxu0 0
    %6748 = vmatmul.mubr.bf16.gmra.mxu0 %v6554
    %v6749 = vpop.f32.mrf.mxu0
    %v6750 = vadd.f32 %v6024, %v6749
    %v6751 = vpop.f32.mrf.mxu0
    %v6752 = vadd.f32 %v6028, %v6751
    %v6753 = vpop.f32.mrf.mxu0
    %v6754 = vpop.f32.mrf.mxu0
    %6755 = vdwg.mxu0
    %6756 = vmatprep.subr.bf16.mxu0 0
    %6757 = vmatpush1.bf16.msra.mxu0 %v6690
    %6758 = vmatprep.subr.bf16.mxu0 0
    %6759 = vmatpush1.bf16.msra.mxu0 %v6687
    %6760 = vmatprep.subr.bf16.mxu0 0
    %6761 = vmatpush1.bf16.msra.mxu0 %v6684
    %6762 = vmatprep.subr.bf16.mxu0 0
    %6763 = vmatpush1.bf16.msra.mxu0 %v6681
    %6764 = vmatprep.subr.bf16.mxu0 0
    %6765 = vmatpush1.bf16.msra.mxu0 %v6678
    %6766 = vmatprep.subr.bf16.mxu0 0
    %6767 = vmatpush1.bf16.msra.mxu0 %v6675
    %6768 = vmatprep.subr.bf16.mxu0 0
    %6769 = vmatpush1.bf16.msra.mxu0 %v6672
    %6770 = vmatprep.subr.bf16.mxu0 0
    %6771 = vmatpush1.bf16.msra.mxu0 %v6669
    %6772 = vmatprep.subr.bf16.mxu0 0
    %6773 = vmatpush2.bf16.msra.mxu0 0
    %6774 = vmatprep.subr.bf16.mxu0 0
    %6775 = vmatpush2.bf16.msra.mxu0 0
    %6776 = vmatprep.subr.bf16.mxu0 0
    %6777 = vmatpush2.bf16.msra.mxu0 0
    %6778 = vmatprep.subr.bf16.mxu0 0
    %6779 = vmatpush2.bf16.msra.mxu0 0
    %6780 = vmatprep.subr.bf16.mxu0 0
    %6781 = vmatpush2.bf16.msra.mxu0 0
    %6782 = vmatprep.subr.bf16.mxu0 0
    %6783 = vmatpush2.bf16.msra.mxu0 0
    %6784 = vmatprep.subr.bf16.mxu0 0
    %6785 = vmatpush2.bf16.msra.mxu0 0
    %6786 = vmatprep.subr.bf16.mxu0 0
    %6787 = vmatpush2.bf16.msra.mxu0 0
    %6788 = vmatprep.mubr.bf16.mxu0 0
    %6789 = vmatmul.mubr.bf16.gmra.mxu0 %v6554
    %v6790 = vpop.f32.mrf.mxu0
    %v6791 = vadd.f32 %v6032, %v6790
    %v6792 = vpop.f32.mrf.mxu0
    %v6793 = vpop.f32.mrf.mxu0
    %v6794 = vpop.f32.mrf.mxu0
    %6795 = vdwg.mxu0
    %v6796 = vld [vmem:[#allocation2 + $0x18] sm:$0xff]
    %v6797 = vld [vmem:[#allocation2 + $0x20] sm:$0xff]
    %v6798 = vld [vmem:[#allocation2 + $0x28] sm:$0xff]
    %v6799 = vadd.f32 %v6796, %v6750
    %v6800 = vxor.u32 %v6799, 2147483648
    %v6801 = vmul.f32 %v6800, 1.442695
    %v6802 = vpow.pop %v6801
    %v6803 = vadd.f32 %v6802, 1.0
    %v6804 = vrcp.pop %v6803
    %v6805 = vmul.f32 1.0, %v6804
    %v6806 = vadd.f32 %v6797, %v6752
    %v6807 = vxor.u32 %v6806, 2147483648
    %v6808 = vmul.f32 %v6807, 1.442695
    %v6809 = vpow.pop %v6808
    %v6810 = vadd.f32 %v6809, 1.0
    %v6811 = vrcp.pop %v6810
    %v6812 = vmul.f32 1.0, %v6811
    %v6813 = vmul.f32 %v6805, %v6791
    %v6814 = vadd.f32 %v6798, %v6813
    %v6815 = vtanh.pop %v6814
    %v6816 = vsub.f32 1.0, %v6812
    %v6817 = vmul.f32 %v6816, %v6815
    %v6818 = vmul.f32 %v6812, %v6269
    %v6819 = vadd.f32 %v6817, %v6818
    %v6820 = vsel %vm76, %v6819, %v6269
    %v6821 = vsel %vm76, %v6819, 0.0
    %v6822 = vpack.c.bf16 %v6551, %v6551
    %v6823 = vld [vmem:[%s15] sm:$0xff]
    %v6824 = vld [vmem:[%s15 + $0x8] sm:$0xf]
    %v6825 = vld [vmem:[%s15 + $0xc] sm:$0xff]
    %v6826 = vld [vmem:[%s15 + $0x14] sm:$0xf]
    %v6827 = vld [vmem:[%s15 + $0x18] sm:$0xff]
    %v6828 = vld [vmem:[%s15 + $0x20] sm:$0xf]
    %v6829 = vld [vmem:[%s15 + $0x24] sm:$0xff]
    %v6830 = vld [vmem:[%s15 + $0x2c] sm:$0xf]
    %v6831 = vld [vmem:[%s15 + $0x30] sm:$0xff]
    %v6832 = vld [vmem:[%s15 + $0x38] sm:$0xf]
    %v6833 = vld [vmem:[%s15 + $0x3c] sm:$0xff]
    %v6834 = vld [vmem:[%s15 + $0x44] sm:$0xf]
    %v6835 = vld [vmem:[%s15 + $0x48] sm:$0xff]
    %v6836 = vld [vmem:[%s15 + $0x50] sm:$0xf]
    %v6837 = vld [vmem:[%s15 + $0x54] sm:$0xff]
    %v6838 = vld [vmem:[%s15 + $0x5c] sm:$0xf]
    %v6839 = vld [vmem:[%s15 + $0x60] sm:$0xff]
    %v6840 = vld [vmem:[%s15 + $0x68] sm:$0xf]
    %v6841 = vld [vmem:[%s15 + $0x6c] sm:$0xff]
    %v6842 = vld [vmem:[%s15 + $0x74] sm:$0xf]
    %v6843 = vld [vmem:[%s15 + $0x78] sm:$0xff]
    %v6844 = vld [vmem:[%s15 + $0x80] sm:$0xf]
    %v6845 = vld [vmem:[%s15 + $0x84] sm:$0xff]
    %v6846 = vld [vmem:[%s15 + $0x8c] sm:$0xf]
    %v6847 = vld [vmem:[%s15 + $0x90] sm:$0xff]
    %v6848 = vld [vmem:[%s15 + $0x98] sm:$0xf]
    %v6849 = vld [vmem:[%s15 + $0x9c] sm:$0xff]
    %v6850 = vld [vmem:[%s15 + $0xa4] sm:$0xf]
    %v6851 = vld [vmem:[%s15 + $0xa8] sm:$0xff]
    %v6852 = vld [vmem:[%s15 + $0xb0] sm:$0xf]
    %v6853 = vld [vmem:[%s15 + $0xb4] sm:$0xff]
    %v6854 = vld [vmem:[%s15 + $0xbc] sm:$0xf]
    %v6887 = vunpack.c.l.b16 %v6823
    %v6888 = vunpack.c.h.b16 %v6823
    %v6889 = vunpack.c.l.b16 %v6824
    %v6890 = vunpack.c.l.b16 %v6825
    %v6891 = vunpack.c.h.b16 %v6825
    %v6892 = vunpack.c.l.b16 %v6826
    %v6893 = vunpack.c.l.b16 %v6827
    %v6894 = vunpack.c.h.b16 %v6827
    %v6895 = vunpack.c.l.b16 %v6828
    %v6896 = vunpack.c.l.b16 %v6829
    %v6897 = vunpack.c.h.b16 %v6829
    %v6898 = vunpack.c.l.b16 %v6830
    %v6899 = vunpack.c.l.b16 %v6831
    %v6900 = vunpack.c.h.b16 %v6831
    %v6901 = vunpack.c.l.b16 %v6832
    %v6902 = vunpack.c.l.b16 %v6833
    %v6903 = vunpack.c.h.b16 %v6833
    %v6904 = vunpack.c.l.b16 %v6834
    %v6905 = vunpack.c.l.b16 %v6835
    %v6906 = vunpack.c.h.b16 %v6835
    %v6907 = vunpack.c.l.b16 %v6836
    %v6908 = vunpack.c.l.b16 %v6837
    %v6909 = vunpack.c.h.b16 %v6837
    %v6910 = vunpack.c.l.b16 %v6838
    %v6911 = vunpack.c.l.b16 %v6839
    %v6912 = vunpack.c.h.b16 %v6839
    %v6913 = vunpack.c.l.b16 %v6840
    %v6914 = vunpack.c.l.b16 %v6841
    %v6915 = vunpack.c.h.b16 %v6841
    %v6916 = vunpack.c.l.b16 %v6842
    %v6917 = vunpack.c.l.b16 %v6843
    %v6918 = vunpack.c.h.b16 %v6843
    %v6919 = vunpack.c.l.b16 %v6844
    %v6920 = vunpack.c.l.b16 %v6845
    %v6921 = vunpack.c.h.b16 %v6845
    %v6922 = vunpack.c.l.b16 %v6846
    %v6923 = vunpack.c.l.b16 %v6847
    %v6924 = vunpack.c.h.b16 %v6847
    %v6925 = vunpack.c.l.b16 %v6848
    %v6926 = vunpack.c.l.b16 %v6849
    %v6927 = vunpack.c.h.b16 %v6849
    %v6928 = vunpack.c.l.b16 %v6850
    %v6929 = vunpack.c.l.b16 %v6851
    %v6930 = vunpack.c.h.b16 %v6851
    %v6931 = vunpack.c.l.b16 %v6852
    %v6932 = vunpack.c.l.b16 %v6853
    %v6933 = vunpack.c.h.b16 %v6853
    %v6934 = vunpack.c.l.b16 %v6854
    %v6935 = vpack.c.b16 %v6890, %v6887
    %v6936 = vpack.c.b16 %v6891, %v6888
    %v6937 = vpack.c.b16 %v6892, %v6889
    %v6938 = vpack.c.b16 %v6896, %v6893
    %v6939 = vpack.c.b16 %v6897, %v6894
    %v6940 = vpack.c.b16 %v6898, %v6895
    %v6941 = vpack.c.b16 %v6902, %v6899
    %v6942 = vpack.c.b16 %v6903, %v6900
    %v6943 = vpack.c.b16 %v6904, %v6901
    %v6944 = vpack.c.b16 %v6908, %v6905
    %v6945 = vpack.c.b16 %v6909, %v6906
    %v6946 = vpack.c.b16 %v6910, %v6907
    %v6947 = vpack.c.b16 %v6914, %v6911
    %v6948 = vpack.c.b16 %v6915, %v6912
    %v6949 = vpack.c.b16 %v6916, %v6913
    %v6950 = vpack.c.b16 %v6920, %v6917
    %v6951 = vpack.c.b16 %v6921, %v6918
    %v6952 = vpack.c.b16 %v6922, %v6919
    %v6953 = vpack.c.b16 %v6926, %v6923
    %v6954 = vpack.c.b16 %v6927, %v6924
    %v6955 = vpack.c.b16 %v6928, %v6925
    %v6956 = vpack.c.b16 %v6932, %v6929
    %v6957 = vpack.c.b16 %v6933, %v6930
    %v6958 = vpack.c.b16 %v6934, %v6931
    %6983 = vmatprep.subr.bf16.mxu0 %v6957
    %6984 = vmatpush1.bf16.msra.mxu0 %v6956
    %6985 = vmatprep.subr.bf16.mxu0 %v6954
    %6986 = vmatpush1.bf16.msra.mxu0 %v6953
    %6987 = vmatprep.subr.bf16.mxu0 %v6951
    %6988 = vmatpush1.bf16.msra.mxu0 %v6950
    %6989 = vmatprep.subr.bf16.mxu0 %v6948
    %6990 = vmatpush1.bf16.msra.mxu0 %v6947
    %6991 = vmatprep.subr.bf16.mxu0 %v6945
    %6992 = vmatpush1.bf16.msra.mxu0 %v6944
    %6993 = vmatprep.subr.bf16.mxu0 %v6942
    %6994 = vmatpush1.bf16.msra.mxu0 %v6941
    %6995 = vmatprep.subr.bf16.mxu0 %v6939
    %6996 = vmatpush1.bf16.msra.mxu0 %v6938
    %6997 = vmatprep.subr.bf16.mxu0 %v6936
    %6998 = vmatpush1.bf16.msra.mxu0 %v6935
    %6999 = vmatprep.subr.bf16.mxu0 0
    %7000 = vmatpush2.bf16.msra.mxu0 0
    %7001 = vmatprep.subr.bf16.mxu0 0
    %7002 = vmatpush2.bf16.msra.mxu0 0
    %7003 = vmatprep.subr.bf16.mxu0 0
    %7004 = vmatpush2.bf16.msra.mxu0 0
    %7005 = vmatprep.subr.bf16.mxu0 0
    %7006 = vmatpush2.bf16.msra.mxu0 0
    %7007 = vmatprep.subr.bf16.mxu0 0
    %7008 = vmatpush2.bf16.msra.mxu0 0
    %7009 = vmatprep.subr.bf16.mxu0 0
    %7010 = vmatpush2.bf16.msra.mxu0 0
    %7011 = vmatprep.subr.bf16.mxu0 0
    %7012 = vmatpush2.bf16.msra.mxu0 0
    %7013 = vmatprep.subr.bf16.mxu0 0
    %7014 = vmatpush2.bf16.msra.mxu0 0
    %7015 = vmatprep.mubr.bf16.mxu0 0
    %7016 = vmatmul.mubr.bf16.gmra.mxu0 %v6822
    %v7017 = vpop.f32.mrf.mxu0
    %v7018 = vadd.f32 %v6306, %v7017
    %v7019 = vpop.f32.mrf.mxu0
    %v7020 = vadd.f32 %v6310, %v7019
    %v7021 = vpop.f32.mrf.mxu0
    %v7022 = vpop.f32.mrf.mxu0
    %7023 = vdwg.mxu0
    %7024 = vmatprep.subr.bf16.mxu0 0
    %7025 = vmatpush1.bf16.msra.mxu0 %v6958
    %7026 = vmatprep.subr.bf16.mxu0 0
    %7027 = vmatpush1.bf16.msra.mxu0 %v6955
    %7028 = vmatprep.subr.bf16.mxu0 0
    %7029 = vmatpush1.bf16.msra.mxu0 %v6952
    %7030 = vmatprep.subr.bf16.mxu0 0
    %7031 = vmatpush1.bf16.msra.mxu0 %v6949
    %7032 = vmatprep.subr.bf16.mxu0 0
    %7033 = vmatpush1.bf16.msra.mxu0 %v6946
    %7034 = vmatprep.subr.bf16.mxu0 0
    %7035 = vmatpush1.bf16.msra.mxu0 %v6943
    %7036 = vmatprep.subr.bf16.mxu0 0
    %7037 = vmatpush1.bf16.msra.mxu0 %v6940
    %7038 = vmatprep.subr.bf16.mxu0 0
    %7039 = vmatpush1.bf16.msra.mxu0 %v6937
    %7040 = vmatprep.subr.bf16.mxu0 0
    %7041 = vmatpush2.bf16.msra.mxu0 0
    %7042 = vmatprep.subr.bf16.mxu0 0
    %7043 = vmatpush2.bf16.msra.mxu0 0
    %7044 = vmatprep.subr.bf16.mxu0 0
    %7045 = vmatpush2.bf16.msra.mxu0 0
    %7046 = vmatprep.subr.bf16.mxu0 0
    %7047 = vmatpush2.bf16.msra.mxu0 0
    %7048 = vmatprep.subr.bf16.mxu0 0
    %7049 = vmatpush2.bf16.msra.mxu0 0
    %7050 = vmatprep.subr.bf16.mxu0 0
    %7051 = vmatpush2.bf16.msra.mxu0 0
    %7052 = vmatprep.subr.bf16.mxu0 0
    %7053 = vmatpush2.bf16.msra.mxu0 0
    %7054 = vmatprep.subr.bf16.mxu0 0
    %7055 = vmatpush2.bf16.msra.mxu0 0
    %7056 = vmatprep.mubr.bf16.mxu0 0
    %7057 = vmatmul.mubr.bf16.gmra.mxu0 %v6822
    %v7058 = vpop.f32.mrf.mxu0
    %v7059 = vadd.f32 %v6314, %v7058
    %v7060 = vpop.f32.mrf.mxu0
    %v7061 = vpop.f32.mrf.mxu0
    %v7062 = vpop.f32.mrf.mxu0
    %7063 = vdwg.mxu0
    %v7064 = vld [vmem:[#allocation3 + $0x90] sm:$0xff]
    %v7065 = vld [vmem:[#allocation3 + $0x98] sm:$0xff]
    %v7066 = vld [vmem:[#allocation3 + $0xa0] sm:$0xff]
    %v7067 = vadd.f32 %v7064, %v7018
    %v7068 = vxor.u32 %v7067, 2147483648
    %v7069 = vmul.f32 %v7068, 1.442695
    %v7070 = vpow.pop %v7069
    %v7071 = vadd.f32 %v7070, 1.0
    %v7072 = vrcp.pop %v7071
    %v7073 = vmul.f32 1.0, %v7072
    %v7074 = vadd.f32 %v7065, %v7020
    %v7075 = vxor.u32 %v7074, 2147483648
    %v7076 = vmul.f32 %v7075, 1.442695
    %v7077 = vpow.pop %v7076
    %v7078 = vadd.f32 %v7077, 1.0
    %v7079 = vrcp.pop %v7078
    %v7080 = vmul.f32 1.0, %v7079
    %v7081 = vmul.f32 %v7073, %v7059
    %v7082 = vadd.f32 %v7066, %v7081
    %v7083 = vtanh.pop %v7082
    %v7084 = vsub.f32 1.0, %v7080
    %v7085 = vmul.f32 %v7084, %v7083
    %v7086 = vmul.f32 %v7080, %v6551
    %v7087 = vadd.f32 %v7085, %v7086
    %v7088 = vsel %vm106, %v7087, %v6551
    %v7089 = vsel %vm106, %v7087, 0.0
    %7090 = vst [vmem:[#allocation6 + $0x8] sm:$0xff] %v6821
    %7091 = vst [vmem:[#allocation5 + $0x30] sm:$0xff] %v7089
    %v7092 = vpack.c.bf16 %v6820, %v6820
    %v7093 = vld [vmem:[%s11] sm:$0xff]
    %v7094 = vld [vmem:[%s11 + $0x8] sm:$0xf]
    %v7095 = vld [vmem:[%s11 + $0xc] sm:$0xff]
    %v7096 = vld [vmem:[%s11 + $0x14] sm:$0xf]
    %v7097 = vld [vmem:[%s11 + $0x18] sm:$0xff]
    %v7098 = vld [vmem:[%s11 + $0x20] sm:$0xf]
    %v7099 = vld [vmem:[%s11 + $0x24] sm:$0xff]
    %v7100 = vld [vmem:[%s11 + $0x2c] sm:$0xf]
    %v7101 = vld [vmem:[%s11 + $0x30] sm:$0xff]
    %v7102 = vld [vmem:[%s11 + $0x38] sm:$0xf]
    %v7103 = vld [vmem:[%s11 + $0x3c] sm:$0xff]
    %v7104 = vld [vmem:[%s11 + $0x44] sm:$0xf]
    %v7105 = vld [vmem:[%s11 + $0x48] sm:$0xff]
    %v7106 = vld [vmem:[%s11 + $0x50] sm:$0xf]
    %v7107 = vld [vmem:[%s11 + $0x54] sm:$0xff]
    %v7108 = vld [vmem:[%s11 + $0x5c] sm:$0xf]
    %v7109 = vld [vmem:[%s11 + $0x60] sm:$0xff]
    %v7110 = vld [vmem:[%s11 + $0x68] sm:$0xf]
    %v7111 = vld [vmem:[%s11 + $0x6c] sm:$0xff]
    %v7112 = vld [vmem:[%s11 + $0x74] sm:$0xf]
    %v7113 = vld [vmem:[%s11 + $0x78] sm:$0xff]
    %v7114 = vld [vmem:[%s11 + $0x80] sm:$0xf]
    %v7115 = vld [vmem:[%s11 + $0x84] sm:$0xff]
    %v7116 = vld [vmem:[%s11 + $0x8c] sm:$0xf]
    %v7117 = vld [vmem:[%s11 + $0x90] sm:$0xff]
    %v7118 = vld [vmem:[%s11 + $0x98] sm:$0xf]
    %v7119 = vld [vmem:[%s11 + $0x9c] sm:$0xff]
    %v7120 = vld [vmem:[%s11 + $0xa4] sm:$0xf]
    %v7121 = vld [vmem:[%s11 + $0xa8] sm:$0xff]
    %v7122 = vld [vmem:[%s11 + $0xb0] sm:$0xf]
    %v7123 = vld [vmem:[%s11 + $0xb4] sm:$0xff]
    %v7124 = vld [vmem:[%s11 + $0xbc] sm:$0xf]
    %v7157 = vunpack.c.l.b16 %v7093
    %v7158 = vunpack.c.h.b16 %v7093
    %v7159 = vunpack.c.l.b16 %v7094
    %v7160 = vunpack.c.l.b16 %v7095
    %v7161 = vunpack.c.h.b16 %v7095
    %v7162 = vunpack.c.l.b16 %v7096
    %v7163 = vunpack.c.l.b16 %v7097
    %v7164 = vunpack.c.h.b16 %v7097
    %v7165 = vunpack.c.l.b16 %v7098
    %v7166 = vunpack.c.l.b16 %v7099
    %v7167 = vunpack.c.h.b16 %v7099
    %v7168 = vunpack.c.l.b16 %v7100
    %v7169 = vunpack.c.l.b16 %v7101
    %v7170 = vunpack.c.h.b16 %v7101
    %v7171 = vunpack.c.l.b16 %v7102
    %v7172 = vunpack.c.l.b16 %v7103
    %v7173 = vunpack.c.h.b16 %v7103
    %v7174 = vunpack.c.l.b16 %v7104
    %v7175 = vunpack.c.l.b16 %v7105
    %v7176 = vunpack.c.h.b16 %v7105
    %v7177 = vunpack.c.l.b16 %v7106
    %v7178 = vunpack.c.l.b16 %v7107
    %v7179 = vunpack.c.h.b16 %v7107
    %v7180 = vunpack.c.l.b16 %v7108
    %v7181 = vunpack.c.l.b16 %v7109
    %v7182 = vunpack.c.h.b16 %v7109
    %v7183 = vunpack.c.l.b16 %v7110
    %v7184 = vunpack.c.l.b16 %v7111
    %v7185 = vunpack.c.h.b16 %v7111
    %v7186 = vunpack.c.l.b16 %v7112
    %v7187 = vunpack.c.l.b16 %v7113
    %v7188 = vunpack.c.h.b16 %v7113
    %v7189 = vunpack.c.l.b16 %v7114
    %v7190 = vunpack.c.l.b16 %v7115
    %v7191 = vunpack.c.h.b16 %v7115
    %v7192 = vunpack.c.l.b16 %v7116
    %v7193 = vunpack.c.l.b16 %v7117
    %v7194 = vunpack.c.h.b16 %v7117
    %v7195 = vunpack.c.l.b16 %v7118
    %v7196 = vunpack.c.l.b16 %v7119
    %v7197 = vunpack.c.h.b16 %v7119
    %v7198 = vunpack.c.l.b16 %v7120
    %v7199 = vunpack.c.l.b16 %v7121
    %v7200 = vunpack.c.h.b16 %v7121
    %v7201 = vunpack.c.l.b16 %v7122
    %v7202 = vunpack.c.l.b16 %v7123
    %v7203 = vunpack.c.h.b16 %v7123
    %v7204 = vunpack.c.l.b16 %v7124
    %v7205 = vpack.c.b16 %v7160, %v7157
    %v7206 = vpack.c.b16 %v7161, %v7158
    %v7207 = vpack.c.b16 %v7162, %v7159
    %v7208 = vpack.c.b16 %v7166, %v7163
    %v7209 = vpack.c.b16 %v7167, %v7164
    %v7210 = vpack.c.b16 %v7168, %v7165
    %v7211 = vpack.c.b16 %v7172, %v7169
    %v7212 = vpack.c.b16 %v7173, %v7170
    %v7213 = vpack.c.b16 %v7174, %v7171
    %v7214 = vpack.c.b16 %v7178, %v7175
    %v7215 = vpack.c.b16 %v7179, %v7176
    %v7216 = vpack.c.b16 %v7180, %v7177
    %v7217 = vpack.c.b16 %v7184, %v7181
    %v7218 = vpack.c.b16 %v7185, %v7182
    %v7219 = vpack.c.b16 %v7186, %v7183
    %v7220 = vpack.c.b16 %v7190, %v7187
    %v7221 = vpack.c.b16 %v7191, %v7188
    %v7222 = vpack.c.b16 %v7192, %v7189
    %v7223 = vpack.c.b16 %v7196, %v7193
    %v7224 = vpack.c.b16 %v7197, %v7194
    %v7225 = vpack.c.b16 %v7198, %v7195
    %v7226 = vpack.c.b16 %v7202, %v7199
    %v7227 = vpack.c.b16 %v7203, %v7200
    %v7228 = vpack.c.b16 %v7204, %v7201
    %7253 = vmatprep.subr.bf16.mxu0 %v7227
    %7254 = vmatpush1.bf16.msra.mxu0 %v7226
    %7255 = vmatprep.subr.bf16.mxu0 %v7224
    %7256 = vmatpush1.bf16.msra.mxu0 %v7223
    %7257 = vmatprep.subr.bf16.mxu0 %v7221
    %7258 = vmatpush1.bf16.msra.mxu0 %v7220
    %7259 = vmatprep.subr.bf16.mxu0 %v7218
    %7260 = vmatpush1.bf16.msra.mxu0 %v7217
    %7261 = vmatprep.subr.bf16.mxu0 %v7215
    %7262 = vmatpush1.bf16.msra.mxu0 %v7214
    %7263 = vmatprep.subr.bf16.mxu0 %v7212
    %7264 = vmatpush1.bf16.msra.mxu0 %v7211
    %7265 = vmatprep.subr.bf16.mxu0 %v7209
    %7266 = vmatpush1.bf16.msra.mxu0 %v7208
    %7267 = vmatprep.subr.bf16.mxu0 %v7206
    %7268 = vmatpush1.bf16.msra.mxu0 %v7205
    %7269 = vmatprep.subr.bf16.mxu0 0
    %7270 = vmatpush2.bf16.msra.mxu0 0
    %7271 = vmatprep.subr.bf16.mxu0 0
    %7272 = vmatpush2.bf16.msra.mxu0 0
    %7273 = vmatprep.subr.bf16.mxu0 0
    %7274 = vmatpush2.bf16.msra.mxu0 0
    %7275 = vmatprep.subr.bf16.mxu0 0
    %7276 = vmatpush2.bf16.msra.mxu0 0
    %7277 = vmatprep.subr.bf16.mxu0 0
    %7278 = vmatpush2.bf16.msra.mxu0 0
    %7279 = vmatprep.subr.bf16.mxu0 0
    %7280 = vmatpush2.bf16.msra.mxu0 0
    %7281 = vmatprep.subr.bf16.mxu0 0
    %7282 = vmatpush2.bf16.msra.mxu0 0
    %7283 = vmatprep.subr.bf16.mxu0 0
    %7284 = vmatpush2.bf16.msra.mxu0 0
    %7285 = vmatprep.mubr.bf16.mxu0 0
    %7286 = vmatmul.mubr.bf16.gmra.mxu0 %v7092
    %v7287 = vpop.f32.mrf.mxu0
    %v7288 = vadd.f32 %v6024, %v7287
    %v7289 = vpop.f32.mrf.mxu0
    %v7290 = vadd.f32 %v6028, %v7289
    %v7291 = vpop.f32.mrf.mxu0
    %v7292 = vpop.f32.mrf.mxu0
    %7293 = vdwg.mxu0
    %7294 = vmatprep.subr.bf16.mxu0 0
    %7295 = vmatpush1.bf16.msra.mxu0 %v7228
    %7296 = vmatprep.subr.bf16.mxu0 0
    %7297 = vmatpush1.bf16.msra.mxu0 %v7225
    %7298 = vmatprep.subr.bf16.mxu0 0
    %7299 = vmatpush1.bf16.msra.mxu0 %v7222
    %7300 = vmatprep.subr.bf16.mxu0 0
    %7301 = vmatpush1.bf16.msra.mxu0 %v7219
    %7302 = vmatprep.subr.bf16.mxu0 0
    %7303 = vmatpush1.bf16.msra.mxu0 %v7216
    %7304 = vmatprep.subr.bf16.mxu0 0
    %7305 = vmatpush1.bf16.msra.mxu0 %v7213
    %7306 = vmatprep.subr.bf16.mxu0 0
    %7307 = vmatpush1.bf16.msra.mxu0 %v7210
    %7308 = vmatprep.subr.bf16.mxu0 0
    %7309 = vmatpush1.bf16.msra.mxu0 %v7207
    %7310 = vmatprep.subr.bf16.mxu0 0
    %7311 = vmatpush2.bf16.msra.mxu0 0
    %7312 = vmatprep.subr.bf16.mxu0 0
    %7313 = vmatpush2.bf16.msra.mxu0 0
    %7314 = vmatprep.subr.bf16.mxu0 0
    %7315 = vmatpush2.bf16.msra.mxu0 0
    %7316 = vmatprep.subr.bf16.mxu0 0
    %7317 = vmatpush2.bf16.msra.mxu0 0
    %7318 = vmatprep.subr.bf16.mxu0 0
    %7319 = vmatpush2.bf16.msra.mxu0 0
    %7320 = vmatprep.subr.bf16.mxu0 0
    %7321 = vmatpush2.bf16.msra.mxu0 0
    %7322 = vmatprep.subr.bf16.mxu0 0
    %7323 = vmatpush2.bf16.msra.mxu0 0
    %7324 = vmatprep.subr.bf16.mxu0 0
    %7325 = vmatpush2.bf16.msra.mxu0 0
    %7326 = vmatprep.mubr.bf16.mxu0 0
    %7327 = vmatmul.mubr.bf16.gmra.mxu0 %v7092
    %v7328 = vpop.f32.mrf.mxu0
    %v7329 = vadd.f32 %v6032, %v7328
    %v7330 = vpop.f32.mrf.mxu0
    %v7331 = vpop.f32.mrf.mxu0
    %v7332 = vpop.f32.mrf.mxu0
    %7333 = vdwg.mxu0
    %v7334 = vld [vmem:[#allocation2 + $0x30] sm:$0xff]
    %v7335 = vld [vmem:[#allocation2 + $0x38] sm:$0xff]
    %v7336 = vld [vmem:[#allocation2 + $0x40] sm:$0xff]
    %v7337 = vadd.f32 %v7334, %v7288
    %v7338 = vxor.u32 %v7337, 2147483648
    %v7339 = vmul.f32 %v7338, 1.442695
    %v7340 = vpow.pop %v7339
    %v7341 = vadd.f32 %v7340, 1.0
    %v7342 = vrcp.pop %v7341
    %v7343 = vmul.f32 1.0, %v7342
    %v7344 = vadd.f32 %v7335, %v7290
    %v7345 = vxor.u32 %v7344, 2147483648
    %v7346 = vmul.f32 %v7345, 1.442695
    %v7347 = vpow.pop %v7346
    %v7348 = vadd.f32 %v7347, 1.0
    %v7349 = vrcp.pop %v7348
    %v7350 = vmul.f32 1.0, %v7349
    %v7351 = vmul.f32 %v7343, %v7329
    %v7352 = vadd.f32 %v7336, %v7351
    %v7353 = vtanh.pop %v7352
    %v7354 = vsub.f32 1.0, %v7350
    %v7355 = vmul.f32 %v7354, %v7353
    %v7356 = vmul.f32 %v7350, %v6820
    %v7357 = vadd.f32 %v7355, %v7356
    %v7358 = vsel %vm82, %v7357, %v6820
    %v7359 = vsel %vm82, %v7357, 0.0
    %v7360 = vpack.c.bf16 %v7088, %v7088
    %v7361 = vld [vmem:[%s15] sm:$0xff]
    %v7362 = vld [vmem:[%s15 + $0x8] sm:$0xf]
    %v7363 = vld [vmem:[%s15 + $0xc] sm:$0xff]
    %v7364 = vld [vmem:[%s15 + $0x14] sm:$0xf]
    %v7365 = vld [vmem:[%s15 + $0x18] sm:$0xff]
    %v7366 = vld [vmem:[%s15 + $0x20] sm:$0xf]
    %v7367 = vld [vmem:[%s15 + $0x24] sm:$0xff]
    %v7368 = vld [vmem:[%s15 + $0x2c] sm:$0xf]
    %v7369 = vld [vmem:[%s15 + $0x30] sm:$0xff]
    %v7370 = vld [vmem:[%s15 + $0x38] sm:$0xf]
    %v7371 = vld [vmem:[%s15 + $0x3c] sm:$0xff]
    %v7372 = vld [vmem:[%s15 + $0x44] sm:$0xf]
    %v7373 = vld [vmem:[%s15 + $0x48] sm:$0xff]
    %v7374 = vld [vmem:[%s15 + $0x50] sm:$0xf]
    %v7375 = vld [vmem:[%s15 + $0x54] sm:$0xff]
    %v7376 = vld [vmem:[%s15 + $0x5c] sm:$0xf]
    %v7377 = vld [vmem:[%s15 + $0x60] sm:$0xff]
    %v7378 = vld [vmem:[%s15 + $0x68] sm:$0xf]
    %v7379 = vld [vmem:[%s15 + $0x6c] sm:$0xff]
    %v7380 = vld [vmem:[%s15 + $0x74] sm:$0xf]
    %v7381 = vld [vmem:[%s15 + $0x78] sm:$0xff]
    %v7382 = vld [vmem:[%s15 + $0x80] sm:$0xf]
    %v7383 = vld [vmem:[%s15 + $0x84] sm:$0xff]
    %v7384 = vld [vmem:[%s15 + $0x8c] sm:$0xf]
    %v7385 = vld [vmem:[%s15 + $0x90] sm:$0xff]
    %v7386 = vld [vmem:[%s15 + $0x98] sm:$0xf]
    %v7387 = vld [vmem:[%s15 + $0x9c] sm:$0xff]
    %v7388 = vld [vmem:[%s15 + $0xa4] sm:$0xf]
    %v7389 = vld [vmem:[%s15 + $0xa8] sm:$0xff]
    %v7390 = vld [vmem:[%s15 + $0xb0] sm:$0xf]
    %v7391 = vld [vmem:[%s15 + $0xb4] sm:$0xff]
    %v7392 = vld [vmem:[%s15 + $0xbc] sm:$0xf]
    %v7425 = vunpack.c.l.b16 %v7361
    %v7426 = vunpack.c.h.b16 %v7361
    %v7427 = vunpack.c.l.b16 %v7362
    %v7428 = vunpack.c.l.b16 %v7363
    %v7429 = vunpack.c.h.b16 %v7363
    %v7430 = vunpack.c.l.b16 %v7364
    %v7431 = vunpack.c.l.b16 %v7365
    %v7432 = vunpack.c.h.b16 %v7365
    %v7433 = vunpack.c.l.b16 %v7366
    %v7434 = vunpack.c.l.b16 %v7367
    %v7435 = vunpack.c.h.b16 %v7367
    %v7436 = vunpack.c.l.b16 %v7368
    %v7437 = vunpack.c.l.b16 %v7369
    %v7438 = vunpack.c.h.b16 %v7369
    %v7439 = vunpack.c.l.b16 %v7370
    %v7440 = vunpack.c.l.b16 %v7371
    %v7441 = vunpack.c.h.b16 %v7371
    %v7442 = vunpack.c.l.b16 %v7372
    %v7443 = vunpack.c.l.b16 %v7373
    %v7444 = vunpack.c.h.b16 %v7373
    %v7445 = vunpack.c.l.b16 %v7374
    %v7446 = vunpack.c.l.b16 %v7375
    %v7447 = vunpack.c.h.b16 %v7375
    %v7448 = vunpack.c.l.b16 %v7376
    %v7449 = vunpack.c.l.b16 %v7377
    %v7450 = vunpack.c.h.b16 %v7377
    %v7451 = vunpack.c.l.b16 %v7378
    %v7452 = vunpack.c.l.b16 %v7379
    %v7453 = vunpack.c.h.b16 %v7379
    %v7454 = vunpack.c.l.b16 %v7380
    %v7455 = vunpack.c.l.b16 %v7381
    %v7456 = vunpack.c.h.b16 %v7381
    %v7457 = vunpack.c.l.b16 %v7382
    %v7458 = vunpack.c.l.b16 %v7383
    %v7459 = vunpack.c.h.b16 %v7383
    %v7460 = vunpack.c.l.b16 %v7384
    %v7461 = vunpack.c.l.b16 %v7385
    %v7462 = vunpack.c.h.b16 %v7385
    %v7463 = vunpack.c.l.b16 %v7386
    %v7464 = vunpack.c.l.b16 %v7387
    %v7465 = vunpack.c.h.b16 %v7387
    %v7466 = vunpack.c.l.b16 %v7388
    %v7467 = vunpack.c.l.b16 %v7389
    %v7468 = vunpack.c.h.b16 %v7389
    %v7469 = vunpack.c.l.b16 %v7390
    %v7470 = vunpack.c.l.b16 %v7391
    %v7471 = vunpack.c.h.b16 %v7391
    %v7472 = vunpack.c.l.b16 %v7392
    %v7473 = vpack.c.b16 %v7428, %v7425
    %v7474 = vpack.c.b16 %v7429, %v7426
    %v7475 = vpack.c.b16 %v7430, %v7427
    %v7476 = vpack.c.b16 %v7434, %v7431
    %v7477 = vpack.c.b16 %v7435, %v7432
    %v7478 = vpack.c.b16 %v7436, %v7433
    %v7479 = vpack.c.b16 %v7440, %v7437
    %v7480 = vpack.c.b16 %v7441, %v7438
    %v7481 = vpack.c.b16 %v7442, %v7439
    %v7482 = vpack.c.b16 %v7446, %v7443
    %v7483 = vpack.c.b16 %v7447, %v7444
    %v7484 = vpack.c.b16 %v7448, %v7445
    %v7485 = vpack.c.b16 %v7452, %v7449
    %v7486 = vpack.c.b16 %v7453, %v7450
    %v7487 = vpack.c.b16 %v7454, %v7451
    %v7488 = vpack.c.b16 %v7458, %v7455
    %v7489 = vpack.c.b16 %v7459, %v7456
    %v7490 = vpack.c.b16 %v7460, %v7457
    %v7491 = vpack.c.b16 %v7464, %v7461
    %v7492 = vpack.c.b16 %v7465, %v7462
    %v7493 = vpack.c.b16 %v7466, %v7463
    %v7494 = vpack.c.b16 %v7470, %v7467
    %v7495 = vpack.c.b16 %v7471, %v7468
    %v7496 = vpack.c.b16 %v7472, %v7469
    %7521 = vmatprep.subr.bf16.mxu0 %v7495
    %7522 = vmatpush1.bf16.msra.mxu0 %v7494
    %7523 = vmatprep.subr.bf16.mxu0 %v7492
    %7524 = vmatpush1.bf16.msra.mxu0 %v7491
    %7525 = vmatprep.subr.bf16.mxu0 %v7489
    %7526 = vmatpush1.bf16.msra.mxu0 %v7488
    %7527 = vmatprep.subr.bf16.mxu0 %v7486
    %7528 = vmatpush1.bf16.msra.mxu0 %v7485
    %7529 = vmatprep.subr.bf16.mxu0 %v7483
    %7530 = vmatpush1.bf16.msra.mxu0 %v7482
    %7531 = vmatprep.subr.bf16.mxu0 %v7480
    %7532 = vmatpush1.bf16.msra.mxu0 %v7479
    %7533 = vmatprep.subr.bf16.mxu0 %v7477
    %7534 = vmatpush1.bf16.msra.mxu0 %v7476
    %7535 = vmatprep.subr.bf16.mxu0 %v7474
    %7536 = vmatpush1.bf16.msra.mxu0 %v7473
    %7537 = vmatprep.subr.bf16.mxu0 0
    %7538 = vmatpush2.bf16.msra.mxu0 0
    %7539 = vmatprep.subr.bf16.mxu0 0
    %7540 = vmatpush2.bf16.msra.mxu0 0
    %7541 = vmatprep.subr.bf16.mxu0 0
    %7542 = vmatpush2.bf16.msra.mxu0 0
    %7543 = vmatprep.subr.bf16.mxu0 0
    %7544 = vmatpush2.bf16.msra.mxu0 0
    %7545 = vmatprep.subr.bf16.mxu0 0
    %7546 = vmatpush2.bf16.msra.mxu0 0
    %7547 = vmatprep.subr.bf16.mxu0 0
    %7548 = vmatpush2.bf16.msra.mxu0 0
    %7549 = vmatprep.subr.bf16.mxu0 0
    %7550 = vmatpush2.bf16.msra.mxu0 0
    %7551 = vmatprep.subr.bf16.mxu0 0
    %7552 = vmatpush2.bf16.msra.mxu0 0
    %7553 = vmatprep.mubr.bf16.mxu0 0
    %7554 = vmatmul.mubr.bf16.gmra.mxu0 %v7360
    %v7555 = vpop.f32.mrf.mxu0
    %v7556 = vadd.f32 %v6306, %v7555
    %v7557 = vpop.f32.mrf.mxu0
    %v7558 = vadd.f32 %v6310, %v7557
    %v7559 = vpop.f32.mrf.mxu0
    %v7560 = vpop.f32.mrf.mxu0
    %7561 = vdwg.mxu0
    %7562 = vmatprep.subr.bf16.mxu0 0
    %7563 = vmatpush1.bf16.msra.mxu0 %v7496
    %7564 = vmatprep.subr.bf16.mxu0 0
    %7565 = vmatpush1.bf16.msra.mxu0 %v7493
    %7566 = vmatprep.subr.bf16.mxu0 0
    %7567 = vmatpush1.bf16.msra.mxu0 %v7490
    %7568 = vmatprep.subr.bf16.mxu0 0
    %7569 = vmatpush1.bf16.msra.mxu0 %v7487
    %7570 = vmatprep.subr.bf16.mxu0 0
    %7571 = vmatpush1.bf16.msra.mxu0 %v7484
    %7572 = vmatprep.subr.bf16.mxu0 0
    %7573 = vmatpush1.bf16.msra.mxu0 %v7481
    %7574 = vmatprep.subr.bf16.mxu0 0
    %7575 = vmatpush1.bf16.msra.mxu0 %v7478
    %7576 = vmatprep.subr.bf16.mxu0 0
    %7577 = vmatpush1.bf16.msra.mxu0 %v7475
    %7578 = vmatprep.subr.bf16.mxu0 0
    %7579 = vmatpush2.bf16.msra.mxu0 0
    %7580 = vmatprep.subr.bf16.mxu0 0
    %7581 = vmatpush2.bf16.msra.mxu0 0
    %7582 = vmatprep.subr.bf16.mxu0 0
    %7583 = vmatpush2.bf16.msra.mxu0 0
    %7584 = vmatprep.subr.bf16.mxu0 0
    %7585 = vmatpush2.bf16.msra.mxu0 0
    %7586 = vmatprep.subr.bf16.mxu0 0
    %7587 = vmatpush2.bf16.msra.mxu0 0
    %7588 = vmatprep.subr.bf16.mxu0 0
    %7589 = vmatpush2.bf16.msra.mxu0 0
    %7590 = vmatprep.subr.bf16.mxu0 0
    %7591 = vmatpush2.bf16.msra.mxu0 0
    %7592 = vmatprep.subr.bf16.mxu0 0
    %7593 = vmatpush2.bf16.msra.mxu0 0
    %7594 = vmatprep.mubr.bf16.mxu0 0
    %7595 = vmatmul.mubr.bf16.gmra.mxu0 %v7360
    %v7596 = vpop.f32.mrf.mxu0
    %v7597 = vadd.f32 %v6314, %v7596
    %v7598 = vpop.f32.mrf.mxu0
    %v7599 = vpop.f32.mrf.mxu0
    %v7600 = vpop.f32.mrf.mxu0
    %7601 = vdwg.mxu0
    %v7602 = vld [vmem:[#allocation3 + $0x78] sm:$0xff]
    %v7603 = vld [vmem:[#allocation3 + $0x80] sm:$0xff]
    %v7604 = vld [vmem:[#allocation3 + $0x88] sm:$0xff]
    %v7605 = vadd.f32 %v7602, %v7556
    %v7606 = vxor.u32 %v7605, 2147483648
    %v7607 = vmul.f32 %v7606, 1.442695
    %v7608 = vpow.pop %v7607
    %v7609 = vadd.f32 %v7608, 1.0
    %v7610 = vrcp.pop %v7609
    %v7611 = vmul.f32 1.0, %v7610
    %v7612 = vadd.f32 %v7603, %v7558
    %v7613 = vxor.u32 %v7612, 2147483648
    %v7614 = vmul.f32 %v7613, 1.442695
    %v7615 = vpow.pop %v7614
    %v7616 = vadd.f32 %v7615, 1.0
    %v7617 = vrcp.pop %v7616
    %v7618 = vmul.f32 1.0, %v7617
    %v7619 = vmul.f32 %v7611, %v7597
    %v7620 = vadd.f32 %v7604, %v7619
    %v7621 = vtanh.pop %v7620
    %v7622 = vsub.f32 1.0, %v7618
    %v7623 = vmul.f32 %v7622, %v7621
    %v7624 = vmul.f32 %v7618, %v7088
    %v7625 = vadd.f32 %v7623, %v7624
    %v7626 = vsel %vm100, %v7625, %v7088
    %v7627 = vsel %vm100, %v7625, 0.0
    %7628 = vst [vmem:[#allocation6 + $0x10] sm:$0xff] %v7359
    %7629 = vst [vmem:[#allocation5 + $0x28] sm:$0xff] %v7627
    %v7630 = vpack.c.bf16 %v7358, %v7358
    %v7631 = vld [vmem:[%s11] sm:$0xff]
    %v7632 = vld [vmem:[%s11 + $0x8] sm:$0xf]
    %v7633 = vld [vmem:[%s11 + $0xc] sm:$0xff]
    %v7634 = vld [vmem:[%s11 + $0x14] sm:$0xf]
    %v7635 = vld [vmem:[%s11 + $0x18] sm:$0xff]
    %v7636 = vld [vmem:[%s11 + $0x20] sm:$0xf]
    %v7637 = vld [vmem:[%s11 + $0x24] sm:$0xff]
    %v7638 = vld [vmem:[%s11 + $0x2c] sm:$0xf]
    %v7639 = vld [vmem:[%s11 + $0x30] sm:$0xff]
    %v7640 = vld [vmem:[%s11 + $0x38] sm:$0xf]
    %v7641 = vld [vmem:[%s11 + $0x3c] sm:$0xff]
    %v7642 = vld [vmem:[%s11 + $0x44] sm:$0xf]
    %v7643 = vld [vmem:[%s11 + $0x48] sm:$0xff]
    %v7644 = vld [vmem:[%s11 + $0x50] sm:$0xf]
    %v7645 = vld [vmem:[%s11 + $0x54] sm:$0xff]
    %v7646 = vld [vmem:[%s11 + $0x5c] sm:$0xf]
    %v7647 = vld [vmem:[%s11 + $0x60] sm:$0xff]
    %v7648 = vld [vmem:[%s11 + $0x68] sm:$0xf]
    %v7649 = vld [vmem:[%s11 + $0x6c] sm:$0xff]
    %v7650 = vld [vmem:[%s11 + $0x74] sm:$0xf]
    %v7651 = vld [vmem:[%s11 + $0x78] sm:$0xff]
    %v7652 = vld [vmem:[%s11 + $0x80] sm:$0xf]
    %v7653 = vld [vmem:[%s11 + $0x84] sm:$0xff]
    %v7654 = vld [vmem:[%s11 + $0x8c] sm:$0xf]
    %v7655 = vld [vmem:[%s11 + $0x90] sm:$0xff]
    %v7656 = vld [vmem:[%s11 + $0x98] sm:$0xf]
    %v7657 = vld [vmem:[%s11 + $0x9c] sm:$0xff]
    %v7658 = vld [vmem:[%s11 + $0xa4] sm:$0xf]
    %v7659 = vld [vmem:[%s11 + $0xa8] sm:$0xff]
    %v7660 = vld [vmem:[%s11 + $0xb0] sm:$0xf]
    %v7661 = vld [vmem:[%s11 + $0xb4] sm:$0xff]
    %v7662 = vld [vmem:[%s11 + $0xbc] sm:$0xf]
    %v7695 = vunpack.c.l.b16 %v7631
    %v7696 = vunpack.c.h.b16 %v7631
    %v7697 = vunpack.c.l.b16 %v7632
    %v7698 = vunpack.c.l.b16 %v7633
    %v7699 = vunpack.c.h.b16 %v7633
    %v7700 = vunpack.c.l.b16 %v7634
    %v7701 = vunpack.c.l.b16 %v7635
    %v7702 = vunpack.c.h.b16 %v7635
    %v7703 = vunpack.c.l.b16 %v7636
    %v7704 = vunpack.c.l.b16 %v7637
    %v7705 = vunpack.c.h.b16 %v7637
    %v7706 = vunpack.c.l.b16 %v7638
    %v7707 = vunpack.c.l.b16 %v7639
    %v7708 = vunpack.c.h.b16 %v7639
    %v7709 = vunpack.c.l.b16 %v7640
    %v7710 = vunpack.c.l.b16 %v7641
    %v7711 = vunpack.c.h.b16 %v7641
    %v7712 = vunpack.c.l.b16 %v7642
    %v7713 = vunpack.c.l.b16 %v7643
    %v7714 = vunpack.c.h.b16 %v7643
    %v7715 = vunpack.c.l.b16 %v7644
    %v7716 = vunpack.c.l.b16 %v7645
    %v7717 = vunpack.c.h.b16 %v7645
    %v7718 = vunpack.c.l.b16 %v7646
    %v7719 = vunpack.c.l.b16 %v7647
    %v7720 = vunpack.c.h.b16 %v7647
    %v7721 = vunpack.c.l.b16 %v7648
    %v7722 = vunpack.c.l.b16 %v7649
    %v7723 = vunpack.c.h.b16 %v7649
    %v7724 = vunpack.c.l.b16 %v7650
    %v7725 = vunpack.c.l.b16 %v7651
    %v7726 = vunpack.c.h.b16 %v7651
    %v7727 = vunpack.c.l.b16 %v7652
    %v7728 = vunpack.c.l.b16 %v7653
    %v7729 = vunpack.c.h.b16 %v7653
    %v7730 = vunpack.c.l.b16 %v7654
    %v7731 = vunpack.c.l.b16 %v7655
    %v7732 = vunpack.c.h.b16 %v7655
    %v7733 = vunpack.c.l.b16 %v7656
    %v7734 = vunpack.c.l.b16 %v7657
    %v7735 = vunpack.c.h.b16 %v7657
    %v7736 = vunpack.c.l.b16 %v7658
    %v7737 = vunpack.c.l.b16 %v7659
    %v7738 = vunpack.c.h.b16 %v7659
    %v7739 = vunpack.c.l.b16 %v7660
    %v7740 = vunpack.c.l.b16 %v7661
    %v7741 = vunpack.c.h.b16 %v7661
    %v7742 = vunpack.c.l.b16 %v7662
    %v7743 = vpack.c.b16 %v7698, %v7695
    %v7744 = vpack.c.b16 %v7699, %v7696
    %v7745 = vpack.c.b16 %v7700, %v7697
    %v7746 = vpack.c.b16 %v7704, %v7701
    %v7747 = vpack.c.b16 %v7705, %v7702
    %v7748 = vpack.c.b16 %v7706, %v7703
    %v7749 = vpack.c.b16 %v7710, %v7707
    %v7750 = vpack.c.b16 %v7711, %v7708
    %v7751 = vpack.c.b16 %v7712, %v7709
    %v7752 = vpack.c.b16 %v7716, %v7713
    %v7753 = vpack.c.b16 %v7717, %v7714
    %v7754 = vpack.c.b16 %v7718, %v7715
    %v7755 = vpack.c.b16 %v7722, %v7719
    %v7756 = vpack.c.b16 %v7723, %v7720
    %v7757 = vpack.c.b16 %v7724, %v7721
    %v7758 = vpack.c.b16 %v7728, %v7725
    %v7759 = vpack.c.b16 %v7729, %v7726
    %v7760 = vpack.c.b16 %v7730, %v7727
    %v7761 = vpack.c.b16 %v7734, %v7731
    %v7762 = vpack.c.b16 %v7735, %v7732
    %v7763 = vpack.c.b16 %v7736, %v7733
    %v7764 = vpack.c.b16 %v7740, %v7737
    %v7765 = vpack.c.b16 %v7741, %v7738
    %v7766 = vpack.c.b16 %v7742, %v7739
    %7791 = vmatprep.subr.bf16.mxu0 %v7765
    %7792 = vmatpush1.bf16.msra.mxu0 %v7764
    %7793 = vmatprep.subr.bf16.mxu0 %v7762
    %7794 = vmatpush1.bf16.msra.mxu0 %v7761
    %7795 = vmatprep.subr.bf16.mxu0 %v7759
    %7796 = vmatpush1.bf16.msra.mxu0 %v7758
    %7797 = vmatprep.subr.bf16.mxu0 %v7756
    %7798 = vmatpush1.bf16.msra.mxu0 %v7755
    %7799 = vmatprep.subr.bf16.mxu0 %v7753
    %7800 = vmatpush1.bf16.msra.mxu0 %v7752
    %7801 = vmatprep.subr.bf16.mxu0 %v7750
    %7802 = vmatpush1.bf16.msra.mxu0 %v7749
    %7803 = vmatprep.subr.bf16.mxu0 %v7747
    %7804 = vmatpush1.bf16.msra.mxu0 %v7746
    %7805 = vmatprep.subr.bf16.mxu0 %v7744
    %7806 = vmatpush1.bf16.msra.mxu0 %v7743
    %7807 = vmatprep.subr.bf16.mxu0 0
    %7808 = vmatpush2.bf16.msra.mxu0 0
    %7809 = vmatprep.subr.bf16.mxu0 0
    %7810 = vmatpush2.bf16.msra.mxu0 0
    %7811 = vmatprep.subr.bf16.mxu0 0
    %7812 = vmatpush2.bf16.msra.mxu0 0
    %7813 = vmatprep.subr.bf16.mxu0 0
    %7814 = vmatpush2.bf16.msra.mxu0 0
    %7815 = vmatprep.subr.bf16.mxu0 0
    %7816 = vmatpush2.bf16.msra.mxu0 0
    %7817 = vmatprep.subr.bf16.mxu0 0
    %7818 = vmatpush2.bf16.msra.mxu0 0
    %7819 = vmatprep.subr.bf16.mxu0 0
    %7820 = vmatpush2.bf16.msra.mxu0 0
    %7821 = vmatprep.subr.bf16.mxu0 0
    %7822 = vmatpush2.bf16.msra.mxu0 0
    %7823 = vmatprep.mubr.bf16.mxu0 0
    %7824 = vmatmul.mubr.bf16.gmra.mxu0 %v7630
    %v7825 = vpop.f32.mrf.mxu0
    %v7826 = vadd.f32 %v6024, %v7825
    %v7827 = vpop.f32.mrf.mxu0
    %v7828 = vadd.f32 %v6028, %v7827
    %v7829 = vpop.f32.mrf.mxu0
    %v7830 = vpop.f32.mrf.mxu0
    %7831 = vdwg.mxu0
    %7832 = vmatprep.subr.bf16.mxu0 0
    %7833 = vmatpush1.bf16.msra.mxu0 %v7766
    %7834 = vmatprep.subr.bf16.mxu0 0
    %7835 = vmatpush1.bf16.msra.mxu0 %v7763
    %7836 = vmatprep.subr.bf16.mxu0 0
    %7837 = vmatpush1.bf16.msra.mxu0 %v7760
    %7838 = vmatprep.subr.bf16.mxu0 0
    %7839 = vmatpush1.bf16.msra.mxu0 %v7757
    %7840 = vmatprep.subr.bf16.mxu0 0
    %7841 = vmatpush1.bf16.msra.mxu0 %v7754
    %7842 = vmatprep.subr.bf16.mxu0 0
    %7843 = vmatpush1.bf16.msra.mxu0 %v7751
    %7844 = vmatprep.subr.bf16.mxu0 0
    %7845 = vmatpush1.bf16.msra.mxu0 %v7748
    %7846 = vmatprep.subr.bf16.mxu0 0
    %7847 = vmatpush1.bf16.msra.mxu0 %v7745
    %7848 = vmatprep.subr.bf16.mxu0 0
    %7849 = vmatpush2.bf16.msra.mxu0 0
    %7850 = vmatprep.subr.bf16.mxu0 0
    %7851 = vmatpush2.bf16.msra.mxu0 0
    %7852 = vmatprep.subr.bf16.mxu0 0
    %7853 = vmatpush2.bf16.msra.mxu0 0
    %7854 = vmatprep.subr.bf16.mxu0 0
    %7855 = vmatpush2.bf16.msra.mxu0 0
    %7856 = vmatprep.subr.bf16.mxu0 0
    %7857 = vmatpush2.bf16.msra.mxu0 0
    %7858 = vmatprep.subr.bf16.mxu0 0
    %7859 = vmatpush2.bf16.msra.mxu0 0
    %7860 = vmatprep.subr.bf16.mxu0 0
    %7861 = vmatpush2.bf16.msra.mxu0 0
    %7862 = vmatprep.subr.bf16.mxu0 0
    %7863 = vmatpush2.bf16.msra.mxu0 0
    %7864 = vmatprep.mubr.bf16.mxu0 0
    %7865 = vmatmul.mubr.bf16.gmra.mxu0 %v7630
    %v7866 = vpop.f32.mrf.mxu0
    %v7867 = vadd.f32 %v6032, %v7866
    %v7868 = vpop.f32.mrf.mxu0
    %v7869 = vpop.f32.mrf.mxu0
    %v7870 = vpop.f32.mrf.mxu0
    %7871 = vdwg.mxu0
    %v7872 = vld [vmem:[#allocation2 + $0x48] sm:$0xff]
    %v7873 = vld [vmem:[#allocation2 + $0x50] sm:$0xff]
    %v7874 = vld [vmem:[#allocation2 + $0x58] sm:$0xff]
    %v7875 = vadd.f32 %v7872, %v7826
    %v7876 = vxor.u32 %v7875, 2147483648
    %v7877 = vmul.f32 %v7876, 1.442695
    %v7878 = vpow.pop %v7877
    %v7879 = vadd.f32 %v7878, 1.0
    %v7880 = vrcp.pop %v7879
    %v7881 = vmul.f32 1.0, %v7880
    %v7882 = vadd.f32 %v7873, %v7828
    %v7883 = vxor.u32 %v7882, 2147483648
    %v7884 = vmul.f32 %v7883, 1.442695
    %v7885 = vpow.pop %v7884
    %v7886 = vadd.f32 %v7885, 1.0
    %v7887 = vrcp.pop %v7886
    %v7888 = vmul.f32 1.0, %v7887
    %v7889 = vmul.f32 %v7881, %v7867
    %v7890 = vadd.f32 %v7874, %v7889
    %v7891 = vtanh.pop %v7890
    %v7892 = vsub.f32 1.0, %v7888
    %v7893 = vmul.f32 %v7892, %v7891
    %v7894 = vmul.f32 %v7888, %v7358
    %v7895 = vadd.f32 %v7893, %v7894
    %v7896 = vsel %vm88, %v7895, %v7358
    %v7897 = vsel %vm88, %v7895, 0.0
    %v7898 = vpack.c.bf16 %v7626, %v7626
    %v7899 = vld [vmem:[%s15] sm:$0xff]
    %v7900 = vld [vmem:[%s15 + $0x8] sm:$0xf]
    %v7901 = vld [vmem:[%s15 + $0xc] sm:$0xff]
    %v7902 = vld [vmem:[%s15 + $0x14] sm:$0xf]
    %v7903 = vld [vmem:[%s15 + $0x18] sm:$0xff]
    %v7904 = vld [vmem:[%s15 + $0x20] sm:$0xf]
    %v7905 = vld [vmem:[%s15 + $0x24] sm:$0xff]
    %v7906 = vld [vmem:[%s15 + $0x2c] sm:$0xf]
    %v7907 = vld [vmem:[%s15 + $0x30] sm:$0xff]
    %v7908 = vld [vmem:[%s15 + $0x38] sm:$0xf]
    %v7909 = vld [vmem:[%s15 + $0x3c] sm:$0xff]
    %v7910 = vld [vmem:[%s15 + $0x44] sm:$0xf]
    %v7911 = vld [vmem:[%s15 + $0x48] sm:$0xff]
    %v7912 = vld [vmem:[%s15 + $0x50] sm:$0xf]
    %v7913 = vld [vmem:[%s15 + $0x54] sm:$0xff]
    %v7914 = vld [vmem:[%s15 + $0x5c] sm:$0xf]
    %v7915 = vld [vmem:[%s15 + $0x60] sm:$0xff]
    %v7916 = vld [vmem:[%s15 + $0x68] sm:$0xf]
    %v7917 = vld [vmem:[%s15 + $0x6c] sm:$0xff]
    %v7918 = vld [vmem:[%s15 + $0x74] sm:$0xf]
    %v7919 = vld [vmem:[%s15 + $0x78] sm:$0xff]
    %v7920 = vld [vmem:[%s15 + $0x80] sm:$0xf]
    %v7921 = vld [vmem:[%s15 + $0x84] sm:$0xff]
    %v7922 = vld [vmem:[%s15 + $0x8c] sm:$0xf]
    %v7923 = vld [vmem:[%s15 + $0x90] sm:$0xff]
    %v7924 = vld [vmem:[%s15 + $0x98] sm:$0xf]
    %v7925 = vld [vmem:[%s15 + $0x9c] sm:$0xff]
    %v7926 = vld [vmem:[%s15 + $0xa4] sm:$0xf]
    %v7927 = vld [vmem:[%s15 + $0xa8] sm:$0xff]
    %v7928 = vld [vmem:[%s15 + $0xb0] sm:$0xf]
    %v7929 = vld [vmem:[%s15 + $0xb4] sm:$0xff]
    %v7930 = vld [vmem:[%s15 + $0xbc] sm:$0xf]
    %v7963 = vunpack.c.l.b16 %v7899
    %v7964 = vunpack.c.h.b16 %v7899
    %v7965 = vunpack.c.l.b16 %v7900
    %v7966 = vunpack.c.l.b16 %v7901
    %v7967 = vunpack.c.h.b16 %v7901
    %v7968 = vunpack.c.l.b16 %v7902
    %v7969 = vunpack.c.l.b16 %v7903
    %v7970 = vunpack.c.h.b16 %v7903
    %v7971 = vunpack.c.l.b16 %v7904
    %v7972 = vunpack.c.l.b16 %v7905
    %v7973 = vunpack.c.h.b16 %v7905
    %v7974 = vunpack.c.l.b16 %v7906
    %v7975 = vunpack.c.l.b16 %v7907
    %v7976 = vunpack.c.h.b16 %v7907
    %v7977 = vunpack.c.l.b16 %v7908
    %v7978 = vunpack.c.l.b16 %v7909
    %v7979 = vunpack.c.h.b16 %v7909
    %v7980 = vunpack.c.l.b16 %v7910
    %v7981 = vunpack.c.l.b16 %v7911
    %v7982 = vunpack.c.h.b16 %v7911
    %v7983 = vunpack.c.l.b16 %v7912
    %v7984 = vunpack.c.l.b16 %v7913
    %v7985 = vunpack.c.h.b16 %v7913
    %v7986 = vunpack.c.l.b16 %v7914
    %v7987 = vunpack.c.l.b16 %v7915
    %v7988 = vunpack.c.h.b16 %v7915
    %v7989 = vunpack.c.l.b16 %v7916
    %v7990 = vunpack.c.l.b16 %v7917
    %v7991 = vunpack.c.h.b16 %v7917
    %v7992 = vunpack.c.l.b16 %v7918
    %v7993 = vunpack.c.l.b16 %v7919
    %v7994 = vunpack.c.h.b16 %v7919
    %v7995 = vunpack.c.l.b16 %v7920
    %v7996 = vunpack.c.l.b16 %v7921
    %v7997 = vunpack.c.h.b16 %v7921
    %v7998 = vunpack.c.l.b16 %v7922
    %v7999 = vunpack.c.l.b16 %v7923
    %v8000 = vunpack.c.h.b16 %v7923
    %v8001 = vunpack.c.l.b16 %v7924
    %v8002 = vunpack.c.l.b16 %v7925
    %v8003 = vunpack.c.h.b16 %v7925
    %v8004 = vunpack.c.l.b16 %v7926
    %v8005 = vunpack.c.l.b16 %v7927
    %v8006 = vunpack.c.h.b16 %v7927
    %v8007 = vunpack.c.l.b16 %v7928
    %v8008 = vunpack.c.l.b16 %v7929
    %v8009 = vunpack.c.h.b16 %v7929
    %v8010 = vunpack.c.l.b16 %v7930
    %v8011 = vpack.c.b16 %v7966, %v7963
    %v8012 = vpack.c.b16 %v7967, %v7964
    %v8013 = vpack.c.b16 %v7968, %v7965
    %v8014 = vpack.c.b16 %v7972, %v7969
    %v8015 = vpack.c.b16 %v7973, %v7970
    %v8016 = vpack.c.b16 %v7974, %v7971
    %v8017 = vpack.c.b16 %v7978, %v7975
    %v8018 = vpack.c.b16 %v7979, %v7976
    %v8019 = vpack.c.b16 %v7980, %v7977
    %v8020 = vpack.c.b16 %v7984, %v7981
    %v8021 = vpack.c.b16 %v7985, %v7982
    %v8022 = vpack.c.b16 %v7986, %v7983
    %v8023 = vpack.c.b16 %v7990, %v7987
    %v8024 = vpack.c.b16 %v7991, %v7988
    %v8025 = vpack.c.b16 %v7992, %v7989
    %v8026 = vpack.c.b16 %v7996, %v7993
    %v8027 = vpack.c.b16 %v7997, %v7994
    %v8028 = vpack.c.b16 %v7998, %v7995
    %v8029 = vpack.c.b16 %v8002, %v7999
    %v8030 = vpack.c.b16 %v8003, %v8000
    %v8031 = vpack.c.b16 %v8004, %v8001
    %v8032 = vpack.c.b16 %v8008, %v8005
    %v8033 = vpack.c.b16 %v8009, %v8006
    %v8034 = vpack.c.b16 %v8010, %v8007
    %8059 = vmatprep.subr.bf16.mxu0 %v8033
    %8060 = vmatpush1.bf16.msra.mxu0 %v8032
    %8061 = vmatprep.subr.bf16.mxu0 %v8030
    %8062 = vmatpush1.bf16.msra.mxu0 %v8029
    %8063 = vmatprep.subr.bf16.mxu0 %v8027
    %8064 = vmatpush1.bf16.msra.mxu0 %v8026
    %8065 = vmatprep.subr.bf16.mxu0 %v8024
    %8066 = vmatpush1.bf16.msra.mxu0 %v8023
    %8067 = vmatprep.subr.bf16.mxu0 %v8021
    %8068 = vmatpush1.bf16.msra.mxu0 %v8020
    %8069 = vmatprep.subr.bf16.mxu0 %v8018
    %8070 = vmatpush1.bf16.msra.mxu0 %v8017
    %8071 = vmatprep.subr.bf16.mxu0 %v8015
    %8072 = vmatpush1.bf16.msra.mxu0 %v8014
    %8073 = vmatprep.subr.bf16.mxu0 %v8012
    %8074 = vmatpush1.bf16.msra.mxu0 %v8011
    %8075 = vmatprep.subr.bf16.mxu0 0
    %8076 = vmatpush2.bf16.msra.mxu0 0
    %8077 = vmatprep.subr.bf16.mxu0 0
    %8078 = vmatpush2.bf16.msra.mxu0 0
    %8079 = vmatprep.subr.bf16.mxu0 0
    %8080 = vmatpush2.bf16.msra.mxu0 0
    %8081 = vmatprep.subr.bf16.mxu0 0
    %8082 = vmatpush2.bf16.msra.mxu0 0
    %8083 = vmatprep.subr.bf16.mxu0 0
    %8084 = vmatpush2.bf16.msra.mxu0 0
    %8085 = vmatprep.subr.bf16.mxu0 0
    %8086 = vmatpush2.bf16.msra.mxu0 0
    %8087 = vmatprep.subr.bf16.mxu0 0
    %8088 = vmatpush2.bf16.msra.mxu0 0
    %8089 = vmatprep.subr.bf16.mxu0 0
    %8090 = vmatpush2.bf16.msra.mxu0 0
    %8091 = vmatprep.mubr.bf16.mxu0 0
    %8092 = vmatmul.mubr.bf16.gmra.mxu0 %v7898
    %v8093 = vpop.f32.mrf.mxu0
    %v8094 = vadd.f32 %v6306, %v8093
    %v8095 = vpop.f32.mrf.mxu0
    %v8096 = vadd.f32 %v6310, %v8095
    %v8097 = vpop.f32.mrf.mxu0
    %v8098 = vpop.f32.mrf.mxu0
    %8099 = vdwg.mxu0
    %8100 = vmatprep.subr.bf16.mxu0 0
    %8101 = vmatpush1.bf16.msra.mxu0 %v8034
    %8102 = vmatprep.subr.bf16.mxu0 0
    %8103 = vmatpush1.bf16.msra.mxu0 %v8031
    %8104 = vmatprep.subr.bf16.mxu0 0
    %8105 = vmatpush1.bf16.msra.mxu0 %v8028
    %8106 = vmatprep.subr.bf16.mxu0 0
    %8107 = vmatpush1.bf16.msra.mxu0 %v8025
    %8108 = vmatprep.subr.bf16.mxu0 0
    %8109 = vmatpush1.bf16.msra.mxu0 %v8022
    %8110 = vmatprep.subr.bf16.mxu0 0
    %8111 = vmatpush1.bf16.msra.mxu0 %v8019
    %8112 = vmatprep.subr.bf16.mxu0 0
    %8113 = vmatpush1.bf16.msra.mxu0 %v8016
    %8114 = vmatprep.subr.bf16.mxu0 0
    %8115 = vmatpush1.bf16.msra.mxu0 %v8013
    %8116 = vmatprep.subr.bf16.mxu0 0
    %8117 = vmatpush2.bf16.msra.mxu0 0
    %8118 = vmatprep.subr.bf16.mxu0 0
    %8119 = vmatpush2.bf16.msra.mxu0 0
    %8120 = vmatprep.subr.bf16.mxu0 0
    %8121 = vmatpush2.bf16.msra.mxu0 0
    %8122 = vmatprep.subr.bf16.mxu0 0
    %8123 = vmatpush2.bf16.msra.mxu0 0
    %8124 = vmatprep.subr.bf16.mxu0 0
    %8125 = vmatpush2.bf16.msra.mxu0 0
    %8126 = vmatprep.subr.bf16.mxu0 0
    %8127 = vmatpush2.bf16.msra.mxu0 0
    %8128 = vmatprep.subr.bf16.mxu0 0
    %8129 = vmatpush2.bf16.msra.mxu0 0
    %8130 = vmatprep.subr.bf16.mxu0 0
    %8131 = vmatpush2.bf16.msra.mxu0 0
    %8132 = vmatprep.mubr.bf16.mxu0 0
    %8133 = vmatmul.mubr.bf16.gmra.mxu0 %v7898
    %v8134 = vpop.f32.mrf.mxu0
    %v8135 = vadd.f32 %v6314, %v8134
    %v8136 = vpop.f32.mrf.mxu0
    %v8137 = vpop.f32.mrf.mxu0
    %v8138 = vpop.f32.mrf.mxu0
    %8139 = vdwg.mxu0
    %v8140 = vld [vmem:[#allocation3 + $0x60] sm:$0xff]
    %v8141 = vld [vmem:[#allocation3 + $0x68] sm:$0xff]
    %v8142 = vld [vmem:[#allocation3 + $0x70] sm:$0xff]
    %v8143 = vadd.f32 %v8140, %v8094
    %v8144 = vxor.u32 %v8143, 2147483648
    %v8145 = vmul.f32 %v8144, 1.442695
    %v8146 = vpow.pop %v8145
    %v8147 = vadd.f32 %v8146, 1.0
    %v8148 = vrcp.pop %v8147
    %v8149 = vmul.f32 1.0, %v8148
    %v8150 = vadd.f32 %v8141, %v8096
    %v8151 = vxor.u32 %v8150, 2147483648
    %v8152 = vmul.f32 %v8151, 1.442695
    %v8153 = vpow.pop %v8152
    %v8154 = vadd.f32 %v8153, 1.0
    %v8155 = vrcp.pop %v8154
    %v8156 = vmul.f32 1.0, %v8155
    %v8157 = vmul.f32 %v8149, %v8135
    %v8158 = vadd.f32 %v8142, %v8157
    %v8159 = vtanh.pop %v8158
    %v8160 = vsub.f32 1.0, %v8156
    %v8161 = vmul.f32 %v8160, %v8159
    %v8162 = vmul.f32 %v8156, %v7626
    %v8163 = vadd.f32 %v8161, %v8162
    %v8164 = vsel %vm94, %v8163, %v7626
    %v8165 = vsel %vm94, %v8163, 0.0
    %8166 = vst [vmem:[#allocation6 + $0x18] sm:$0xff] %v7897
    %8167 = vst [vmem:[#allocation5 + $0x20] sm:$0xff] %v8165
    %v8168 = vpack.c.bf16 %v7896, %v7896
    %v8169 = vld [vmem:[%s11] sm:$0xff]
    %v8170 = vld [vmem:[%s11 + $0x8] sm:$0xf]
    %v8171 = vld [vmem:[%s11 + $0xc] sm:$0xff]
    %v8172 = vld [vmem:[%s11 + $0x14] sm:$0xf]
    %v8173 = vld [vmem:[%s11 + $0x18] sm:$0xff]
    %v8174 = vld [vmem:[%s11 + $0x20] sm:$0xf]
    %v8175 = vld [vmem:[%s11 + $0x24] sm:$0xff]
    %v8176 = vld [vmem:[%s11 + $0x2c] sm:$0xf]
    %v8177 = vld [vmem:[%s11 + $0x30] sm:$0xff]
    %v8178 = vld [vmem:[%s11 + $0x38] sm:$0xf]
    %v8179 = vld [vmem:[%s11 + $0x3c] sm:$0xff]
    %v8180 = vld [vmem:[%s11 + $0x44] sm:$0xf]
    %v8181 = vld [vmem:[%s11 + $0x48] sm:$0xff]
    %v8182 = vld [vmem:[%s11 + $0x50] sm:$0xf]
    %v8183 = vld [vmem:[%s11 + $0x54] sm:$0xff]
    %v8184 = vld [vmem:[%s11 + $0x5c] sm:$0xf]
    %v8185 = vld [vmem:[%s11 + $0x60] sm:$0xff]
    %v8186 = vld [vmem:[%s11 + $0x68] sm:$0xf]
    %v8187 = vld [vmem:[%s11 + $0x6c] sm:$0xff]
    %v8188 = vld [vmem:[%s11 + $0x74] sm:$0xf]
    %v8189 = vld [vmem:[%s11 + $0x78] sm:$0xff]
    %v8190 = vld [vmem:[%s11 + $0x80] sm:$0xf]
    %v8191 = vld [vmem:[%s11 + $0x84] sm:$0xff]
    %v8192 = vld [vmem:[%s11 + $0x8c] sm:$0xf]
    %v8193 = vld [vmem:[%s11 + $0x90] sm:$0xff]
    %v8194 = vld [vmem:[%s11 + $0x98] sm:$0xf]
    %v8195 = vld [vmem:[%s11 + $0x9c] sm:$0xff]
    %v8196 = vld [vmem:[%s11 + $0xa4] sm:$0xf]
    %v8197 = vld [vmem:[%s11 + $0xa8] sm:$0xff]
    %v8198 = vld [vmem:[%s11 + $0xb0] sm:$0xf]
    %v8199 = vld [vmem:[%s11 + $0xb4] sm:$0xff]
    %v8200 = vld [vmem:[%s11 + $0xbc] sm:$0xf]
    %v8233 = vunpack.c.l.b16 %v8169
    %v8234 = vunpack.c.h.b16 %v8169
    %v8235 = vunpack.c.l.b16 %v8170
    %v8236 = vunpack.c.l.b16 %v8171
    %v8237 = vunpack.c.h.b16 %v8171
    %v8238 = vunpack.c.l.b16 %v8172
    %v8239 = vunpack.c.l.b16 %v8173
    %v8240 = vunpack.c.h.b16 %v8173
    %v8241 = vunpack.c.l.b16 %v8174
    %v8242 = vunpack.c.l.b16 %v8175
    %v8243 = vunpack.c.h.b16 %v8175
    %v8244 = vunpack.c.l.b16 %v8176
    %v8245 = vunpack.c.l.b16 %v8177
    %v8246 = vunpack.c.h.b16 %v8177
    %v8247 = vunpack.c.l.b16 %v8178
    %v8248 = vunpack.c.l.b16 %v8179
    %v8249 = vunpack.c.h.b16 %v8179
    %v8250 = vunpack.c.l.b16 %v8180
    %v8251 = vunpack.c.l.b16 %v8181
    %v8252 = vunpack.c.h.b16 %v8181
    %v8253 = vunpack.c.l.b16 %v8182
    %v8254 = vunpack.c.l.b16 %v8183
    %v8255 = vunpack.c.h.b16 %v8183
    %v8256 = vunpack.c.l.b16 %v8184
    %v8257 = vunpack.c.l.b16 %v8185
    %v8258 = vunpack.c.h.b16 %v8185
    %v8259 = vunpack.c.l.b16 %v8186
    %v8260 = vunpack.c.l.b16 %v8187
    %v8261 = vunpack.c.h.b16 %v8187
    %v8262 = vunpack.c.l.b16 %v8188
    %v8263 = vunpack.c.l.b16 %v8189
    %v8264 = vunpack.c.h.b16 %v8189
    %v8265 = vunpack.c.l.b16 %v8190
    %v8266 = vunpack.c.l.b16 %v8191
    %v8267 = vunpack.c.h.b16 %v8191
    %v8268 = vunpack.c.l.b16 %v8192
    %v8269 = vunpack.c.l.b16 %v8193
    %v8270 = vunpack.c.h.b16 %v8193
    %v8271 = vunpack.c.l.b16 %v8194
    %v8272 = vunpack.c.l.b16 %v8195
    %v8273 = vunpack.c.h.b16 %v8195
    %v8274 = vunpack.c.l.b16 %v8196
    %v8275 = vunpack.c.l.b16 %v8197
    %v8276 = vunpack.c.h.b16 %v8197
    %v8277 = vunpack.c.l.b16 %v8198
    %v8278 = vunpack.c.l.b16 %v8199
    %v8279 = vunpack.c.h.b16 %v8199
    %v8280 = vunpack.c.l.b16 %v8200
    %v8281 = vpack.c.b16 %v8236, %v8233
    %v8282 = vpack.c.b16 %v8237, %v8234
    %v8283 = vpack.c.b16 %v8238, %v8235
    %v8284 = vpack.c.b16 %v8242, %v8239
    %v8285 = vpack.c.b16 %v8243, %v8240
    %v8286 = vpack.c.b16 %v8244, %v8241
    %v8287 = vpack.c.b16 %v8248, %v8245
    %v8288 = vpack.c.b16 %v8249, %v8246
    %v8289 = vpack.c.b16 %v8250, %v8247
    %v8290 = vpack.c.b16 %v8254, %v8251
    %v8291 = vpack.c.b16 %v8255, %v8252
    %v8292 = vpack.c.b16 %v8256, %v8253
    %v8293 = vpack.c.b16 %v8260, %v8257
    %v8294 = vpack.c.b16 %v8261, %v8258
    %v8295 = vpack.c.b16 %v8262, %v8259
    %v8296 = vpack.c.b16 %v8266, %v8263
    %v8297 = vpack.c.b16 %v8267, %v8264
    %v8298 = vpack.c.b16 %v8268, %v8265
    %v8299 = vpack.c.b16 %v8272, %v8269
    %v8300 = vpack.c.b16 %v8273, %v8270
    %v8301 = vpack.c.b16 %v8274, %v8271
    %v8302 = vpack.c.b16 %v8278, %v8275
    %v8303 = vpack.c.b16 %v8279, %v8276
    %v8304 = vpack.c.b16 %v8280, %v8277
    %8329 = vmatprep.subr.bf16.mxu0 %v8303
    %8330 = vmatpush1.bf16.msra.mxu0 %v8302
    %8331 = vmatprep.subr.bf16.mxu0 %v8300
    %8332 = vmatpush1.bf16.msra.mxu0 %v8299
    %8333 = vmatprep.subr.bf16.mxu0 %v8297
    %8334 = vmatpush1.bf16.msra.mxu0 %v8296
    %8335 = vmatprep.subr.bf16.mxu0 %v8294
    %8336 = vmatpush1.bf16.msra.mxu0 %v8293
    %8337 = vmatprep.subr.bf16.mxu0 %v8291
    %8338 = vmatpush1.bf16.msra.mxu0 %v8290
    %8339 = vmatprep.subr.bf16.mxu0 %v8288
    %8340 = vmatpush1.bf16.msra.mxu0 %v8287
    %8341 = vmatprep.subr.bf16.mxu0 %v8285
    %8342 = vmatpush1.bf16.msra.mxu0 %v8284
    %8343 = vmatprep.subr.bf16.mxu0 %v8282
    %8344 = vmatpush1.bf16.msra.mxu0 %v8281
    %8345 = vmatprep.subr.bf16.mxu0 0
    %8346 = vmatpush2.bf16.msra.mxu0 0
    %8347 = vmatprep.subr.bf16.mxu0 0
    %8348 = vmatpush2.bf16.msra.mxu0 0
    %8349 = vmatprep.subr.bf16.mxu0 0
    %8350 = vmatpush2.bf16.msra.mxu0 0
    %8351 = vmatprep.subr.bf16.mxu0 0
    %8352 = vmatpush2.bf16.msra.mxu0 0
    %8353 = vmatprep.subr.bf16.mxu0 0
    %8354 = vmatpush2.bf16.msra.mxu0 0
    %8355 = vmatprep.subr.bf16.mxu0 0
    %8356 = vmatpush2.bf16.msra.mxu0 0
    %8357 = vmatprep.subr.bf16.mxu0 0
    %8358 = vmatpush2.bf16.msra.mxu0 0
    %8359 = vmatprep.subr.bf16.mxu0 0
    %8360 = vmatpush2.bf16.msra.mxu0 0
    %8361 = vmatprep.mubr.bf16.mxu0 0
    %8362 = vmatmul.mubr.bf16.gmra.mxu0 %v8168
    %v8363 = vpop.f32.mrf.mxu0
    %v8364 = vadd.f32 %v6024, %v8363
    %v8365 = vpop.f32.mrf.mxu0
    %v8366 = vadd.f32 %v6028, %v8365
    %v8367 = vpop.f32.mrf.mxu0
    %v8368 = vpop.f32.mrf.mxu0
    %8369 = vdwg.mxu0
    %8370 = vmatprep.subr.bf16.mxu0 0
    %8371 = vmatpush1.bf16.msra.mxu0 %v8304
    %8372 = vmatprep.subr.bf16.mxu0 0
    %8373 = vmatpush1.bf16.msra.mxu0 %v8301
    %8374 = vmatprep.subr.bf16.mxu0 0
    %8375 = vmatpush1.bf16.msra.mxu0 %v8298
    %8376 = vmatprep.subr.bf16.mxu0 0
    %8377 = vmatpush1.bf16.msra.mxu0 %v8295
    %8378 = vmatprep.subr.bf16.mxu0 0
    %8379 = vmatpush1.bf16.msra.mxu0 %v8292
    %8380 = vmatprep.subr.bf16.mxu0 0
    %8381 = vmatpush1.bf16.msra.mxu0 %v8289
    %8382 = vmatprep.subr.bf16.mxu0 0
    %8383 = vmatpush1.bf16.msra.mxu0 %v8286
    %8384 = vmatprep.subr.bf16.mxu0 0
    %8385 = vmatpush1.bf16.msra.mxu0 %v8283
    %8386 = vmatprep.subr.bf16.mxu0 0
    %8387 = vmatpush2.bf16.msra.mxu0 0
    %8388 = vmatprep.subr.bf16.mxu0 0
    %8389 = vmatpush2.bf16.msra.mxu0 0
    %8390 = vmatprep.subr.bf16.mxu0 0
    %8391 = vmatpush2.bf16.msra.mxu0 0
    %8392 = vmatprep.subr.bf16.mxu0 0
    %8393 = vmatpush2.bf16.msra.mxu0 0
    %8394 = vmatprep.subr.bf16.mxu0 0
    %8395 = vmatpush2.bf16.msra.mxu0 0
    %8396 = vmatprep.subr.bf16.mxu0 0
    %8397 = vmatpush2.bf16.msra.mxu0 0
    %8398 = vmatprep.subr.bf16.mxu0 0
    %8399 = vmatpush2.bf16.msra.mxu0 0
    %8400 = vmatprep.subr.bf16.mxu0 0
    %8401 = vmatpush2.bf16.msra.mxu0 0
    %8402 = vmatprep.mubr.bf16.mxu0 0
    %8403 = vmatmul.mubr.bf16.gmra.mxu0 %v8168
    %v8404 = vpop.f32.mrf.mxu0
    %v8405 = vadd.f32 %v6032, %v8404
    %v8406 = vpop.f32.mrf.mxu0
    %v8407 = vpop.f32.mrf.mxu0
    %v8408 = vpop.f32.mrf.mxu0
    %8409 = vdwg.mxu0
    %v8410 = vld [vmem:[#allocation2 + $0x60] sm:$0xff]
    %v8411 = vld [vmem:[#allocation2 + $0x68] sm:$0xff]
    %v8412 = vld [vmem:[#allocation2 + $0x70] sm:$0xff]
    %v8413 = vadd.f32 %v8410, %v8364
    %v8414 = vxor.u32 %v8413, 2147483648
    %v8415 = vmul.f32 %v8414, 1.442695
    %v8416 = vpow.pop %v8415
    %v8417 = vadd.f32 %v8416, 1.0
    %v8418 = vrcp.pop %v8417
    %v8419 = vmul.f32 1.0, %v8418
    %v8420 = vadd.f32 %v8411, %v8366
    %v8421 = vxor.u32 %v8420, 2147483648
    %v8422 = vmul.f32 %v8421, 1.442695
    %v8423 = vpow.pop %v8422
    %v8424 = vadd.f32 %v8423, 1.0
    %v8425 = vrcp.pop %v8424
    %v8426 = vmul.f32 1.0, %v8425
    %v8427 = vmul.f32 %v8419, %v8405
    %v8428 = vadd.f32 %v8412, %v8427
    %v8429 = vtanh.pop %v8428
    %v8430 = vsub.f32 1.0, %v8426
    %v8431 = vmul.f32 %v8430, %v8429
    %v8432 = vmul.f32 %v8426, %v7896
    %v8433 = vadd.f32 %v8431, %v8432
    %v8434 = vsel %vm94, %v8433, %v7896
    %v8435 = vsel %vm94, %v8433, 0.0
    %v8436 = vpack.c.bf16 %v8164, %v8164
    %v8437 = vld [vmem:[%s15] sm:$0xff]
    %v8438 = vld [vmem:[%s15 + $0x8] sm:$0xf]
    %v8439 = vld [vmem:[%s15 + $0xc] sm:$0xff]
    %v8440 = vld [vmem:[%s15 + $0x14] sm:$0xf]
    %v8441 = vld [vmem:[%s15 + $0x18] sm:$0xff]
    %v8442 = vld [vmem:[%s15 + $0x20] sm:$0xf]
    %v8443 = vld [vmem:[%s15 + $0x24] sm:$0xff]
    %v8444 = vld [vmem:[%s15 + $0x2c] sm:$0xf]
    %v8445 = vld [vmem:[%s15 + $0x30] sm:$0xff]
    %v8446 = vld [vmem:[%s15 + $0x38] sm:$0xf]
    %v8447 = vld [vmem:[%s15 + $0x3c] sm:$0xff]
    %v8448 = vld [vmem:[%s15 + $0x44] sm:$0xf]
    %v8449 = vld [vmem:[%s15 + $0x48] sm:$0xff]
    %v8450 = vld [vmem:[%s15 + $0x50] sm:$0xf]
    %v8451 = vld [vmem:[%s15 + $0x54] sm:$0xff]
    %v8452 = vld [vmem:[%s15 + $0x5c] sm:$0xf]
    %v8453 = vld [vmem:[%s15 + $0x60] sm:$0xff]
    %v8454 = vld [vmem:[%s15 + $0x68] sm:$0xf]
    %v8455 = vld [vmem:[%s15 + $0x6c] sm:$0xff]
    %v8456 = vld [vmem:[%s15 + $0x74] sm:$0xf]
    %v8457 = vld [vmem:[%s15 + $0x78] sm:$0xff]
    %v8458 = vld [vmem:[%s15 + $0x80] sm:$0xf]
    %v8459 = vld [vmem:[%s15 + $0x84] sm:$0xff]
    %v8460 = vld [vmem:[%s15 + $0x8c] sm:$0xf]
    %v8461 = vld [vmem:[%s15 + $0x90] sm:$0xff]
    %v8462 = vld [vmem:[%s15 + $0x98] sm:$0xf]
    %v8463 = vld [vmem:[%s15 + $0x9c] sm:$0xff]
    %v8464 = vld [vmem:[%s15 + $0xa4] sm:$0xf]
    %v8465 = vld [vmem:[%s15 + $0xa8] sm:$0xff]
    %v8466 = vld [vmem:[%s15 + $0xb0] sm:$0xf]
    %v8467 = vld [vmem:[%s15 + $0xb4] sm:$0xff]
    %v8468 = vld [vmem:[%s15 + $0xbc] sm:$0xf]
    %v8501 = vunpack.c.l.b16 %v8437
    %v8502 = vunpack.c.h.b16 %v8437
    %v8503 = vunpack.c.l.b16 %v8438
    %v8504 = vunpack.c.l.b16 %v8439
    %v8505 = vunpack.c.h.b16 %v8439
    %v8506 = vunpack.c.l.b16 %v8440
    %v8507 = vunpack.c.l.b16 %v8441
    %v8508 = vunpack.c.h.b16 %v8441
    %v8509 = vunpack.c.l.b16 %v8442
    %v8510 = vunpack.c.l.b16 %v8443
    %v8511 = vunpack.c.h.b16 %v8443
    %v8512 = vunpack.c.l.b16 %v8444
    %v8513 = vunpack.c.l.b16 %v8445
    %v8514 = vunpack.c.h.b16 %v8445
    %v8515 = vunpack.c.l.b16 %v8446
    %v8516 = vunpack.c.l.b16 %v8447
    %v8517 = vunpack.c.h.b16 %v8447
    %v8518 = vunpack.c.l.b16 %v8448
    %v8519 = vunpack.c.l.b16 %v8449
    %v8520 = vunpack.c.h.b16 %v8449
    %v8521 = vunpack.c.l.b16 %v8450
    %v8522 = vunpack.c.l.b16 %v8451
    %v8523 = vunpack.c.h.b16 %v8451
    %v8524 = vunpack.c.l.b16 %v8452
    %v8525 = vunpack.c.l.b16 %v8453
    %v8526 = vunpack.c.h.b16 %v8453
    %v8527 = vunpack.c.l.b16 %v8454
    %v8528 = vunpack.c.l.b16 %v8455
    %v8529 = vunpack.c.h.b16 %v8455
    %v8530 = vunpack.c.l.b16 %v8456
    %v8531 = vunpack.c.l.b16 %v8457
    %v8532 = vunpack.c.h.b16 %v8457
    %v8533 = vunpack.c.l.b16 %v8458
    %v8534 = vunpack.c.l.b16 %v8459
    %v8535 = vunpack.c.h.b16 %v8459
    %v8536 = vunpack.c.l.b16 %v8460
    %v8537 = vunpack.c.l.b16 %v8461
    %v8538 = vunpack.c.h.b16 %v8461
    %v8539 = vunpack.c.l.b16 %v8462
    %v8540 = vunpack.c.l.b16 %v8463
    %v8541 = vunpack.c.h.b16 %v8463
    %v8542 = vunpack.c.l.b16 %v8464
    %v8543 = vunpack.c.l.b16 %v8465
    %v8544 = vunpack.c.h.b16 %v8465
    %v8545 = vunpack.c.l.b16 %v8466
    %v8546 = vunpack.c.l.b16 %v8467
    %v8547 = vunpack.c.h.b16 %v8467
    %v8548 = vunpack.c.l.b16 %v8468
    %v8549 = vpack.c.b16 %v8504, %v8501
    %v8550 = vpack.c.b16 %v8505, %v8502
    %v8551 = vpack.c.b16 %v8506, %v8503
    %v8552 = vpack.c.b16 %v8510, %v8507
    %v8553 = vpack.c.b16 %v8511, %v8508
    %v8554 = vpack.c.b16 %v8512, %v8509
    %v8555 = vpack.c.b16 %v8516, %v8513
    %v8556 = vpack.c.b16 %v8517, %v8514
    %v8557 = vpack.c.b16 %v8518, %v8515
    %v8558 = vpack.c.b16 %v8522, %v8519
    %v8559 = vpack.c.b16 %v8523, %v8520
    %v8560 = vpack.c.b16 %v8524, %v8521
    %v8561 = vpack.c.b16 %v8528, %v8525
    %v8562 = vpack.c.b16 %v8529, %v8526
    %v8563 = vpack.c.b16 %v8530, %v8527
    %v8564 = vpack.c.b16 %v8534, %v8531
    %v8565 = vpack.c.b16 %v8535, %v8532
    %v8566 = vpack.c.b16 %v8536, %v8533
    %v8567 = vpack.c.b16 %v8540, %v8537
    %v8568 = vpack.c.b16 %v8541, %v8538
    %v8569 = vpack.c.b16 %v8542, %v8539
    %v8570 = vpack.c.b16 %v8546, %v8543
    %v8571 = vpack.c.b16 %v8547, %v8544
    %v8572 = vpack.c.b16 %v8548, %v8545
    %8597 = vmatprep.subr.bf16.mxu0 %v8571
    %8598 = vmatpush1.bf16.msra.mxu0 %v8570
    %8599 = vmatprep.subr.bf16.mxu0 %v8568
    %8600 = vmatpush1.bf16.msra.mxu0 %v8567
    %8601 = vmatprep.subr.bf16.mxu0 %v8565
    %8602 = vmatpush1.bf16.msra.mxu0 %v8564
    %8603 = vmatprep.subr.bf16.mxu0 %v8562
    %8604 = vmatpush1.bf16.msra.mxu0 %v8561
    %8605 = vmatprep.subr.bf16.mxu0 %v8559
    %8606 = vmatpush1.bf16.msra.mxu0 %v8558
    %8607 = vmatprep.subr.bf16.mxu0 %v8556
    %8608 = vmatpush1.bf16.msra.mxu0 %v8555
    %8609 = vmatprep.subr.bf16.mxu0 %v8553
    %8610 = vmatpush1.bf16.msra.mxu0 %v8552
    %8611 = vmatprep.subr.bf16.mxu0 %v8550
    %8612 = vmatpush1.bf16.msra.mxu0 %v8549
    %8613 = vmatprep.subr.bf16.mxu0 0
    %8614 = vmatpush2.bf16.msra.mxu0 0
    %8615 = vmatprep.subr.bf16.mxu0 0
    %8616 = vmatpush2.bf16.msra.mxu0 0
    %8617 = vmatprep.subr.bf16.mxu0 0
    %8618 = vmatpush2.bf16.msra.mxu0 0
    %8619 = vmatprep.subr.bf16.mxu0 0
    %8620 = vmatpush2.bf16.msra.mxu0 0
    %8621 = vmatprep.subr.bf16.mxu0 0
    %8622 = vmatpush2.bf16.msra.mxu0 0
    %8623 = vmatprep.subr.bf16.mxu0 0
    %8624 = vmatpush2.bf16.msra.mxu0 0
    %8625 = vmatprep.subr.bf16.mxu0 0
    %8626 = vmatpush2.bf16.msra.mxu0 0
    %8627 = vmatprep.subr.bf16.mxu0 0
    %8628 = vmatpush2.bf16.msra.mxu0 0
    %8629 = vmatprep.mubr.bf16.mxu0 0
    %8630 = vmatmul.mubr.bf16.gmra.mxu0 %v8436
    %v8631 = vpop.f32.mrf.mxu0
    %v8632 = vadd.f32 %v6306, %v8631
    %v8633 = vpop.f32.mrf.mxu0
    %v8634 = vadd.f32 %v6310, %v8633
    %v8635 = vpop.f32.mrf.mxu0
    %v8636 = vpop.f32.mrf.mxu0
    %8637 = vdwg.mxu0
    %8638 = vmatprep.subr.bf16.mxu0 0
    %8639 = vmatpush1.bf16.msra.mxu0 %v8572
    %8640 = vmatprep.subr.bf16.mxu0 0
    %8641 = vmatpush1.bf16.msra.mxu0 %v8569
    %8642 = vmatprep.subr.bf16.mxu0 0
    %8643 = vmatpush1.bf16.msra.mxu0 %v8566
    %8644 = vmatprep.subr.bf16.mxu0 0
    %8645 = vmatpush1.bf16.msra.mxu0 %v8563
    %8646 = vmatprep.subr.bf16.mxu0 0
    %8647 = vmatpush1.bf16.msra.mxu0 %v8560
    %8648 = vmatprep.subr.bf16.mxu0 0
    %8649 = vmatpush1.bf16.msra.mxu0 %v8557
    %8650 = vmatprep.subr.bf16.mxu0 0
    %8651 = vmatpush1.bf16.msra.mxu0 %v8554
    %8652 = vmatprep.subr.bf16.mxu0 0
    %8653 = vmatpush1.bf16.msra.mxu0 %v8551
    %8654 = vmatprep.subr.bf16.mxu0 0
    %8655 = vmatpush2.bf16.msra.mxu0 0
    %8656 = vmatprep.subr.bf16.mxu0 0
    %8657 = vmatpush2.bf16.msra.mxu0 0
    %8658 = vmatprep.subr.bf16.mxu0 0
    %8659 = vmatpush2.bf16.msra.mxu0 0
    %8660 = vmatprep.subr.bf16.mxu0 0
    %8661 = vmatpush2.bf16.msra.mxu0 0
    %8662 = vmatprep.subr.bf16.mxu0 0
    %8663 = vmatpush2.bf16.msra.mxu0 0
    %8664 = vmatprep.subr.bf16.mxu0 0
    %8665 = vmatpush2.bf16.msra.mxu0 0
    %8666 = vmatprep.subr.bf16.mxu0 0
    %8667 = vmatpush2.bf16.msra.mxu0 0
    %8668 = vmatprep.subr.bf16.mxu0 0
    %8669 = vmatpush2.bf16.msra.mxu0 0
    %8670 = vmatprep.mubr.bf16.mxu0 0
    %8671 = vmatmul.mubr.bf16.gmra.mxu0 %v8436
    %v8672 = vpop.f32.mrf.mxu0
    %v8673 = vadd.f32 %v6314, %v8672
    %v8674 = vpop.f32.mrf.mxu0
    %v8675 = vpop.f32.mrf.mxu0
    %v8676 = vpop.f32.mrf.mxu0
    %8677 = vdwg.mxu0
    %v8678 = vld [vmem:[#allocation3 + $0x48] sm:$0xff]
    %v8679 = vld [vmem:[#allocation3 + $0x50] sm:$0xff]
    %v8680 = vld [vmem:[#allocation3 + $0x58] sm:$0xff]
    %v8681 = vadd.f32 %v8678, %v8632
    %v8682 = vxor.u32 %v8681, 2147483648
    %v8683 = vmul.f32 %v8682, 1.442695
    %v8684 = vpow.pop %v8683
    %v8685 = vadd.f32 %v8684, 1.0
    %v8686 = vrcp.pop %v8685
    %v8687 = vmul.f32 1.0, %v8686
    %v8688 = vadd.f32 %v8679, %v8634
    %v8689 = vxor.u32 %v8688, 2147483648
    %v8690 = vmul.f32 %v8689, 1.442695
    %v8691 = vpow.pop %v8690
    %v8692 = vadd.f32 %v8691, 1.0
    %v8693 = vrcp.pop %v8692
    %v8694 = vmul.f32 1.0, %v8693
    %v8695 = vmul.f32 %v8687, %v8673
    %v8696 = vadd.f32 %v8680, %v8695
    %v8697 = vtanh.pop %v8696
    %v8698 = vsub.f32 1.0, %v8694
    %v8699 = vmul.f32 %v8698, %v8697
    %v8700 = vmul.f32 %v8694, %v8164
    %v8701 = vadd.f32 %v8699, %v8700
    %v8702 = vsel %vm88, %v8701, %v8164
    %v8703 = vsel %vm88, %v8701, 0.0
    %8704 = vst [vmem:[#allocation6 + $0x20] sm:$0xff] %v8435
    %8705 = vst [vmem:[#allocation5 + $0x18] sm:$0xff] %v8703
    %v8706 = vpack.c.bf16 %v8434, %v8434
    %v8707 = vld [vmem:[%s11] sm:$0xff]
    %v8708 = vld [vmem:[%s11 + $0x8] sm:$0xf]
    %v8709 = vld [vmem:[%s11 + $0xc] sm:$0xff]
    %v8710 = vld [vmem:[%s11 + $0x14] sm:$0xf]
    %v8711 = vld [vmem:[%s11 + $0x18] sm:$0xff]
    %v8712 = vld [vmem:[%s11 + $0x20] sm:$0xf]
    %v8713 = vld [vmem:[%s11 + $0x24] sm:$0xff]
    %v8714 = vld [vmem:[%s11 + $0x2c] sm:$0xf]
    %v8715 = vld [vmem:[%s11 + $0x30] sm:$0xff]
    %v8716 = vld [vmem:[%s11 + $0x38] sm:$0xf]
    %v8717 = vld [vmem:[%s11 + $0x3c] sm:$0xff]
    %v8718 = vld [vmem:[%s11 + $0x44] sm:$0xf]
    %v8719 = vld [vmem:[%s11 + $0x48] sm:$0xff]
    %v8720 = vld [vmem:[%s11 + $0x50] sm:$0xf]
    %v8721 = vld [vmem:[%s11 + $0x54] sm:$0xff]
    %v8722 = vld [vmem:[%s11 + $0x5c] sm:$0xf]
    %v8723 = vld [vmem:[%s11 + $0x60] sm:$0xff]
    %v8724 = vld [vmem:[%s11 + $0x68] sm:$0xf]
    %v8725 = vld [vmem:[%s11 + $0x6c] sm:$0xff]
    %v8726 = vld [vmem:[%s11 + $0x74] sm:$0xf]
    %v8727 = vld [vmem:[%s11 + $0x78] sm:$0xff]
    %v8728 = vld [vmem:[%s11 + $0x80] sm:$0xf]
    %v8729 = vld [vmem:[%s11 + $0x84] sm:$0xff]
    %v8730 = vld [vmem:[%s11 + $0x8c] sm:$0xf]
    %v8731 = vld [vmem:[%s11 + $0x90] sm:$0xff]
    %v8732 = vld [vmem:[%s11 + $0x98] sm:$0xf]
    %v8733 = vld [vmem:[%s11 + $0x9c] sm:$0xff]
    %v8734 = vld [vmem:[%s11 + $0xa4] sm:$0xf]
    %v8735 = vld [vmem:[%s11 + $0xa8] sm:$0xff]
    %v8736 = vld [vmem:[%s11 + $0xb0] sm:$0xf]
    %v8737 = vld [vmem:[%s11 + $0xb4] sm:$0xff]
    %v8738 = vld [vmem:[%s11 + $0xbc] sm:$0xf]
    %v8771 = vunpack.c.l.b16 %v8707
    %v8772 = vunpack.c.h.b16 %v8707
    %v8773 = vunpack.c.l.b16 %v8708
    %v8774 = vunpack.c.l.b16 %v8709
    %v8775 = vunpack.c.h.b16 %v8709
    %v8776 = vunpack.c.l.b16 %v8710
    %v8777 = vunpack.c.l.b16 %v8711
    %v8778 = vunpack.c.h.b16 %v8711
    %v8779 = vunpack.c.l.b16 %v8712
    %v8780 = vunpack.c.l.b16 %v8713
    %v8781 = vunpack.c.h.b16 %v8713
    %v8782 = vunpack.c.l.b16 %v8714
    %v8783 = vunpack.c.l.b16 %v8715
    %v8784 = vunpack.c.h.b16 %v8715
    %v8785 = vunpack.c.l.b16 %v8716
    %v8786 = vunpack.c.l.b16 %v8717
    %v8787 = vunpack.c.h.b16 %v8717
    %v8788 = vunpack.c.l.b16 %v8718
    %v8789 = vunpack.c.l.b16 %v8719
    %v8790 = vunpack.c.h.b16 %v8719
    %v8791 = vunpack.c.l.b16 %v8720
    %v8792 = vunpack.c.l.b16 %v8721
    %v8793 = vunpack.c.h.b16 %v8721
    %v8794 = vunpack.c.l.b16 %v8722
    %v8795 = vunpack.c.l.b16 %v8723
    %v8796 = vunpack.c.h.b16 %v8723
    %v8797 = vunpack.c.l.b16 %v8724
    %v8798 = vunpack.c.l.b16 %v8725
    %v8799 = vunpack.c.h.b16 %v8725
    %v8800 = vunpack.c.l.b16 %v8726
    %v8801 = vunpack.c.l.b16 %v8727
    %v8802 = vunpack.c.h.b16 %v8727
    %v8803 = vunpack.c.l.b16 %v8728
    %v8804 = vunpack.c.l.b16 %v8729
    %v8805 = vunpack.c.h.b16 %v8729
    %v8806 = vunpack.c.l.b16 %v8730
    %v8807 = vunpack.c.l.b16 %v8731
    %v8808 = vunpack.c.h.b16 %v8731
    %v8809 = vunpack.c.l.b16 %v8732
    %v8810 = vunpack.c.l.b16 %v8733
    %v8811 = vunpack.c.h.b16 %v8733
    %v8812 = vunpack.c.l.b16 %v8734
    %v8813 = vunpack.c.l.b16 %v8735
    %v8814 = vunpack.c.h.b16 %v8735
    %v8815 = vunpack.c.l.b16 %v8736
    %v8816 = vunpack.c.l.b16 %v8737
    %v8817 = vunpack.c.h.b16 %v8737
    %v8818 = vunpack.c.l.b16 %v8738
    %v8819 = vpack.c.b16 %v8774, %v8771
    %v8820 = vpack.c.b16 %v8775, %v8772
    %v8821 = vpack.c.b16 %v8776, %v8773
    %v8822 = vpack.c.b16 %v8780, %v8777
    %v8823 = vpack.c.b16 %v8781, %v8778
    %v8824 = vpack.c.b16 %v8782, %v8779
    %v8825 = vpack.c.b16 %v8786, %v8783
    %v8826 = vpack.c.b16 %v8787, %v8784
    %v8827 = vpack.c.b16 %v8788, %v8785
    %v8828 = vpack.c.b16 %v8792, %v8789
    %v8829 = vpack.c.b16 %v8793, %v8790
    %v8830 = vpack.c.b16 %v8794, %v8791
    %v8831 = vpack.c.b16 %v8798, %v8795
    %v8832 = vpack.c.b16 %v8799, %v8796
    %v8833 = vpack.c.b16 %v8800, %v8797
    %v8834 = vpack.c.b16 %v8804, %v8801
    %v8835 = vpack.c.b16 %v8805, %v8802
    %v8836 = vpack.c.b16 %v8806, %v8803
    %v8837 = vpack.c.b16 %v8810, %v8807
    %v8838 = vpack.c.b16 %v8811, %v8808
    %v8839 = vpack.c.b16 %v8812, %v8809
    %v8840 = vpack.c.b16 %v8816, %v8813
    %v8841 = vpack.c.b16 %v8817, %v8814
    %v8842 = vpack.c.b16 %v8818, %v8815
    %8867 = vmatprep.subr.bf16.mxu0 %v8841
    %8868 = vmatpush1.bf16.msra.mxu0 %v8840
    %8869 = vmatprep.subr.bf16.mxu0 %v8838
    %8870 = vmatpush1.bf16.msra.mxu0 %v8837
    %8871 = vmatprep.subr.bf16.mxu0 %v8835
    %8872 = vmatpush1.bf16.msra.mxu0 %v8834
    %8873 = vmatprep.subr.bf16.mxu0 %v8832
    %8874 = vmatpush1.bf16.msra.mxu0 %v8831
    %8875 = vmatprep.subr.bf16.mxu0 %v8829
    %8876 = vmatpush1.bf16.msra.mxu0 %v8828
    %8877 = vmatprep.subr.bf16.mxu0 %v8826
    %8878 = vmatpush1.bf16.msra.mxu0 %v8825
    %8879 = vmatprep.subr.bf16.mxu0 %v8823
    %8880 = vmatpush1.bf16.msra.mxu0 %v8822
    %8881 = vmatprep.subr.bf16.mxu0 %v8820
    %8882 = vmatpush1.bf16.msra.mxu0 %v8819
    %8883 = vmatprep.subr.bf16.mxu0 0
    %8884 = vmatpush2.bf16.msra.mxu0 0
    %8885 = vmatprep.subr.bf16.mxu0 0
    %8886 = vmatpush2.bf16.msra.mxu0 0
    %8887 = vmatprep.subr.bf16.mxu0 0
    %8888 = vmatpush2.bf16.msra.mxu0 0
    %8889 = vmatprep.subr.bf16.mxu0 0
    %8890 = vmatpush2.bf16.msra.mxu0 0
    %8891 = vmatprep.subr.bf16.mxu0 0
    %8892 = vmatpush2.bf16.msra.mxu0 0
    %8893 = vmatprep.subr.bf16.mxu0 0
    %8894 = vmatpush2.bf16.msra.mxu0 0
    %8895 = vmatprep.subr.bf16.mxu0 0
    %8896 = vmatpush2.bf16.msra.mxu0 0
    %8897 = vmatprep.subr.bf16.mxu0 0
    %8898 = vmatpush2.bf16.msra.mxu0 0
    %8899 = vmatprep.mubr.bf16.mxu0 0
    %8900 = vmatmul.mubr.bf16.gmra.mxu0 %v8706
    %v8901 = vpop.f32.mrf.mxu0
    %v8902 = vadd.f32 %v6024, %v8901
    %v8903 = vpop.f32.mrf.mxu0
    %v8904 = vadd.f32 %v6028, %v8903
    %v8905 = vpop.f32.mrf.mxu0
    %v8906 = vpop.f32.mrf.mxu0
    %8907 = vdwg.mxu0
    %8908 = vmatprep.subr.bf16.mxu0 0
    %8909 = vmatpush1.bf16.msra.mxu0 %v8842
    %8910 = vmatprep.subr.bf16.mxu0 0
    %8911 = vmatpush1.bf16.msra.mxu0 %v8839
    %8912 = vmatprep.subr.bf16.mxu0 0
    %8913 = vmatpush1.bf16.msra.mxu0 %v8836
    %8914 = vmatprep.subr.bf16.mxu0 0
    %8915 = vmatpush1.bf16.msra.mxu0 %v8833
    %8916 = vmatprep.subr.bf16.mxu0 0
    %8917 = vmatpush1.bf16.msra.mxu0 %v8830
    %8918 = vmatprep.subr.bf16.mxu0 0
    %8919 = vmatpush1.bf16.msra.mxu0 %v8827
    %8920 = vmatprep.subr.bf16.mxu0 0
    %8921 = vmatpush1.bf16.msra.mxu0 %v8824
    %8922 = vmatprep.subr.bf16.mxu0 0
    %8923 = vmatpush1.bf16.msra.mxu0 %v8821
    %8924 = vmatprep.subr.bf16.mxu0 0
    %8925 = vmatpush2.bf16.msra.mxu0 0
    %8926 = vmatprep.subr.bf16.mxu0 0
    %8927 = vmatpush2.bf16.msra.mxu0 0
    %8928 = vmatprep.subr.bf16.mxu0 0
    %8929 = vmatpush2.bf16.msra.mxu0 0
    %8930 = vmatprep.subr.bf16.mxu0 0
    %8931 = vmatpush2.bf16.msra.mxu0 0
    %8932 = vmatprep.subr.bf16.mxu0 0
    %8933 = vmatpush2.bf16.msra.mxu0 0
    %8934 = vmatprep.subr.bf16.mxu0 0
    %8935 = vmatpush2.bf16.msra.mxu0 0
    %8936 = vmatprep.subr.bf16.mxu0 0
    %8937 = vmatpush2.bf16.msra.mxu0 0
    %8938 = vmatprep.subr.bf16.mxu0 0
    %8939 = vmatpush2.bf16.msra.mxu0 0
    %8940 = vmatprep.mubr.bf16.mxu0 0
    %8941 = vmatmul.mubr.bf16.gmra.mxu0 %v8706
    %v8942 = vpop.f32.mrf.mxu0
    %v8943 = vadd.f32 %v6032, %v8942
    %v8944 = vpop.f32.mrf.mxu0
    %v8945 = vpop.f32.mrf.mxu0
    %v8946 = vpop.f32.mrf.mxu0
    %8947 = vdwg.mxu0
    %v8948 = vld [vmem:[#allocation2 + $0x78] sm:$0xff]
    %v8949 = vld [vmem:[#allocation2 + $0x80] sm:$0xff]
    %v8950 = vld [vmem:[#allocation2 + $0x88] sm:$0xff]
    %v8951 = vadd.f32 %v8948, %v8902
    %v8952 = vxor.u32 %v8951, 2147483648
    %v8953 = vmul.f32 %v8952, 1.442695
    %v8954 = vpow.pop %v8953
    %v8955 = vadd.f32 %v8954, 1.0
    %v8956 = vrcp.pop %v8955
    %v8957 = vmul.f32 1.0, %v8956
    %v8958 = vadd.f32 %v8949, %v8904
    %v8959 = vxor.u32 %v8958, 2147483648
    %v8960 = vmul.f32 %v8959, 1.442695
    %v8961 = vpow.pop %v8960
    %v8962 = vadd.f32 %v8961, 1.0
    %v8963 = vrcp.pop %v8962
    %v8964 = vmul.f32 1.0, %v8963
    %v8965 = vmul.f32 %v8957, %v8943
    %v8966 = vadd.f32 %v8950, %v8965
    %v8967 = vtanh.pop %v8966
    %v8968 = vsub.f32 1.0, %v8964
    %v8969 = vmul.f32 %v8968, %v8967
    %v8970 = vmul.f32 %v8964, %v8434
    %v8971 = vadd.f32 %v8969, %v8970
    %v8972 = vsel %vm100, %v8971, %v8434
    %v8973 = vsel %vm100, %v8971, 0.0
    %v8974 = vpack.c.bf16 %v8702, %v8702
    %v8975 = vld [vmem:[%s15] sm:$0xff]
    %v8976 = vld [vmem:[%s15 + $0x8] sm:$0xf]
    %v8977 = vld [vmem:[%s15 + $0xc] sm:$0xff]
    %v8978 = vld [vmem:[%s15 + $0x14] sm:$0xf]
    %v8979 = vld [vmem:[%s15 + $0x18] sm:$0xff]
    %v8980 = vld [vmem:[%s15 + $0x20] sm:$0xf]
    %v8981 = vld [vmem:[%s15 + $0x24] sm:$0xff]
    %v8982 = vld [vmem:[%s15 + $0x2c] sm:$0xf]
    %v8983 = vld [vmem:[%s15 + $0x30] sm:$0xff]
    %v8984 = vld [vmem:[%s15 + $0x38] sm:$0xf]
    %v8985 = vld [vmem:[%s15 + $0x3c] sm:$0xff]
    %v8986 = vld [vmem:[%s15 + $0x44] sm:$0xf]
    %v8987 = vld [vmem:[%s15 + $0x48] sm:$0xff]
    %v8988 = vld [vmem:[%s15 + $0x50] sm:$0xf]
    %v8989 = vld [vmem:[%s15 + $0x54] sm:$0xff]
    %v8990 = vld [vmem:[%s15 + $0x5c] sm:$0xf]
    %v8991 = vld [vmem:[%s15 + $0x60] sm:$0xff]
    %v8992 = vld [vmem:[%s15 + $0x68] sm:$0xf]
    %v8993 = vld [vmem:[%s15 + $0x6c] sm:$0xff]
    %v8994 = vld [vmem:[%s15 + $0x74] sm:$0xf]
    %v8995 = vld [vmem:[%s15 + $0x78] sm:$0xff]
    %v8996 = vld [vmem:[%s15 + $0x80] sm:$0xf]
    %v8997 = vld [vmem:[%s15 + $0x84] sm:$0xff]
    %v8998 = vld [vmem:[%s15 + $0x8c] sm:$0xf]
    %v8999 = vld [vmem:[%s15 + $0x90] sm:$0xff]
    %v9000 = vld [vmem:[%s15 + $0x98] sm:$0xf]
    %v9001 = vld [vmem:[%s15 + $0x9c] sm:$0xff]
    %v9002 = vld [vmem:[%s15 + $0xa4] sm:$0xf]
    %v9003 = vld [vmem:[%s15 + $0xa8] sm:$0xff]
    %v9004 = vld [vmem:[%s15 + $0xb0] sm:$0xf]
    %v9005 = vld [vmem:[%s15 + $0xb4] sm:$0xff]
    %v9006 = vld [vmem:[%s15 + $0xbc] sm:$0xf]
    %v9039 = vunpack.c.l.b16 %v8975
    %v9040 = vunpack.c.h.b16 %v8975
    %v9041 = vunpack.c.l.b16 %v8976
    %v9042 = vunpack.c.l.b16 %v8977
    %v9043 = vunpack.c.h.b16 %v8977
    %v9044 = vunpack.c.l.b16 %v8978
    %v9045 = vunpack.c.l.b16 %v8979
    %v9046 = vunpack.c.h.b16 %v8979
    %v9047 = vunpack.c.l.b16 %v8980
    %v9048 = vunpack.c.l.b16 %v8981
    %v9049 = vunpack.c.h.b16 %v8981
    %v9050 = vunpack.c.l.b16 %v8982
    %v9051 = vunpack.c.l.b16 %v8983
    %v9052 = vunpack.c.h.b16 %v8983
    %v9053 = vunpack.c.l.b16 %v8984
    %v9054 = vunpack.c.l.b16 %v8985
    %v9055 = vunpack.c.h.b16 %v8985
    %v9056 = vunpack.c.l.b16 %v8986
    %v9057 = vunpack.c.l.b16 %v8987
    %v9058 = vunpack.c.h.b16 %v8987
    %v9059 = vunpack.c.l.b16 %v8988
    %v9060 = vunpack.c.l.b16 %v8989
    %v9061 = vunpack.c.h.b16 %v8989
    %v9062 = vunpack.c.l.b16 %v8990
    %v9063 = vunpack.c.l.b16 %v8991
    %v9064 = vunpack.c.h.b16 %v8991
    %v9065 = vunpack.c.l.b16 %v8992
    %v9066 = vunpack.c.l.b16 %v8993
    %v9067 = vunpack.c.h.b16 %v8993
    %v9068 = vunpack.c.l.b16 %v8994
    %v9069 = vunpack.c.l.b16 %v8995
    %v9070 = vunpack.c.h.b16 %v8995
    %v9071 = vunpack.c.l.b16 %v8996
    %v9072 = vunpack.c.l.b16 %v8997
    %v9073 = vunpack.c.h.b16 %v8997
    %v9074 = vunpack.c.l.b16 %v8998
    %v9075 = vunpack.c.l.b16 %v8999
    %v9076 = vunpack.c.h.b16 %v8999
    %v9077 = vunpack.c.l.b16 %v9000
    %v9078 = vunpack.c.l.b16 %v9001
    %v9079 = vunpack.c.h.b16 %v9001
    %v9080 = vunpack.c.l.b16 %v9002
    %v9081 = vunpack.c.l.b16 %v9003
    %v9082 = vunpack.c.h.b16 %v9003
    %v9083 = vunpack.c.l.b16 %v9004
    %v9084 = vunpack.c.l.b16 %v9005
    %v9085 = vunpack.c.h.b16 %v9005
    %v9086 = vunpack.c.l.b16 %v9006
    %v9087 = vpack.c.b16 %v9042, %v9039
    %v9088 = vpack.c.b16 %v9043, %v9040
    %v9089 = vpack.c.b16 %v9044, %v9041
    %v9090 = vpack.c.b16 %v9048, %v9045
    %v9091 = vpack.c.b16 %v9049, %v9046
    %v9092 = vpack.c.b16 %v9050, %v9047
    %v9093 = vpack.c.b16 %v9054, %v9051
    %v9094 = vpack.c.b16 %v9055, %v9052
    %v9095 = vpack.c.b16 %v9056, %v9053
    %v9096 = vpack.c.b16 %v9060, %v9057
    %v9097 = vpack.c.b16 %v9061, %v9058
    %v9098 = vpack.c.b16 %v9062, %v9059
    %v9099 = vpack.c.b16 %v9066, %v9063
    %v9100 = vpack.c.b16 %v9067, %v9064
    %v9101 = vpack.c.b16 %v9068, %v9065
    %v9102 = vpack.c.b16 %v9072, %v9069
    %v9103 = vpack.c.b16 %v9073, %v9070
    %v9104 = vpack.c.b16 %v9074, %v9071
    %v9105 = vpack.c.b16 %v9078, %v9075
    %v9106 = vpack.c.b16 %v9079, %v9076
    %v9107 = vpack.c.b16 %v9080, %v9077
    %v9108 = vpack.c.b16 %v9084, %v9081
    %v9109 = vpack.c.b16 %v9085, %v9082
    %v9110 = vpack.c.b16 %v9086, %v9083
    %9135 = vmatprep.subr.bf16.mxu0 %v9109
    %9136 = vmatpush1.bf16.msra.mxu0 %v9108
    %9137 = vmatprep.subr.bf16.mxu0 %v9106
    %9138 = vmatpush1.bf16.msra.mxu0 %v9105
    %9139 = vmatprep.subr.bf16.mxu0 %v9103
    %9140 = vmatpush1.bf16.msra.mxu0 %v9102
    %9141 = vmatprep.subr.bf16.mxu0 %v9100
    %9142 = vmatpush1.bf16.msra.mxu0 %v9099
    %9143 = vmatprep.subr.bf16.mxu0 %v9097
    %9144 = vmatpush1.bf16.msra.mxu0 %v9096
    %9145 = vmatprep.subr.bf16.mxu0 %v9094
    %9146 = vmatpush1.bf16.msra.mxu0 %v9093
    %9147 = vmatprep.subr.bf16.mxu0 %v9091
    %9148 = vmatpush1.bf16.msra.mxu0 %v9090
    %9149 = vmatprep.subr.bf16.mxu0 %v9088
    %9150 = vmatpush1.bf16.msra.mxu0 %v9087
    %9151 = vmatprep.subr.bf16.mxu0 0
    %9152 = vmatpush2.bf16.msra.mxu0 0
    %9153 = vmatprep.subr.bf16.mxu0 0
    %9154 = vmatpush2.bf16.msra.mxu0 0
    %9155 = vmatprep.subr.bf16.mxu0 0
    %9156 = vmatpush2.bf16.msra.mxu0 0
    %9157 = vmatprep.subr.bf16.mxu0 0
    %9158 = vmatpush2.bf16.msra.mxu0 0
    %9159 = vmatprep.subr.bf16.mxu0 0
    %9160 = vmatpush2.bf16.msra.mxu0 0
    %9161 = vmatprep.subr.bf16.mxu0 0
    %9162 = vmatpush2.bf16.msra.mxu0 0
    %9163 = vmatprep.subr.bf16.mxu0 0
    %9164 = vmatpush2.bf16.msra.mxu0 0
    %9165 = vmatprep.subr.bf16.mxu0 0
    %9166 = vmatpush2.bf16.msra.mxu0 0
    %9167 = vmatprep.mubr.bf16.mxu0 0
    %9168 = vmatmul.mubr.bf16.gmra.mxu0 %v8974
    %v9169 = vpop.f32.mrf.mxu0
    %v9170 = vadd.f32 %v6306, %v9169
    %v9171 = vpop.f32.mrf.mxu0
    %v9172 = vadd.f32 %v6310, %v9171
    %v9173 = vpop.f32.mrf.mxu0
    %v9174 = vpop.f32.mrf.mxu0
    %9175 = vdwg.mxu0
    %9176 = vmatprep.subr.bf16.mxu0 0
    %9177 = vmatpush1.bf16.msra.mxu0 %v9110
    %9178 = vmatprep.subr.bf16.mxu0 0
    %9179 = vmatpush1.bf16.msra.mxu0 %v9107
    %9180 = vmatprep.subr.bf16.mxu0 0
    %9181 = vmatpush1.bf16.msra.mxu0 %v9104
    %9182 = vmatprep.subr.bf16.mxu0 0
    %9183 = vmatpush1.bf16.msra.mxu0 %v9101
    %9184 = vmatprep.subr.bf16.mxu0 0
    %9185 = vmatpush1.bf16.msra.mxu0 %v9098
    %9186 = vmatprep.subr.bf16.mxu0 0
    %9187 = vmatpush1.bf16.msra.mxu0 %v9095
    %9188 = vmatprep.subr.bf16.mxu0 0
    %9189 = vmatpush1.bf16.msra.mxu0 %v9092
    %9190 = vmatprep.subr.bf16.mxu0 0
    %9191 = vmatpush1.bf16.msra.mxu0 %v9089
    %9192 = vmatprep.subr.bf16.mxu0 0
    %9193 = vmatpush2.bf16.msra.mxu0 0
    %9194 = vmatprep.subr.bf16.mxu0 0
    %9195 = vmatpush2.bf16.msra.mxu0 0
    %9196 = vmatprep.subr.bf16.mxu0 0
    %9197 = vmatpush2.bf16.msra.mxu0 0
    %9198 = vmatprep.subr.bf16.mxu0 0
    %9199 = vmatpush2.bf16.msra.mxu0 0
    %9200 = vmatprep.subr.bf16.mxu0 0
    %9201 = vmatpush2.bf16.msra.mxu0 0
    %9202 = vmatprep.subr.bf16.mxu0 0
    %9203 = vmatpush2.bf16.msra.mxu0 0
    %9204 = vmatprep.subr.bf16.mxu0 0
    %9205 = vmatpush2.bf16.msra.mxu0 0
    %9206 = vmatprep.subr.bf16.mxu0 0
    %9207 = vmatpush2.bf16.msra.mxu0 0
    %9208 = vmatprep.mubr.bf16.mxu0 0
    %9209 = vmatmul.mubr.bf16.gmra.mxu0 %v8974
    %v9210 = vpop.f32.mrf.mxu0
    %v9211 = vadd.f32 %v6314, %v9210
    %v9212 = vpop.f32.mrf.mxu0
    %v9213 = vpop.f32.mrf.mxu0
    %v9214 = vpop.f32.mrf.mxu0
    %9215 = vdwg.mxu0
    %v9216 = vld [vmem:[#allocation3 + $0x30] sm:$0xff]
    %v9217 = vld [vmem:[#allocation3 + $0x38] sm:$0xff]
    %v9218 = vld [vmem:[#allocation3 + $0x40] sm:$0xff]
    %v9219 = vadd.f32 %v9216, %v9170
    %v9220 = vxor.u32 %v9219, 2147483648
    %v9221 = vmul.f32 %v9220, 1.442695
    %v9222 = vpow.pop %v9221
    %v9223 = vadd.f32 %v9222, 1.0
    %v9224 = vrcp.pop %v9223
    %v9225 = vmul.f32 1.0, %v9224
    %v9226 = vadd.f32 %v9217, %v9172
    %v9227 = vxor.u32 %v9226, 2147483648
    %v9228 = vmul.f32 %v9227, 1.442695
    %v9229 = vpow.pop %v9228
    %v9230 = vadd.f32 %v9229, 1.0
    %v9231 = vrcp.pop %v9230
    %v9232 = vmul.f32 1.0, %v9231
    %v9233 = vmul.f32 %v9225, %v9211
    %v9234 = vadd.f32 %v9218, %v9233
    %v9235 = vtanh.pop %v9234
    %v9236 = vsub.f32 1.0, %v9232
    %v9237 = vmul.f32 %v9236, %v9235
    %v9238 = vmul.f32 %v9232, %v8702
    %v9239 = vadd.f32 %v9237, %v9238
    %v9240 = vsel %vm82, %v9239, %v8702
    %v9241 = vsel %vm82, %v9239, 0.0
    %9242 = vst [vmem:[#allocation6 + $0x28] sm:$0xff] %v8973
    %9243 = vst [vmem:[#allocation5 + $0x10] sm:$0xff] %v9241
    %v9244 = vpack.c.bf16 %v8972, %v8972
    %v9245 = vld [vmem:[%s11] sm:$0xff]
    %v9246 = vld [vmem:[%s11 + $0x8] sm:$0xf]
    %v9247 = vld [vmem:[%s11 + $0xc] sm:$0xff]
    %v9248 = vld [vmem:[%s11 + $0x14] sm:$0xf]
    %v9249 = vld [vmem:[%s11 + $0x18] sm:$0xff]
    %v9250 = vld [vmem:[%s11 + $0x20] sm:$0xf]
    %v9251 = vld [vmem:[%s11 + $0x24] sm:$0xff]
    %v9252 = vld [vmem:[%s11 + $0x2c] sm:$0xf]
    %v9253 = vld [vmem:[%s11 + $0x30] sm:$0xff]
    %v9254 = vld [vmem:[%s11 + $0x38] sm:$0xf]
    %v9255 = vld [vmem:[%s11 + $0x3c] sm:$0xff]
    %v9256 = vld [vmem:[%s11 + $0x44] sm:$0xf]
    %v9257 = vld [vmem:[%s11 + $0x48] sm:$0xff]
    %v9258 = vld [vmem:[%s11 + $0x50] sm:$0xf]
    %v9259 = vld [vmem:[%s11 + $0x54] sm:$0xff]
    %v9260 = vld [vmem:[%s11 + $0x5c] sm:$0xf]
    %v9261 = vld [vmem:[%s11 + $0x60] sm:$0xff]
    %v9262 = vld [vmem:[%s11 + $0x68] sm:$0xf]
    %v9263 = vld [vmem:[%s11 + $0x6c] sm:$0xff]
    %v9264 = vld [vmem:[%s11 + $0x74] sm:$0xf]
    %v9265 = vld [vmem:[%s11 + $0x78] sm:$0xff]
    %v9266 = vld [vmem:[%s11 + $0x80] sm:$0xf]
    %v9267 = vld [vmem:[%s11 + $0x84] sm:$0xff]
    %v9268 = vld [vmem:[%s11 + $0x8c] sm:$0xf]
    %v9269 = vld [vmem:[%s11 + $0x90] sm:$0xff]
    %v9270 = vld [vmem:[%s11 + $0x98] sm:$0xf]
    %v9271 = vld [vmem:[%s11 + $0x9c] sm:$0xff]
    %v9272 = vld [vmem:[%s11 + $0xa4] sm:$0xf]
    %v9273 = vld [vmem:[%s11 + $0xa8] sm:$0xff]
    %v9274 = vld [vmem:[%s11 + $0xb0] sm:$0xf]
    %v9275 = vld [vmem:[%s11 + $0xb4] sm:$0xff]
    %v9276 = vld [vmem:[%s11 + $0xbc] sm:$0xf]
    %v9309 = vunpack.c.l.b16 %v9245
    %v9310 = vunpack.c.h.b16 %v9245
    %v9311 = vunpack.c.l.b16 %v9246
    %v9312 = vunpack.c.l.b16 %v9247
    %v9313 = vunpack.c.h.b16 %v9247
    %v9314 = vunpack.c.l.b16 %v9248
    %v9315 = vunpack.c.l.b16 %v9249
    %v9316 = vunpack.c.h.b16 %v9249
    %v9317 = vunpack.c.l.b16 %v9250
    %v9318 = vunpack.c.l.b16 %v9251
    %v9319 = vunpack.c.h.b16 %v9251
    %v9320 = vunpack.c.l.b16 %v9252
    %v9321 = vunpack.c.l.b16 %v9253
    %v9322 = vunpack.c.h.b16 %v9253
    %v9323 = vunpack.c.l.b16 %v9254
    %v9324 = vunpack.c.l.b16 %v9255
    %v9325 = vunpack.c.h.b16 %v9255
    %v9326 = vunpack.c.l.b16 %v9256
    %v9327 = vunpack.c.l.b16 %v9257
    %v9328 = vunpack.c.h.b16 %v9257
    %v9329 = vunpack.c.l.b16 %v9258
    %v9330 = vunpack.c.l.b16 %v9259
    %v9331 = vunpack.c.h.b16 %v9259
    %v9332 = vunpack.c.l.b16 %v9260
    %v9333 = vunpack.c.l.b16 %v9261
    %v9334 = vunpack.c.h.b16 %v9261
    %v9335 = vunpack.c.l.b16 %v9262
    %v9336 = vunpack.c.l.b16 %v9263
    %v9337 = vunpack.c.h.b16 %v9263
    %v9338 = vunpack.c.l.b16 %v9264
    %v9339 = vunpack.c.l.b16 %v9265
    %v9340 = vunpack.c.h.b16 %v9265
    %v9341 = vunpack.c.l.b16 %v9266
    %v9342 = vunpack.c.l.b16 %v9267
    %v9343 = vunpack.c.h.b16 %v9267
    %v9344 = vunpack.c.l.b16 %v9268
    %v9345 = vunpack.c.l.b16 %v9269
    %v9346 = vunpack.c.h.b16 %v9269
    %v9347 = vunpack.c.l.b16 %v9270
    %v9348 = vunpack.c.l.b16 %v9271
    %v9349 = vunpack.c.h.b16 %v9271
    %v9350 = vunpack.c.l.b16 %v9272
    %v9351 = vunpack.c.l.b16 %v9273
    %v9352 = vunpack.c.h.b16 %v9273
    %v9353 = vunpack.c.l.b16 %v9274
    %v9354 = vunpack.c.l.b16 %v9275
    %v9355 = vunpack.c.h.b16 %v9275
    %v9356 = vunpack.c.l.b16 %v9276
    %v9357 = vpack.c.b16 %v9312, %v9309
    %v9358 = vpack.c.b16 %v9313, %v9310
    %v9359 = vpack.c.b16 %v9314, %v9311
    %v9360 = vpack.c.b16 %v9318, %v9315
    %v9361 = vpack.c.b16 %v9319, %v9316
    %v9362 = vpack.c.b16 %v9320, %v9317
    %v9363 = vpack.c.b16 %v9324, %v9321
    %v9364 = vpack.c.b16 %v9325, %v9322
    %v9365 = vpack.c.b16 %v9326, %v9323
    %v9366 = vpack.c.b16 %v9330, %v9327
    %v9367 = vpack.c.b16 %v9331, %v9328
    %v9368 = vpack.c.b16 %v9332, %v9329
    %v9369 = vpack.c.b16 %v9336, %v9333
    %v9370 = vpack.c.b16 %v9337, %v9334
    %v9371 = vpack.c.b16 %v9338, %v9335
    %v9372 = vpack.c.b16 %v9342, %v9339
    %v9373 = vpack.c.b16 %v9343, %v9340
    %v9374 = vpack.c.b16 %v9344, %v9341
    %v9375 = vpack.c.b16 %v9348, %v9345
    %v9376 = vpack.c.b16 %v9349, %v9346
    %v9377 = vpack.c.b16 %v9350, %v9347
    %v9378 = vpack.c.b16 %v9354, %v9351
    %v9379 = vpack.c.b16 %v9355, %v9352
    %v9380 = vpack.c.b16 %v9356, %v9353
    %9405 = vmatprep.subr.bf16.mxu0 %v9379
    %9406 = vmatpush1.bf16.msra.mxu0 %v9378
    %9407 = vmatprep.subr.bf16.mxu0 %v9376
    %9408 = vmatpush1.bf16.msra.mxu0 %v9375
    %9409 = vmatprep.subr.bf16.mxu0 %v9373
    %9410 = vmatpush1.bf16.msra.mxu0 %v9372
    %9411 = vmatprep.subr.bf16.mxu0 %v9370
    %9412 = vmatpush1.bf16.msra.mxu0 %v9369
    %9413 = vmatprep.subr.bf16.mxu0 %v9367
    %9414 = vmatpush1.bf16.msra.mxu0 %v9366
    %9415 = vmatprep.subr.bf16.mxu0 %v9364
    %9416 = vmatpush1.bf16.msra.mxu0 %v9363
    %9417 = vmatprep.subr.bf16.mxu0 %v9361
    %9418 = vmatpush1.bf16.msra.mxu0 %v9360
    %9419 = vmatprep.subr.bf16.mxu0 %v9358
    %9420 = vmatpush1.bf16.msra.mxu0 %v9357
    %9421 = vmatprep.subr.bf16.mxu0 0
    %9422 = vmatpush2.bf16.msra.mxu0 0
    %9423 = vmatprep.subr.bf16.mxu0 0
    %9424 = vmatpush2.bf16.msra.mxu0 0
    %9425 = vmatprep.subr.bf16.mxu0 0
    %9426 = vmatpush2.bf16.msra.mxu0 0
    %9427 = vmatprep.subr.bf16.mxu0 0
    %9428 = vmatpush2.bf16.msra.mxu0 0
    %9429 = vmatprep.subr.bf16.mxu0 0
    %9430 = vmatpush2.bf16.msra.mxu0 0
    %9431 = vmatprep.subr.bf16.mxu0 0
    %9432 = vmatpush2.bf16.msra.mxu0 0
    %9433 = vmatprep.subr.bf16.mxu0 0
    %9434 = vmatpush2.bf16.msra.mxu0 0
    %9435 = vmatprep.subr.bf16.mxu0 0
    %9436 = vmatpush2.bf16.msra.mxu0 0
    %9437 = vmatprep.mubr.bf16.mxu0 0
    %9438 = vmatmul.mubr.bf16.gmra.mxu0 %v9244
    %v9439 = vpop.f32.mrf.mxu0
    %v9440 = vadd.f32 %v6024, %v9439
    %v9441 = vpop.f32.mrf.mxu0
    %v9442 = vadd.f32 %v6028, %v9441
    %v9443 = vpop.f32.mrf.mxu0
    %v9444 = vpop.f32.mrf.mxu0
    %9445 = vdwg.mxu0
    %9446 = vmatprep.subr.bf16.mxu0 0
    %9447 = vmatpush1.bf16.msra.mxu0 %v9380
    %9448 = vmatprep.subr.bf16.mxu0 0
    %9449 = vmatpush1.bf16.msra.mxu0 %v9377
    %9450 = vmatprep.subr.bf16.mxu0 0
    %9451 = vmatpush1.bf16.msra.mxu0 %v9374
    %9452 = vmatprep.subr.bf16.mxu0 0
    %9453 = vmatpush1.bf16.msra.mxu0 %v9371
    %9454 = vmatprep.subr.bf16.mxu0 0
    %9455 = vmatpush1.bf16.msra.mxu0 %v9368
    %9456 = vmatprep.subr.bf16.mxu0 0
    %9457 = vmatpush1.bf16.msra.mxu0 %v9365
    %9458 = vmatprep.subr.bf16.mxu0 0
    %9459 = vmatpush1.bf16.msra.mxu0 %v9362
    %9460 = vmatprep.subr.bf16.mxu0 0
    %9461 = vmatpush1.bf16.msra.mxu0 %v9359
    %9462 = vmatprep.subr.bf16.mxu0 0
    %9463 = vmatpush2.bf16.msra.mxu0 0
    %9464 = vmatprep.subr.bf16.mxu0 0
    %9465 = vmatpush2.bf16.msra.mxu0 0
    %9466 = vmatprep.subr.bf16.mxu0 0
    %9467 = vmatpush2.bf16.msra.mxu0 0
    %9468 = vmatprep.subr.bf16.mxu0 0
    %9469 = vmatpush2.bf16.msra.mxu0 0
    %9470 = vmatprep.subr.bf16.mxu0 0
    %9471 = vmatpush2.bf16.msra.mxu0 0
    %9472 = vmatprep.subr.bf16.mxu0 0
    %9473 = vmatpush2.bf16.msra.mxu0 0
    %9474 = vmatprep.subr.bf16.mxu0 0
    %9475 = vmatpush2.bf16.msra.mxu0 0
    %9476 = vmatprep.subr.bf16.mxu0 0
    %9477 = vmatpush2.bf16.msra.mxu0 0
    %9478 = vmatprep.mubr.bf16.mxu0 0
    %9479 = vmatmul.mubr.bf16.gmra.mxu0 %v9244
    %v9480 = vpop.f32.mrf.mxu0
    %v9481 = vadd.f32 %v6032, %v9480
    %v9482 = vpop.f32.mrf.mxu0
    %v9483 = vpop.f32.mrf.mxu0
    %v9484 = vpop.f32.mrf.mxu0
    %9485 = vdwg.mxu0
    %v9486 = vld [vmem:[#allocation2 + $0x90] sm:$0xff]
    %v9487 = vld [vmem:[#allocation2 + $0x98] sm:$0xff]
    %v9488 = vld [vmem:[#allocation2 + $0xa0] sm:$0xff]
    %v9489 = vadd.f32 %v9486, %v9440
    %v9490 = vxor.u32 %v9489, 2147483648
    %v9491 = vmul.f32 %v9490, 1.442695
    %v9492 = vpow.pop %v9491
    %v9493 = vadd.f32 %v9492, 1.0
    %v9494 = vrcp.pop %v9493
    %v9495 = vmul.f32 1.0, %v9494
    %v9496 = vadd.f32 %v9487, %v9442
    %v9497 = vxor.u32 %v9496, 2147483648
    %v9498 = vmul.f32 %v9497, 1.442695
    %v9499 = vpow.pop %v9498
    %v9500 = vadd.f32 %v9499, 1.0
    %v9501 = vrcp.pop %v9500
    %v9502 = vmul.f32 1.0, %v9501
    %v9503 = vmul.f32 %v9495, %v9481
    %v9504 = vadd.f32 %v9488, %v9503
    %v9505 = vtanh.pop %v9504
    %v9506 = vsub.f32 1.0, %v9502
    %v9507 = vmul.f32 %v9506, %v9505
    %v9508 = vmul.f32 %v9502, %v8972
    %v9509 = vadd.f32 %v9507, %v9508
    %v9510 = vsel %vm106, %v9509, %v8972
    %v9511 = vsel %vm106, %v9509, 0.0
    %v9512 = vpack.c.bf16 %v9240, %v9240
    %v9513 = vld [vmem:[%s15] sm:$0xff]
    %v9514 = vld [vmem:[%s15 + $0x8] sm:$0xf]
    %v9515 = vld [vmem:[%s15 + $0xc] sm:$0xff]
    %v9516 = vld [vmem:[%s15 + $0x14] sm:$0xf]
    %v9517 = vld [vmem:[%s15 + $0x18] sm:$0xff]
    %v9518 = vld [vmem:[%s15 + $0x20] sm:$0xf]
    %v9519 = vld [vmem:[%s15 + $0x24] sm:$0xff]
    %v9520 = vld [vmem:[%s15 + $0x2c] sm:$0xf]
    %v9521 = vld [vmem:[%s15 + $0x30] sm:$0xff]
    %v9522 = vld [vmem:[%s15 + $0x38] sm:$0xf]
    %v9523 = vld [vmem:[%s15 + $0x3c] sm:$0xff]
    %v9524 = vld [vmem:[%s15 + $0x44] sm:$0xf]
    %v9525 = vld [vmem:[%s15 + $0x48] sm:$0xff]
    %v9526 = vld [vmem:[%s15 + $0x50] sm:$0xf]
    %v9527 = vld [vmem:[%s15 + $0x54] sm:$0xff]
    %v9528 = vld [vmem:[%s15 + $0x5c] sm:$0xf]
    %v9529 = vld [vmem:[%s15 + $0x60] sm:$0xff]
    %v9530 = vld [vmem:[%s15 + $0x68] sm:$0xf]
    %v9531 = vld [vmem:[%s15 + $0x6c] sm:$0xff]
    %v9532 = vld [vmem:[%s15 + $0x74] sm:$0xf]
    %v9533 = vld [vmem:[%s15 + $0x78] sm:$0xff]
    %v9534 = vld [vmem:[%s15 + $0x80] sm:$0xf]
    %v9535 = vld [vmem:[%s15 + $0x84] sm:$0xff]
    %v9536 = vld [vmem:[%s15 + $0x8c] sm:$0xf]
    %v9537 = vld [vmem:[%s15 + $0x90] sm:$0xff]
    %v9538 = vld [vmem:[%s15 + $0x98] sm:$0xf]
    %v9539 = vld [vmem:[%s15 + $0x9c] sm:$0xff]
    %v9540 = vld [vmem:[%s15 + $0xa4] sm:$0xf]
    %v9541 = vld [vmem:[%s15 + $0xa8] sm:$0xff]
    %v9542 = vld [vmem:[%s15 + $0xb0] sm:$0xf]
    %v9543 = vld [vmem:[%s15 + $0xb4] sm:$0xff]
    %v9544 = vld [vmem:[%s15 + $0xbc] sm:$0xf]
    %v9577 = vunpack.c.l.b16 %v9513
    %v9578 = vunpack.c.h.b16 %v9513
    %v9579 = vunpack.c.l.b16 %v9514
    %v9580 = vunpack.c.l.b16 %v9515
    %v9581 = vunpack.c.h.b16 %v9515
    %v9582 = vunpack.c.l.b16 %v9516
    %v9583 = vunpack.c.l.b16 %v9517
    %v9584 = vunpack.c.h.b16 %v9517
    %v9585 = vunpack.c.l.b16 %v9518
    %v9586 = vunpack.c.l.b16 %v9519
    %v9587 = vunpack.c.h.b16 %v9519
    %v9588 = vunpack.c.l.b16 %v9520
    %v9589 = vunpack.c.l.b16 %v9521
    %v9590 = vunpack.c.h.b16 %v9521
    %v9591 = vunpack.c.l.b16 %v9522
    %v9592 = vunpack.c.l.b16 %v9523
    %v9593 = vunpack.c.h.b16 %v9523
    %v9594 = vunpack.c.l.b16 %v9524
    %v9595 = vunpack.c.l.b16 %v9525
    %v9596 = vunpack.c.h.b16 %v9525
    %v9597 = vunpack.c.l.b16 %v9526
    %v9598 = vunpack.c.l.b16 %v9527
    %v9599 = vunpack.c.h.b16 %v9527
    %v9600 = vunpack.c.l.b16 %v9528
    %v9601 = vunpack.c.l.b16 %v9529
    %v9602 = vunpack.c.h.b16 %v9529
    %v9603 = vunpack.c.l.b16 %v9530
    %v9604 = vunpack.c.l.b16 %v9531
    %v9605 = vunpack.c.h.b16 %v9531
    %v9606 = vunpack.c.l.b16 %v9532
    %v9607 = vunpack.c.l.b16 %v9533
    %v9608 = vunpack.c.h.b16 %v9533
    %v9609 = vunpack.c.l.b16 %v9534
    %v9610 = vunpack.c.l.b16 %v9535
    %v9611 = vunpack.c.h.b16 %v9535
    %v9612 = vunpack.c.l.b16 %v9536
    %v9613 = vunpack.c.l.b16 %v9537
    %v9614 = vunpack.c.h.b16 %v9537
    %v9615 = vunpack.c.l.b16 %v9538
    %v9616 = vunpack.c.l.b16 %v9539
    %v9617 = vunpack.c.h.b16 %v9539
    %v9618 = vunpack.c.l.b16 %v9540
    %v9619 = vunpack.c.l.b16 %v9541
    %v9620 = vunpack.c.h.b16 %v9541
    %v9621 = vunpack.c.l.b16 %v9542
    %v9622 = vunpack.c.l.b16 %v9543
    %v9623 = vunpack.c.h.b16 %v9543
    %v9624 = vunpack.c.l.b16 %v9544
    %v9625 = vpack.c.b16 %v9580, %v9577
    %v9626 = vpack.c.b16 %v9581, %v9578
    %v9627 = vpack.c.b16 %v9582, %v9579
    %v9628 = vpack.c.b16 %v9586, %v9583
    %v9629 = vpack.c.b16 %v9587, %v9584
    %v9630 = vpack.c.b16 %v9588, %v9585
    %v9631 = vpack.c.b16 %v9592, %v9589
    %v9632 = vpack.c.b16 %v9593, %v9590
    %v9633 = vpack.c.b16 %v9594, %v9591
    %v9634 = vpack.c.b16 %v9598, %v9595
    %v9635 = vpack.c.b16 %v9599, %v9596
    %v9636 = vpack.c.b16 %v9600, %v9597
    %v9637 = vpack.c.b16 %v9604, %v9601
    %v9638 = vpack.c.b16 %v9605, %v9602
    %v9639 = vpack.c.b16 %v9606, %v9603
    %v9640 = vpack.c.b16 %v9610, %v9607
    %v9641 = vpack.c.b16 %v9611, %v9608
    %v9642 = vpack.c.b16 %v9612, %v9609
    %v9643 = vpack.c.b16 %v9616, %v9613
    %v9644 = vpack.c.b16 %v9617, %v9614
    %v9645 = vpack.c.b16 %v9618, %v9615
    %v9646 = vpack.c.b16 %v9622, %v9619
    %v9647 = vpack.c.b16 %v9623, %v9620
    %v9648 = vpack.c.b16 %v9624, %v9621
    %9673 = vmatprep.subr.bf16.mxu0 %v9647
    %9674 = vmatpush1.bf16.msra.mxu0 %v9646
    %9675 = vmatprep.subr.bf16.mxu0 %v9644
    %9676 = vmatpush1.bf16.msra.mxu0 %v9643
    %9677 = vmatprep.subr.bf16.mxu0 %v9641
    %9678 = vmatpush1.bf16.msra.mxu0 %v9640
    %9679 = vmatprep.subr.bf16.mxu0 %v9638
    %9680 = vmatpush1.bf16.msra.mxu0 %v9637
    %9681 = vmatprep.subr.bf16.mxu0 %v9635
    %9682 = vmatpush1.bf16.msra.mxu0 %v9634
    %9683 = vmatprep.subr.bf16.mxu0 %v9632
    %9684 = vmatpush1.bf16.msra.mxu0 %v9631
    %9685 = vmatprep.subr.bf16.mxu0 %v9629
    %9686 = vmatpush1.bf16.msra.mxu0 %v9628
    %9687 = vmatprep.subr.bf16.mxu0 %v9626
    %9688 = vmatpush1.bf16.msra.mxu0 %v9625
    %9689 = vmatprep.subr.bf16.mxu0 0
    %9690 = vmatpush2.bf16.msra.mxu0 0
    %9691 = vmatprep.subr.bf16.mxu0 0
    %9692 = vmatpush2.bf16.msra.mxu0 0
    %9693 = vmatprep.subr.bf16.mxu0 0
    %9694 = vmatpush2.bf16.msra.mxu0 0
    %9695 = vmatprep.subr.bf16.mxu0 0
    %9696 = vmatpush2.bf16.msra.mxu0 0
    %9697 = vmatprep.subr.bf16.mxu0 0
    %9698 = vmatpush2.bf16.msra.mxu0 0
    %9699 = vmatprep.subr.bf16.mxu0 0
    %9700 = vmatpush2.bf16.msra.mxu0 0
    %9701 = vmatprep.subr.bf16.mxu0 0
    %9702 = vmatpush2.bf16.msra.mxu0 0
    %9703 = vmatprep.subr.bf16.mxu0 0
    %9704 = vmatpush2.bf16.msra.mxu0 0
    %9705 = vmatprep.mubr.bf16.mxu0 0
    %9706 = vmatmul.mubr.bf16.gmra.mxu0 %v9512
    %v9707 = vpop.f32.mrf.mxu0
    %v9708 = vadd.f32 %v6306, %v9707
    %v9709 = vpop.f32.mrf.mxu0
    %v9710 = vadd.f32 %v6310, %v9709
    %v9711 = vpop.f32.mrf.mxu0
    %v9712 = vpop.f32.mrf.mxu0
    %9713 = vdwg.mxu0
    %9714 = vmatprep.subr.bf16.mxu0 0
    %9715 = vmatpush1.bf16.msra.mxu0 %v9648
    %9716 = vmatprep.subr.bf16.mxu0 0
    %9717 = vmatpush1.bf16.msra.mxu0 %v9645
    %9718 = vmatprep.subr.bf16.mxu0 0
    %9719 = vmatpush1.bf16.msra.mxu0 %v9642
    %9720 = vmatprep.subr.bf16.mxu0 0
    %9721 = vmatpush1.bf16.msra.mxu0 %v9639
    %9722 = vmatprep.subr.bf16.mxu0 0
    %9723 = vmatpush1.bf16.msra.mxu0 %v9636
    %9724 = vmatprep.subr.bf16.mxu0 0
    %9725 = vmatpush1.bf16.msra.mxu0 %v9633
    %9726 = vmatprep.subr.bf16.mxu0 0
    %9727 = vmatpush1.bf16.msra.mxu0 %v9630
    %9728 = vmatprep.subr.bf16.mxu0 0
    %9729 = vmatpush1.bf16.msra.mxu0 %v9627
    %9730 = vmatprep.subr.bf16.mxu0 0
    %9731 = vmatpush2.bf16.msra.mxu0 0
    %9732 = vmatprep.subr.bf16.mxu0 0
    %9733 = vmatpush2.bf16.msra.mxu0 0
    %9734 = vmatprep.subr.bf16.mxu0 0
    %9735 = vmatpush2.bf16.msra.mxu0 0
    %9736 = vmatprep.subr.bf16.mxu0 0
    %9737 = vmatpush2.bf16.msra.mxu0 0
    %9738 = vmatprep.subr.bf16.mxu0 0
    %9739 = vmatpush2.bf16.msra.mxu0 0
    %9740 = vmatprep.subr.bf16.mxu0 0
    %9741 = vmatpush2.bf16.msra.mxu0 0
    %9742 = vmatprep.subr.bf16.mxu0 0
    %9743 = vmatpush2.bf16.msra.mxu0 0
    %9744 = vmatprep.subr.bf16.mxu0 0
    %9745 = vmatpush2.bf16.msra.mxu0 0
    %9746 = vmatprep.mubr.bf16.mxu0 0
    %9747 = vmatmul.mubr.bf16.gmra.mxu0 %v9512
    %v9748 = vpop.f32.mrf.mxu0
    %v9749 = vadd.f32 %v6314, %v9748
    %v9750 = vpop.f32.mrf.mxu0
    %v9751 = vpop.f32.mrf.mxu0
    %v9752 = vpop.f32.mrf.mxu0
    %9753 = vdwg.mxu0
    %v9754 = vld [vmem:[#allocation3 + $0x18] sm:$0xff]
    %v9755 = vld [vmem:[#allocation3 + $0x20] sm:$0xff]
    %v9756 = vld [vmem:[#allocation3 + $0x28] sm:$0xff]
    %v9757 = vadd.f32 %v9754, %v9708
    %v9758 = vxor.u32 %v9757, 2147483648
    %v9759 = vmul.f32 %v9758, 1.442695
    %v9760 = vpow.pop %v9759
    %v9761 = vadd.f32 %v9760, 1.0
    %v9762 = vrcp.pop %v9761
    %v9763 = vmul.f32 1.0, %v9762
    %v9764 = vadd.f32 %v9755, %v9710
    %v9765 = vxor.u32 %v9764, 2147483648
    %v9766 = vmul.f32 %v9765, 1.442695
    %v9767 = vpow.pop %v9766
    %v9768 = vadd.f32 %v9767, 1.0
    %v9769 = vrcp.pop %v9768
    %v9770 = vmul.f32 1.0, %v9769
    %v9771 = vmul.f32 %v9763, %v9749
    %v9772 = vadd.f32 %v9756, %v9771
    %v9773 = vtanh.pop %v9772
    %v9774 = vsub.f32 1.0, %v9770
    %v9775 = vmul.f32 %v9774, %v9773
    %v9776 = vmul.f32 %v9770, %v9240
    %v9777 = vadd.f32 %v9775, %v9776
    %v9778 = vsel %vm76, %v9777, %v9240
    %v9779 = vsel %vm76, %v9777, 0.0
    %9780 = vst [vmem:[#allocation6 + $0x30] sm:$0xff] %v9511
    %9781 = vst [vmem:[#allocation5 + $0x8] sm:$0xff] %v9779
    %v9782 = vpack.c.bf16 %v9510, %v9510
    %v9783 = vld [vmem:[%s11] sm:$0xff]
    %v9784 = vld [vmem:[%s11 + $0x8] sm:$0xf]
    %v9785 = vld [vmem:[%s11 + $0xc] sm:$0xff]
    %v9786 = vld [vmem:[%s11 + $0x14] sm:$0xf]
    %v9787 = vld [vmem:[%s11 + $0x18] sm:$0xff]
    %v9788 = vld [vmem:[%s11 + $0x20] sm:$0xf]
    %v9789 = vld [vmem:[%s11 + $0x24] sm:$0xff]
    %v9790 = vld [vmem:[%s11 + $0x2c] sm:$0xf]
    %v9791 = vld [vmem:[%s11 + $0x30] sm:$0xff]
    %v9792 = vld [vmem:[%s11 + $0x38] sm:$0xf]
    %v9793 = vld [vmem:[%s11 + $0x3c] sm:$0xff]
    %v9794 = vld [vmem:[%s11 + $0x44] sm:$0xf]
    %v9795 = vld [vmem:[%s11 + $0x48] sm:$0xff]
    %v9796 = vld [vmem:[%s11 + $0x50] sm:$0xf]
    %v9797 = vld [vmem:[%s11 + $0x54] sm:$0xff]
    %v9798 = vld [vmem:[%s11 + $0x5c] sm:$0xf]
    %v9799 = vld [vmem:[%s11 + $0x60] sm:$0xff]
    %v9800 = vld [vmem:[%s11 + $0x68] sm:$0xf]
    %v9801 = vld [vmem:[%s11 + $0x6c] sm:$0xff]
    %v9802 = vld [vmem:[%s11 + $0x74] sm:$0xf]
    %v9803 = vld [vmem:[%s11 + $0x78] sm:$0xff]
    %v9804 = vld [vmem:[%s11 + $0x80] sm:$0xf]
    %v9805 = vld [vmem:[%s11 + $0x84] sm:$0xff]
    %v9806 = vld [vmem:[%s11 + $0x8c] sm:$0xf]
    %v9807 = vld [vmem:[%s11 + $0x90] sm:$0xff]
    %v9808 = vld [vmem:[%s11 + $0x98] sm:$0xf]
    %v9809 = vld [vmem:[%s11 + $0x9c] sm:$0xff]
    %v9810 = vld [vmem:[%s11 + $0xa4] sm:$0xf]
    %v9811 = vld [vmem:[%s11 + $0xa8] sm:$0xff]
    %v9812 = vld [vmem:[%s11 + $0xb0] sm:$0xf]
    %v9813 = vld [vmem:[%s11 + $0xb4] sm:$0xff]
    %v9814 = vld [vmem:[%s11 + $0xbc] sm:$0xf]
    %v9847 = vunpack.c.l.b16 %v9783
    %v9848 = vunpack.c.h.b16 %v9783
    %v9849 = vunpack.c.l.b16 %v9784
    %v9850 = vunpack.c.l.b16 %v9785
    %v9851 = vunpack.c.h.b16 %v9785
    %v9852 = vunpack.c.l.b16 %v9786
    %v9853 = vunpack.c.l.b16 %v9787
    %v9854 = vunpack.c.h.b16 %v9787
    %v9855 = vunpack.c.l.b16 %v9788
    %v9856 = vunpack.c.l.b16 %v9789
    %v9857 = vunpack.c.h.b16 %v9789
    %v9858 = vunpack.c.l.b16 %v9790
    %v9859 = vunpack.c.l.b16 %v9791
    %v9860 = vunpack.c.h.b16 %v9791
    %v9861 = vunpack.c.l.b16 %v9792
    %v9862 = vunpack.c.l.b16 %v9793
    %v9863 = vunpack.c.h.b16 %v9793
    %v9864 = vunpack.c.l.b16 %v9794
    %v9865 = vunpack.c.l.b16 %v9795
    %v9866 = vunpack.c.h.b16 %v9795
    %v9867 = vunpack.c.l.b16 %v9796
    %v9868 = vunpack.c.l.b16 %v9797
    %v9869 = vunpack.c.h.b16 %v9797
    %v9870 = vunpack.c.l.b16 %v9798
    %v9871 = vunpack.c.l.b16 %v9799
    %v9872 = vunpack.c.h.b16 %v9799
    %v9873 = vunpack.c.l.b16 %v9800
    %v9874 = vunpack.c.l.b16 %v9801
    %v9875 = vunpack.c.h.b16 %v9801
    %v9876 = vunpack.c.l.b16 %v9802
    %v9877 = vunpack.c.l.b16 %v9803
    %v9878 = vunpack.c.h.b16 %v9803
    %v9879 = vunpack.c.l.b16 %v9804
    %v9880 = vunpack.c.l.b16 %v9805
    %v9881 = vunpack.c.h.b16 %v9805
    %v9882 = vunpack.c.l.b16 %v9806
    %v9883 = vunpack.c.l.b16 %v9807
    %v9884 = vunpack.c.h.b16 %v9807
    %v9885 = vunpack.c.l.b16 %v9808
    %v9886 = vunpack.c.l.b16 %v9809
    %v9887 = vunpack.c.h.b16 %v9809
    %v9888 = vunpack.c.l.b16 %v9810
    %v9889 = vunpack.c.l.b16 %v9811
    %v9890 = vunpack.c.h.b16 %v9811
    %v9891 = vunpack.c.l.b16 %v9812
    %v9892 = vunpack.c.l.b16 %v9813
    %v9893 = vunpack.c.h.b16 %v9813
    %v9894 = vunpack.c.l.b16 %v9814
    %v9895 = vpack.c.b16 %v9850, %v9847
    %v9896 = vpack.c.b16 %v9851, %v9848
    %v9897 = vpack.c.b16 %v9852, %v9849
    %v9898 = vpack.c.b16 %v9856, %v9853
    %v9899 = vpack.c.b16 %v9857, %v9854
    %v9900 = vpack.c.b16 %v9858, %v9855
    %v9901 = vpack.c.b16 %v9862, %v9859
    %v9902 = vpack.c.b16 %v9863, %v9860
    %v9903 = vpack.c.b16 %v9864, %v9861
    %v9904 = vpack.c.b16 %v9868, %v9865
    %v9905 = vpack.c.b16 %v9869, %v9866
    %v9906 = vpack.c.b16 %v9870, %v9867
    %v9907 = vpack.c.b16 %v9874, %v9871
    %v9908 = vpack.c.b16 %v9875, %v9872
    %v9909 = vpack.c.b16 %v9876, %v9873
    %v9910 = vpack.c.b16 %v9880, %v9877
    %v9911 = vpack.c.b16 %v9881, %v9878
    %v9912 = vpack.c.b16 %v9882, %v9879
    %v9913 = vpack.c.b16 %v9886, %v9883
    %v9914 = vpack.c.b16 %v9887, %v9884
    %v9915 = vpack.c.b16 %v9888, %v9885
    %v9916 = vpack.c.b16 %v9892, %v9889
    %v9917 = vpack.c.b16 %v9893, %v9890
    %v9918 = vpack.c.b16 %v9894, %v9891
    %9943 = vmatprep.subr.bf16.mxu0 %v9917
    %9944 = vmatpush1.bf16.msra.mxu0 %v9916
    %9945 = vmatprep.subr.bf16.mxu0 %v9914
    %9946 = vmatpush1.bf16.msra.mxu0 %v9913
    %9947 = vmatprep.subr.bf16.mxu0 %v9911
    %9948 = vmatpush1.bf16.msra.mxu0 %v9910
    %9949 = vmatprep.subr.bf16.mxu0 %v9908
    %9950 = vmatpush1.bf16.msra.mxu0 %v9907
    %9951 = vmatprep.subr.bf16.mxu0 %v9905
    %9952 = vmatpush1.bf16.msra.mxu0 %v9904
    %9953 = vmatprep.subr.bf16.mxu0 %v9902
    %9954 = vmatpush1.bf16.msra.mxu0 %v9901
    %9955 = vmatprep.subr.bf16.mxu0 %v9899
    %9956 = vmatpush1.bf16.msra.mxu0 %v9898
    %9957 = vmatprep.subr.bf16.mxu0 %v9896
    %9958 = vmatpush1.bf16.msra.mxu0 %v9895
    %9959 = vmatprep.subr.bf16.mxu0 0
    %9960 = vmatpush2.bf16.msra.mxu0 0
    %9961 = vmatprep.subr.bf16.mxu0 0
    %9962 = vmatpush2.bf16.msra.mxu0 0
    %9963 = vmatprep.subr.bf16.mxu0 0
    %9964 = vmatpush2.bf16.msra.mxu0 0
    %9965 = vmatprep.subr.bf16.mxu0 0
    %9966 = vmatpush2.bf16.msra.mxu0 0
    %9967 = vmatprep.subr.bf16.mxu0 0
    %9968 = vmatpush2.bf16.msra.mxu0 0
    %9969 = vmatprep.subr.bf16.mxu0 0
    %9970 = vmatpush2.bf16.msra.mxu0 0
    %9971 = vmatprep.subr.bf16.mxu0 0
    %9972 = vmatpush2.bf16.msra.mxu0 0
    %9973 = vmatprep.subr.bf16.mxu0 0
    %9974 = vmatpush2.bf16.msra.mxu0 0
    %9975 = vmatprep.mubr.bf16.mxu0 0
    %9976 = vmatmul.mubr.bf16.gmra.mxu0 %v9782
    %v9977 = vpop.f32.mrf.mxu0
    %v9978 = vadd.f32 %v6024, %v9977
    %v9979 = vpop.f32.mrf.mxu0
    %v9980 = vadd.f32 %v6028, %v9979
    %v9981 = vpop.f32.mrf.mxu0
    %v9982 = vpop.f32.mrf.mxu0
    %9983 = vdwg.mxu0
    %9984 = vmatprep.subr.bf16.mxu0 0
    %9985 = vmatpush1.bf16.msra.mxu0 %v9918
    %9986 = vmatprep.subr.bf16.mxu0 0
    %9987 = vmatpush1.bf16.msra.mxu0 %v9915
    %9988 = vmatprep.subr.bf16.mxu0 0
    %9989 = vmatpush1.bf16.msra.mxu0 %v9912
    %9990 = vmatprep.subr.bf16.mxu0 0
    %9991 = vmatpush1.bf16.msra.mxu0 %v9909
    %9992 = vmatprep.subr.bf16.mxu0 0
    %9993 = vmatpush1.bf16.msra.mxu0 %v9906
    %9994 = vmatprep.subr.bf16.mxu0 0
    %9995 = vmatpush1.bf16.msra.mxu0 %v9903
    %9996 = vmatprep.subr.bf16.mxu0 0
    %9997 = vmatpush1.bf16.msra.mxu0 %v9900
    %9998 = vmatprep.subr.bf16.mxu0 0
    %9999 = vmatpush1.bf16.msra.mxu0 %v9897
    %10000 = vmatprep.subr.bf16.mxu0 0
    %10001 = vmatpush2.bf16.msra.mxu0 0
    %10002 = vmatprep.subr.bf16.mxu0 0
    %10003 = vmatpush2.bf16.msra.mxu0 0
    %10004 = vmatprep.subr.bf16.mxu0 0
    %10005 = vmatpush2.bf16.msra.mxu0 0
    %10006 = vmatprep.subr.bf16.mxu0 0
    %10007 = vmatpush2.bf16.msra.mxu0 0
    %10008 = vmatprep.subr.bf16.mxu0 0
    %10009 = vmatpush2.bf16.msra.mxu0 0
    %10010 = vmatprep.subr.bf16.mxu0 0
    %10011 = vmatpush2.bf16.msra.mxu0 0
    %10012 = vmatprep.subr.bf16.mxu0 0
    %10013 = vmatpush2.bf16.msra.mxu0 0
    %10014 = vmatprep.subr.bf16.mxu0 0
    %10015 = vmatpush2.bf16.msra.mxu0 0
    %10016 = vmatprep.mubr.bf16.mxu0 0
    %10017 = vmatmul.mubr.bf16.gmra.mxu0 %v9782
    %v10018 = vpop.f32.mrf.mxu0
    %v10019 = vadd.f32 %v6032, %v10018
    %v10020 = vpop.f32.mrf.mxu0
    %v10021 = vpop.f32.mrf.mxu0
    %v10022 = vpop.f32.mrf.mxu0
    %10023 = vdwg.mxu0
    %v10024 = vld [vmem:[#allocation2 + $0xa8] sm:$0xff]
    %v10025 = vld [vmem:[#allocation2 + $0xb0] sm:$0xff]
    %v10026 = vld [vmem:[#allocation2 + $0xb8] sm:$0xff]
    %v10027 = vadd.f32 %v10024, %v9978
    %v10028 = vxor.u32 %v10027, 2147483648
    %v10029 = vmul.f32 %v10028, 1.442695
    %v10030 = vpow.pop %v10029
    %v10031 = vadd.f32 %v10030, 1.0
    %v10032 = vrcp.pop %v10031
    %v10033 = vmul.f32 1.0, %v10032
    %v10034 = vadd.f32 %v10025, %v9980
    %v10035 = vxor.u32 %v10034, 2147483648
    %v10036 = vmul.f32 %v10035, 1.442695
    %v10037 = vpow.pop %v10036
    %v10038 = vadd.f32 %v10037, 1.0
    %v10039 = vrcp.pop %v10038
    %v10040 = vmul.f32 1.0, %v10039
    %v10041 = vmul.f32 %v10033, %v10019
    %v10042 = vadd.f32 %v10026, %v10041
    %v10043 = vtanh.pop %v10042
    %v10044 = vsub.f32 1.0, %v10040
    %v10045 = vmul.f32 %v10044, %v10043
    %v10046 = vmul.f32 %v10040, %v9510
    %v10047 = vadd.f32 %v10045, %v10046
    %v10048 = vsel %vm112, %v10047, %v9510
    %v10049 = vsel %vm112, %v10047, 0.0
    %v10050 = vpack.c.bf16 %v9778, %v9778
    %v10051 = vld [vmem:[%s15] sm:$0xff]
    %v10052 = vld [vmem:[%s15 + $0x8] sm:$0xf]
    %v10053 = vld [vmem:[%s15 + $0xc] sm:$0xff]
    %v10054 = vld [vmem:[%s15 + $0x14] sm:$0xf]
    %v10055 = vld [vmem:[%s15 + $0x18] sm:$0xff]
    %v10056 = vld [vmem:[%s15 + $0x20] sm:$0xf]
    %v10057 = vld [vmem:[%s15 + $0x24] sm:$0xff]
    %v10058 = vld [vmem:[%s15 + $0x2c] sm:$0xf]
    %v10059 = vld [vmem:[%s15 + $0x30] sm:$0xff]
    %v10060 = vld [vmem:[%s15 + $0x38] sm:$0xf]
    %v10061 = vld [vmem:[%s15 + $0x3c] sm:$0xff]
    %v10062 = vld [vmem:[%s15 + $0x44] sm:$0xf]
    %v10063 = vld [vmem:[%s15 + $0x48] sm:$0xff]
    %v10064 = vld [vmem:[%s15 + $0x50] sm:$0xf]
    %v10065 = vld [vmem:[%s15 + $0x54] sm:$0xff]
    %v10066 = vld [vmem:[%s15 + $0x5c] sm:$0xf]
    %v10067 = vld [vmem:[%s15 + $0x60] sm:$0xff]
    %v10068 = vld [vmem:[%s15 + $0x68] sm:$0xf]
    %v10069 = vld [vmem:[%s15 + $0x6c] sm:$0xff]
    %v10070 = vld [vmem:[%s15 + $0x74] sm:$0xf]
    %v10071 = vld [vmem:[%s15 + $0x78] sm:$0xff]
    %v10072 = vld [vmem:[%s15 + $0x80] sm:$0xf]
    %v10073 = vld [vmem:[%s15 + $0x84] sm:$0xff]
    %v10074 = vld [vmem:[%s15 + $0x8c] sm:$0xf]
    %v10075 = vld [vmem:[%s15 + $0x90] sm:$0xff]
    %v10076 = vld [vmem:[%s15 + $0x98] sm:$0xf]
    %v10077 = vld [vmem:[%s15 + $0x9c] sm:$0xff]
    %v10078 = vld [vmem:[%s15 + $0xa4] sm:$0xf]
    %v10079 = vld [vmem:[%s15 + $0xa8] sm:$0xff]
    %v10080 = vld [vmem:[%s15 + $0xb0] sm:$0xf]
    %v10081 = vld [vmem:[%s15 + $0xb4] sm:$0xff]
    %v10082 = vld [vmem:[%s15 + $0xbc] sm:$0xf]
    %v10115 = vunpack.c.l.b16 %v10051
    %v10116 = vunpack.c.h.b16 %v10051
    %v10117 = vunpack.c.l.b16 %v10052
    %v10118 = vunpack.c.l.b16 %v10053
    %v10119 = vunpack.c.h.b16 %v10053
    %v10120 = vunpack.c.l.b16 %v10054
    %v10121 = vunpack.c.l.b16 %v10055
    %v10122 = vunpack.c.h.b16 %v10055
    %v10123 = vunpack.c.l.b16 %v10056
    %v10124 = vunpack.c.l.b16 %v10057
    %v10125 = vunpack.c.h.b16 %v10057
    %v10126 = vunpack.c.l.b16 %v10058
    %v10127 = vunpack.c.l.b16 %v10059
    %v10128 = vunpack.c.h.b16 %v10059
    %v10129 = vunpack.c.l.b16 %v10060
    %v10130 = vunpack.c.l.b16 %v10061
    %v10131 = vunpack.c.h.b16 %v10061
    %v10132 = vunpack.c.l.b16 %v10062
    %v10133 = vunpack.c.l.b16 %v10063
    %v10134 = vunpack.c.h.b16 %v10063
    %v10135 = vunpack.c.l.b16 %v10064
    %v10136 = vunpack.c.l.b16 %v10065
    %v10137 = vunpack.c.h.b16 %v10065
    %v10138 = vunpack.c.l.b16 %v10066
    %v10139 = vunpack.c.l.b16 %v10067
    %v10140 = vunpack.c.h.b16 %v10067
    %v10141 = vunpack.c.l.b16 %v10068
    %v10142 = vunpack.c.l.b16 %v10069
    %v10143 = vunpack.c.h.b16 %v10069
    %v10144 = vunpack.c.l.b16 %v10070
    %v10145 = vunpack.c.l.b16 %v10071
    %v10146 = vunpack.c.h.b16 %v10071
    %v10147 = vunpack.c.l.b16 %v10072
    %v10148 = vunpack.c.l.b16 %v10073
    %v10149 = vunpack.c.h.b16 %v10073
    %v10150 = vunpack.c.l.b16 %v10074
    %v10151 = vunpack.c.l.b16 %v10075
    %v10152 = vunpack.c.h.b16 %v10075
    %v10153 = vunpack.c.l.b16 %v10076
    %v10154 = vunpack.c.l.b16 %v10077
    %v10155 = vunpack.c.h.b16 %v10077
    %v10156 = vunpack.c.l.b16 %v10078
    %v10157 = vunpack.c.l.b16 %v10079
    %v10158 = vunpack.c.h.b16 %v10079
    %v10159 = vunpack.c.l.b16 %v10080
    %v10160 = vunpack.c.l.b16 %v10081
    %v10161 = vunpack.c.h.b16 %v10081
    %v10162 = vunpack.c.l.b16 %v10082
    %v10163 = vpack.c.b16 %v10118, %v10115
    %v10164 = vpack.c.b16 %v10119, %v10116
    %v10165 = vpack.c.b16 %v10120, %v10117
    %v10166 = vpack.c.b16 %v10124, %v10121
    %v10167 = vpack.c.b16 %v10125, %v10122
    %v10168 = vpack.c.b16 %v10126, %v10123
    %v10169 = vpack.c.b16 %v10130, %v10127
    %v10170 = vpack.c.b16 %v10131, %v10128
    %v10171 = vpack.c.b16 %v10132, %v10129
    %v10172 = vpack.c.b16 %v10136, %v10133
    %v10173 = vpack.c.b16 %v10137, %v10134
    %v10174 = vpack.c.b16 %v10138, %v10135
    %v10175 = vpack.c.b16 %v10142, %v10139
    %v10176 = vpack.c.b16 %v10143, %v10140
    %v10177 = vpack.c.b16 %v10144, %v10141
    %v10178 = vpack.c.b16 %v10148, %v10145
    %v10179 = vpack.c.b16 %v10149, %v10146
    %v10180 = vpack.c.b16 %v10150, %v10147
    %v10181 = vpack.c.b16 %v10154, %v10151
    %v10182 = vpack.c.b16 %v10155, %v10152
    %v10183 = vpack.c.b16 %v10156, %v10153
    %v10184 = vpack.c.b16 %v10160, %v10157
    %v10185 = vpack.c.b16 %v10161, %v10158
    %v10186 = vpack.c.b16 %v10162, %v10159
    %10211 = vmatprep.subr.bf16.mxu0 %v10185
    %10212 = vmatpush1.bf16.msra.mxu0 %v10184
    %10213 = vmatprep.subr.bf16.mxu0 %v10182
    %10214 = vmatpush1.bf16.msra.mxu0 %v10181
    %10215 = vmatprep.subr.bf16.mxu0 %v10179
    %10216 = vmatpush1.bf16.msra.mxu0 %v10178
    %10217 = vmatprep.subr.bf16.mxu0 %v10176
    %10218 = vmatpush1.bf16.msra.mxu0 %v10175
    %10219 = vmatprep.subr.bf16.mxu0 %v10173
    %10220 = vmatpush1.bf16.msra.mxu0 %v10172
    %10221 = vmatprep.subr.bf16.mxu0 %v10170
    %10222 = vmatpush1.bf16.msra.mxu0 %v10169
    %10223 = vmatprep.subr.bf16.mxu0 %v10167
    %10224 = vmatpush1.bf16.msra.mxu0 %v10166
    %10225 = vmatprep.subr.bf16.mxu0 %v10164
    %10226 = vmatpush1.bf16.msra.mxu0 %v10163
    %10227 = vmatprep.subr.bf16.mxu0 0
    %10228 = vmatpush2.bf16.msra.mxu0 0
    %10229 = vmatprep.subr.bf16.mxu0 0
    %10230 = vmatpush2.bf16.msra.mxu0 0
    %10231 = vmatprep.subr.bf16.mxu0 0
    %10232 = vmatpush2.bf16.msra.mxu0 0
    %10233 = vmatprep.subr.bf16.mxu0 0
    %10234 = vmatpush2.bf16.msra.mxu0 0
    %10235 = vmatprep.subr.bf16.mxu0 0
    %10236 = vmatpush2.bf16.msra.mxu0 0
    %10237 = vmatprep.subr.bf16.mxu0 0
    %10238 = vmatpush2.bf16.msra.mxu0 0
    %10239 = vmatprep.subr.bf16.mxu0 0
    %10240 = vmatpush2.bf16.msra.mxu0 0
    %10241 = vmatprep.subr.bf16.mxu0 0
    %10242 = vmatpush2.bf16.msra.mxu0 0
    %10243 = vmatprep.mubr.bf16.mxu0 0
    %10244 = vmatmul.mubr.bf16.gmra.mxu0 %v10050
    %v10245 = vpop.f32.mrf.mxu0
    %v10246 = vadd.f32 %v6306, %v10245
    %v10247 = vpop.f32.mrf.mxu0
    %v10248 = vadd.f32 %v6310, %v10247
    %v10249 = vpop.f32.mrf.mxu0
    %v10250 = vpop.f32.mrf.mxu0
    %10251 = vdwg.mxu0
    %10252 = vmatprep.subr.bf16.mxu0 0
    %10253 = vmatpush1.bf16.msra.mxu0 %v10186
    %10254 = vmatprep.subr.bf16.mxu0 0
    %10255 = vmatpush1.bf16.msra.mxu0 %v10183
    %10256 = vmatprep.subr.bf16.mxu0 0
    %10257 = vmatpush1.bf16.msra.mxu0 %v10180
    %10258 = vmatprep.subr.bf16.mxu0 0
    %10259 = vmatpush1.bf16.msra.mxu0 %v10177
    %10260 = vmatprep.subr.bf16.mxu0 0
    %10261 = vmatpush1.bf16.msra.mxu0 %v10174
    %10262 = vmatprep.subr.bf16.mxu0 0
    %10263 = vmatpush1.bf16.msra.mxu0 %v10171
    %10264 = vmatprep.subr.bf16.mxu0 0
    %10265 = vmatpush1.bf16.msra.mxu0 %v10168
    %10266 = vmatprep.subr.bf16.mxu0 0
    %10267 = vmatpush1.bf16.msra.mxu0 %v10165
    %10268 = vmatprep.subr.bf16.mxu0 0
    %10269 = vmatpush2.bf16.msra.mxu0 0
    %10270 = vmatprep.subr.bf16.mxu0 0
    %10271 = vmatpush2.bf16.msra.mxu0 0
    %10272 = vmatprep.subr.bf16.mxu0 0
    %10273 = vmatpush2.bf16.msra.mxu0 0
    %10274 = vmatprep.subr.bf16.mxu0 0
    %10275 = vmatpush2.bf16.msra.mxu0 0
    %10276 = vmatprep.subr.bf16.mxu0 0
    %10277 = vmatpush2.bf16.msra.mxu0 0
    %10278 = vmatprep.subr.bf16.mxu0 0
    %10279 = vmatpush2.bf16.msra.mxu0 0
    %10280 = vmatprep.subr.bf16.mxu0 0
    %10281 = vmatpush2.bf16.msra.mxu0 0
    %10282 = vmatprep.subr.bf16.mxu0 0
    %10283 = vmatpush2.bf16.msra.mxu0 0
    %10284 = vmatprep.mubr.bf16.mxu0 0
    %10285 = vmatmul.mubr.bf16.gmra.mxu0 %v10050
    %v10286 = vpop.f32.mrf.mxu0
    %v10287 = vadd.f32 %v6314, %v10286
    %v10288 = vpop.f32.mrf.mxu0
    %v10289 = vpop.f32.mrf.mxu0
    %v10290 = vpop.f32.mrf.mxu0
    %10291 = vdwg.mxu0
    %v10292 = vld [vmem:[#allocation3] sm:$0xff]
    %v10293 = vld [vmem:[#allocation3 + $0x8] sm:$0xff]
    %v10294 = vld [vmem:[#allocation3 + $0x10] sm:$0xff]
    %v10295 = vadd.f32 %v10292, %v10246
    %v10296 = vxor.u32 %v10295, 2147483648
    %v10297 = vmul.f32 %v10296, 1.442695
    %v10298 = vpow.pop %v10297
    %v10299 = vadd.f32 %v10298, 1.0
    %v10300 = vrcp.pop %v10299
    %v10301 = vmul.f32 1.0, %v10300
    %v10302 = vadd.f32 %v10293, %v10248
    %v10303 = vxor.u32 %v10302, 2147483648
    %v10304 = vmul.f32 %v10303, 1.442695
    %v10305 = vpow.pop %v10304
    %v10306 = vadd.f32 %v10305, 1.0
    %v10307 = vrcp.pop %v10306
    %v10308 = vmul.f32 1.0, %v10307
    %v10309 = vmul.f32 %v10301, %v10287
    %v10310 = vadd.f32 %v10294, %v10309
    %v10311 = vtanh.pop %v10310
    %v10312 = vsub.f32 1.0, %v10308
    %v10313 = vmul.f32 %v10312, %v10311
    %v10314 = vmul.f32 %v10308, %v9778
    %v10315 = vadd.f32 %v10313, %v10314
    %v10316 = vsel %vm70, %v10315, %v9778
    %v10317 = vsel %vm70, %v10315, 0.0
    %10318 = vst [vmem:[#allocation6 + $0x38] sm:$0xff] %v10049
    %10319 = vst [vmem:[#allocation5] sm:$0xff] %v10317
    %v10320 = vld [vmem:[#allocation6] sm:$0xff]
    %v10321 = vld [vmem:[#allocation6 + $0x8] sm:$0xff]
    %v10322 = vld [vmem:[#allocation6 + $0x10] sm:$0xff]
    %v10323 = vld [vmem:[#allocation6 + $0x18] sm:$0xff]
    %v10324 = vld [vmem:[#allocation6 + $0x20] sm:$0xff]
    %v10325 = vld [vmem:[#allocation6 + $0x28] sm:$0xff]
    %v10326 = vld [vmem:[#allocation6 + $0x30] sm:$0xff]
    %v10327 = vld [vmem:[#allocation6 + $0x38] sm:$0xff]
    %v10328 = vld [vmem:[#allocation5] sm:$0xff]
    %v10329 = vld [vmem:[#allocation5 + $0x8] sm:$0xff]
    %v10330 = vld [vmem:[#allocation5 + $0x10] sm:$0xff]
    %v10331 = vld [vmem:[#allocation5 + $0x18] sm:$0xff]
    %v10332 = vld [vmem:[#allocation5 + $0x20] sm:$0xff]
    %v10333 = vld [vmem:[#allocation5 + $0x28] sm:$0xff]
    %v10334 = vld [vmem:[#allocation5 + $0x30] sm:$0xff]
    %v10335 = vld [vmem:[#allocation5 + $0x38] sm:$0xff]
    %v10336 = vadd.f32 %v10320, %v10328
    %v10337 = vadd.f32 %v10321, %v10329
    %v10338 = vadd.f32 %v10322, %v10330
    %v10339 = vadd.f32 %v10323, %v10331
    %v10340 = vadd.f32 %v10324, %v10332
    %v10341 = vadd.f32 %v10325, %v10333
    %v10342 = vadd.f32 %v10326, %v10334
    %v10343 = vadd.f32 %v10327, %v10335
    %10344 = vst [vmem:[#allocation6] sm:$0xff] %v10336
    %10345 = vst [vmem:[#allocation6 + $0x8] sm:$0xff] %v10337
    %10346 = vst [vmem:[#allocation6 + $0x10] sm:$0xff] %v10338
    %10347 = vst [vmem:[#allocation6 + $0x18] sm:$0xff] %v10339
    %10348 = vst [vmem:[#allocation6 + $0x20] sm:$0xff] %v10340
    %10349 = vst [vmem:[#allocation6 + $0x28] sm:$0xff] %v10341
    %10350 = vst [vmem:[#allocation6 + $0x30] sm:$0xff] %v10342
    %10351 = vst [vmem:[#allocation6 + $0x38] sm:$0xff] %v10343
    %10352 = vst [vmem:[#allocation8] sm:$0xff] %v4666
    %s10353 = scalar_lea.vmem [#allocation8], 8
    %10354 = vst [vmem:[%s10353] sm:$0xff] %v4934
    %s10355 = scalar_lea.vmem [#allocation8], 16
    %10356 = vst [vmem:[%s10355] sm:$0xff] %v10048
    %s10357 = scalar_lea.vmem [#allocation8], 24
    %10358 = vst [vmem:[%s10357] sm:$0xff] %v10316
    // Predicated region
    $region74: #{encoder_rnn_forward.1} parent=1 // pred_check
      _
    $region75: #{encoder_rnn_forward.1} parent=1 // pred_check_branch
      %10360 = sbr.rel (0) target = $region77
    $region76: #{encoder_rnn_forward.1} parent=1 // pred_region
      %s10362 = ssub.s32 1024, 1024
      %10363 = vsyncadd [#allocation7], %s10362
      %s10364 = sshll.u32 [#allocation6], 4
      %s10365 = int_to_ptr.vmem [resolvable:$true] %s10364
      %10370 = dma.vmem_to_hbm [thread:$0]  %s10365, 1024, %s18, [#allocation7], 128, 128, 8
    $region77: #{encoder_rnn_forward.1} parent=1 // pred_fallthru
      _
    // Predicated region
    $region78: #{encoder_rnn_forward.1} parent=1 // pred_check
      _
    $region79: #{encoder_rnn_forward.1} parent=1 // pred_check_branch
      %10372 = sbr.rel (0) target = $region81
    $region80: #{encoder_rnn_forward.1} parent=1 // pred_region
      %s10374 = ssub.s32 512, 512
      %10375 = vsyncadd [#allocation9], %s10374
      %s10376 = sshll.u32 [#allocation8], 4
      %s10377 = int_to_ptr.vmem [resolvable:$true] %s10376
      %10382 = dma.vmem_to_hbm [thread:$0]  %s10377, 512, %s19, [#allocation9], 128, 128, 8
    $region81: #{encoder_rnn_forward.1} parent=1 // pred_fallthru
      _
    // Predicated region
    $region82: #{encoder_rnn_forward.1} parent=1 // pred_check
      _
    $region83: #{encoder_rnn_forward.1} parent=1 // pred_check_branch
      %10384 = sbr.rel (0) target = $region85
    $region84: #{encoder_rnn_forward.1} parent=1 // pred_region
      %10385 = dma.done [#allocation7], 1024
    $region85: #{encoder_rnn_forward.1} parent=1 // pred_fallthru
      _
    // Predicated region
    $region86: #{encoder_rnn_forward.1} parent=1 // pred_check
      _
    $region87: #{encoder_rnn_forward.1} parent=1 // pred_check_branch
      %10387 = sbr.rel (0) target = $region89
    $region88: #{encoder_rnn_forward.1} parent=1 // pred_region
      %10388 = dma.done [#allocation9], 512
    $region89: #{encoder_rnn_forward.1} parent=1 // pred_fallthru
      _
    %10389 = vsyncpa [#allocation7], 1
    %10390 = vsyncpa [#allocation9], 1

</llo_original>
